<compile_context>
chip_gen: v5e
topology: v5e:2x2
jax: 0.10.0
libtpu: 0.0.40
codegen_flags: <defaults>
</compile_context>

<pallas_src>
import functools
import math

import jax
import jax.numpy as jnp
from jax import lax
from jax.experimental import pallas as pl
from jax.experimental.pallas import tpu as pltpu

_EPS = 1e-5


def _pick_rows(m, target=2048):
    """Largest row-tile <= target that divides m and is a multiple of 8
    (or m itself, which is always a legal full block)."""
    if m <= target:
        return m
    start = target - (target % 8)
    for t in range(start, 7, -8):
        if m % t == 0:
            return t
    return m  # fallback: single full block


# ---------------- conv-as-matmul with fused BN statistics -------------------

def _matmul_bias_stats_kernel(x_ref, w_ref, b_ref, y_ref, s1_ref, s2_ref):
    i = pl.program_id(0)

    @pl.when(i == 0)
    def _():
        s1_ref[...] = jnp.zeros_like(s1_ref)
        s2_ref[...] = jnp.zeros_like(s2_ref)

    acc = jnp.dot(x_ref[...], w_ref[...],
                  preferred_element_type=jnp.float32) + b_ref[...]
    y_ref[...] = acc
    s1_ref[...] += jnp.sum(acc, axis=0, keepdims=True)
    s2_ref[...] += jnp.sum(acc * acc, axis=0, keepdims=True)


def matmul_bias_stats(x, w, b, target_tm=2048):
    """y = x @ w + b (bf16 operands, f32 accumulation) with per-column
    sum / sum-of-squares fused into the epilogue.

    Returns y (M, N) f32, col_sum (1, N) f32, col_sumsq (1, N) f32."""
    M, K = x.shape
    N = w.shape[1]
    tm = _pick_rows(M, target_tm)
    b2 = b.reshape(1, N).astype(jnp.float32)
    y, s1, s2 = pl.pallas_call(
        _matmul_bias_stats_kernel,
        out_shape=(jax.ShapeDtypeStruct((M, N), jnp.float32),
                   jax.ShapeDtypeStruct((1, N), jnp.float32),
                   jax.ShapeDtypeStruct((1, N), jnp.float32)),
        grid=(M // tm,),
        in_specs=[
            pl.BlockSpec((tm, K), lambda i: (i, 0)),
            pl.BlockSpec((K, N), lambda i: (0, 0)),
            pl.BlockSpec((1, N), lambda i: (0, 0)),
        ],
        out_specs=(
            pl.BlockSpec((tm, N), lambda i: (i, 0)),
            pl.BlockSpec((1, N), lambda i: (0, 0)),
            pl.BlockSpec((1, N), lambda i: (0, 0)),
        ),
        # stats outputs are resident accumulators across the M axis
        compiler_params=pltpu.CompilerParams(
            dimension_semantics=("arbitrary",)),
    )(x.astype(jnp.bfloat16), w.astype(jnp.bfloat16), b2)
    return y, s1, s2


# -------------- in-kernel 3x3 reflect conv with fused BN stats --------------

def _conv3x3_stats_kernel(xp_ref, w_ref, b_ref, y_ref, s1_ref, s2_ref, *, H, W):
    bi = pl.program_id(0)

    @pl.when(bi == 0)
    def _():
        s1_ref[...] = jnp.zeros_like(s1_ref)
        s2_ref[...] = jnp.zeros_like(s2_ref)

    x = xp_ref[0].astype(jnp.bfloat16)            # (H+2, W+2, Cin), padded
    cin = x.shape[-1]
    cout = y_ref.shape[-1]
    acc = jnp.zeros((H * W, cout), jnp.float32)
    for k in range(9):                            # static unroll: 9 shifted dots
        dy, dx = k // 3, k % 3
        patch = x[dy:dy + H, dx:dx + W, :].reshape(H * W, cin)
        acc = acc + jnp.dot(patch, w_ref[k], preferred_element_type=jnp.float32)
    acc = acc + b_ref[...]
    y_ref[0] = acc
    s1_ref[...] += jnp.sum(acc, axis=0, keepdims=True)
    s2_ref[...] += jnp.sum(acc * acc, axis=0, keepdims=True)


def conv3x3_reflect_stats(x_nhwc, w_oihw, bias):
    """3x3 conv with reflect padding done fully in-kernel (no HBM im2col),
    fused per-channel BN statistics. Grid over batch; one padded image per
    step (small UTAE decoder feature maps fit easily in VMEM).
    Returns y (B*H*W, Cout) f32, col_sum (1, Cout), col_sumsq (1, Cout)."""
    # TODO(synk): for large feature maps, halo-tile the H axis instead of
    # loading one full padded image per grid step.
    B, H, W, Cin = x_nhwc.shape
    Cout = w_oihw.shape[0]
    xp = jnp.pad(x_nhwc, ((0, 0), (1, 1), (1, 1), (0, 0)),
                 mode="reflect").astype(jnp.bfloat16)
    wk = (jnp.transpose(w_oihw, (2, 3, 1, 0))       # (kh, kw, ci, co)
          .reshape(9, Cin, Cout).astype(jnp.bfloat16))
    b2 = bias.reshape(1, Cout).astype(jnp.float32)
    y, s1, s2 = pl.pallas_call(
        functools.partial(_conv3x3_stats_kernel, H=H, W=W),
        out_shape=(jax.ShapeDtypeStruct((B, H * W, Cout), jnp.float32),
                   jax.ShapeDtypeStruct((1, Cout), jnp.float32),
                   jax.ShapeDtypeStruct((1, Cout), jnp.float32)),
        grid=(B,),
        in_specs=[
            pl.BlockSpec((1, H + 2, W + 2, Cin), lambda b: (b, 0, 0, 0)),
            pl.BlockSpec((9, Cin, Cout), lambda b: (0, 0, 0)),
            pl.BlockSpec((1, Cout), lambda b: (0, 0)),
        ],
        out_specs=(
            pl.BlockSpec((1, H * W, Cout), lambda b: (b, 0, 0)),
            pl.BlockSpec((1, Cout), lambda b: (0, 0)),
            pl.BlockSpec((1, Cout), lambda b: (0, 0)),
        ),
        compiler_params=pltpu.CompilerParams(
            dimension_semantics=("arbitrary",)),
    )(xp, wk, b2)
    return y.reshape(B * H * W, Cout), s1, s2


# ----------------------- lane-dense BN apply passes -------------------------

def _bn_apply_kernel(x_ref, sc_ref, sh_ref, o_ref, *, relu):
    y = x_ref[...] * sc_ref[...] + sh_ref[...]
    if relu:
        y = jnp.maximum(y, 0.0)
    o_ref[...] = y.astype(o_ref.dtype)


def _bn_apply_res_kernel(x_ref, sc_ref, sh_ref, r_ref, o_ref):
    y = x_ref[...] * sc_ref[...] + sh_ref[...] + r_ref[...].astype(jnp.float32)
    o_ref[...] = y.astype(o_ref.dtype)


def bn_scale_shift(col_sum, col_sumsq, count, gamma, beta, eps=_EPS):
    """Per-channel scale/shift from fused conv statistics (training-mode BN)."""
    mean = col_sum.reshape(-1) / count
    var = jnp.maximum(col_sumsq.reshape(-1) / count - mean * mean, 0.0)
    inv = lax.rsqrt(var + eps)
    scale = gamma * inv
    shift = beta - mean * scale
    return scale, shift


def bn_apply(x, scale, shift, *, relu, residual=None, out_dtype=jnp.float32,
             target_tm=2048):
    """y = x * scale + shift (per channel), optional ReLU / residual add.

    Lane-dense: the (M, C) activation is viewed as (M/g, g*C) with g*C a
    multiple of 128 so loads/stores are full-lane (no masked 4-lane stores)."""
    M, C = x.shape
    g = 128 // math.gcd(C, 128)
    if M % g != 0:
        g = 1                                    # still correct, just masked
    Mg, Cg = M // g, C * g
    xg = x.reshape(Mg, Cg)
    scg = jnp.tile(scale.astype(jnp.float32), g).reshape(1, Cg)
    shg = jnp.tile(shift.astype(jnp.float32), g).reshape(1, Cg)
    tm = _pick_rows(Mg, target_tm)

    args = [xg, scg, shg]
    in_specs = [
        pl.BlockSpec((tm, Cg), lambda i: (i, 0)),
        pl.BlockSpec((1, Cg), lambda i: (0, 0)),
        pl.BlockSpec((1, Cg), lambda i: (0, 0)),
    ]
    if residual is None:
        kern = functools.partial(_bn_apply_kernel, relu=relu)
    else:
        kern = _bn_apply_res_kernel               # conv2 path has no ReLU
        args.append(residual.reshape(Mg, Cg))
        in_specs.append(pl.BlockSpec((tm, Cg), lambda i: (i, 0)))

    out = pl.pallas_call(
        kern,
        out_shape=jax.ShapeDtypeStruct((Mg, Cg), out_dtype),
        grid=(Mg // tm,),
        in_specs=in_specs,
        out_specs=pl.BlockSpec((tm, Cg), lambda i: (i, 0)),
        compiler_params=pltpu.CompilerParams(
            dimension_semantics=("parallel",)),
    )(*args)
    return out.reshape(M, C)


# --------------------------- UpConvBlock forward ----------------------------

def upconv_block_forward(params, input_nchw, skip_nchw):
    B, d_in, Hin, Win = input_nchw.shape
    _, d, Hs, Ws = skip_nchw.shape
    d_out = params["up_w"].shape[1]
    assert Hs == 2 * Hin and Ws == 2 * Win

    # single layout change at the boundary: NCHW -> NHWC (channels-last), bf16
    x_nhwc = jnp.transpose(input_nchw, (0, 2, 3, 1)).astype(jnp.bfloat16)
    s_nhwc = jnp.transpose(skip_nchw, (0, 2, 3, 1)).astype(jnp.bfloat16)

    # ---- skip branch: Conv1x1 -> BN -> ReLU ----
    Ms = B * Hs * Ws
    sflat = s_nhwc.reshape(Ms, d)
    sw = params["skip_w"].reshape(d, d).T                      # (ci, co)
    sy, ss1, ss2 = matmul_bias_stats(sflat, sw, params["skip_b"])
    ssc, ssh = bn_scale_shift(ss1, ss2, Ms,
                              params["skip_bn_g"], params["skip_bn_b"])
    skip_act = bn_apply(sy, ssc, ssh, relu=True, out_dtype=jnp.bfloat16)
    skip_out = skip_act.reshape(B, Hs, Ws, d)

    # ---- up branch: ConvTranspose2d(k=2, s=2, p=0) -> BN -> ReLU ----
    Mi = B * Hin * Win
    xflat = x_nhwc.reshape(Mi, d_in)
    uw = params["up_w"].reshape(d_in, d_out * 4)               # cols = (co, ky, kx)
    ub = jnp.repeat(params["up_b"], 4)
    uy, us1, us2 = matmul_bias_stats(xflat, uw, ub)            # (Mi, 4*d_out)
    # per-channel stats over the upsampled map: fold the 4 sub-pixel columns
    us1c = us1.reshape(d_out, 4).sum(axis=-1)
    us2c = us2.reshape(d_out, 4).sum(axis=-1)
    usc, ush = bn_scale_shift(us1c, us2c, 4 * Mi,
                              params["up_bn_g"], params["up_bn_b"])
    up_act = bn_apply(uy, jnp.repeat(usc, 4), jnp.repeat(ush, 4),
                      relu=True, out_dtype=jnp.bfloat16)       # (Mi, 4*d_out)
    # pixel-shuffle to NHWC at the upsampled resolution (pure layout glue)
    up_out = (up_act.reshape(B, Hin, Win, d_out, 2, 2)
              .transpose(0, 1, 4, 2, 5, 3)
              .reshape(B, Hs, Ws, d_out))

    # channel concat in NHWC (== torch.cat(dim=1) in NCHW, up first)
    cat = jnp.concatenate([up_out, skip_out], axis=-1)         # (B,Hs,Ws,d_out+d)

    # ---- conv1: Conv3x3(reflect) -> BN -> ReLU ----
    Mo = B * Hs * Ws
    c1y, c1s1, c1s2 = conv3x3_reflect_stats(cat, params["c1_w"], params["c1_b"])
    c1sc, c1sh = bn_scale_shift(c1s1, c1s2, Mo,
                                params["c1_bn_g"], params["c1_bn_b"])
    out1 = bn_apply(c1y, c1sc, c1sh, relu=True,
                    out_dtype=jnp.float32)                     # (Mo, d_out) f32

    # ---- conv2: Conv3x3(reflect) -> BN (no ReLU), fused residual add ----
    c2y, c2s1, c2s2 = conv3x3_reflect_stats(out1.reshape(B, Hs, Ws, d_out),
                                            params["c2_w"], params["c2_b"])
    c2sc, c2sh = bn_scale_shift(c2s1, c2s2, Mo,
                                params["c2_bn_g"], params["c2_bn_b"])
    outf = bn_apply(c2y, c2sc, c2sh, relu=False, residual=out1,
                    out_dtype=jnp.float32)                     # (Mo, d_out)

    return jnp.transpose(outf.reshape(B, Hs, Ws, d_out), (0, 3, 1, 2))


def init_params(key, d_in, d_out, d):
    ks = jax.random.split(key, 16)
    n = lambda k, shape, s=0.1: s * jax.random.normal(k, shape, jnp.float32)
    return {
        "skip_w": n(ks[0], (d, d, 1, 1)),
        "skip_b": n(ks[1], (d,)),
        "skip_bn_g": 1.0 + n(ks[2], (d,)),
        "skip_bn_b": n(ks[3], (d,)),
        "up_w": n(ks[4], (d_in, d_out, 2, 2)),
        "up_b": n(ks[5], (d_out,)),
        "up_bn_g": 1.0 + n(ks[6], (d_out,)),
        "up_bn_b": n(ks[7], (d_out,)),
        "c1_w": n(ks[8], (d_out, d_out + d, 3, 3)),
        "c1_b": n(ks[9], (d_out,)),
        "c1_bn_g": 1.0 + n(ks[10], (d_out,)),
        "c1_bn_b": n(ks[11], (d_out,)),
        "c2_w": n(ks[12], (d_out, d_out, 3, 3)),
        "c2_b": n(ks[13], (d_out,)),
        "c2_bn_g": 1.0 + n(ks[14], (d_out,)),
        "c2_bn_b": n(ks[15], (d_out,)),
    }


if __name__ == "__main__":
    # UpConvBlock(d_in=8, d_out=4, k=2, s=2, p=0, d_skip=None -> d=4, cond_dim=None)
    B, d_in, d_out = 2, 8, 4
    d = d_out
    Hin = Win = 8          # low-res input -> upsampled x2
    Hs = Ws = 16           # skip spatial size

    key = jax.random.PRNGKey(0)
    k_in, k_skip, k_par = jax.random.split(key, 3)
    x = jax.random.normal(k_in, (B, d_in, Hin, Win), jnp.float32)
    skip = jax.random.normal(k_skip, (B, d, Hs, Ws), jnp.float32)
    params = init_params(k_par, d_in, d_out, d)

    fwd = jax.jit(upconv_block_forward)
    out = fwd(params, x, skip)
    jax.block_until_ready(out)
    assert out.shape == (B, d_out, Hs, Ws), out.shape
    print("KERNEL_OK")
</pallas_src>

<mosaic_0001>
module attributes {stable_mosaic.version = 11 : i64} {
  func.func @_matmul_bias_stats_kernel(%arg0: i32, %arg1: memref<512x4xbf16, #tpu.memory_space<vmem>>, %arg2: memref<4x4xbf16, #tpu.memory_space<vmem>>, %arg3: memref<1x4xf32, #tpu.memory_space<vmem>>, %arg4: memref<512x4xf32, #tpu.memory_space<vmem>>, %arg5: memref<1x4xf32, #tpu.memory_space<vmem>>, %arg6: memref<1x4xf32, #tpu.memory_space<vmem>>) attributes {dimension_semantics = [#tpu.dimension_semantics<arbitrary>], iteration_bounds = array<i64: 1>, scalar_prefetch = 0 : i64, scratch_operands = 0 : i64, tpu.core_type = #tpu.core_type<tc>, window_params = [{transform_indices = @transform_0, window_bounds = array<i64: 512, 4>}, {pipeline_mode = #tpu.pipeline_mode<synchronous>, transform_indices = @transform_1, window_bounds = array<i64: 4, 4>}, {pipeline_mode = #tpu.pipeline_mode<synchronous>, transform_indices = @transform_2, window_bounds = array<i64: 1, 4>}, {transform_indices = @transform_3, window_bounds = array<i64: 512, 4>}, {pipeline_mode = #tpu.pipeline_mode<synchronous>, transform_indices = @transform_4, window_bounds = array<i64: 1, 4>}, {pipeline_mode = #tpu.pipeline_mode<synchronous>, transform_indices = @transform_5, window_bounds = array<i64: 1, 4>}]} {
    %c0_i32 = arith.constant 0 : i32
    %0 = arith.cmpi eq, %arg0, %c0_i32 : i32
    %1 = arith.extui %0 : i1 to i32
    %c0_i32_0 = arith.constant 0 : i32
    %2 = arith.cmpi ne, %1, %c0_i32_0 : i32
    scf.if %2 {
      %cst_18 = arith.constant 0.000000e+00 : f32
      %21 = vector.broadcast %cst_18 : f32 to vector<1x4xf32>
      %c0_19 = arith.constant 0 : index
      %c0_20 = arith.constant 0 : index
      %22 = vector.load %arg5[%c0_19, %c0_20] : memref<1x4xf32, #tpu.memory_space<vmem>>, vector<1x4xf32>
      tpu.vector_store %arg5[%c0_19, %c0_20], %21 {strides = array<i32>} : memref<1x4xf32, #tpu.memory_space<vmem>>, vector<1x4xf32>,
      %cst_21 = arith.constant 0.000000e+00 : f32
      %23 = vector.broadcast %cst_21 : f32 to vector<1x4xf32>
      %c0_22 = arith.constant 0 : index
      %c0_23 = arith.constant 0 : index
      %24 = vector.load %arg6[%c0_22, %c0_23] : memref<1x4xf32, #tpu.memory_space<vmem>>, vector<1x4xf32>
      tpu.vector_store %arg6[%c0_22, %c0_23], %23 {strides = array<i32>} : memref<1x4xf32, #tpu.memory_space<vmem>>, vector<1x4xf32>,
    } else {
    }
    %c0 = arith.constant 0 : index
    %c0_1 = arith.constant 0 : index
    %3 = vector.load %arg1[%c0, %c0_1] : memref<512x4xbf16, #tpu.memory_space<vmem>>, vector<512x4xbf16>
    %c0_2 = arith.constant 0 : index
    %c0_3 = arith.constant 0 : index
    %4 = vector.load %arg2[%c0_2, %c0_3] : memref<4x4xbf16, #tpu.memory_space<vmem>>, vector<4x4xbf16>
    %cst = arith.constant dense<0.000000e+00> : vector<512x4xf32>
    %5 = tpu.matmul %3, %4, %cst {dimension_numbers = #tpu.dot_dimension_numbers<[1], [0], [0], [1], [0, 0, 1, 1], [], []>} : vector<512x4xbf16>, vector<4x4xbf16>, vector<512x4xf32> -> vector<512x4xf32>
    %c0_4 = arith.constant 0 : index
    %c0_5 = arith.constant 0 : index
    %6 = vector.load %arg3[%c0_4, %c0_5] : memref<1x4xf32, #tpu.memory_space<vmem>>, vector<1x4xf32>
    %7 = vector.broadcast %6 : vector<1x4xf32> to vector<512x4xf32>
    %8 = arith.addf %5, %7 : vector<512x4xf32>
    %c0_6 = arith.constant 0 : index
    %c0_7 = arith.constant 0 : index
    %9 = vector.load %arg4[%c0_6, %c0_7] : memref<512x4xf32, #tpu.memory_space<vmem>>, vector<512x4xf32>
    tpu.vector_store %arg4[%c0_6, %c0_7], %8 {strides = array<i32>} : memref<512x4xf32, #tpu.memory_space<vmem>>, vector<512x4xf32>,
    %c0_8 = arith.constant 0 : index
    %c0_9 = arith.constant 0 : index
    %10 = vector.load %arg5[%c0_8, %c0_9] : memref<1x4xf32, #tpu.memory_space<vmem>>, vector<1x4xf32>
    %cst_10 = arith.constant dense<0.000000e+00> : vector<4xf32>
    %11 = vector.multi_reduction <add>, %8, %cst_10 [0] : vector<512x4xf32> to vector<4xf32>
    %12 = vector.shape_cast %11 : vector<4xf32> to vector<1x4xf32>
    %13 = arith.addf %10, %12 : vector<1x4xf32>
    %c0_11 = arith.constant 0 : index
    %c0_12 = arith.constant 0 : index
    %14 = vector.load %arg5[%c0_11, %c0_12] : memref<1x4xf32, #tpu.memory_space<vmem>>, vector<1x4xf32>
    tpu.vector_store %arg5[%c0_11, %c0_12], %13 {strides = array<i32>} : memref<1x4xf32, #tpu.memory_space<vmem>>, vector<1x4xf32>,
    %c0_13 = arith.constant 0 : index
    %c0_14 = arith.constant 0 : index
    %15 = vector.load %arg6[%c0_13, %c0_14] : memref<1x4xf32, #tpu.memory_space<vmem>>, vector<1x4xf32>
    %16 = arith.mulf %8, %8 : vector<512x4xf32>
    %cst_15 = arith.constant dense<0.000000e+00> : vector<4xf32>
    %17 = vector.multi_reduction <add>, %16, %cst_15 [0] : vector<512x4xf32> to vector<4xf32>
    %18 = vector.shape_cast %17 : vector<4xf32> to vector<1x4xf32>
    %19 = arith.addf %15, %18 : vector<1x4xf32>
    %c0_16 = arith.constant 0 : index
    %c0_17 = arith.constant 0 : index
    %20 = vector.load %arg6[%c0_16, %c0_17] : memref<1x4xf32, #tpu.memory_space<vmem>>, vector<1x4xf32>
    tpu.vector_store %arg6[%c0_16, %c0_17], %19 {strides = array<i32>} : memref<1x4xf32, #tpu.memory_space<vmem>>, vector<1x4xf32>,
    return
  }
  func.func @transform_0(%arg0: i32) -> (i32, i32) {
    %c0_i32 = arith.constant 0 : i32
    %c0_i32_0 = arith.constant 0 : i32
    return %arg0, %c0_i32 : i32, i32
  }
  func.func @transform_1(%arg0: i32) -> (i32, i32) {
    %c0_i32 = arith.constant 0 : i32
    %c0_i32_0 = arith.constant 0 : i32
    %c0_i32_1 = arith.constant 0 : i32
    return %c0_i32, %c0_i32_0 : i32, i32
  }
  func.func @transform_2(%arg0: i32) -> (i32, i32) {
    %c0_i32 = arith.constant 0 : i32
    %c0_i32_0 = arith.constant 0 : i32
    %c0_i32_1 = arith.constant 0 : i32
    return %c0_i32, %c0_i32_0 : i32, i32
  }
  func.func @transform_3(%arg0: i32) -> (i32, i32) {
    %c0_i32 = arith.constant 0 : i32
    %c0_i32_0 = arith.constant 0 : i32
    return %arg0, %c0_i32 : i32, i32
  }
  func.func @transform_4(%arg0: i32) -> (i32, i32) {
    %c0_i32 = arith.constant 0 : i32
    %c0_i32_0 = arith.constant 0 : i32
    %c0_i32_1 = arith.constant 0 : i32
    return %c0_i32, %c0_i32_0 : i32, i32
  }
  func.func @transform_5(%arg0: i32) -> (i32, i32) {
    %c0_i32 = arith.constant 0 : i32
    %c0_i32_0 = arith.constant 0 : i32
    %c0_i32_1 = arith.constant 0 : i32
    return %c0_i32, %c0_i32_0 : i32, i32
  }
}

module attributes {stable_mosaic.version = 11 : i64} {
  func.func @_bn_apply_kernel(%arg0: i32, %arg1: memref<16x128xf32, #tpu.memory_space<vmem>>, %arg2: memref<1x128xf32, #tpu.memory_space<vmem>>, %arg3: memref<1x128xf32, #tpu.memory_space<vmem>>, %arg4: memref<16x128xbf16, #tpu.memory_space<vmem>>) attributes {dimension_semantics = [#tpu.dimension_semantics<parallel>], iteration_bounds = array<i64: 1>, scalar_prefetch = 0 : i64, scratch_operands = 0 : i64, tpu.core_type = #tpu.core_type<tc>, window_params = [{transform_indices = @transform_0, window_bounds = array<i64: 16, 128>}, {pipeline_mode = #tpu.pipeline_mode<synchronous>, transform_indices = @transform_1, window_bounds = array<i64: 1, 128>}, {pipeline_mode = #tpu.pipeline_mode<synchronous>, transform_indices = @transform_2, window_bounds = array<i64: 1, 128>}, {transform_indices = @transform_3, window_bounds = array<i64: 16, 128>}]} {
    %c0 = arith.constant 0 : index
    %c0_0 = arith.constant 0 : index
    %0 = vector.load %arg1[%c0, %c0_0] : memref<16x128xf32, #tpu.memory_space<vmem>>, vector<16x128xf32>
    %c0_1 = arith.constant 0 : index
    %c0_2 = arith.constant 0 : index
    %1 = vector.load %arg2[%c0_1, %c0_2] : memref<1x128xf32, #tpu.memory_space<vmem>>, vector<1x128xf32>
    %2 = vector.broadcast %1 : vector<1x128xf32> to vector<16x128xf32>
    %3 = arith.mulf %0, %2 : vector<16x128xf32>
    %c0_3 = arith.constant 0 : index
    %c0_4 = arith.constant 0 : index
    %4 = vector.load %arg3[%c0_3, %c0_4] : memref<1x128xf32, #tpu.memory_space<vmem>>, vector<1x128xf32>
    %5 = vector.broadcast %4 : vector<1x128xf32> to vector<16x128xf32>
    %6 = arith.addf %3, %5 : vector<16x128xf32>
    %cst = arith.constant 0.000000e+00 : f32
    %7 = vector.broadcast %cst : f32 to vector<16x128xf32>
    %8 = arith.maximumf %6, %7 : vector<16x128xf32>
    %9 = arith.truncf %8 : vector<16x128xf32> to vector<16x128xbf16>
    %c0_5 = arith.constant 0 : index
    %c0_6 = arith.constant 0 : index
    %10 = vector.load %arg4[%c0_5, %c0_6] : memref<16x128xbf16, #tpu.memory_space<vmem>>, vector<16x128xbf16>
    tpu.vector_store %arg4[%c0_5, %c0_6], %9 {strides = array<i32>} : memref<16x128xbf16, #tpu.memory_space<vmem>>, vector<16x128xbf16>,
    return
  }
  func.func @transform_0(%arg0: i32) -> (i32, i32) {
    %c0_i32 = arith.constant 0 : i32
    %c0_i32_0 = arith.constant 0 : i32
    return %arg0, %c0_i32 : i32, i32
  }
  func.func @transform_1(%arg0: i32) -> (i32, i32) {
    %c0_i32 = arith.constant 0 : i32
    %c0_i32_0 = arith.constant 0 : i32
    %c0_i32_1 = arith.constant 0 : i32
    return %c0_i32, %c0_i32_0 : i32, i32
  }
  func.func @transform_2(%arg0: i32) -> (i32, i32) {
    %c0_i32 = arith.constant 0 : i32
    %c0_i32_0 = arith.constant 0 : i32
    %c0_i32_1 = arith.constant 0 : i32
    return %c0_i32, %c0_i32_0 : i32, i32
  }
  func.func @transform_3(%arg0: i32) -> (i32, i32) {
    %c0_i32 = arith.constant 0 : i32
    %c0_i32_0 = arith.constant 0 : i32
    return %arg0, %c0_i32 : i32, i32
  }
}

module attributes {stable_mosaic.version = 11 : i64} {
  func.func @_matmul_bias_stats_kernel(%arg0: i32, %arg1: memref<128x8xbf16, #tpu.memory_space<vmem>>, %arg2: memref<8x16xbf16, #tpu.memory_space<vmem>>, %arg3: memref<1x16xf32, #tpu.memory_space<vmem>>, %arg4: memref<128x16xf32, #tpu.memory_space<vmem>>, %arg5: memref<1x16xf32, #tpu.memory_space<vmem>>, %arg6: memref<1x16xf32, #tpu.memory_space<vmem>>) attributes {dimension_semantics = [#tpu.dimension_semantics<arbitrary>], iteration_bounds = array<i64: 1>, scalar_prefetch = 0 : i64, scratch_operands = 0 : i64, tpu.core_type = #tpu.core_type<tc>, window_params = [{transform_indices = @transform_0, window_bounds = array<i64: 128, 8>}, {pipeline_mode = #tpu.pipeline_mode<synchronous>, transform_indices = @transform_1, window_bounds = array<i64: 8, 16>}, {pipeline_mode = #tpu.pipeline_mode<synchronous>, transform_indices = @transform_2, window_bounds = array<i64: 1, 16>}, {transform_indices = @transform_3, window_bounds = array<i64: 128, 16>}, {pipeline_mode = #tpu.pipeline_mode<synchronous>, transform_indices = @transform_4, window_bounds = array<i64: 1, 16>}, {pipeline_mode = #tpu.pipeline_mode<synchronous>, transform_indices = @transform_5, window_bounds = array<i64: 1, 16>}]} {
    %c0_i32 = arith.constant 0 : i32
    %0 = arith.cmpi eq, %arg0, %c0_i32 : i32
    %1 = arith.extui %0 : i1 to i32
    %c0_i32_0 = arith.constant 0 : i32
    %2 = arith.cmpi ne, %1, %c0_i32_0 : i32
    scf.if %2 {
      %cst_18 = arith.constant 0.000000e+00 : f32
      %21 = vector.broadcast %cst_18 : f32 to vector<1x16xf32>
      %c0_19 = arith.constant 0 : index
      %c0_20 = arith.constant 0 : index
      %22 = vector.load %arg5[%c0_19, %c0_20] : memref<1x16xf32, #tpu.memory_space<vmem>>, vector<1x16xf32>
      tpu.vector_store %arg5[%c0_19, %c0_20], %21 {strides = array<i32>} : memref<1x16xf32, #tpu.memory_space<vmem>>, vector<1x16xf32>,
      %cst_21 = arith.constant 0.000000e+00 : f32
      %23 = vector.broadcast %cst_21 : f32 to vector<1x16xf32>
      %c0_22 = arith.constant 0 : index
      %c0_23 = arith.constant 0 : index
      %24 = vector.load %arg6[%c0_22, %c0_23] : memref<1x16xf32, #tpu.memory_space<vmem>>, vector<1x16xf32>
      tpu.vector_store %arg6[%c0_22, %c0_23], %23 {strides = array<i32>} : memref<1x16xf32, #tpu.memory_space<vmem>>, vector<1x16xf32>,
    } else {
    }
    %c0 = arith.constant 0 : index
    %c0_1 = arith.constant 0 : index
    %3 = vector.load %arg1[%c0, %c0_1] : memref<128x8xbf16, #tpu.memory_space<vmem>>, vector<128x8xbf16>
    %c0_2 = arith.constant 0 : index
    %c0_3 = arith.constant 0 : index
    %4 = vector.load %arg2[%c0_2, %c0_3] : memref<8x16xbf16, #tpu.memory_space<vmem>>, vector<8x16xbf16>
    %cst = arith.constant dense<0.000000e+00> : vector<128x16xf32>
    %5 = tpu.matmul %3, %4, %cst {dimension_numbers = #tpu.dot_dimension_numbers<[1], [0], [0], [1], [0, 0, 1, 1], [], []>} : vector<128x8xbf16>, vector<8x16xbf16>, vector<128x16xf32> -> vector<128x16xf32>
    %c0_4 = arith.constant 0 : index
    %c0_5 = arith.constant 0 : index
    %6 = vector.load %arg3[%c0_4, %c0_5] : memref<1x16xf32, #tpu.memory_space<vmem>>, vector<1x16xf32>
    %7 = vector.broadcast %6 : vector<1x16xf32> to vector<128x16xf32>
    %8 = arith.addf %5, %7 : vector<128x16xf32>
    %c0_6 = arith.constant 0 : index
    %c0_7 = arith.constant 0 : index
    %9 = vector.load %arg4[%c0_6, %c0_7] : memref<128x16xf32, #tpu.memory_space<vmem>>, vector<128x16xf32>
    tpu.vector_store %arg4[%c0_6, %c0_7], %8 {strides = array<i32>} : memref<128x16xf32, #tpu.memory_space<vmem>>, vector<128x16xf32>,
    %c0_8 = arith.constant 0 : index
    %c0_9 = arith.constant 0 : index
    %10 = vector.load %arg5[%c0_8, %c0_9] : memref<1x16xf32, #tpu.memory_space<vmem>>, vector<1x16xf32>
    %cst_10 = arith.constant dense<0.000000e+00> : vector<16xf32>
    %11 = vector.multi_reduction <add>, %8, %cst_10 [0] : vector<128x16xf32> to vector<16xf32>
    %12 = vector.shape_cast %11 : vector<16xf32> to vector<1x16xf32>
    %13 = arith.addf %10, %12 : vector<1x16xf32>
    %c0_11 = arith.constant 0 : index
    %c0_12 = arith.constant 0 : index
    %14 = vector.load %arg5[%c0_11, %c0_12] : memref<1x16xf32, #tpu.memory_space<vmem>>, vector<1x16xf32>
    tpu.vector_store %arg5[%c0_11, %c0_12], %13 {strides = array<i32>} : memref<1x16xf32, #tpu.memory_space<vmem>>, vector<1x16xf32>,
    %c0_13 = arith.constant 0 : index
    %c0_14 = arith.constant 0 : index
    %15 = vector.load %arg6[%c0_13, %c0_14] : memref<1x16xf32, #tpu.memory_space<vmem>>, vector<1x16xf32>
    %16 = arith.mulf %8, %8 : vector<128x16xf32>
    %cst_15 = arith.constant dense<0.000000e+00> : vector<16xf32>
    %17 = vector.multi_reduction <add>, %16, %cst_15 [0] : vector<128x16xf32> to vector<16xf32>
    %18 = vector.shape_cast %17 : vector<16xf32> to vector<1x16xf32>
    %19 = arith.addf %15, %18 : vector<1x16xf32>
    %c0_16 = arith.constant 0 : index
    %c0_17 = arith.constant 0 : index
    %20 = vector.load %arg6[%c0_16, %c0_17] : memref<1x16xf32, #tpu.memory_space<vmem>>, vector<1x16xf32>
    tpu.vector_store %arg6[%c0_16, %c0_17], %19 {strides = array<i32>} : memref<1x16xf32, #tpu.memory_space<vmem>>, vector<1x16xf32>,
    return
  }
  func.func @transform_0(%arg0: i32) -> (i32, i32) {
    %c0_i32 = arith.constant 0 : i32
    %c0_i32_0 = arith.constant 0 : i32
    return %arg0, %c0_i32 : i32, i32
  }
  func.func @transform_1(%arg0: i32) -> (i32, i32) {
    %c0_i32 = arith.constant 0 : i32
    %c0_i32_0 = arith.constant 0 : i32
    %c0_i32_1 = arith.constant 0 : i32
    return %c0_i32, %c0_i32_0 : i32, i32
  }
  func.func @transform_2(%arg0: i32) -> (i32, i32) {
    %c0_i32 = arith.constant 0 : i32
    %c0_i32_0 = arith.constant 0 : i32
    %c0_i32_1 = arith.constant 0 : i32
    return %c0_i32, %c0_i32_0 : i32, i32
  }
  func.func @transform_3(%arg0: i32) -> (i32, i32) {
    %c0_i32 = arith.constant 0 : i32
    %c0_i32_0 = arith.constant 0 : i32
    return %arg0, %c0_i32 : i32, i32
  }
  func.func @transform_4(%arg0: i32) -> (i32, i32) {
    %c0_i32 = arith.constant 0 : i32
    %c0_i32_0 = arith.constant 0 : i32
    %c0_i32_1 = arith.constant 0 : i32
    return %c0_i32, %c0_i32_0 : i32, i32
  }
  func.func @transform_5(%arg0: i32) -> (i32, i32) {
    %c0_i32 = arith.constant 0 : i32
    %c0_i32_0 = arith.constant 0 : i32
    %c0_i32_1 = arith.constant 0 : i32
    return %c0_i32, %c0_i32_0 : i32, i32
  }
}

module attributes {stable_mosaic.version = 11 : i64} {
  func.func @_conv3x3_stats_kernel(%arg0: i32, %arg1: memref<1x18x18x8xbf16, #tpu.memory_space<vmem>>, %arg2: memref<9x8x4xbf16, #tpu.memory_space<vmem>>, %arg3: memref<1x4xf32, #tpu.memory_space<vmem>>, %arg4: memref<1x256x4xf32, #tpu.memory_space<vmem>>, %arg5: memref<1x4xf32, #tpu.memory_space<vmem>>, %arg6: memref<1x4xf32, #tpu.memory_space<vmem>>) attributes {dimension_semantics = [#tpu.dimension_semantics<arbitrary>], iteration_bounds = array<i64: 2>, scalar_prefetch = 0 : i64, scratch_operands = 0 : i64, tpu.core_type = #tpu.core_type<tc>, window_params = [{transform_indices = @transform_0, window_bounds = array<i64: 1, 18, 18, 8>}, {pipeline_mode = #tpu.pipeline_mode<synchronous>, transform_indices = @transform_1, window_bounds = array<i64: 9, 8, 4>}, {pipeline_mode = #tpu.pipeline_mode<synchronous>, transform_indices = @transform_2, window_bounds = array<i64: 1, 4>}, {transform_indices = @transform_3, window_bounds = array<i64: 1, 256, 4>}, {pipeline_mode = #tpu.pipeline_mode<synchronous>, transform_indices = @transform_4, window_bounds = array<i64: 1, 4>}, {pipeline_mode = #tpu.pipeline_mode<synchronous>, transform_indices = @transform_5, window_bounds = array<i64: 1, 4>}]} {
    %c0_i32 = arith.constant 0 : i32
    %0 = arith.cmpi eq, %arg0, %c0_i32 : i32
    %1 = arith.extui %0 : i1 to i32
    %c0_i32_0 = arith.constant 0 : i32
    %2 = arith.cmpi ne, %1, %c0_i32_0 : i32
    scf.if %2 {
      %cst_47 = arith.constant 0.000000e+00 : f32
      %77 = vector.broadcast %cst_47 : f32 to vector<1x4xf32>
      %c0_48 = arith.constant 0 : index
      %c0_49 = arith.constant 0 : index
      %78 = vector.load %arg5[%c0_48, %c0_49] : memref<1x4xf32, #tpu.memory_space<vmem>>, vector<1x4xf32>
      tpu.vector_store %arg5[%c0_48, %c0_49], %77 {strides = array<i32>} : memref<1x4xf32, #tpu.memory_space<vmem>>, vector<1x4xf32>,
      %cst_50 = arith.constant 0.000000e+00 : f32
      %79 = vector.broadcast %cst_50 : f32 to vector<1x4xf32>
      %c0_51 = arith.constant 0 : index
      %c0_52 = arith.constant 0 : index
      %80 = vector.load %arg6[%c0_51, %c0_52] : memref<1x4xf32, #tpu.memory_space<vmem>>, vector<1x4xf32>
      tpu.vector_store %arg6[%c0_51, %c0_52], %79 {strides = array<i32>} : memref<1x4xf32, #tpu.memory_space<vmem>>, vector<1x4xf32>,
    } else {
    }
    %c0 = arith.constant 0 : index
    %c0_1 = arith.constant 0 : index
    %c0_2 = arith.constant 0 : index
    %c0_3 = arith.constant 0 : index
    %3 = vector.load %arg1[%c0, %c0_1, %c0_2, %c0_3] : memref<1x18x18x8xbf16, #tpu.memory_space<vmem>>, vector<1x18x18x8xbf16>
    %4 = vector.shape_cast %3 : vector<1x18x18x8xbf16> to vector<18x18x8xbf16>
    %cst = arith.constant 0.000000e+00 : f32
    %5 = vector.broadcast %cst : f32 to vector<256x4xf32>
    %6 = vector.extract_strided_slice %4 {offsets = [0, 0, 0], sizes = [16, 16, 8], strides = [1, 1, 1]} : vector<18x18x8xbf16> to vector<16x16x8xbf16>
    %7 = vector.shape_cast %6 : vector<16x16x8xbf16> to vector<256x8xbf16>
    %c0_4 = arith.constant 0 : index
    %c0_5 = arith.constant 0 : index
    %c0_6 = arith.constant 0 : index
    %8 = vector.load %arg2[%c0_4, %c0_5, %c0_6] : memref<9x8x4xbf16, #tpu.memory_space<vmem>>, vector<1x8x4xbf16>
    %9 = vector.shape_cast %8 : vector<1x8x4xbf16> to vector<8x4xbf16>
    %cst_7 = arith.constant dense<0.000000e+00> : vector<256x4xf32>
    %10 = tpu.matmul %7, %9, %cst_7 {dimension_numbers = #tpu.dot_dimension_numbers<[1], [0], [0], [1], [0, 0, 1, 1], [], []>} : vector<256x8xbf16>, vector<8x4xbf16>, vector<256x4xf32> -> vector<256x4xf32>
    %11 = arith.addf %5, %10 : vector<256x4xf32>
    %12 = vector.extract_strided_slice %4 {offsets = [0, 1, 0], sizes = [16, 16, 8], strides = [1, 1, 1]} : vector<18x18x8xbf16> to vector<16x16x8xbf16>
    %13 = vector.shape_cast %12 : vector<16x16x8xbf16> to vector<256x8xbf16>
    %c1 = arith.constant 1 : index
    %c0_8 = arith.constant 0 : index
    %c0_9 = arith.constant 0 : index
    %14 = vector.load %arg2[%c1, %c0_8, %c0_9] : memref<9x8x4xbf16, #tpu.memory_space<vmem>>, vector<1x8x4xbf16>
    %15 = vector.shape_cast %14 : vector<1x8x4xbf16> to vector<8x4xbf16>
    %cst_10 = arith.constant dense<0.000000e+00> : vector<256x4xf32>
    %16 = tpu.matmul %13, %15, %cst_10 {dimension_numbers = #tpu.dot_dimension_numbers<[1], [0], [0], [1], [0, 0, 1, 1], [], []>} : vector<256x8xbf16>, vector<8x4xbf16>, vector<256x4xf32> -> vector<256x4xf32>
    %17 = arith.addf %11, %16 : vector<256x4xf32>
    %18 = vector.extract_strided_slice %4 {offsets = [0, 2, 0], sizes = [16, 16, 8], strides = [1, 1, 1]} : vector<18x18x8xbf16> to vector<16x16x8xbf16>
    %19 = vector.shape_cast %18 : vector<16x16x8xbf16> to vector<256x8xbf16>
    %c2 = arith.constant 2 : index
    %c0_11 = arith.constant 0 : index
    %c0_12 = arith.constant 0 : index
    %20 = vector.load %arg2[%c2, %c0_11, %c0_12] : memref<9x8x4xbf16, #tpu.memory_space<vmem>>, vector<1x8x4xbf16>
    %21 = vector.shape_cast %20 : vector<1x8x4xbf16> to vector<8x4xbf16>
    %cst_13 = arith.constant dense<0.000000e+00> : vector<256x4xf32>
    %22 = tpu.matmul %19, %21, %cst_13 {dimension_numbers = #tpu.dot_dimension_numbers<[1], [0], [0], [1], [0, 0, 1, 1], [], []>} : vector<256x8xbf16>, vector<8x4xbf16>, vector<256x4xf32> -> vector<256x4xf32>
    %23 = arith.addf %17, %22 : vector<256x4xf32>
    %24 = vector.extract_strided_slice %4 {offsets = [1, 0, 0], sizes = [16, 16, 8], strides = [1, 1, 1]} : vector<18x18x8xbf16> to vector<16x16x8xbf16>
    %25 = vector.shape_cast %24 : vector<16x16x8xbf16> to vector<256x8xbf16>
    %c3 = arith.constant 3 : index
    %c0_14 = arith.constant 0 : index
    %c0_15 = arith.constant 0 : index
    %26 = vector.load %arg2[%c3, %c0_14, %c0_15] : memref<9x8x4xbf16, #tpu.memory_space<vmem>>, vector<1x8x4xbf16>
    %27 = vector.shape_cast %26 : vector<1x8x4xbf16> to vector<8x4xbf16>
    %cst_16 = arith.constant dense<0.000000e+00> : vector<256x4xf32>
    %28 = tpu.matmul %25, %27, %cst_16 {dimension_numbers = #tpu.dot_dimension_numbers<[1], [0], [0], [1], [0, 0, 1, 1], [], []>} : vector<256x8xbf16>, vector<8x4xbf16>, vector<256x4xf32> -> vector<256x4xf32>
    %29 = arith.addf %23, %28 : vector<256x4xf32>
    %30 = vector.extract_strided_slice %4 {offsets = [1, 1, 0], sizes = [16, 16, 8], strides = [1, 1, 1]} : vector<18x18x8xbf16> to vector<16x16x8xbf16>
    %31 = vector.shape_cast %30 : vector<16x16x8xbf16> to vector<256x8xbf16>
    %c4 = arith.constant 4 : index
    %c0_17 = arith.constant 0 : index
    %c0_18 = arith.constant 0 : index
    %32 = vector.load %arg2[%c4, %c0_17, %c0_18] : memref<9x8x4xbf16, #tpu.memory_space<vmem>>, vector<1x8x4xbf16>
    %33 = vector.shape_cast %32 : vector<1x8x4xbf16> to vector<8x4xbf16>
    %cst_19 = arith.constant dense<0.000000e+00> : vector<256x4xf32>
    %34 = tpu.matmul %31, %33, %cst_19 {dimension_numbers = #tpu.dot_dimension_numbers<[1], [0], [0], [1], [0, 0, 1, 1], [], []>} : vector<256x8xbf16>, vector<8x4xbf16>, vector<256x4xf32> -> vector<256x4xf32>
    %35 = arith.addf %29, %34 : vector<256x4xf32>
    %36 = vector.extract_strided_slice %4 {offsets = [1, 2, 0], sizes = [16, 16, 8], strides = [1, 1, 1]} : vector<18x18x8xbf16> to vector<16x16x8xbf16>
    %37 = vector.shape_cast %36 : vector<16x16x8xbf16> to vector<256x8xbf16>
    %c5 = arith.constant 5 : index
    %c0_20 = arith.constant 0 : index
    %c0_21 = arith.constant 0 : index
    %38 = vector.load %arg2[%c5, %c0_20, %c0_21] : memref<9x8x4xbf16, #tpu.memory_space<vmem>>, vector<1x8x4xbf16>
    %39 = vector.shape_cast %38 : vector<1x8x4xbf16> to vector<8x4xbf16>
    %cst_22 = arith.constant dense<0.000000e+00> : vector<256x4xf32>
    %40 = tpu.matmul %37, %39, %cst_22 {dimension_numbers = #tpu.dot_dimension_numbers<[1], [0], [0], [1], [0, 0, 1, 1], [], []>} : vector<256x8xbf16>, vector<8x4xbf16>, vector<256x4xf32> -> vector<256x4xf32>
    %41 = arith.addf %35, %40 : vector<256x4xf32>
    %42 = vector.extract_strided_slice %4 {offsets = [2, 0, 0], sizes = [16, 16, 8], strides = [1, 1, 1]} : vector<18x18x8xbf16> to vector<16x16x8xbf16>
    %43 = vector.shape_cast %42 : vector<16x16x8xbf16> to vector<256x8xbf16>
    %c6 = arith.constant 6 : index
    %c0_23 = arith.constant 0 : index
    %c0_24 = arith.constant 0 : index
    %44 = vector.load %arg2[%c6, %c0_23, %c0_24] : memref<9x8x4xbf16, #tpu.memory_space<vmem>>, vector<1x8x4xbf16>
    %45 = vector.shape_cast %44 : vector<1x8x4xbf16> to vector<8x4xbf16>
    %cst_25 = arith.constant dense<0.000000e+00> : vector<256x4xf32>
    %46 = tpu.matmul %43, %45, %cst_25 {dimension_numbers = #tpu.dot_dimension_numbers<[1], [0], [0], [1], [0, 0, 1, 1], [], []>} : vector<256x8xbf16>, vector<8x4xbf16>, vector<256x4xf32> -> vector<256x4xf32>
    %47 = arith.addf %41, %46 : vector<256x4xf32>
    %48 = vector.extract_strided_slice %4 {offsets = [2, 1, 0], sizes = [16, 16, 8], strides = [1, 1, 1]} : vector<18x18x8xbf16> to vector<16x16x8xbf16>
    %49 = vector.shape_cast %48 : vector<16x16x8xbf16> to vector<256x8xbf16>
    %c7 = arith.constant 7 : index
    %c0_26 = arith.constant 0 : index
    %c0_27 = arith.constant 0 : index
    %50 = vector.load %arg2[%c7, %c0_26, %c0_27] : memref<9x8x4xbf16, #tpu.memory_space<vmem>>, vector<1x8x4xbf16>
    %51 = vector.shape_cast %50 : vector<1x8x4xbf16> to vector<8x4xbf16>
    %cst_28 = arith.constant dense<0.000000e+00> : vector<256x4xf32>
    %52 = tpu.matmul %49, %51, %cst_28 {dimension_numbers = #tpu.dot_dimension_numbers<[1], [0], [0], [1], [0, 0, 1, 1], [], []>} : vector<256x8xbf16>, vector<8x4xbf16>, vector<256x4xf32> -> vector<256x4xf32>
    %53 = arith.addf %47, %52 : vector<256x4xf32>
    %54 = vector.extract_strided_slice %4 {offsets = [2, 2, 0], sizes = [16, 16, 8], strides = [1, 1, 1]} : vector<18x18x8xbf16> to vector<16x16x8xbf16>
    %55 = vector.shape_cast %54 : vector<16x16x8xbf16> to vector<256x8xbf16>
    %c8 = arith.constant 8 : index
    %c0_29 = arith.constant 0 : index
    %c0_30 = arith.constant 0 : index
    %56 = vector.load %arg2[%c8, %c0_29, %c0_30] : memref<9x8x4xbf16, #tpu.memory_space<vmem>>, vector<1x8x4xbf16>
    %57 = vector.shape_cast %56 : vector<1x8x4xbf16> to vector<8x4xbf16>
    %cst_31 = arith.constant dense<0.000000e+00> : vector<256x4xf32>
    %58 = tpu.matmul %55, %57, %cst_31 {dimension_numbers = #tpu.dot_dimension_numbers<[1], [0], [0], [1], [0, 0, 1, 1], [], []>} : vector<256x8xbf16>, vector<8x4xbf16>, vector<256x4xf32> -> vector<256x4xf32>
    %59 = arith.addf %53, %58 : vector<256x4xf32>
    %c0_32 = arith.constant 0 : index
    %c0_33 = arith.constant 0 : index
    %60 = vector.load %arg3[%c0_32, %c0_33] : memref<1x4xf32, #tpu.memory_space<vmem>>, vector<1x4xf32>
    %61 = vector.broadcast %60 : vector<1x4xf32> to vector<256x4xf32>
    %62 = arith.addf %59, %61 : vector<256x4xf32>
    %c0_34 = arith.constant 0 : index
    %c0_35 = arith.constant 0 : index
    %c0_36 = arith.constant 0 : index
    %63 = vector.load %arg4[%c0_34, %c0_35, %c0_36] : memref<1x256x4xf32, #tpu.memory_space<vmem>>, vector<1x256x4xf32>
    %64 = vector.shape_cast %63 : vector<1x256x4xf32> to vector<256x4xf32>
    %65 = vector.shape_cast %62 : vector<256x4xf32> to vector<1x256x4xf32>
    tpu.vector_store %arg4[%c0_34, %c0_35, %c0_36], %65 {strides = array<i32>} : memref<1x256x4xf32, #tpu.memory_space<vmem>>, vector<1x256x4xf32>,
    %c0_37 = arith.constant 0 : index
    %c0_38 = arith.constant 0 : index
    %66 = vector.load %arg5[%c0_37, %c0_38] : memref<1x4xf32, #tpu.memory_space<vmem>>, vector<1x4xf32>
    %cst_39 = arith.constant dense<0.000000e+00> : vector<4xf32>
    %67 = vector.multi_reduction <add>, %62, %cst_39 [0] : vector<256x4xf32> to vector<4xf32>
    %68 = vector.shape_cast %67 : vector<4xf32> to vector<1x4xf32>
    %69 = arith.addf %66, %68 : vector<1x4xf32>
    %c0_40 = arith.constant 0 : index
    %c0_41 = arith.constant 0 : index
    %70 = vector.load %arg5[%c0_40, %c0_41] : memref<1x4xf32, #tpu.memory_space<vmem>>, vector<1x4xf32>
    tpu.vector_store %arg5[%c0_40, %c0_41], %69 {strides = array<i32>} : memref<1x4xf32, #tpu.memory_space<vmem>>, vector<1x4xf32>,
    %c0_42 = arith.constant 0 : index
    %c0_43 = arith.constant 0 : index
    %71 = vector.load %arg6[%c0_42, %c0_43] : memref<1x4xf32, #tpu.memory_space<vmem>>, vector<1x4xf32>
    %72 = arith.mulf %62, %62 : vector<256x4xf32>
    %cst_44 = arith.constant dense<0.000000e+00> : vector<4xf32>
    %73 = vector.multi_reduction <add>, %72, %cst_44 [0] : vector<256x4xf32> to vector<4xf32>
    %74 = vector.shape_cast %73 : vector<4xf32> to vector<1x4xf32>
    %75 = arith.addf %71, %74 : vector<1x4xf32>
    %c0_45 = arith.constant 0 : index
    %c0_46 = arith.constant 0 : index
    %76 = vector.load %arg6[%c0_45, %c0_46] : memref<1x4xf32, #tpu.memory_space<vmem>>, vector<1x4xf32>
    tpu.vector_store %arg6[%c0_45, %c0_46], %75 {strides = array<i32>} : memref<1x4xf32, #tpu.memory_space<vmem>>, vector<1x4xf32>,
    return
  }
  func.func @transform_0(%arg0: i32) -> (i32, i32, i32, i32) {
    %c0_i32 = arith.constant 0 : i32
    %c0_i32_0 = arith.constant 0 : i32
    %c0_i32_1 = arith.constant 0 : i32
    %c0_i32_2 = arith.constant 0 : i32
    return %arg0, %c0_i32, %c0_i32_0, %c0_i32_1 : i32, i32, i32, i32
  }
  func.func @transform_1(%arg0: i32) -> (i32, i32, i32) {
    %c0_i32 = arith.constant 0 : i32
    %c0_i32_0 = arith.constant 0 : i32
    %c0_i32_1 = arith.constant 0 : i32
    %c0_i32_2 = arith.constant 0 : i32
    return %c0_i32, %c0_i32_0, %c0_i32_1 : i32, i32, i32
  }
  func.func @transform_2(%arg0: i32) -> (i32, i32) {
    %c0_i32 = arith.constant 0 : i32
    %c0_i32_0 = arith.constant 0 : i32
    %c0_i32_1 = arith.constant 0 : i32
    return %c0_i32, %c0_i32_0 : i32, i32
  }
  func.func @transform_3(%arg0: i32) -> (i32, i32, i32) {
    %c0_i32 = arith.constant 0 : i32
    %c0_i32_0 = arith.constant 0 : i32
    %c0_i32_1 = arith.constant 0 : i32
    return %arg0, %c0_i32, %c0_i32_0 : i32, i32, i32
  }
  func.func @transform_4(%arg0: i32) -> (i32, i32) {
    %c0_i32 = arith.constant 0 : i32
    %c0_i32_0 = arith.constant 0 : i32
    %c0_i32_1 = arith.constant 0 : i32
    return %c0_i32, %c0_i32_0 : i32, i32
  }
  func.func @transform_5(%arg0: i32) -> (i32, i32) {
    %c0_i32 = arith.constant 0 : i32
    %c0_i32_0 = arith.constant 0 : i32
    %c0_i32_1 = arith.constant 0 : i32
    return %c0_i32, %c0_i32_0 : i32, i32
  }
}

module attributes {stable_mosaic.version = 11 : i64} {
  func.func @_bn_apply_kernel(%arg0: i32, %arg1: memref<16x128xf32, #tpu.memory_space<vmem>>, %arg2: memref<1x128xf32, #tpu.memory_space<vmem>>, %arg3: memref<1x128xf32, #tpu.memory_space<vmem>>, %arg4: memref<16x128xf32, #tpu.memory_space<vmem>>) attributes {dimension_semantics = [#tpu.dimension_semantics<parallel>], iteration_bounds = array<i64: 1>, scalar_prefetch = 0 : i64, scratch_operands = 0 : i64, tpu.core_type = #tpu.core_type<tc>, window_params = [{transform_indices = @transform_0, window_bounds = array<i64: 16, 128>}, {pipeline_mode = #tpu.pipeline_mode<synchronous>, transform_indices = @transform_1, window_bounds = array<i64: 1, 128>}, {pipeline_mode = #tpu.pipeline_mode<synchronous>, transform_indices = @transform_2, window_bounds = array<i64: 1, 128>}, {transform_indices = @transform_3, window_bounds = array<i64: 16, 128>}]} {
    %c0 = arith.constant 0 : index
    %c0_0 = arith.constant 0 : index
    %0 = vector.load %arg1[%c0, %c0_0] : memref<16x128xf32, #tpu.memory_space<vmem>>, vector<16x128xf32>
    %c0_1 = arith.constant 0 : index
    %c0_2 = arith.constant 0 : index
    %1 = vector.load %arg2[%c0_1, %c0_2] : memref<1x128xf32, #tpu.memory_space<vmem>>, vector<1x128xf32>
    %2 = vector.broadcast %1 : vector<1x128xf32> to vector<16x128xf32>
    %3 = arith.mulf %0, %2 : vector<16x128xf32>
    %c0_3 = arith.constant 0 : index
    %c0_4 = arith.constant 0 : index
    %4 = vector.load %arg3[%c0_3, %c0_4] : memref<1x128xf32, #tpu.memory_space<vmem>>, vector<1x128xf32>
    %5 = vector.broadcast %4 : vector<1x128xf32> to vector<16x128xf32>
    %6 = arith.addf %3, %5 : vector<16x128xf32>
    %cst = arith.constant 0.000000e+00 : f32
    %7 = vector.broadcast %cst : f32 to vector<16x128xf32>
    %8 = arith.maximumf %6, %7 : vector<16x128xf32>
    %c0_5 = arith.constant 0 : index
    %c0_6 = arith.constant 0 : index
    %9 = vector.load %arg4[%c0_5, %c0_6] : memref<16x128xf32, #tpu.memory_space<vmem>>, vector<16x128xf32>
    tpu.vector_store %arg4[%c0_5, %c0_6], %8 {strides = array<i32>} : memref<16x128xf32, #tpu.memory_space<vmem>>, vector<16x128xf32>,
    return
  }
  func.func @transform_0(%arg0: i32) -> (i32, i32) {
    %c0_i32 = arith.constant 0 : i32
    %c0_i32_0 = arith.constant 0 : i32
    return %arg0, %c0_i32 : i32, i32
  }
  func.func @transform_1(%arg0: i32) -> (i32, i32) {
    %c0_i32 = arith.constant 0 : i32
    %c0_i32_0 = arith.constant 0 : i32
    %c0_i32_1 = arith.constant 0 : i32
    return %c0_i32, %c0_i32_0 : i32, i32
  }
  func.func @transform_2(%arg0: i32) -> (i32, i32) {
    %c0_i32 = arith.constant 0 : i32
    %c0_i32_0 = arith.constant 0 : i32
    %c0_i32_1 = arith.constant 0 : i32
    return %c0_i32, %c0_i32_0 : i32, i32
  }
  func.func @transform_3(%arg0: i32) -> (i32, i32) {
    %c0_i32 = arith.constant 0 : i32
    %c0_i32_0 = arith.constant 0 : i32
    return %arg0, %c0_i32 : i32, i32
  }
}

module attributes {stable_mosaic.version = 11 : i64} {
  func.func @_conv3x3_stats_kernel(%arg0: i32, %arg1: memref<1x18x18x4xbf16, #tpu.memory_space<vmem>>, %arg2: memref<9x4x4xbf16, #tpu.memory_space<vmem>>, %arg3: memref<1x4xf32, #tpu.memory_space<vmem>>, %arg4: memref<1x256x4xf32, #tpu.memory_space<vmem>>, %arg5: memref<1x4xf32, #tpu.memory_space<vmem>>, %arg6: memref<1x4xf32, #tpu.memory_space<vmem>>) attributes {dimension_semantics = [#tpu.dimension_semantics<arbitrary>], iteration_bounds = array<i64: 2>, scalar_prefetch = 0 : i64, scratch_operands = 0 : i64, tpu.core_type = #tpu.core_type<tc>, window_params = [{transform_indices = @transform_0, window_bounds = array<i64: 1, 18, 18, 4>}, {pipeline_mode = #tpu.pipeline_mode<synchronous>, transform_indices = @transform_1, window_bounds = array<i64: 9, 4, 4>}, {pipeline_mode = #tpu.pipeline_mode<synchronous>, transform_indices = @transform_2, window_bounds = array<i64: 1, 4>}, {transform_indices = @transform_3, window_bounds = array<i64: 1, 256, 4>}, {pipeline_mode = #tpu.pipeline_mode<synchronous>, transform_indices = @transform_4, window_bounds = array<i64: 1, 4>}, {pipeline_mode = #tpu.pipeline_mode<synchronous>, transform_indices = @transform_5, window_bounds = array<i64: 1, 4>}]} {
    %c0_i32 = arith.constant 0 : i32
    %0 = arith.cmpi eq, %arg0, %c0_i32 : i32
    %1 = arith.extui %0 : i1 to i32
    %c0_i32_0 = arith.constant 0 : i32
    %2 = arith.cmpi ne, %1, %c0_i32_0 : i32
    scf.if %2 {
      %cst_47 = arith.constant 0.000000e+00 : f32
      %77 = vector.broadcast %cst_47 : f32 to vector<1x4xf32>
      %c0_48 = arith.constant 0 : index
      %c0_49 = arith.constant 0 : index
      %78 = vector.load %arg5[%c0_48, %c0_49] : memref<1x4xf32, #tpu.memory_space<vmem>>, vector<1x4xf32>
      tpu.vector_store %arg5[%c0_48, %c0_49], %77 {strides = array<i32>} : memref<1x4xf32, #tpu.memory_space<vmem>>, vector<1x4xf32>,
      %cst_50 = arith.constant 0.000000e+00 : f32
      %79 = vector.broadcast %cst_50 : f32 to vector<1x4xf32>
      %c0_51 = arith.constant 0 : index
      %c0_52 = arith.constant 0 : index
      %80 = vector.load %arg6[%c0_51, %c0_52] : memref<1x4xf32, #tpu.memory_space<vmem>>, vector<1x4xf32>
      tpu.vector_store %arg6[%c0_51, %c0_52], %79 {strides = array<i32>} : memref<1x4xf32, #tpu.memory_space<vmem>>, vector<1x4xf32>,
    } else {
    }
    %c0 = arith.constant 0 : index
    %c0_1 = arith.constant 0 : index
    %c0_2 = arith.constant 0 : index
    %c0_3 = arith.constant 0 : index
    %3 = vector.load %arg1[%c0, %c0_1, %c0_2, %c0_3] : memref<1x18x18x4xbf16, #tpu.memory_space<vmem>>, vector<1x18x18x4xbf16>
    %4 = vector.shape_cast %3 : vector<1x18x18x4xbf16> to vector<18x18x4xbf16>
    %cst = arith.constant 0.000000e+00 : f32
    %5 = vector.broadcast %cst : f32 to vector<256x4xf32>
    %6 = vector.extract_strided_slice %4 {offsets = [0, 0, 0], sizes = [16, 16, 4], strides = [1, 1, 1]} : vector<18x18x4xbf16> to vector<16x16x4xbf16>
    %7 = vector.shape_cast %6 : vector<16x16x4xbf16> to vector<256x4xbf16>
    %c0_4 = arith.constant 0 : index
    %c0_5 = arith.constant 0 : index
    %c0_6 = arith.constant 0 : index
    %8 = vector.load %arg2[%c0_4, %c0_5, %c0_6] : memref<9x4x4xbf16, #tpu.memory_space<vmem>>, vector<1x4x4xbf16>
    %9 = vector.shape_cast %8 : vector<1x4x4xbf16> to vector<4x4xbf16>
    %cst_7 = arith.constant dense<0.000000e+00> : vector<256x4xf32>
    %10 = tpu.matmul %7, %9, %cst_7 {dimension_numbers = #tpu.dot_dimension_numbers<[1], [0], [0], [1], [0, 0, 1, 1], [], []>} : vector<256x4xbf16>, vector<4x4xbf16>, vector<256x4xf32> -> vector<256x4xf32>
    %11 = arith.addf %5, %10 : vector<256x4xf32>
    %12 = vector.extract_strided_slice %4 {offsets = [0, 1, 0], sizes = [16, 16, 4], strides = [1, 1, 1]} : vector<18x18x4xbf16> to vector<16x16x4xbf16>
    %13 = vector.shape_cast %12 : vector<16x16x4xbf16> to vector<256x4xbf16>
    %c1 = arith.constant 1 : index
    %c0_8 = arith.constant 0 : index
    %c0_9 = arith.constant 0 : index
    %14 = vector.load %arg2[%c1, %c0_8, %c0_9] : memref<9x4x4xbf16, #tpu.memory_space<vmem>>, vector<1x4x4xbf16>
    %15 = vector.shape_cast %14 : vector<1x4x4xbf16> to vector<4x4xbf16>
    %cst_10 = arith.constant dense<0.000000e+00> : vector<256x4xf32>
    %16 = tpu.matmul %13, %15, %cst_10 {dimension_numbers = #tpu.dot_dimension_numbers<[1], [0], [0], [1], [0, 0, 1, 1], [], []>} : vector<256x4xbf16>, vector<4x4xbf16>, vector<256x4xf32> -> vector<256x4xf32>
    %17 = arith.addf %11, %16 : vector<256x4xf32>
    %18 = vector.extract_strided_slice %4 {offsets = [0, 2, 0], sizes = [16, 16, 4], strides = [1, 1, 1]} : vector<18x18x4xbf16> to vector<16x16x4xbf16>
    %19 = vector.shape_cast %18 : vector<16x16x4xbf16> to vector<256x4xbf16>
    %c2 = arith.constant 2 : index
    %c0_11 = arith.constant 0 : index
    %c0_12 = arith.constant 0 : index
    %20 = vector.load %arg2[%c2, %c0_11, %c0_12] : memref<9x4x4xbf16, #tpu.memory_space<vmem>>, vector<1x4x4xbf16>
    %21 = vector.shape_cast %20 : vector<1x4x4xbf16> to vector<4x4xbf16>
    %cst_13 = arith.constant dense<0.000000e+00> : vector<256x4xf32>
    %22 = tpu.matmul %19, %21, %cst_13 {dimension_numbers = #tpu.dot_dimension_numbers<[1], [0], [0], [1], [0, 0, 1, 1], [], []>} : vector<256x4xbf16>, vector<4x4xbf16>, vector<256x4xf32> -> vector<256x4xf32>
    %23 = arith.addf %17, %22 : vector<256x4xf32>
    %24 = vector.extract_strided_slice %4 {offsets = [1, 0, 0], sizes = [16, 16, 4], strides = [1, 1, 1]} : vector<18x18x4xbf16> to vector<16x16x4xbf16>
    %25 = vector.shape_cast %24 : vector<16x16x4xbf16> to vector<256x4xbf16>
    %c3 = arith.constant 3 : index
    %c0_14 = arith.constant 0 : index
    %c0_15 = arith.constant 0 : index
    %26 = vector.load %arg2[%c3, %c0_14, %c0_15] : memref<9x4x4xbf16, #tpu.memory_space<vmem>>, vector<1x4x4xbf16>
    %27 = vector.shape_cast %26 : vector<1x4x4xbf16> to vector<4x4xbf16>
    %cst_16 = arith.constant dense<0.000000e+00> : vector<256x4xf32>
    %28 = tpu.matmul %25, %27, %cst_16 {dimension_numbers = #tpu.dot_dimension_numbers<[1], [0], [0], [1], [0, 0, 1, 1], [], []>} : vector<256x4xbf16>, vector<4x4xbf16>, vector<256x4xf32> -> vector<256x4xf32>
    %29 = arith.addf %23, %28 : vector<256x4xf32>
    %30 = vector.extract_strided_slice %4 {offsets = [1, 1, 0], sizes = [16, 16, 4], strides = [1, 1, 1]} : vector<18x18x4xbf16> to vector<16x16x4xbf16>
    %31 = vector.shape_cast %30 : vector<16x16x4xbf16> to vector<256x4xbf16>
    %c4 = arith.constant 4 : index
    %c0_17 = arith.constant 0 : index
    %c0_18 = arith.constant 0 : index
    %32 = vector.load %arg2[%c4, %c0_17, %c0_18] : memref<9x4x4xbf16, #tpu.memory_space<vmem>>, vector<1x4x4xbf16>
    %33 = vector.shape_cast %32 : vector<1x4x4xbf16> to vector<4x4xbf16>
    %cst_19 = arith.constant dense<0.000000e+00> : vector<256x4xf32>
    %34 = tpu.matmul %31, %33, %cst_19 {dimension_numbers = #tpu.dot_dimension_numbers<[1], [0], [0], [1], [0, 0, 1, 1], [], []>} : vector<256x4xbf16>, vector<4x4xbf16>, vector<256x4xf32> -> vector<256x4xf32>
    %35 = arith.addf %29, %34 : vector<256x4xf32>
    %36 = vector.extract_strided_slice %4 {offsets = [1, 2, 0], sizes = [16, 16, 4], strides = [1, 1, 1]} : vector<18x18x4xbf16> to vector<16x16x4xbf16>
    %37 = vector.shape_cast %36 : vector<16x16x4xbf16> to vector<256x4xbf16>
    %c5 = arith.constant 5 : index
    %c0_20 = arith.constant 0 : index
    %c0_21 = arith.constant 0 : index
    %38 = vector.load %arg2[%c5, %c0_20, %c0_21] : memref<9x4x4xbf16, #tpu.memory_space<vmem>>, vector<1x4x4xbf16>
    %39 = vector.shape_cast %38 : vector<1x4x4xbf16> to vector<4x4xbf16>
    %cst_22 = arith.constant dense<0.000000e+00> : vector<256x4xf32>
    %40 = tpu.matmul %37, %39, %cst_22 {dimension_numbers = #tpu.dot_dimension_numbers<[1], [0], [0], [1], [0, 0, 1, 1], [], []>} : vector<256x4xbf16>, vector<4x4xbf16>, vector<256x4xf32> -> vector<256x4xf32>
    %41 = arith.addf %35, %40 : vector<256x4xf32>
    %42 = vector.extract_strided_slice %4 {offsets = [2, 0, 0], sizes = [16, 16, 4], strides = [1, 1, 1]} : vector<18x18x4xbf16> to vector<16x16x4xbf16>
    %43 = vector.shape_cast %42 : vector<16x16x4xbf16> to vector<256x4xbf16>
    %c6 = arith.constant 6 : index
    %c0_23 = arith.constant 0 : index
    %c0_24 = arith.constant 0 : index
    %44 = vector.load %arg2[%c6, %c0_23, %c0_24] : memref<9x4x4xbf16, #tpu.memory_space<vmem>>, vector<1x4x4xbf16>
    %45 = vector.shape_cast %44 : vector<1x4x4xbf16> to vector<4x4xbf16>
    %cst_25 = arith.constant dense<0.000000e+00> : vector<256x4xf32>
    %46 = tpu.matmul %43, %45, %cst_25 {dimension_numbers = #tpu.dot_dimension_numbers<[1], [0], [0], [1], [0, 0, 1, 1], [], []>} : vector<256x4xbf16>, vector<4x4xbf16>, vector<256x4xf32> -> vector<256x4xf32>
    %47 = arith.addf %41, %46 : vector<256x4xf32>
    %48 = vector.extract_strided_slice %4 {offsets = [2, 1, 0], sizes = [16, 16, 4], strides = [1, 1, 1]} : vector<18x18x4xbf16> to vector<16x16x4xbf16>
    %49 = vector.shape_cast %48 : vector<16x16x4xbf16> to vector<256x4xbf16>
    %c7 = arith.constant 7 : index
    %c0_26 = arith.constant 0 : index
    %c0_27 = arith.constant 0 : index
    %50 = vector.load %arg2[%c7, %c0_26, %c0_27] : memref<9x4x4xbf16, #tpu.memory_space<vmem>>, vector<1x4x4xbf16>
    %51 = vector.shape_cast %50 : vector<1x4x4xbf16> to vector<4x4xbf16>
    %cst_28 = arith.constant dense<0.000000e+00> : vector<256x4xf32>
    %52 = tpu.matmul %49, %51, %cst_28 {dimension_numbers = #tpu.dot_dimension_numbers<[1], [0], [0], [1], [0, 0, 1, 1], [], []>} : vector<256x4xbf16>, vector<4x4xbf16>, vector<256x4xf32> -> vector<256x4xf32>
    %53 = arith.addf %47, %52 : vector<256x4xf32>
    %54 = vector.extract_strided_slice %4 {offsets = [2, 2, 0], sizes = [16, 16, 4], strides = [1, 1, 1]} : vector<18x18x4xbf16> to vector<16x16x4xbf16>
    %55 = vector.shape_cast %54 : vector<16x16x4xbf16> to vector<256x4xbf16>
    %c8 = arith.constant 8 : index
    %c0_29 = arith.constant 0 : index
    %c0_30 = arith.constant 0 : index
    %56 = vector.load %arg2[%c8, %c0_29, %c0_30] : memref<9x4x4xbf16, #tpu.memory_space<vmem>>, vector<1x4x4xbf16>
    %57 = vector.shape_cast %56 : vector<1x4x4xbf16> to vector<4x4xbf16>
    %cst_31 = arith.constant dense<0.000000e+00> : vector<256x4xf32>
    %58 = tpu.matmul %55, %57, %cst_31 {dimension_numbers = #tpu.dot_dimension_numbers<[1], [0], [0], [1], [0, 0, 1, 1], [], []>} : vector<256x4xbf16>, vector<4x4xbf16>, vector<256x4xf32> -> vector<256x4xf32>
    %59 = arith.addf %53, %58 : vector<256x4xf32>
    %c0_32 = arith.constant 0 : index
    %c0_33 = arith.constant 0 : index
    %60 = vector.load %arg3[%c0_32, %c0_33] : memref<1x4xf32, #tpu.memory_space<vmem>>, vector<1x4xf32>
    %61 = vector.broadcast %60 : vector<1x4xf32> to vector<256x4xf32>
    %62 = arith.addf %59, %61 : vector<256x4xf32>
    %c0_34 = arith.constant 0 : index
    %c0_35 = arith.constant 0 : index
    %c0_36 = arith.constant 0 : index
    %63 = vector.load %arg4[%c0_34, %c0_35, %c0_36] : memref<1x256x4xf32, #tpu.memory_space<vmem>>, vector<1x256x4xf32>
    %64 = vector.shape_cast %63 : vector<1x256x4xf32> to vector<256x4xf32>
    %65 = vector.shape_cast %62 : vector<256x4xf32> to vector<1x256x4xf32>
    tpu.vector_store %arg4[%c0_34, %c0_35, %c0_36], %65 {strides = array<i32>} : memref<1x256x4xf32, #tpu.memory_space<vmem>>, vector<1x256x4xf32>,
    %c0_37 = arith.constant 0 : index
    %c0_38 = arith.constant 0 : index
    %66 = vector.load %arg5[%c0_37, %c0_38] : memref<1x4xf32, #tpu.memory_space<vmem>>, vector<1x4xf32>
    %cst_39 = arith.constant dense<0.000000e+00> : vector<4xf32>
    %67 = vector.multi_reduction <add>, %62, %cst_39 [0] : vector<256x4xf32> to vector<4xf32>
    %68 = vector.shape_cast %67 : vector<4xf32> to vector<1x4xf32>
    %69 = arith.addf %66, %68 : vector<1x4xf32>
    %c0_40 = arith.constant 0 : index
    %c0_41 = arith.constant 0 : index
    %70 = vector.load %arg5[%c0_40, %c0_41] : memref<1x4xf32, #tpu.memory_space<vmem>>, vector<1x4xf32>
    tpu.vector_store %arg5[%c0_40, %c0_41], %69 {strides = array<i32>} : memref<1x4xf32, #tpu.memory_space<vmem>>, vector<1x4xf32>,
    %c0_42 = arith.constant 0 : index
    %c0_43 = arith.constant 0 : index
    %71 = vector.load %arg6[%c0_42, %c0_43] : memref<1x4xf32, #tpu.memory_space<vmem>>, vector<1x4xf32>
    %72 = arith.mulf %62, %62 : vector<256x4xf32>
    %cst_44 = arith.constant dense<0.000000e+00> : vector<4xf32>
    %73 = vector.multi_reduction <add>, %72, %cst_44 [0] : vector<256x4xf32> to vector<4xf32>
    %74 = vector.shape_cast %73 : vector<4xf32> to vector<1x4xf32>
    %75 = arith.addf %71, %74 : vector<1x4xf32>
    %c0_45 = arith.constant 0 : index
    %c0_46 = arith.constant 0 : index
    %76 = vector.load %arg6[%c0_45, %c0_46] : memref<1x4xf32, #tpu.memory_space<vmem>>, vector<1x4xf32>
    tpu.vector_store %arg6[%c0_45, %c0_46], %75 {strides = array<i32>} : memref<1x4xf32, #tpu.memory_space<vmem>>, vector<1x4xf32>,
    return
  }
  func.func @transform_0(%arg0: i32) -> (i32, i32, i32, i32) {
    %c0_i32 = arith.constant 0 : i32
    %c0_i32_0 = arith.constant 0 : i32
    %c0_i32_1 = arith.constant 0 : i32
    %c0_i32_2 = arith.constant 0 : i32
    return %arg0, %c0_i32, %c0_i32_0, %c0_i32_1 : i32, i32, i32, i32
  }
  func.func @transform_1(%arg0: i32) -> (i32, i32, i32) {
    %c0_i32 = arith.constant 0 : i32
    %c0_i32_0 = arith.constant 0 : i32
    %c0_i32_1 = arith.constant 0 : i32
    %c0_i32_2 = arith.constant 0 : i32
    return %c0_i32, %c0_i32_0, %c0_i32_1 : i32, i32, i32
  }
  func.func @transform_2(%arg0: i32) -> (i32, i32) {
    %c0_i32 = arith.constant 0 : i32
    %c0_i32_0 = arith.constant 0 : i32
    %c0_i32_1 = arith.constant 0 : i32
    return %c0_i32, %c0_i32_0 : i32, i32
  }
  func.func @transform_3(%arg0: i32) -> (i32, i32, i32) {
    %c0_i32 = arith.constant 0 : i32
    %c0_i32_0 = arith.constant 0 : i32
    %c0_i32_1 = arith.constant 0 : i32
    return %arg0, %c0_i32, %c0_i32_0 : i32, i32, i32
  }
  func.func @transform_4(%arg0: i32) -> (i32, i32) {
    %c0_i32 = arith.constant 0 : i32
    %c0_i32_0 = arith.constant 0 : i32
    %c0_i32_1 = arith.constant 0 : i32
    return %c0_i32, %c0_i32_0 : i32, i32
  }
  func.func @transform_5(%arg0: i32) -> (i32, i32) {
    %c0_i32 = arith.constant 0 : i32
    %c0_i32_0 = arith.constant 0 : i32
    %c0_i32_1 = arith.constant 0 : i32
    return %c0_i32, %c0_i32_0 : i32, i32
  }
}

module attributes {stable_mosaic.version = 11 : i64} {
  func.func @_bn_apply_res_kernel(%arg0: i32, %arg1: memref<16x128xf32, #tpu.memory_space<vmem>>, %arg2: memref<1x128xf32, #tpu.memory_space<vmem>>, %arg3: memref<1x128xf32, #tpu.memory_space<vmem>>, %arg4: memref<16x128xf32, #tpu.memory_space<vmem>>, %arg5: memref<16x128xf32, #tpu.memory_space<vmem>>) attributes {dimension_semantics = [#tpu.dimension_semantics<parallel>], iteration_bounds = array<i64: 1>, scalar_prefetch = 0 : i64, scratch_operands = 0 : i64, tpu.core_type = #tpu.core_type<tc>, window_params = [{transform_indices = @transform_0, window_bounds = array<i64: 16, 128>}, {pipeline_mode = #tpu.pipeline_mode<synchronous>, transform_indices = @transform_1, window_bounds = array<i64: 1, 128>}, {pipeline_mode = #tpu.pipeline_mode<synchronous>, transform_indices = @transform_2, window_bounds = array<i64: 1, 128>}, {transform_indices = @transform_3, window_bounds = array<i64: 16, 128>}, {transform_indices = @transform_4, window_bounds = array<i64: 16, 128>}]} {
    %c0 = arith.constant 0 : index
    %c0_0 = arith.constant 0 : index
    %0 = vector.load %arg1[%c0, %c0_0] : memref<16x128xf32, #tpu.memory_space<vmem>>, vector<16x128xf32>
    %c0_1 = arith.constant 0 : index
    %c0_2 = arith.constant 0 : index
    %1 = vector.load %arg2[%c0_1, %c0_2] : memref<1x128xf32, #tpu.memory_space<vmem>>, vector<1x128xf32>
    %2 = vector.broadcast %1 : vector<1x128xf32> to vector<16x128xf32>
    %3 = arith.mulf %0, %2 : vector<16x128xf32>
    %c0_3 = arith.constant 0 : index
    %c0_4 = arith.constant 0 : index
    %4 = vector.load %arg3[%c0_3, %c0_4] : memref<1x128xf32, #tpu.memory_space<vmem>>, vector<1x128xf32>
    %5 = vector.broadcast %4 : vector<1x128xf32> to vector<16x128xf32>
    %6 = arith.addf %3, %5 : vector<16x128xf32>
    %c0_5 = arith.constant 0 : index
    %c0_6 = arith.constant 0 : index
    %7 = vector.load %arg4[%c0_5, %c0_6] : memref<16x128xf32, #tpu.memory_space<vmem>>, vector<16x128xf32>
    %8 = arith.addf %6, %7 : vector<16x128xf32>
    %c0_7 = arith.constant 0 : index
    %c0_8 = arith.constant 0 : index
    %9 = vector.load %arg5[%c0_7, %c0_8] : memref<16x128xf32, #tpu.memory_space<vmem>>, vector<16x128xf32>
    tpu.vector_store %arg5[%c0_7, %c0_8], %8 {strides = array<i32>} : memref<16x128xf32, #tpu.memory_space<vmem>>, vector<16x128xf32>,
    return
  }
  func.func @transform_0(%arg0: i32) -> (i32, i32) {
    %c0_i32 = arith.constant 0 : i32
    %c0_i32_0 = arith.constant 0 : i32
    return %arg0, %c0_i32 : i32, i32
  }
  func.func @transform_1(%arg0: i32) -> (i32, i32) {
    %c0_i32 = arith.constant 0 : i32
    %c0_i32_0 = arith.constant 0 : i32
    %c0_i32_1 = arith.constant 0 : i32
    return %c0_i32, %c0_i32_0 : i32, i32
  }
  func.func @transform_2(%arg0: i32) -> (i32, i32) {
    %c0_i32 = arith.constant 0 : i32
    %c0_i32_0 = arith.constant 0 : i32
    %c0_i32_1 = arith.constant 0 : i32
    return %c0_i32, %c0_i32_0 : i32, i32
  }
  func.func @transform_3(%arg0: i32) -> (i32, i32) {
    %c0_i32 = arith.constant 0 : i32
    %c0_i32_0 = arith.constant 0 : i32
    return %arg0, %c0_i32 : i32, i32
  }
  func.func @transform_4(%arg0: i32) -> (i32, i32) {
    %c0_i32 = arith.constant 0 : i32
    %c0_i32_0 = arith.constant 0 : i32
    return %arg0, %c0_i32 : i32, i32
  }
}

</mosaic_0001>

<llo_original>
// kernel: tile.42
$region0: #{tile.42}
  %s0 = inlined_call_operand.vmem [shape: f32[32,4], index: 0, kind: input, shape index: {}]
  %s1 = inlined_call_operand.vmem [shape: f32[1,128], index: 1, kind: output, shape index: {}]
  $region1: #{tile.42} parent=0
    #allocation0 [shape = 'u8[4096]{0}', space=vmem, size = 0x1000, scoped, tag = 'scoped mem for output reshape']
    %v2 = vld [vmem:[%s0] sm:$0x1]
    %vm3 = vcmask 31744
    %4 = vst.msk [vmem:[#allocation0] sm:$0x1] %vm3, %v2
    %s5 = scalar_lea.vmem %s0, 31
    %v6 = vld [vmem:[%s5] sm:$0x1]
    %7 = vrot.lane.b32.xlu0 %v6, 124
    %v8 = vpop.permute.xlu0 %7
    %vm9 = vcmask 1048544
    %10 = vst.msk [vmem:[#allocation0] sm:$0x1] %vm9, %v8
    %s11 = scalar_lea.vmem %s0, 30
    %v12 = vld [vmem:[%s11] sm:$0x1]
    %13 = vrot.lane.b32.xlu0 %v12, 120
    %v14 = vpop.permute.xlu0 %13
    %vm15 = vcmask 1015744
    %16 = vst.msk [vmem:[#allocation0] sm:$0x1] %vm15, %v14
    %s17 = scalar_lea.vmem %s0, 29
    %v18 = vld [vmem:[%s17] sm:$0x1]
    %19 = vrot.lane.b32.xlu0 %v18, 116
    %v20 = vpop.permute.xlu0 %19
    %vm21 = vcmask 982944
    %22 = vst.msk [vmem:[#allocation0] sm:$0x1] %vm21, %v20
    %s23 = scalar_lea.vmem %s0, 28
    %v24 = vld [vmem:[%s23] sm:$0x1]
    %25 = vrot.lane.b32.xlu0 %v24, 112
    %v26 = vpop.permute.xlu0 %25
    %vm27 = vcmask 950144
    %28 = vst.msk [vmem:[#allocation0] sm:$0x1] %vm27, %v26
    %s29 = scalar_lea.vmem %s0, 27
    %v30 = vld [vmem:[%s29] sm:$0x1]
    %31 = vrot.lane.b32.xlu0 %v30, 108
    %v32 = vpop.permute.xlu0 %31
    %vm33 = vcmask 917344
    %34 = vst.msk [vmem:[#allocation0] sm:$0x1] %vm33, %v32
    %s35 = scalar_lea.vmem %s0, 26
    %v36 = vld [vmem:[%s35] sm:$0x1]
    %37 = vrot.lane.b32.xlu0 %v36, 104
    %v38 = vpop.permute.xlu0 %37
    %vm39 = vcmask 884544
    %40 = vst.msk [vmem:[#allocation0] sm:$0x1] %vm39, %v38
    %s41 = scalar_lea.vmem %s0, 25
    %v42 = vld [vmem:[%s41] sm:$0x1]
    %43 = vrot.lane.b32.xlu0 %v42, 100
    %v44 = vpop.permute.xlu0 %43
    %vm45 = vcmask 851744
    %46 = vst.msk [vmem:[#allocation0] sm:$0x1] %vm45, %v44
    %s47 = scalar_lea.vmem %s0, 24
    %v48 = vld [vmem:[%s47] sm:$0x1]
    %49 = vrot.lane.b32.xlu0 %v48, 96
    %v50 = vpop.permute.xlu0 %49
    %vm51 = vcmask 818944
    %52 = vst.msk [vmem:[#allocation0] sm:$0x1] %vm51, %v50
    %s53 = scalar_lea.vmem %s0, 23
    %v54 = vld [vmem:[%s53] sm:$0x1]
    %55 = vrot.lane.b32.xlu0 %v54, 92
    %v56 = vpop.permute.xlu0 %55
    %vm57 = vcmask 786144
    %58 = vst.msk [vmem:[#allocation0] sm:$0x1] %vm57, %v56
    %s59 = scalar_lea.vmem %s0, 22
    %v60 = vld [vmem:[%s59] sm:$0x1]
    %61 = vrot.lane.b32.xlu0 %v60, 88
    %v62 = vpop.permute.xlu0 %61
    %vm63 = vcmask 753344
    %64 = vst.msk [vmem:[#allocation0] sm:$0x1] %vm63, %v62
    %s65 = scalar_lea.vmem %s0, 21
    %v66 = vld [vmem:[%s65] sm:$0x1]
    %67 = vrot.lane.b32.xlu0 %v66, 84
    %v68 = vpop.permute.xlu0 %67
    %vm69 = vcmask 720544
    %70 = vst.msk [vmem:[#allocation0] sm:$0x1] %vm69, %v68
    %s71 = scalar_lea.vmem %s0, 20
    %v72 = vld [vmem:[%s71] sm:$0x1]
    %73 = vrot.lane.b32.xlu0 %v72, 80
    %v74 = vpop.permute.xlu0 %73
    %vm75 = vcmask 687744
    %76 = vst.msk [vmem:[#allocation0] sm:$0x1] %vm75, %v74
    %s77 = scalar_lea.vmem %s0, 19
    %v78 = vld [vmem:[%s77] sm:$0x1]
    %79 = vrot.lane.b32.xlu0 %v78, 76
    %v80 = vpop.permute.xlu0 %79
    %vm81 = vcmask 654944
    %82 = vst.msk [vmem:[#allocation0] sm:$0x1] %vm81, %v80
    %s83 = scalar_lea.vmem %s0, 18
    %v84 = vld [vmem:[%s83] sm:$0x1]
    %85 = vrot.lane.b32.xlu0 %v84, 72
    %v86 = vpop.permute.xlu0 %85
    %vm87 = vcmask 622144
    %88 = vst.msk [vmem:[#allocation0] sm:$0x1] %vm87, %v86
    %s89 = scalar_lea.vmem %s0, 17
    %v90 = vld [vmem:[%s89] sm:$0x1]
    %91 = vrot.lane.b32.xlu0 %v90, 68
    %v92 = vpop.permute.xlu0 %91
    %vm93 = vcmask 589344
    %94 = vst.msk [vmem:[#allocation0] sm:$0x1] %vm93, %v92
    %s95 = scalar_lea.vmem %s0, 16
    %v96 = vld [vmem:[%s95] sm:$0x1]
    %97 = vrot.lane.b32.xlu0 %v96, 64
    %v98 = vpop.permute.xlu0 %97
    %vm99 = vcmask 556544
    %100 = vst.msk [vmem:[#allocation0] sm:$0x1] %vm99, %v98
    %s101 = scalar_lea.vmem %s0, 15
    %v102 = vld [vmem:[%s101] sm:$0x1]
    %103 = vrot.lane.b32.xlu0 %v102, 60
    %v104 = vpop.permute.xlu0 %103
    %vm105 = vcmask 523744
    %106 = vst.msk [vmem:[#allocation0] sm:$0x1] %vm105, %v104
    %s107 = scalar_lea.vmem %s0, 14
    %v108 = vld [vmem:[%s107] sm:$0x1]
    %109 = vrot.lane.b32.xlu0 %v108, 56
    %v110 = vpop.permute.xlu0 %109
    %vm111 = vcmask 490944
    %112 = vst.msk [vmem:[#allocation0] sm:$0x1] %vm111, %v110
    %s113 = scalar_lea.vmem %s0, 13
    %v114 = vld [vmem:[%s113] sm:$0x1]
    %115 = vrot.lane.b32.xlu0 %v114, 52
    %v116 = vpop.permute.xlu0 %115
    %vm117 = vcmask 458144
    %118 = vst.msk [vmem:[#allocation0] sm:$0x1] %vm117, %v116
    %s119 = scalar_lea.vmem %s0, 12
    %v120 = vld [vmem:[%s119] sm:$0x1]
    %121 = vrot.lane.b32.xlu0 %v120, 48
    %v122 = vpop.permute.xlu0 %121
    %vm123 = vcmask 425344
    %124 = vst.msk [vmem:[#allocation0] sm:$0x1] %vm123, %v122
    %s125 = scalar_lea.vmem %s0, 11
    %v126 = vld [vmem:[%s125] sm:$0x1]
    %127 = vrot.lane.b32.xlu0 %v126, 44
    %v128 = vpop.permute.xlu0 %127
    %vm129 = vcmask 392544
    %130 = vst.msk [vmem:[#allocation0] sm:$0x1] %vm129, %v128
    %s131 = scalar_lea.vmem %s0, 10
    %v132 = vld [vmem:[%s131] sm:$0x1]
    %133 = vrot.lane.b32.xlu0 %v132, 40
    %v134 = vpop.permute.xlu0 %133
    %vm135 = vcmask 359744
    %136 = vst.msk [vmem:[#allocation0] sm:$0x1] %vm135, %v134
    %s137 = scalar_lea.vmem %s0, 9
    %v138 = vld [vmem:[%s137] sm:$0x1]
    %139 = vrot.lane.b32.xlu0 %v138, 36
    %v140 = vpop.permute.xlu0 %139
    %vm141 = vcmask 326944
    %142 = vst.msk [vmem:[#allocation0] sm:$0x1] %vm141, %v140
    %s143 = scalar_lea.vmem %s0, 8
    %v144 = vld [vmem:[%s143] sm:$0x1]
    %145 = vrot.lane.b32.xlu0 %v144, 32
    %v146 = vpop.permute.xlu0 %145
    %vm147 = vcmask 294144
    %148 = vst.msk [vmem:[#allocation0] sm:$0x1] %vm147, %v146
    %s149 = scalar_lea.vmem %s0, 7
    %v150 = vld [vmem:[%s149] sm:$0x1]
    %151 = vrot.lane.b32.xlu0 %v150, 28
    %v152 = vpop.permute.xlu0 %151
    %vm153 = vcmask 261344
    %154 = vst.msk [vmem:[#allocation0] sm:$0x1] %vm153, %v152
    %s155 = scalar_lea.vmem %s0, 6
    %v156 = vld [vmem:[%s155] sm:$0x1]
    %157 = vrot.lane.b32.xlu0 %v156, 24
    %v158 = vpop.permute.xlu0 %157
    %vm159 = vcmask 228544
    %160 = vst.msk [vmem:[#allocation0] sm:$0x1] %vm159, %v158
    %s161 = scalar_lea.vmem %s0, 5
    %v162 = vld [vmem:[%s161] sm:$0x1]
    %163 = vrot.lane.b32.xlu0 %v162, 20
    %v164 = vpop.permute.xlu0 %163
    %vm165 = vcmask 195744
    %166 = vst.msk [vmem:[#allocation0] sm:$0x1] %vm165, %v164
    %s167 = scalar_lea.vmem %s0, 4
    %v168 = vld [vmem:[%s167] sm:$0x1]
    %169 = vrot.lane.b32.xlu0 %v168, 16
    %v170 = vpop.permute.xlu0 %169
    %vm171 = vcmask 162944
    %172 = vst.msk [vmem:[#allocation0] sm:$0x1] %vm171, %v170
    %s173 = scalar_lea.vmem %s0, 3
    %v174 = vld [vmem:[%s173] sm:$0x1]
    %175 = vrot.lane.b32.xlu0 %v174, 12
    %v176 = vpop.permute.xlu0 %175
    %vm177 = vcmask 130144
    %178 = vst.msk [vmem:[#allocation0] sm:$0x1] %vm177, %v176
    %s179 = scalar_lea.vmem %s0, 2
    %v180 = vld [vmem:[%s179] sm:$0x1]
    %181 = vrot.lane.b32.xlu0 %v180, 8
    %v182 = vpop.permute.xlu0 %181
    %vm183 = vcmask 97344
    %184 = vst.msk [vmem:[#allocation0] sm:$0x1] %vm183, %v182
    %s185 = scalar_lea.vmem %s0, 1
    %v186 = vld [vmem:[%s185] sm:$0x1]
    %187 = vrot.lane.b32.xlu0 %v186, 4
    %v188 = vpop.permute.xlu0 %187
    %vm189 = vcmask 64544
    %190 = vst.msk [vmem:[#allocation0] sm:$0x1] %vm189, %v188
    %s192 = ssub.s32 2, 1
    %v193 = vld [vmem:[#allocation0] sm:%s192]
    %s195 = ssub.s32 2, 1
    %196 = vst [vmem:[%s1] sm:%s195] %v193

// kernel: tile.41
$region0: #{tile.41}
  #allocation0 [shape = 's32[1]{0}', space=sflag, size = 0x4, scoped, tag = 'scoped memory for tile.41']
  %s0 = inlined_call_operand.vmem [shape: f32[4], index: 0, kind: input, shape index: {}]
  %s1 = inlined_call_operand.vmem [shape: f32[32,4], index: 1, kind: output, shape index: {}]
  // Predicated region
  $region2: #{tile.41} parent=0 // pred_check
    _
  $region3: #{tile.41} parent=0 // pred_check_branch
    %3 = sbr.rel (0) target = $region5
  $region4: #{tile.41} parent=0 // pred_region
    _
  $region5: #{tile.41} parent=0 // pred_fallthru
    _
  %v4 = vld [vmem:[%s0] ss:$0 sm:$0xff]
  %5 = vst [vmem:[%s1] sm:$0xff] %v4
  %s6 = scalar_lea.vmem %s1, 8
  %7 = vst [vmem:[%s6] sm:$0xff] %v4
  %s8 = scalar_lea.vmem %s1, 16
  %9 = vst [vmem:[%s8] sm:$0xff] %v4
  %s10 = scalar_lea.vmem %s1, 24
  %11 = vst [vmem:[%s10] sm:$0xff] %v4

// kernel: upconv_block_forward.9
$region0: #{upconv_block_forward.9}
  #allocation0 [shape = 'u32[]', space=smem, size = 0x4, offset = 0x4, fixed_abs, tag = 'smem constant byte address 0x4 - core index']
  #allocation1 [shape = 'u32[72,128]{1,0:T(1,128)}', space=vmem, size = 0x9000, scoped, tag = 'internal scratch']
  %s0 = inlined_call_operand.vmem [shape: f32[16,128], index: 0, kind: input, shape index: {}]
  %s1 = inlined_call_operand.vmem [shape: f32[1,128], index: 1, kind: input, shape index: {}]
  %s2 = inlined_call_operand.vmem [shape: f32[1,128], index: 2, kind: input, shape index: {}]
  %s3 = inlined_call_operand.vmem [shape: bf16[16,128], index: 3, kind: output, shape index: {}]
  %s4 = sld [smem:[#allocation0]]
  $region22: #{upconv_block_forward.9} parent=0
    _
  %s6 = ssub.s32 1, %s4
  %s7 = scalar_select 0, %s6, %s4
  // Predicated region
  $region2: #{upconv_block_forward.9} parent=0 // pred_check
    _
  $region3: #{upconv_block_forward.9} parent=0 // pred_check_branch
    %9 = sbr.rel (0) target = $region5
  $region4: #{upconv_block_forward.9} parent=0 // pred_region
    _
  $region5: #{upconv_block_forward.9} parent=0 // pred_fallthru
    _
  // Predicated region
  $region6: #{upconv_block_forward.9} parent=0 // pred_check
    _
  $region7: #{upconv_block_forward.9} parent=0 // pred_check_branch
    %11 = sbr.rel (0) target = $region9
  $region8: #{upconv_block_forward.9} parent=0 // pred_region
    _
  $region9: #{upconv_block_forward.9} parent=0 // pred_fallthru
    _
  // Predicated region
  $region10: #{upconv_block_forward.9} parent=0 // pred_check
    _
  $region11: #{upconv_block_forward.9} parent=0 // pred_check_branch
    %13 = sbr.rel (0) target = $region13
  $region12: #{upconv_block_forward.9} parent=0 // pred_region
    _
  $region13: #{upconv_block_forward.9} parent=0 // pred_fallthru
    _
  %v14 = vld [vmem:[%s0] sm:$0xff]
  %v15 = vld [vmem:[%s0 + $0x8] sm:$0xff]
  %v16 = vld [vmem:[%s1] sm:$0x1]
  %v18 = vperm.slane %v16, 0
  %v20 = vmul.f32 %v14, %v18
  %v21 = vmul.f32 %v15, %v18
  %v22 = vld [vmem:[%s2] sm:$0x1]
  %v24 = vperm.slane %v22, 0
  %v26 = vadd.f32 %v20, %v24
  %v27 = vadd.f32 %v21, %v24
  %v28 = vmax.f32 %v26, 0.0
  %v29 = vmax.f32 %v27, 0.0
  %v30 = vpack.c.bf16 %v28, %v28
  %v31 = vpack.c.bf16 %v29, %v29
  %32 = vst [vmem:[%s3] sm:$0xf] %v30
  %33 = vst [vmem:[%s3 + $0x4] sm:$0xf] %v31
  // Predicated region
  $region14: #{upconv_block_forward.9} parent=0 // pred_check
    _
  $region15: #{upconv_block_forward.9} parent=0 // pred_check_branch
    %35 = sbr.rel (0) target = $region17
  $region16: #{upconv_block_forward.9} parent=0 // pred_region
    _
  $region17: #{upconv_block_forward.9} parent=0 // pred_fallthru
    _
  // Predicated region
  $region18: #{upconv_block_forward.9} parent=0 // pred_check
    _
  $region19: #{upconv_block_forward.9} parent=0 // pred_check_branch
    %37 = sbr.rel (0) target = $region21
  $region20: #{upconv_block_forward.9} parent=0 // pred_region
    _
  $region21: #{upconv_block_forward.9} parent=0 // pred_fallthru
    _

// kernel: upconv_block_forward.8
$region0: #{upconv_block_forward.8}
  #allocation0 [shape = 'u32[]', space=smem, size = 0x4, offset = 0x4, fixed_abs, tag = 'smem constant byte address 0x4 - core index']
  #allocation1 [shape = 'u32[72,128]{1,0:T(1,128)}', space=vmem, size = 0x9000, scoped, tag = 'internal scratch']
  %s0 = inlined_call_operand.vmem [shape: bf16[512,4], index: 0, kind: input, shape index: {}]
  %s1 = inlined_call_operand.vmem [shape: bf16[4,4], index: 1, kind: input, shape index: {}]
  %s2 = inlined_call_operand.vmem [shape: f32[1,4], index: 2, kind: input, shape index: {}]
  %s3 = inlined_call_operand.vmem [shape: f32[512,4], index: 3, kind: output, shape index: {0}]
  %s4 = inlined_call_operand.vmem [shape: f32[1,4], index: 4, kind: output, shape index: {1}]
  %s5 = inlined_call_operand.vmem [shape: f32[1,4], index: 5, kind: output, shape index: {2}]
  %6 = xla_tuple %s3, %s4, %s5
  %s7 = sld [smem:[#allocation0]]
  $region42: #{upconv_block_forward.8} parent=0
    _
  %s9 = ssub.s32 1, %s7
  %s10 = scalar_select 0, %s9, %s7
  // Predicated region
  $region2: #{upconv_block_forward.8} parent=0 // pred_check
    _
  $region3: #{upconv_block_forward.8} parent=0 // pred_check_branch
    %12 = sbr.rel (0) target = $region5
  $region4: #{upconv_block_forward.8} parent=0 // pred_region
    _
  $region5: #{upconv_block_forward.8} parent=0 // pred_fallthru
    _
  // Predicated region
  $region6: #{upconv_block_forward.8} parent=0 // pred_check
    _
  $region7: #{upconv_block_forward.8} parent=0 // pred_check_branch
    %14 = sbr.rel (0) target = $region9
  $region8: #{upconv_block_forward.8} parent=0 // pred_region
    _
  $region9: #{upconv_block_forward.8} parent=0 // pred_fallthru
    _
  // Predicated region
  $region10: #{upconv_block_forward.8} parent=0 // pred_check
    _
  $region11: #{upconv_block_forward.8} parent=0 // pred_check_branch
    %16 = sbr.rel (0) target = $region13
  $region12: #{upconv_block_forward.8} parent=0 // pred_region
    _
  $region13: #{upconv_block_forward.8} parent=0 // pred_fallthru
    _
  %p18 = scmp.eq.s32.totalorder 0, 0
  // Predicated region
  $region14: #{upconv_block_forward.8} parent=0 // pred_check
    %p19 = pneg %p18
  $region15: #{upconv_block_forward.8} parent=0 // pred_check_branch
    %21 = sbr.rel (%p19) target = $region17
  $region16: #{upconv_block_forward.8} parent=0 // pred_region
    %vm22 = vcmask 24576
    %23 = vst.msk [vmem:[%s4] sm:$0x1] %vm22, 0.0
    %24 = vst.msk [vmem:[%s5] sm:$0x1] %vm22, 0.0
  $region17: #{upconv_block_forward.8} parent=0 // pred_fallthru
    _
  %v25 = vld [vmem:[%s0] sm:$0xf]
  %v26 = vld [vmem:[%s0 + $0x4] sm:$0xf]
  %v27 = vld [vmem:[%s0 + $0x8] sm:$0xf]
  %v28 = vld [vmem:[%s0 + $0xc] sm:$0xf]
  %v29 = vld [vmem:[%s0 + $0x10] sm:$0xf]
  %v30 = vld [vmem:[%s0 + $0x14] sm:$0xf]
  %v31 = vld [vmem:[%s0 + $0x18] sm:$0xf]
  %v32 = vld [vmem:[%s0 + $0x1c] sm:$0xf]
  %v33 = vld [vmem:[%s0 + $0x20] sm:$0xf]
  %v34 = vld [vmem:[%s0 + $0x24] sm:$0xf]
  %v35 = vld [vmem:[%s0 + $0x28] sm:$0xf]
  %v36 = vld [vmem:[%s0 + $0x2c] sm:$0xf]
  %v37 = vld [vmem:[%s0 + $0x30] sm:$0xf]
  %v38 = vld [vmem:[%s0 + $0x34] sm:$0xf]
  %v39 = vld [vmem:[%s0 + $0x38] sm:$0xf]
  %v40 = vld [vmem:[%s0 + $0x3c] sm:$0xf]
  %v41 = vld [vmem:[%s0 + $0x40] sm:$0xf]
  %v42 = vld [vmem:[%s0 + $0x44] sm:$0xf]
  %v43 = vld [vmem:[%s0 + $0x48] sm:$0xf]
  %v44 = vld [vmem:[%s0 + $0x4c] sm:$0xf]
  %v45 = vld [vmem:[%s0 + $0x50] sm:$0xf]
  %v46 = vld [vmem:[%s0 + $0x54] sm:$0xf]
  %v47 = vld [vmem:[%s0 + $0x58] sm:$0xf]
  %v48 = vld [vmem:[%s0 + $0x5c] sm:$0xf]
  %v49 = vld [vmem:[%s0 + $0x60] sm:$0xf]
  %v50 = vld [vmem:[%s0 + $0x64] sm:$0xf]
  %v51 = vld [vmem:[%s0 + $0x68] sm:$0xf]
  %v52 = vld [vmem:[%s0 + $0x6c] sm:$0xf]
  %v53 = vld [vmem:[%s0 + $0x70] sm:$0xf]
  %v54 = vld [vmem:[%s0 + $0x74] sm:$0xf]
  %v55 = vld [vmem:[%s0 + $0x78] sm:$0xf]
  %v56 = vld [vmem:[%s0 + $0x7c] sm:$0xf]
  %v57 = vld [vmem:[%s0 + $0x80] sm:$0xf]
  %v58 = vld [vmem:[%s0 + $0x84] sm:$0xf]
  %v59 = vld [vmem:[%s0 + $0x88] sm:$0xf]
  %v60 = vld [vmem:[%s0 + $0x8c] sm:$0xf]
  %v61 = vld [vmem:[%s0 + $0x90] sm:$0xf]
  %v62 = vld [vmem:[%s0 + $0x94] sm:$0xf]
  %v63 = vld [vmem:[%s0 + $0x98] sm:$0xf]
  %v64 = vld [vmem:[%s0 + $0x9c] sm:$0xf]
  %v65 = vld [vmem:[%s0 + $0xa0] sm:$0xf]
  %v66 = vld [vmem:[%s0 + $0xa4] sm:$0xf]
  %v67 = vld [vmem:[%s0 + $0xa8] sm:$0xf]
  %v68 = vld [vmem:[%s0 + $0xac] sm:$0xf]
  %v69 = vld [vmem:[%s0 + $0xb0] sm:$0xf]
  %v70 = vld [vmem:[%s0 + $0xb4] sm:$0xf]
  %v71 = vld [vmem:[%s0 + $0xb8] sm:$0xf]
  %v72 = vld [vmem:[%s0 + $0xbc] sm:$0xf]
  %v73 = vld [vmem:[%s0 + $0xc0] sm:$0xf]
  %v74 = vld [vmem:[%s0 + $0xc4] sm:$0xf]
  %v75 = vld [vmem:[%s0 + $0xc8] sm:$0xf]
  %v76 = vld [vmem:[%s0 + $0xcc] sm:$0xf]
  %v77 = vld [vmem:[%s0 + $0xd0] sm:$0xf]
  %v78 = vld [vmem:[%s0 + $0xd4] sm:$0xf]
  %v79 = vld [vmem:[%s0 + $0xd8] sm:$0xf]
  %v80 = vld [vmem:[%s0 + $0xdc] sm:$0xf]
  %v81 = vld [vmem:[%s0 + $0xe0] sm:$0xf]
  %v82 = vld [vmem:[%s0 + $0xe4] sm:$0xf]
  %v83 = vld [vmem:[%s0 + $0xe8] sm:$0xf]
  %v84 = vld [vmem:[%s0 + $0xec] sm:$0xf]
  %v85 = vld [vmem:[%s0 + $0xf0] sm:$0xf]
  %v86 = vld [vmem:[%s0 + $0xf4] sm:$0xf]
  %v87 = vld [vmem:[%s0 + $0xf8] sm:$0xf]
  %v88 = vld [vmem:[%s0 + $0xfc] sm:$0xf]
  %v89 = vld [vmem:[%s1] sm:$0x3]
  %v90 = vld [vmem:[%s2] sm:$0x1]
  %v92 = vperm.slane %v90, 0
  %v158 = vunpack.c.l.b16 %v25
  %v159 = vunpack.c.l.b16 %v26
  %v160 = vunpack.c.l.b16 %v27
  %v161 = vunpack.c.l.b16 %v28
  %v162 = vunpack.c.l.b16 %v29
  %v163 = vunpack.c.l.b16 %v30
  %v164 = vunpack.c.l.b16 %v31
  %v165 = vunpack.c.l.b16 %v32
  %v166 = vunpack.c.l.b16 %v33
  %v167 = vunpack.c.l.b16 %v34
  %v168 = vunpack.c.l.b16 %v35
  %v169 = vunpack.c.l.b16 %v36
  %v170 = vunpack.c.l.b16 %v37
  %v171 = vunpack.c.l.b16 %v38
  %v172 = vunpack.c.l.b16 %v39
  %v173 = vunpack.c.l.b16 %v40
  %v174 = vunpack.c.l.b16 %v41
  %v175 = vunpack.c.l.b16 %v42
  %v176 = vunpack.c.l.b16 %v43
  %v177 = vunpack.c.l.b16 %v44
  %v178 = vunpack.c.l.b16 %v45
  %v179 = vunpack.c.l.b16 %v46
  %v180 = vunpack.c.l.b16 %v47
  %v181 = vunpack.c.l.b16 %v48
  %v182 = vunpack.c.l.b16 %v49
  %v183 = vunpack.c.l.b16 %v50
  %v184 = vunpack.c.l.b16 %v51
  %v185 = vunpack.c.l.b16 %v52
  %v186 = vunpack.c.l.b16 %v53
  %v187 = vunpack.c.l.b16 %v54
  %v188 = vunpack.c.l.b16 %v55
  %v189 = vunpack.c.l.b16 %v56
  %v190 = vunpack.c.l.b16 %v57
  %v191 = vunpack.c.l.b16 %v58
  %v192 = vunpack.c.l.b16 %v59
  %v193 = vunpack.c.l.b16 %v60
  %v194 = vunpack.c.l.b16 %v61
  %v195 = vunpack.c.l.b16 %v62
  %v196 = vunpack.c.l.b16 %v63
  %v197 = vunpack.c.l.b16 %v64
  %v198 = vunpack.c.l.b16 %v65
  %v199 = vunpack.c.l.b16 %v66
  %v200 = vunpack.c.l.b16 %v67
  %v201 = vunpack.c.l.b16 %v68
  %v202 = vunpack.c.l.b16 %v69
  %v203 = vunpack.c.l.b16 %v70
  %v204 = vunpack.c.l.b16 %v71
  %v205 = vunpack.c.l.b16 %v72
  %v206 = vunpack.c.l.b16 %v73
  %v207 = vunpack.c.l.b16 %v74
  %v208 = vunpack.c.l.b16 %v75
  %v209 = vunpack.c.l.b16 %v76
  %v210 = vunpack.c.l.b16 %v77
  %v211 = vunpack.c.l.b16 %v78
  %v212 = vunpack.c.l.b16 %v79
  %v213 = vunpack.c.l.b16 %v80
  %v214 = vunpack.c.l.b16 %v81
  %v215 = vunpack.c.l.b16 %v82
  %v216 = vunpack.c.l.b16 %v83
  %v217 = vunpack.c.l.b16 %v84
  %v218 = vunpack.c.l.b16 %v85
  %v219 = vunpack.c.l.b16 %v86
  %v220 = vunpack.c.l.b16 %v87
  %v221 = vunpack.c.l.b16 %v88
  %v222 = vpack.c.b16 %v159, %v158
  %v223 = vpack.c.b16 %v161, %v160
  %v224 = vpack.c.b16 %v163, %v162
  %v225 = vpack.c.b16 %v165, %v164
  %v226 = vpack.c.b16 %v167, %v166
  %v227 = vpack.c.b16 %v169, %v168
  %v228 = vpack.c.b16 %v171, %v170
  %v229 = vpack.c.b16 %v173, %v172
  %v230 = vpack.c.b16 %v175, %v174
  %v231 = vpack.c.b16 %v177, %v176
  %v232 = vpack.c.b16 %v179, %v178
  %v233 = vpack.c.b16 %v181, %v180
  %v234 = vpack.c.b16 %v183, %v182
  %v235 = vpack.c.b16 %v185, %v184
  %v236 = vpack.c.b16 %v187, %v186
  %v237 = vpack.c.b16 %v189, %v188
  %v238 = vpack.c.b16 %v191, %v190
  %v239 = vpack.c.b16 %v193, %v192
  %v240 = vpack.c.b16 %v195, %v194
  %v241 = vpack.c.b16 %v197, %v196
  %v242 = vpack.c.b16 %v199, %v198
  %v243 = vpack.c.b16 %v201, %v200
  %v244 = vpack.c.b16 %v203, %v202
  %v245 = vpack.c.b16 %v205, %v204
  %v246 = vpack.c.b16 %v207, %v206
  %v247 = vpack.c.b16 %v209, %v208
  %v248 = vpack.c.b16 %v211, %v210
  %v249 = vpack.c.b16 %v213, %v212
  %v250 = vpack.c.b16 %v215, %v214
  %v251 = vpack.c.b16 %v217, %v216
  %v252 = vpack.c.b16 %v219, %v218
  %v253 = vpack.c.b16 %v221, %v220
  %vm254 = vcmask 31744
  %v256 = vsel %vm254, %v222, 0
  %v259 = vsel %vm254, %v223, 0
  %v262 = vsel %vm254, %v224, 0
  %v265 = vsel %vm254, %v225, 0
  %v268 = vsel %vm254, %v226, 0
  %v271 = vsel %vm254, %v227, 0
  %v274 = vsel %vm254, %v228, 0
  %v277 = vsel %vm254, %v229, 0
  %v280 = vsel %vm254, %v230, 0
  %v283 = vsel %vm254, %v231, 0
  %v286 = vsel %vm254, %v232, 0
  %v289 = vsel %vm254, %v233, 0
  %v292 = vsel %vm254, %v234, 0
  %v295 = vsel %vm254, %v235, 0
  %v298 = vsel %vm254, %v236, 0
  %v301 = vsel %vm254, %v237, 0
  %v304 = vsel %vm254, %v238, 0
  %v307 = vsel %vm254, %v239, 0
  %v310 = vsel %vm254, %v240, 0
  %v313 = vsel %vm254, %v241, 0
  %v316 = vsel %vm254, %v242, 0
  %v319 = vsel %vm254, %v243, 0
  %v322 = vsel %vm254, %v244, 0
  %v325 = vsel %vm254, %v245, 0
  %v328 = vsel %vm254, %v246, 0
  %v331 = vsel %vm254, %v247, 0
  %v334 = vsel %vm254, %v248, 0
  %v337 = vsel %vm254, %v249, 0
  %v340 = vsel %vm254, %v250, 0
  %v343 = vsel %vm254, %v251, 0
  %v346 = vsel %vm254, %v252, 0
  %v349 = vsel %vm254, %v253, 0
  %vm351 = vcmask 1041408
  %v353 = vsel %vm351, %v89, 0
  %355 = vmatpush.bf16.msra.mxu0 0
  %356 = vmatpush.bf16.msra.mxu0 0
  %357 = vmatpush.bf16.msra.mxu0 0
  %358 = vmatpush.bf16.msra.mxu0 0
  %359 = vmatpush.bf16.msra.mxu0 0
  %360 = vmatpush.bf16.msra.mxu0 0
  %361 = vmatpush.bf16.msra.mxu0 0
  %362 = vmatpush.bf16.msra.mxu0 %v353
  %363 = vmatmul.bf16.gmra.mxu0 %v256
  %v364 = vpop.f32.mrf.mxu0
  %v365 = vadd.f32 %v92, %v364
  %v366 = vpop.f32.mrf.mxu0
  %v367 = vadd.f32 %v92, %v366
  %368 = vmatmul.bf16.gmra.mxu0 %v259
  %v369 = vpop.f32.mrf.mxu0
  %v370 = vadd.f32 %v92, %v369
  %v371 = vpop.f32.mrf.mxu0
  %v372 = vadd.f32 %v92, %v371
  %373 = vmatmul.bf16.gmra.mxu0 %v262
  %v374 = vpop.f32.mrf.mxu0
  %v375 = vadd.f32 %v92, %v374
  %v376 = vpop.f32.mrf.mxu0
  %v377 = vadd.f32 %v92, %v376
  %378 = vmatmul.bf16.gmra.mxu0 %v265
  %v379 = vpop.f32.mrf.mxu0
  %v380 = vadd.f32 %v92, %v379
  %v381 = vpop.f32.mrf.mxu0
  %v382 = vadd.f32 %v92, %v381
  %383 = vmatmul.bf16.gmra.mxu0 %v268
  %v384 = vpop.f32.mrf.mxu0
  %v385 = vadd.f32 %v92, %v384
  %v386 = vpop.f32.mrf.mxu0
  %v387 = vadd.f32 %v92, %v386
  %388 = vmatmul.bf16.gmra.mxu0 %v271
  %v389 = vpop.f32.mrf.mxu0
  %v390 = vadd.f32 %v92, %v389
  %v391 = vpop.f32.mrf.mxu0
  %v392 = vadd.f32 %v92, %v391
  %393 = vmatmul.bf16.gmra.mxu0 %v274
  %v394 = vpop.f32.mrf.mxu0
  %v395 = vadd.f32 %v92, %v394
  %v396 = vpop.f32.mrf.mxu0
  %v397 = vadd.f32 %v92, %v396
  %398 = vmatmul.bf16.gmra.mxu0 %v277
  %v399 = vpop.f32.mrf.mxu0
  %v400 = vadd.f32 %v92, %v399
  %v401 = vpop.f32.mrf.mxu0
  %v402 = vadd.f32 %v92, %v401
  %403 = vmatmul.bf16.gmra.mxu0 %v280
  %v404 = vpop.f32.mrf.mxu0
  %v405 = vadd.f32 %v92, %v404
  %v406 = vpop.f32.mrf.mxu0
  %v407 = vadd.f32 %v92, %v406
  %408 = vmatmul.bf16.gmra.mxu0 %v283
  %v409 = vpop.f32.mrf.mxu0
  %v410 = vadd.f32 %v92, %v409
  %v411 = vpop.f32.mrf.mxu0
  %v412 = vadd.f32 %v92, %v411
  %413 = vmatmul.bf16.gmra.mxu0 %v286
  %v414 = vpop.f32.mrf.mxu0
  %v415 = vadd.f32 %v92, %v414
  %v416 = vpop.f32.mrf.mxu0
  %v417 = vadd.f32 %v92, %v416
  %418 = vmatmul.bf16.gmra.mxu0 %v289
  %v419 = vpop.f32.mrf.mxu0
  %v420 = vadd.f32 %v92, %v419
  %v421 = vpop.f32.mrf.mxu0
  %v422 = vadd.f32 %v92, %v421
  %423 = vmatmul.bf16.gmra.mxu0 %v292
  %v424 = vpop.f32.mrf.mxu0
  %v425 = vadd.f32 %v92, %v424
  %v426 = vpop.f32.mrf.mxu0
  %v427 = vadd.f32 %v92, %v426
  %428 = vmatmul.bf16.gmra.mxu0 %v295
  %v429 = vpop.f32.mrf.mxu0
  %v430 = vadd.f32 %v92, %v429
  %v431 = vpop.f32.mrf.mxu0
  %v432 = vadd.f32 %v92, %v431
  %433 = vmatmul.bf16.gmra.mxu0 %v298
  %v434 = vpop.f32.mrf.mxu0
  %v435 = vadd.f32 %v92, %v434
  %v436 = vpop.f32.mrf.mxu0
  %v437 = vadd.f32 %v92, %v436
  %438 = vmatmul.bf16.gmra.mxu0 %v301
  %v439 = vpop.f32.mrf.mxu0
  %v440 = vadd.f32 %v92, %v439
  %v441 = vpop.f32.mrf.mxu0
  %v442 = vadd.f32 %v92, %v441
  %443 = vmatmul.bf16.gmra.mxu0 %v304
  %v444 = vpop.f32.mrf.mxu0
  %v445 = vadd.f32 %v92, %v444
  %v446 = vpop.f32.mrf.mxu0
  %v447 = vadd.f32 %v92, %v446
  %448 = vmatmul.bf16.gmra.mxu0 %v307
  %v449 = vpop.f32.mrf.mxu0
  %v450 = vadd.f32 %v92, %v449
  %v451 = vpop.f32.mrf.mxu0
  %v452 = vadd.f32 %v92, %v451
  %453 = vmatmul.bf16.gmra.mxu0 %v310
  %v454 = vpop.f32.mrf.mxu0
  %v455 = vadd.f32 %v92, %v454
  %v456 = vpop.f32.mrf.mxu0
  %v457 = vadd.f32 %v92, %v456
  %458 = vmatmul.bf16.gmra.mxu0 %v313
  %v459 = vpop.f32.mrf.mxu0
  %v460 = vadd.f32 %v92, %v459
  %v461 = vpop.f32.mrf.mxu0
  %v462 = vadd.f32 %v92, %v461
  %463 = vmatmul.bf16.gmra.mxu0 %v316
  %v464 = vpop.f32.mrf.mxu0
  %v465 = vadd.f32 %v92, %v464
  %v466 = vpop.f32.mrf.mxu0
  %v467 = vadd.f32 %v92, %v466
  %468 = vmatmul.bf16.gmra.mxu0 %v319
  %v469 = vpop.f32.mrf.mxu0
  %v470 = vadd.f32 %v92, %v469
  %v471 = vpop.f32.mrf.mxu0
  %v472 = vadd.f32 %v92, %v471
  %473 = vmatmul.bf16.gmra.mxu0 %v322
  %v474 = vpop.f32.mrf.mxu0
  %v475 = vadd.f32 %v92, %v474
  %v476 = vpop.f32.mrf.mxu0
  %v477 = vadd.f32 %v92, %v476
  %478 = vmatmul.bf16.gmra.mxu0 %v325
  %v479 = vpop.f32.mrf.mxu0
  %v480 = vadd.f32 %v92, %v479
  %v481 = vpop.f32.mrf.mxu0
  %v482 = vadd.f32 %v92, %v481
  %483 = vmatmul.bf16.gmra.mxu0 %v328
  %v484 = vpop.f32.mrf.mxu0
  %v485 = vadd.f32 %v92, %v484
  %v486 = vpop.f32.mrf.mxu0
  %v487 = vadd.f32 %v92, %v486
  %488 = vmatmul.bf16.gmra.mxu0 %v331
  %v489 = vpop.f32.mrf.mxu0
  %v490 = vadd.f32 %v92, %v489
  %v491 = vpop.f32.mrf.mxu0
  %v492 = vadd.f32 %v92, %v491
  %493 = vmatmul.bf16.gmra.mxu0 %v334
  %v494 = vpop.f32.mrf.mxu0
  %v495 = vadd.f32 %v92, %v494
  %v496 = vpop.f32.mrf.mxu0
  %v497 = vadd.f32 %v92, %v496
  %498 = vmatmul.bf16.gmra.mxu0 %v337
  %v499 = vpop.f32.mrf.mxu0
  %v500 = vadd.f32 %v92, %v499
  %v501 = vpop.f32.mrf.mxu0
  %v502 = vadd.f32 %v92, %v501
  %503 = vmatmul.bf16.gmra.mxu0 %v340
  %v504 = vpop.f32.mrf.mxu0
  %v505 = vadd.f32 %v92, %v504
  %v506 = vpop.f32.mrf.mxu0
  %v507 = vadd.f32 %v92, %v506
  %508 = vmatmul.bf16.gmra.mxu0 %v343
  %v509 = vpop.f32.mrf.mxu0
  %v510 = vadd.f32 %v92, %v509
  %v511 = vpop.f32.mrf.mxu0
  %v512 = vadd.f32 %v92, %v511
  %513 = vmatmul.bf16.gmra.mxu0 %v346
  %v514 = vpop.f32.mrf.mxu0
  %v515 = vadd.f32 %v92, %v514
  %v516 = vpop.f32.mrf.mxu0
  %v517 = vadd.f32 %v92, %v516
  %518 = vmatmul.bf16.gmra.mxu0 %v349
  %v519 = vpop.f32.mrf.mxu0
  %v520 = vadd.f32 %v92, %v519
  %v521 = vpop.f32.mrf.mxu0
  %v522 = vadd.f32 %v92, %v521
  %523 = vdwg.mxu0
  %524 = vst.msk [vmem:[%s3] sm:$0xff] %vm254, %v365
  %525 = vst.msk [vmem:[%s3 + $0x8] sm:$0xff] %vm254, %v367
  %526 = vst.msk [vmem:[%s3 + $0x10] sm:$0xff] %vm254, %v370
  %527 = vst.msk [vmem:[%s3 + $0x18] sm:$0xff] %vm254, %v372
  %528 = vst.msk [vmem:[%s3 + $0x20] sm:$0xff] %vm254, %v375
  %529 = vst.msk [vmem:[%s3 + $0x28] sm:$0xff] %vm254, %v377
  %530 = vst.msk [vmem:[%s3 + $0x30] sm:$0xff] %vm254, %v380
  %531 = vst.msk [vmem:[%s3 + $0x38] sm:$0xff] %vm254, %v382
  %532 = vst.msk [vmem:[%s3 + $0x40] sm:$0xff] %vm254, %v385
  %533 = vst.msk [vmem:[%s3 + $0x48] sm:$0xff] %vm254, %v387
  %534 = vst.msk [vmem:[%s3 + $0x50] sm:$0xff] %vm254, %v390
  %535 = vst.msk [vmem:[%s3 + $0x58] sm:$0xff] %vm254, %v392
  %536 = vst.msk [vmem:[%s3 + $0x60] sm:$0xff] %vm254, %v395
  %537 = vst.msk [vmem:[%s3 + $0x68] sm:$0xff] %vm254, %v397
  %538 = vst.msk [vmem:[%s3 + $0x70] sm:$0xff] %vm254, %v400
  %539 = vst.msk [vmem:[%s3 + $0x78] sm:$0xff] %vm254, %v402
  %540 = vst.msk [vmem:[%s3 + $0x80] sm:$0xff] %vm254, %v405
  %541 = vst.msk [vmem:[%s3 + $0x88] sm:$0xff] %vm254, %v407
  %542 = vst.msk [vmem:[%s3 + $0x90] sm:$0xff] %vm254, %v410
  %543 = vst.msk [vmem:[%s3 + $0x98] sm:$0xff] %vm254, %v412
  %544 = vst.msk [vmem:[%s3 + $0xa0] sm:$0xff] %vm254, %v415
  %545 = vst.msk [vmem:[%s3 + $0xa8] sm:$0xff] %vm254, %v417
  %546 = vst.msk [vmem:[%s3 + $0xb0] sm:$0xff] %vm254, %v420
  %547 = vst.msk [vmem:[%s3 + $0xb8] sm:$0xff] %vm254, %v422
  %548 = vst.msk [vmem:[%s3 + $0xc0] sm:$0xff] %vm254, %v425
  %549 = vst.msk [vmem:[%s3 + $0xc8] sm:$0xff] %vm254, %v427
  %550 = vst.msk [vmem:[%s3 + $0xd0] sm:$0xff] %vm254, %v430
  %551 = vst.msk [vmem:[%s3 + $0xd8] sm:$0xff] %vm254, %v432
  %552 = vst.msk [vmem:[%s3 + $0xe0] sm:$0xff] %vm254, %v435
  %553 = vst.msk [vmem:[%s3 + $0xe8] sm:$0xff] %vm254, %v437
  %554 = vst.msk [vmem:[%s3 + $0xf0] sm:$0xff] %vm254, %v440
  %555 = vst.msk [vmem:[%s3 + $0xf8] sm:$0xff] %vm254, %v442
  %556 = vst.msk [vmem:[%s3 + $0x100] sm:$0xff] %vm254, %v445
  %557 = vst.msk [vmem:[%s3 + $0x108] sm:$0xff] %vm254, %v447
  %558 = vst.msk [vmem:[%s3 + $0x110] sm:$0xff] %vm254, %v450
  %559 = vst.msk [vmem:[%s3 + $0x118] sm:$0xff] %vm254, %v452
  %560 = vst.msk [vmem:[%s3 + $0x120] sm:$0xff] %vm254, %v455
  %561 = vst.msk [vmem:[%s3 + $0x128] sm:$0xff] %vm254, %v457
  %562 = vst.msk [vmem:[%s3 + $0x130] sm:$0xff] %vm254, %v460
  %563 = vst.msk [vmem:[%s3 + $0x138] sm:$0xff] %vm254, %v462
  %564 = vst.msk [vmem:[%s3 + $0x140] sm:$0xff] %vm254, %v465
  %565 = vst.msk [vmem:[%s3 + $0x148] sm:$0xff] %vm254, %v467
  %566 = vst.msk [vmem:[%s3 + $0x150] sm:$0xff] %vm254, %v470
  %567 = vst.msk [vmem:[%s3 + $0x158] sm:$0xff] %vm254, %v472
  %568 = vst.msk [vmem:[%s3 + $0x160] sm:$0xff] %vm254, %v475
  %569 = vst.msk [vmem:[%s3 + $0x168] sm:$0xff] %vm254, %v477
  %570 = vst.msk [vmem:[%s3 + $0x170] sm:$0xff] %vm254, %v480
  %571 = vst.msk [vmem:[%s3 + $0x178] sm:$0xff] %vm254, %v482
  %572 = vst.msk [vmem:[%s3 + $0x180] sm:$0xff] %vm254, %v485
  %573 = vst.msk [vmem:[%s3 + $0x188] sm:$0xff] %vm254, %v487
  %574 = vst.msk [vmem:[%s3 + $0x190] sm:$0xff] %vm254, %v490
  %575 = vst.msk [vmem:[%s3 + $0x198] sm:$0xff] %vm254, %v492
  %576 = vst.msk [vmem:[%s3 + $0x1a0] sm:$0xff] %vm254, %v495
  %577 = vst.msk [vmem:[%s3 + $0x1a8] sm:$0xff] %vm254, %v497
  %578 = vst.msk [vmem:[%s3 + $0x1b0] sm:$0xff] %vm254, %v500
  %579 = vst.msk [vmem:[%s3 + $0x1b8] sm:$0xff] %vm254, %v502
  %580 = vst.msk [vmem:[%s3 + $0x1c0] sm:$0xff] %vm254, %v505
  %581 = vst.msk [vmem:[%s3 + $0x1c8] sm:$0xff] %vm254, %v507
  %582 = vst.msk [vmem:[%s3 + $0x1d0] sm:$0xff] %vm254, %v510
  %583 = vst.msk [vmem:[%s3 + $0x1d8] sm:$0xff] %vm254, %v512
  %584 = vst.msk [vmem:[%s3 + $0x1e0] sm:$0xff] %vm254, %v515
  %585 = vst.msk [vmem:[%s3 + $0x1e8] sm:$0xff] %vm254, %v517
  %586 = vst.msk [vmem:[%s3 + $0x1f0] sm:$0xff] %vm254, %v520
  %587 = vst.msk [vmem:[%s3 + $0x1f8] sm:$0xff] %vm254, %v522
  %v588 = vld [vmem:[%s4] sm:$0x1]
  %v589 = vsel %vm254, %v365, 0.0
  %v590 = vsel %vm254, %v367, 0.0
  %v591 = vadd.f32 %v589, %v590
  %v592 = vsel %vm254, %v370, 0.0
  %v593 = vadd.f32 %v591, %v592
  %v594 = vsel %vm254, %v372, 0.0
  %v595 = vadd.f32 %v593, %v594
  %v596 = vsel %vm254, %v375, 0.0
  %v597 = vadd.f32 %v595, %v596
  %v598 = vsel %vm254, %v377, 0.0
  %v599 = vadd.f32 %v597, %v598
  %v600 = vsel %vm254, %v380, 0.0
  %v601 = vadd.f32 %v599, %v600
  %v602 = vsel %vm254, %v382, 0.0
  %v603 = vadd.f32 %v601, %v602
  %v604 = vsel %vm254, %v385, 0.0
  %v605 = vadd.f32 %v603, %v604
  %v606 = vsel %vm254, %v387, 0.0
  %v607 = vadd.f32 %v605, %v606
  %v608 = vsel %vm254, %v390, 0.0
  %v609 = vadd.f32 %v607, %v608
  %v610 = vsel %vm254, %v392, 0.0
  %v611 = vadd.f32 %v609, %v610
  %v612 = vsel %vm254, %v395, 0.0
  %v613 = vadd.f32 %v611, %v612
  %v614 = vsel %vm254, %v397, 0.0
  %v615 = vadd.f32 %v613, %v614
  %v616 = vsel %vm254, %v400, 0.0
  %v617 = vadd.f32 %v615, %v616
  %v618 = vsel %vm254, %v402, 0.0
  %v619 = vadd.f32 %v617, %v618
  %v620 = vsel %vm254, %v405, 0.0
  %v621 = vadd.f32 %v619, %v620
  %v622 = vsel %vm254, %v407, 0.0
  %v623 = vadd.f32 %v621, %v622
  %v624 = vsel %vm254, %v410, 0.0
  %v625 = vadd.f32 %v623, %v624
  %v626 = vsel %vm254, %v412, 0.0
  %v627 = vadd.f32 %v625, %v626
  %v628 = vsel %vm254, %v415, 0.0
  %v629 = vadd.f32 %v627, %v628
  %v630 = vsel %vm254, %v417, 0.0
  %v631 = vadd.f32 %v629, %v630
  %v632 = vsel %vm254, %v420, 0.0
  %v633 = vadd.f32 %v631, %v632
  %v634 = vsel %vm254, %v422, 0.0
  %v635 = vadd.f32 %v633, %v634
  %v636 = vsel %vm254, %v425, 0.0
  %v637 = vadd.f32 %v635, %v636
  %v638 = vsel %vm254, %v427, 0.0
  %v639 = vadd.f32 %v637, %v638
  %v640 = vsel %vm254, %v430, 0.0
  %v641 = vadd.f32 %v639, %v640
  %v642 = vsel %vm254, %v432, 0.0
  %v643 = vadd.f32 %v641, %v642
  %v644 = vsel %vm254, %v435, 0.0
  %v645 = vadd.f32 %v643, %v644
  %v646 = vsel %vm254, %v437, 0.0
  %v647 = vadd.f32 %v645, %v646
  %v648 = vsel %vm254, %v440, 0.0
  %v649 = vadd.f32 %v647, %v648
  %v650 = vsel %vm254, %v442, 0.0
  %v651 = vadd.f32 %v649, %v650
  %v652 = vsel %vm254, %v445, 0.0
  %v653 = vadd.f32 %v651, %v652
  %v654 = vsel %vm254, %v447, 0.0
  %v655 = vadd.f32 %v653, %v654
  %v656 = vsel %vm254, %v450, 0.0
  %v657 = vadd.f32 %v655, %v656
  %v658 = vsel %vm254, %v452, 0.0
  %v659 = vadd.f32 %v657, %v658
  %v660 = vsel %vm254, %v455, 0.0
  %v661 = vadd.f32 %v659, %v660
  %v662 = vsel %vm254, %v457, 0.0
  %v663 = vadd.f32 %v661, %v662
  %v664 = vsel %vm254, %v460, 0.0
  %v665 = vadd.f32 %v663, %v664
  %v666 = vsel %vm254, %v462, 0.0
  %v667 = vadd.f32 %v665, %v666
  %v668 = vsel %vm254, %v465, 0.0
  %v669 = vadd.f32 %v667, %v668
  %v670 = vsel %vm254, %v467, 0.0
  %v671 = vadd.f32 %v669, %v670
  %v672 = vsel %vm254, %v470, 0.0
  %v673 = vadd.f32 %v671, %v672
  %v674 = vsel %vm254, %v472, 0.0
  %v675 = vadd.f32 %v673, %v674
  %v676 = vsel %vm254, %v475, 0.0
  %v677 = vadd.f32 %v675, %v676
  %v678 = vsel %vm254, %v477, 0.0
  %v679 = vadd.f32 %v677, %v678
  %v680 = vsel %vm254, %v480, 0.0
  %v681 = vadd.f32 %v679, %v680
  %v682 = vsel %vm254, %v482, 0.0
  %v683 = vadd.f32 %v681, %v682
  %v684 = vsel %vm254, %v485, 0.0
  %v685 = vadd.f32 %v683, %v684
  %v686 = vsel %vm254, %v487, 0.0
  %v687 = vadd.f32 %v685, %v686
  %v688 = vsel %vm254, %v490, 0.0
  %v689 = vadd.f32 %v687, %v688
  %v690 = vsel %vm254, %v492, 0.0
  %v691 = vadd.f32 %v689, %v690
  %v692 = vsel %vm254, %v495, 0.0
  %v693 = vadd.f32 %v691, %v692
  %v694 = vsel %vm254, %v497, 0.0
  %v695 = vadd.f32 %v693, %v694
  %v696 = vsel %vm254, %v500, 0.0
  %v697 = vadd.f32 %v695, %v696
  %v698 = vsel %vm254, %v502, 0.0
  %v699 = vadd.f32 %v697, %v698
  %v700 = vsel %vm254, %v505, 0.0
  %v701 = vadd.f32 %v699, %v700
  %v702 = vsel %vm254, %v507, 0.0
  %v703 = vadd.f32 %v701, %v702
  %v704 = vsel %vm254, %v510, 0.0
  %v705 = vadd.f32 %v703, %v704
  %v706 = vsel %vm254, %v512, 0.0
  %v707 = vadd.f32 %v705, %v706
  %v708 = vsel %vm254, %v515, 0.0
  %v709 = vadd.f32 %v707, %v708
  %v710 = vsel %vm254, %v517, 0.0
  %v711 = vadd.f32 %v709, %v710
  %v712 = vsel %vm254, %v520, 0.0
  %v713 = vadd.f32 %v711, %v712
  %v714 = vsel %vm254, %v522, 0.0
  %v715 = vadd.f32 %v713, %v714
  %v716 = vrot.slane %v715, 4
  %v717 = vadd.f32 %v715, %v716
  %v718 = vrot.slane %v717, 2
  %v719 = vadd.f32 %v717, %v718
  %v720 = vrot.slane %v719, 1
  %v721 = vadd.f32 %v719, %v720
  %v722 = vadd.f32 %v588, %v721
  %vm723 = vcmask 24576
  %724 = vst.msk [vmem:[%s4] sm:$0x1] %vm723, %v722
  %v725 = vld [vmem:[%s5] sm:$0x1]
  %v726 = vmul.f32 %v365, %v365
  %v727 = vmul.f32 %v367, %v367
  %v728 = vmul.f32 %v370, %v370
  %v729 = vmul.f32 %v372, %v372
  %v730 = vmul.f32 %v375, %v375
  %v731 = vmul.f32 %v377, %v377
  %v732 = vmul.f32 %v380, %v380
  %v733 = vmul.f32 %v382, %v382
  %v734 = vmul.f32 %v385, %v385
  %v735 = vmul.f32 %v387, %v387
  %v736 = vmul.f32 %v390, %v390
  %v737 = vmul.f32 %v392, %v392
  %v738 = vmul.f32 %v395, %v395
  %v739 = vmul.f32 %v397, %v397
  %v740 = vmul.f32 %v400, %v400
  %v741 = vmul.f32 %v402, %v402
  %v742 = vmul.f32 %v405, %v405
  %v743 = vmul.f32 %v407, %v407
  %v744 = vmul.f32 %v410, %v410
  %v745 = vmul.f32 %v412, %v412
  %v746 = vmul.f32 %v415, %v415
  %v747 = vmul.f32 %v417, %v417
  %v748 = vmul.f32 %v420, %v420
  %v749 = vmul.f32 %v422, %v422
  %v750 = vmul.f32 %v425, %v425
  %v751 = vmul.f32 %v427, %v427
  %v752 = vmul.f32 %v430, %v430
  %v753 = vmul.f32 %v432, %v432
  %v754 = vmul.f32 %v435, %v435
  %v755 = vmul.f32 %v437, %v437
  %v756 = vmul.f32 %v440, %v440
  %v757 = vmul.f32 %v442, %v442
  %v758 = vmul.f32 %v445, %v445
  %v759 = vmul.f32 %v447, %v447
  %v760 = vmul.f32 %v450, %v450
  %v761 = vmul.f32 %v452, %v452
  %v762 = vmul.f32 %v455, %v455
  %v763 = vmul.f32 %v457, %v457
  %v764 = vmul.f32 %v460, %v460
  %v765 = vmul.f32 %v462, %v462
  %v766 = vmul.f32 %v465, %v465
  %v767 = vmul.f32 %v467, %v467
  %v768 = vmul.f32 %v470, %v470
  %v769 = vmul.f32 %v472, %v472
  %v770 = vmul.f32 %v475, %v475
  %v771 = vmul.f32 %v477, %v477
  %v772 = vmul.f32 %v480, %v480
  %v773 = vmul.f32 %v482, %v482
  %v774 = vmul.f32 %v485, %v485
  %v775 = vmul.f32 %v487, %v487
  %v776 = vmul.f32 %v490, %v490
  %v777 = vmul.f32 %v492, %v492
  %v778 = vmul.f32 %v495, %v495
  %v779 = vmul.f32 %v497, %v497
  %v780 = vmul.f32 %v500, %v500
  %v781 = vmul.f32 %v502, %v502
  %v782 = vmul.f32 %v505, %v505
  %v783 = vmul.f32 %v507, %v507
  %v784 = vmul.f32 %v510, %v510
  %v785 = vmul.f32 %v512, %v512
  %v786 = vmul.f32 %v515, %v515
  %v787 = vmul.f32 %v517, %v517
  %v788 = vmul.f32 %v520, %v520
  %v789 = vmul.f32 %v522, %v522
  %v790 = vsel %vm254, %v726, 0.0
  %v791 = vsel %vm254, %v727, 0.0
  %v792 = vadd.f32 %v790, %v791
  %v793 = vsel %vm254, %v728, 0.0
  %v794 = vadd.f32 %v792, %v793
  %v795 = vsel %vm254, %v729, 0.0
  %v796 = vadd.f32 %v794, %v795
  %v797 = vsel %vm254, %v730, 0.0
  %v798 = vadd.f32 %v796, %v797
  %v799 = vsel %vm254, %v731, 0.0
  %v800 = vadd.f32 %v798, %v799
  %v801 = vsel %vm254, %v732, 0.0
  %v802 = vadd.f32 %v800, %v801
  %v803 = vsel %vm254, %v733, 0.0
  %v804 = vadd.f32 %v802, %v803
  %v805 = vsel %vm254, %v734, 0.0
  %v806 = vadd.f32 %v804, %v805
  %v807 = vsel %vm254, %v735, 0.0
  %v808 = vadd.f32 %v806, %v807
  %v809 = vsel %vm254, %v736, 0.0
  %v810 = vadd.f32 %v808, %v809
  %v811 = vsel %vm254, %v737, 0.0
  %v812 = vadd.f32 %v810, %v811
  %v813 = vsel %vm254, %v738, 0.0
  %v814 = vadd.f32 %v812, %v813
  %v815 = vsel %vm254, %v739, 0.0
  %v816 = vadd.f32 %v814, %v815
  %v817 = vsel %vm254, %v740, 0.0
  %v818 = vadd.f32 %v816, %v817
  %v819 = vsel %vm254, %v741, 0.0
  %v820 = vadd.f32 %v818, %v819
  %v821 = vsel %vm254, %v742, 0.0
  %v822 = vadd.f32 %v820, %v821
  %v823 = vsel %vm254, %v743, 0.0
  %v824 = vadd.f32 %v822, %v823
  %v825 = vsel %vm254, %v744, 0.0
  %v826 = vadd.f32 %v824, %v825
  %v827 = vsel %vm254, %v745, 0.0
  %v828 = vadd.f32 %v826, %v827
  %v829 = vsel %vm254, %v746, 0.0
  %v830 = vadd.f32 %v828, %v829
  %v831 = vsel %vm254, %v747, 0.0
  %v832 = vadd.f32 %v830, %v831
  %v833 = vsel %vm254, %v748, 0.0
  %v834 = vadd.f32 %v832, %v833
  %v835 = vsel %vm254, %v749, 0.0
  %v836 = vadd.f32 %v834, %v835
  %v837 = vsel %vm254, %v750, 0.0
  %v838 = vadd.f32 %v836, %v837
  %v839 = vsel %vm254, %v751, 0.0
  %v840 = vadd.f32 %v838, %v839
  %v841 = vsel %vm254, %v752, 0.0
  %v842 = vadd.f32 %v840, %v841
  %v843 = vsel %vm254, %v753, 0.0
  %v844 = vadd.f32 %v842, %v843
  %v845 = vsel %vm254, %v754, 0.0
  %v846 = vadd.f32 %v844, %v845
  %v847 = vsel %vm254, %v755, 0.0
  %v848 = vadd.f32 %v846, %v847
  %v849 = vsel %vm254, %v756, 0.0
  %v850 = vadd.f32 %v848, %v849
  %v851 = vsel %vm254, %v757, 0.0
  %v852 = vadd.f32 %v850, %v851
  %v853 = vsel %vm254, %v758, 0.0
  %v854 = vadd.f32 %v852, %v853
  %v855 = vsel %vm254, %v759, 0.0
  %v856 = vadd.f32 %v854, %v855
  %v857 = vsel %vm254, %v760, 0.0
  %v858 = vadd.f32 %v856, %v857
  %v859 = vsel %vm254, %v761, 0.0
  %v860 = vadd.f32 %v858, %v859
  %v861 = vsel %vm254, %v762, 0.0
  %v862 = vadd.f32 %v860, %v861
  %v863 = vsel %vm254, %v763, 0.0
  %v864 = vadd.f32 %v862, %v863
  %v865 = vsel %vm254, %v764, 0.0
  %v866 = vadd.f32 %v864, %v865
  %v867 = vsel %vm254, %v765, 0.0
  %v868 = vadd.f32 %v866, %v867
  %v869 = vsel %vm254, %v766, 0.0
  %v870 = vadd.f32 %v868, %v869
  %v871 = vsel %vm254, %v767, 0.0
  %v872 = vadd.f32 %v870, %v871
  %v873 = vsel %vm254, %v768, 0.0
  %v874 = vadd.f32 %v872, %v873
  %v875 = vsel %vm254, %v769, 0.0
  %v876 = vadd.f32 %v874, %v875
  %v877 = vsel %vm254, %v770, 0.0
  %v878 = vadd.f32 %v876, %v877
  %v879 = vsel %vm254, %v771, 0.0
  %v880 = vadd.f32 %v878, %v879
  %v881 = vsel %vm254, %v772, 0.0
  %v882 = vadd.f32 %v880, %v881
  %v883 = vsel %vm254, %v773, 0.0
  %v884 = vadd.f32 %v882, %v883
  %v885 = vsel %vm254, %v774, 0.0
  %v886 = vadd.f32 %v884, %v885
  %v887 = vsel %vm254, %v775, 0.0
  %v888 = vadd.f32 %v886, %v887
  %v889 = vsel %vm254, %v776, 0.0
  %v890 = vadd.f32 %v888, %v889
  %v891 = vsel %vm254, %v777, 0.0
  %v892 = vadd.f32 %v890, %v891
  %v893 = vsel %vm254, %v778, 0.0
  %v894 = vadd.f32 %v892, %v893
  %v895 = vsel %vm254, %v779, 0.0
  %v896 = vadd.f32 %v894, %v895
  %v897 = vsel %vm254, %v780, 0.0
  %v898 = vadd.f32 %v896, %v897
  %v899 = vsel %vm254, %v781, 0.0
  %v900 = vadd.f32 %v898, %v899
  %v901 = vsel %vm254, %v782, 0.0
  %v902 = vadd.f32 %v900, %v901
  %v903 = vsel %vm254, %v783, 0.0
  %v904 = vadd.f32 %v902, %v903
  %v905 = vsel %vm254, %v784, 0.0
  %v906 = vadd.f32 %v904, %v905
  %v907 = vsel %vm254, %v785, 0.0
  %v908 = vadd.f32 %v906, %v907
  %v909 = vsel %vm254, %v786, 0.0
  %v910 = vadd.f32 %v908, %v909
  %v911 = vsel %vm254, %v787, 0.0
  %v912 = vadd.f32 %v910, %v911
  %v913 = vsel %vm254, %v788, 0.0
  %v914 = vadd.f32 %v912, %v913
  %v915 = vsel %vm254, %v789, 0.0
  %v916 = vadd.f32 %v914, %v915
  %v917 = vrot.slane %v916, 4
  %v918 = vadd.f32 %v916, %v917
  %v919 = vrot.slane %v918, 2
  %v920 = vadd.f32 %v918, %v919
  %v921 = vrot.slane %v920, 1
  %v922 = vadd.f32 %v920, %v921
  %v923 = vadd.f32 %v725, %v922
  %924 = vst.msk [vmem:[%s5] sm:$0x1] %vm723, %v923
  // Predicated region
  $region18: #{upconv_block_forward.8} parent=0 // pred_check
    _
  $region19: #{upconv_block_forward.8} parent=0 // pred_check_branch
    %926 = sbr.rel (0) target = $region21
  $region20: #{upconv_block_forward.8} parent=0 // pred_region
    _
  $region21: #{upconv_block_forward.8} parent=0 // pred_fallthru
    _
  // Predicated region
  $region22: #{upconv_block_forward.8} parent=0 // pred_check
    _
  $region23: #{upconv_block_forward.8} parent=0 // pred_check_branch
    %928 = sbr.rel (0) target = $region25
  $region24: #{upconv_block_forward.8} parent=0 // pred_region
    _
  $region25: #{upconv_block_forward.8} parent=0 // pred_fallthru
    _
  // Predicated region
  $region26: #{upconv_block_forward.8} parent=0 // pred_check
    _
  $region27: #{upconv_block_forward.8} parent=0 // pred_check_branch
    %930 = sbr.rel (0) target = $region29
  $region28: #{upconv_block_forward.8} parent=0 // pred_region
    _
  $region29: #{upconv_block_forward.8} parent=0 // pred_fallthru
    _
  // Predicated region
  $region30: #{upconv_block_forward.8} parent=0 // pred_check
    _
  $region31: #{upconv_block_forward.8} parent=0 // pred_check_branch
    %932 = sbr.rel (0) target = $region33
  $region32: #{upconv_block_forward.8} parent=0 // pred_region
    _
  $region33: #{upconv_block_forward.8} parent=0 // pred_fallthru
    _
  // Predicated region
  $region34: #{upconv_block_forward.8} parent=0 // pred_check
    _
  $region35: #{upconv_block_forward.8} parent=0 // pred_check_branch
    %934 = sbr.rel (0) target = $region37
  $region36: #{upconv_block_forward.8} parent=0 // pred_region
    _
  $region37: #{upconv_block_forward.8} parent=0 // pred_fallthru
    _
  // Predicated region
  $region38: #{upconv_block_forward.8} parent=0 // pred_check
    _
  $region39: #{upconv_block_forward.8} parent=0 // pred_check_branch
    %936 = sbr.rel (0) target = $region41
  $region40: #{upconv_block_forward.8} parent=0 // pred_region
    _
  $region41: #{upconv_block_forward.8} parent=0 // pred_fallthru
    _

// kernel: tile.49
$region0: #{tile.49}
  %s0 = inlined_call_operand.vmem [shape: f32[4,4], index: 0, kind: input, shape index: {}]
  %s1 = inlined_call_operand.vmem [shape: f32[16], index: 1, kind: output, shape index: {}]
  $region1: #{tile.49} parent=0
    #allocation0 [shape = 'u8[4096]{0}', space=vmem, size = 0x1000, scoped, tag = 'scoped mem for output reshape']
    #allocation1 [shape = 'u8[4096]{0}', space=vmem, size = 0x1000, scoped, tag = 'scoped mem for input reshape']
    %s3 = ssub.s32 16, 1
    %v4 = vld [vmem:[%s0] sm:%s3]
    %5 = vst [vmem:[#allocation1] sm:%s3] %v4
    %v6 = vld [vmem:[#allocation1] sm:$0x1]
    %vm7 = vcmask 31744
    %8 = vst.msk [vmem:[#allocation0] sm:$0x1] %vm7, %v6
    %s9 = scalar_lea.vmem [#allocation1], 3
    %v10 = vld [vmem:[%s9] sm:$0x1]
    %11 = vrot.lane.b32.xlu0 %v10, 12
    %v12 = vpop.permute.xlu0 %11
    %vm13 = vcmask 130144
    %14 = vst.msk [vmem:[#allocation0] sm:$0x1] %vm13, %v12
    %s15 = scalar_lea.vmem [#allocation1], 2
    %v16 = vld [vmem:[%s15] sm:$0x1]
    %17 = vrot.lane.b32.xlu0 %v16, 8
    %v18 = vpop.permute.xlu0 %17
    %vm19 = vcmask 97344
    %20 = vst.msk [vmem:[#allocation0] sm:$0x1] %vm19, %v18
    %s21 = scalar_lea.vmem [#allocation1], 1
    %v22 = vld [vmem:[%s21] sm:$0x1]
    %23 = vrot.lane.b32.xlu0 %v22, 4
    %v24 = vpop.permute.xlu0 %23
    %vm25 = vcmask 64544
    %26 = vst.msk [vmem:[#allocation0] sm:$0x1] %vm25, %v24
    %s28 = ssub.s32 2, 1
    %v29 = vld [vmem:[#allocation0] sm:%s28]
    %s31 = ssub.s32 2, 1
    %32 = vst [vmem:[%s1] sm:%s31] %v29

// kernel: tile.50
$region0: #{tile.50}
  #allocation0 [shape = 's32[1]{0}', space=sflag, size = 0x4, scoped, tag = 'scoped memory for tile.50']
  %s0 = inlined_call_operand.vmem [shape: f32[16], index: 0, kind: input, shape index: {}]
  %s1 = inlined_call_operand.vmem [shape: f32[8,16], index: 1, kind: output, shape index: {}]
  // Predicated region
  $region2: #{tile.50} parent=0 // pred_check
    _
  $region3: #{tile.50} parent=0 // pred_check_branch
    %3 = sbr.rel (0) target = $region5
  $region4: #{tile.50} parent=0 // pred_region
    _
  $region5: #{tile.50} parent=0 // pred_fallthru
    _
  %v4 = vld [vmem:[%s0] ss:$0 sm:$0xff]
  %5 = vst [vmem:[%s1] sm:$0xff] %v4

// kernel: tile.51
$region0: #{tile.51}
  %s0 = inlined_call_operand.vmem [shape: f32[8,16], index: 0, kind: input, shape index: {}]
  %s1 = inlined_call_operand.vmem [shape: f32[1,128], index: 1, kind: output, shape index: {}]
  $region1: #{tile.51} parent=0
    #allocation0 [shape = 'u8[4096]{0}', space=vmem, size = 0x1000, scoped, tag = 'scoped mem for output reshape']
    %v2 = vld [vmem:[%s0] sm:$0x1]
    %vm3 = vcmask 130048
    %4 = vst.msk [vmem:[#allocation0] sm:$0x1] %vm3, %v2
    %s5 = scalar_lea.vmem %s0, 7
    %v6 = vld [vmem:[%s5] sm:$0x1]
    %7 = vrot.lane.b32.xlu0 %v6, 112
    %v8 = vpop.permute.xlu0 %7
    %vm9 = vcmask 1048448
    %10 = vst.msk [vmem:[#allocation0] sm:$0x1] %vm9, %v8
    %s11 = scalar_lea.vmem %s0, 6
    %v12 = vld [vmem:[%s11] sm:$0x1]
    %13 = vrot.lane.b32.xlu0 %v12, 96
    %v14 = vpop.permute.xlu0 %13
    %vm15 = vcmask 917248
    %16 = vst.msk [vmem:[#allocation0] sm:$0x1] %vm15, %v14
    %s17 = scalar_lea.vmem %s0, 5
    %v18 = vld [vmem:[%s17] sm:$0x1]
    %19 = vrot.lane.b32.xlu0 %v18, 80
    %v20 = vpop.permute.xlu0 %19
    %vm21 = vcmask 786048
    %22 = vst.msk [vmem:[#allocation0] sm:$0x1] %vm21, %v20
    %s23 = scalar_lea.vmem %s0, 4
    %v24 = vld [vmem:[%s23] sm:$0x1]
    %25 = vrot.lane.b32.xlu0 %v24, 64
    %v26 = vpop.permute.xlu0 %25
    %vm27 = vcmask 654848
    %28 = vst.msk [vmem:[#allocation0] sm:$0x1] %vm27, %v26
    %s29 = scalar_lea.vmem %s0, 3
    %v30 = vld [vmem:[%s29] sm:$0x1]
    %31 = vrot.lane.b32.xlu0 %v30, 48
    %v32 = vpop.permute.xlu0 %31
    %vm33 = vcmask 523648
    %34 = vst.msk [vmem:[#allocation0] sm:$0x1] %vm33, %v32
    %s35 = scalar_lea.vmem %s0, 2
    %v36 = vld [vmem:[%s35] sm:$0x1]
    %37 = vrot.lane.b32.xlu0 %v36, 32
    %v38 = vpop.permute.xlu0 %37
    %vm39 = vcmask 392448
    %40 = vst.msk [vmem:[#allocation0] sm:$0x1] %vm39, %v38
    %s41 = scalar_lea.vmem %s0, 1
    %v42 = vld [vmem:[%s41] sm:$0x1]
    %43 = vrot.lane.b32.xlu0 %v42, 16
    %v44 = vpop.permute.xlu0 %43
    %vm45 = vcmask 261248
    %46 = vst.msk [vmem:[#allocation0] sm:$0x1] %vm45, %v44
    %s48 = ssub.s32 2, 1
    %v49 = vld [vmem:[#allocation0] sm:%s48]
    %s51 = ssub.s32 2, 1
    %52 = vst [vmem:[%s1] sm:%s51] %v49

// kernel: upconv_block_forward.10
$region0: #{upconv_block_forward.10}
  #allocation0 [shape = 'u32[]', space=smem, size = 0x4, offset = 0x4, fixed_abs, tag = 'smem constant byte address 0x4 - core index']
  #allocation1 [shape = 'u32[72,128]{1,0:T(1,128)}', space=vmem, size = 0x9000, scoped, tag = 'internal scratch']
  %s0 = inlined_call_operand.vmem [shape: bf16[128,8], index: 0, kind: input, shape index: {}]
  %s1 = inlined_call_operand.vmem [shape: bf16[8,16], index: 1, kind: input, shape index: {}]
  %s2 = inlined_call_operand.vmem [shape: f32[1,16], index: 2, kind: input, shape index: {}]
  %s3 = inlined_call_operand.vmem [shape: f32[128,16], index: 3, kind: output, shape index: {0}]
  %s4 = inlined_call_operand.vmem [shape: f32[1,16], index: 4, kind: output, shape index: {1}]
  %s5 = inlined_call_operand.vmem [shape: f32[1,16], index: 5, kind: output, shape index: {2}]
  %6 = xla_tuple %s3, %s4, %s5
  %s7 = sld [smem:[#allocation0]]
  $region42: #{upconv_block_forward.10} parent=0
    _
  %s9 = ssub.s32 1, %s7
  %s10 = scalar_select 0, %s9, %s7
  // Predicated region
  $region2: #{upconv_block_forward.10} parent=0 // pred_check
    _
  $region3: #{upconv_block_forward.10} parent=0 // pred_check_branch
    %12 = sbr.rel (0) target = $region5
  $region4: #{upconv_block_forward.10} parent=0 // pred_region
    _
  $region5: #{upconv_block_forward.10} parent=0 // pred_fallthru
    _
  // Predicated region
  $region6: #{upconv_block_forward.10} parent=0 // pred_check
    _
  $region7: #{upconv_block_forward.10} parent=0 // pred_check_branch
    %14 = sbr.rel (0) target = $region9
  $region8: #{upconv_block_forward.10} parent=0 // pred_region
    _
  $region9: #{upconv_block_forward.10} parent=0 // pred_fallthru
    _
  // Predicated region
  $region10: #{upconv_block_forward.10} parent=0 // pred_check
    _
  $region11: #{upconv_block_forward.10} parent=0 // pred_check_branch
    %16 = sbr.rel (0) target = $region13
  $region12: #{upconv_block_forward.10} parent=0 // pred_region
    _
  $region13: #{upconv_block_forward.10} parent=0 // pred_fallthru
    _
  %p18 = scmp.eq.s32.totalorder 0, 0
  // Predicated region
  $region14: #{upconv_block_forward.10} parent=0 // pred_check
    %p19 = pneg %p18
  $region15: #{upconv_block_forward.10} parent=0 // pred_check_branch
    %21 = sbr.rel (%p19) target = $region17
  $region16: #{upconv_block_forward.10} parent=0 // pred_region
    %vm22 = vcmask 122880
    %23 = vst.msk [vmem:[%s4] sm:$0x1] %vm22, 0.0
    %24 = vst.msk [vmem:[%s5] sm:$0x1] %vm22, 0.0
  $region17: #{upconv_block_forward.10} parent=0 // pred_fallthru
    _
  %v25 = vld [vmem:[%s0] sm:$0xf]
  %v26 = vld [vmem:[%s0 + $0x4] sm:$0xf]
  %v27 = vld [vmem:[%s0 + $0x8] sm:$0xf]
  %v28 = vld [vmem:[%s0 + $0xc] sm:$0xf]
  %v29 = vld [vmem:[%s0 + $0x10] sm:$0xf]
  %v30 = vld [vmem:[%s0 + $0x14] sm:$0xf]
  %v31 = vld [vmem:[%s0 + $0x18] sm:$0xf]
  %v32 = vld [vmem:[%s0 + $0x1c] sm:$0xf]
  %v33 = vld [vmem:[%s0 + $0x20] sm:$0xf]
  %v34 = vld [vmem:[%s0 + $0x24] sm:$0xf]
  %v35 = vld [vmem:[%s0 + $0x28] sm:$0xf]
  %v36 = vld [vmem:[%s0 + $0x2c] sm:$0xf]
  %v37 = vld [vmem:[%s0 + $0x30] sm:$0xf]
  %v38 = vld [vmem:[%s0 + $0x34] sm:$0xf]
  %v39 = vld [vmem:[%s0 + $0x38] sm:$0xf]
  %v40 = vld [vmem:[%s0 + $0x3c] sm:$0xf]
  %v41 = vld [vmem:[%s1] sm:$0xf]
  %v42 = vld [vmem:[%s2] sm:$0x1]
  %v44 = vperm.slane %v42, 0
  %v62 = vunpack.c.l.b16 %v25
  %v63 = vunpack.c.l.b16 %v26
  %v64 = vunpack.c.l.b16 %v27
  %v65 = vunpack.c.l.b16 %v28
  %v66 = vunpack.c.l.b16 %v29
  %v67 = vunpack.c.l.b16 %v30
  %v68 = vunpack.c.l.b16 %v31
  %v69 = vunpack.c.l.b16 %v32
  %v70 = vunpack.c.l.b16 %v33
  %v71 = vunpack.c.l.b16 %v34
  %v72 = vunpack.c.l.b16 %v35
  %v73 = vunpack.c.l.b16 %v36
  %v74 = vunpack.c.l.b16 %v37
  %v75 = vunpack.c.l.b16 %v38
  %v76 = vunpack.c.l.b16 %v39
  %v77 = vunpack.c.l.b16 %v40
  %v78 = vpack.c.b16 %v63, %v62
  %v79 = vpack.c.b16 %v65, %v64
  %v80 = vpack.c.b16 %v67, %v66
  %v81 = vpack.c.b16 %v69, %v68
  %v82 = vpack.c.b16 %v71, %v70
  %v83 = vpack.c.b16 %v73, %v72
  %v84 = vpack.c.b16 %v75, %v74
  %v85 = vpack.c.b16 %v77, %v76
  %vm86 = vcmask 64512
  %v88 = vsel %vm86, %v78, 0
  %v91 = vsel %vm86, %v79, 0
  %v94 = vsel %vm86, %v80, 0
  %v97 = vsel %vm86, %v81, 0
  %v100 = vsel %vm86, %v82, 0
  %v103 = vsel %vm86, %v83, 0
  %v106 = vsel %vm86, %v84, 0
  %v109 = vsel %vm86, %v85, 0
  %vm111 = vcmask 1043456
  %v113 = vsel %vm111, %v41, 0
  %115 = vmatpush.bf16.msra.mxu0 0
  %116 = vmatpush.bf16.msra.mxu0 0
  %117 = vmatpush.bf16.msra.mxu0 0
  %118 = vmatpush.bf16.msra.mxu0 0
  %119 = vmatpush.bf16.msra.mxu0 0
  %120 = vmatpush.bf16.msra.mxu0 0
  %121 = vmatpush.bf16.msra.mxu0 0
  %122 = vmatpush.bf16.msra.mxu0 %v113
  %123 = vmatmul.bf16.gmra.mxu0 %v88
  %v124 = vpop.f32.mrf.mxu0
  %v125 = vadd.f32 %v44, %v124
  %v126 = vpop.f32.mrf.mxu0
  %v127 = vadd.f32 %v44, %v126
  %128 = vmatmul.bf16.gmra.mxu0 %v91
  %v129 = vpop.f32.mrf.mxu0
  %v130 = vadd.f32 %v44, %v129
  %v131 = vpop.f32.mrf.mxu0
  %v132 = vadd.f32 %v44, %v131
  %133 = vmatmul.bf16.gmra.mxu0 %v94
  %v134 = vpop.f32.mrf.mxu0
  %v135 = vadd.f32 %v44, %v134
  %v136 = vpop.f32.mrf.mxu0
  %v137 = vadd.f32 %v44, %v136
  %138 = vmatmul.bf16.gmra.mxu0 %v97
  %v139 = vpop.f32.mrf.mxu0
  %v140 = vadd.f32 %v44, %v139
  %v141 = vpop.f32.mrf.mxu0
  %v142 = vadd.f32 %v44, %v141
  %143 = vmatmul.bf16.gmra.mxu0 %v100
  %v144 = vpop.f32.mrf.mxu0
  %v145 = vadd.f32 %v44, %v144
  %v146 = vpop.f32.mrf.mxu0
  %v147 = vadd.f32 %v44, %v146
  %148 = vmatmul.bf16.gmra.mxu0 %v103
  %v149 = vpop.f32.mrf.mxu0
  %v150 = vadd.f32 %v44, %v149
  %v151 = vpop.f32.mrf.mxu0
  %v152 = vadd.f32 %v44, %v151
  %153 = vmatmul.bf16.gmra.mxu0 %v106
  %v154 = vpop.f32.mrf.mxu0
  %v155 = vadd.f32 %v44, %v154
  %v156 = vpop.f32.mrf.mxu0
  %v157 = vadd.f32 %v44, %v156
  %158 = vmatmul.bf16.gmra.mxu0 %v109
  %v159 = vpop.f32.mrf.mxu0
  %v160 = vadd.f32 %v44, %v159
  %v161 = vpop.f32.mrf.mxu0
  %v162 = vadd.f32 %v44, %v161
  %163 = vdwg.mxu0
  %vm164 = vcmask 130048
  %165 = vst.msk [vmem:[%s3] sm:$0xff] %vm164, %v125
  %166 = vst.msk [vmem:[%s3 + $0x8] sm:$0xff] %vm164, %v127
  %167 = vst.msk [vmem:[%s3 + $0x10] sm:$0xff] %vm164, %v130
  %168 = vst.msk [vmem:[%s3 + $0x18] sm:$0xff] %vm164, %v132
  %169 = vst.msk [vmem:[%s3 + $0x20] sm:$0xff] %vm164, %v135
  %170 = vst.msk [vmem:[%s3 + $0x28] sm:$0xff] %vm164, %v137
  %171 = vst.msk [vmem:[%s3 + $0x30] sm:$0xff] %vm164, %v140
  %172 = vst.msk [vmem:[%s3 + $0x38] sm:$0xff] %vm164, %v142
  %173 = vst.msk [vmem:[%s3 + $0x40] sm:$0xff] %vm164, %v145
  %174 = vst.msk [vmem:[%s3 + $0x48] sm:$0xff] %vm164, %v147
  %175 = vst.msk [vmem:[%s3 + $0x50] sm:$0xff] %vm164, %v150
  %176 = vst.msk [vmem:[%s3 + $0x58] sm:$0xff] %vm164, %v152
  %177 = vst.msk [vmem:[%s3 + $0x60] sm:$0xff] %vm164, %v155
  %178 = vst.msk [vmem:[%s3 + $0x68] sm:$0xff] %vm164, %v157
  %179 = vst.msk [vmem:[%s3 + $0x70] sm:$0xff] %vm164, %v160
  %180 = vst.msk [vmem:[%s3 + $0x78] sm:$0xff] %vm164, %v162
  %v181 = vld [vmem:[%s4] sm:$0x1]
  %v182 = vsel %vm164, %v125, 0.0
  %v183 = vsel %vm164, %v127, 0.0
  %v184 = vadd.f32 %v182, %v183
  %v185 = vsel %vm164, %v130, 0.0
  %v186 = vadd.f32 %v184, %v185
  %v187 = vsel %vm164, %v132, 0.0
  %v188 = vadd.f32 %v186, %v187
  %v189 = vsel %vm164, %v135, 0.0
  %v190 = vadd.f32 %v188, %v189
  %v191 = vsel %vm164, %v137, 0.0
  %v192 = vadd.f32 %v190, %v191
  %v193 = vsel %vm164, %v140, 0.0
  %v194 = vadd.f32 %v192, %v193
  %v195 = vsel %vm164, %v142, 0.0
  %v196 = vadd.f32 %v194, %v195
  %v197 = vsel %vm164, %v145, 0.0
  %v198 = vadd.f32 %v196, %v197
  %v199 = vsel %vm164, %v147, 0.0
  %v200 = vadd.f32 %v198, %v199
  %v201 = vsel %vm164, %v150, 0.0
  %v202 = vadd.f32 %v200, %v201
  %v203 = vsel %vm164, %v152, 0.0
  %v204 = vadd.f32 %v202, %v203
  %v205 = vsel %vm164, %v155, 0.0
  %v206 = vadd.f32 %v204, %v205
  %v207 = vsel %vm164, %v157, 0.0
  %v208 = vadd.f32 %v206, %v207
  %v209 = vsel %vm164, %v160, 0.0
  %v210 = vadd.f32 %v208, %v209
  %v211 = vsel %vm164, %v162, 0.0
  %v212 = vadd.f32 %v210, %v211
  %v213 = vrot.slane %v212, 4
  %v214 = vadd.f32 %v212, %v213
  %v215 = vrot.slane %v214, 2
  %v216 = vadd.f32 %v214, %v215
  %v217 = vrot.slane %v216, 1
  %v218 = vadd.f32 %v216, %v217
  %v219 = vadd.f32 %v181, %v218
  %vm220 = vcmask 122880
  %221 = vst.msk [vmem:[%s4] sm:$0x1] %vm220, %v219
  %v222 = vld [vmem:[%s5] sm:$0x1]
  %v223 = vmul.f32 %v125, %v125
  %v224 = vmul.f32 %v127, %v127
  %v225 = vmul.f32 %v130, %v130
  %v226 = vmul.f32 %v132, %v132
  %v227 = vmul.f32 %v135, %v135
  %v228 = vmul.f32 %v137, %v137
  %v229 = vmul.f32 %v140, %v140
  %v230 = vmul.f32 %v142, %v142
  %v231 = vmul.f32 %v145, %v145
  %v232 = vmul.f32 %v147, %v147
  %v233 = vmul.f32 %v150, %v150
  %v234 = vmul.f32 %v152, %v152
  %v235 = vmul.f32 %v155, %v155
  %v236 = vmul.f32 %v157, %v157
  %v237 = vmul.f32 %v160, %v160
  %v238 = vmul.f32 %v162, %v162
  %v239 = vsel %vm164, %v223, 0.0
  %v240 = vsel %vm164, %v224, 0.0
  %v241 = vadd.f32 %v239, %v240
  %v242 = vsel %vm164, %v225, 0.0
  %v243 = vadd.f32 %v241, %v242
  %v244 = vsel %vm164, %v226, 0.0
  %v245 = vadd.f32 %v243, %v244
  %v246 = vsel %vm164, %v227, 0.0
  %v247 = vadd.f32 %v245, %v246
  %v248 = vsel %vm164, %v228, 0.0
  %v249 = vadd.f32 %v247, %v248
  %v250 = vsel %vm164, %v229, 0.0
  %v251 = vadd.f32 %v249, %v250
  %v252 = vsel %vm164, %v230, 0.0
  %v253 = vadd.f32 %v251, %v252
  %v254 = vsel %vm164, %v231, 0.0
  %v255 = vadd.f32 %v253, %v254
  %v256 = vsel %vm164, %v232, 0.0
  %v257 = vadd.f32 %v255, %v256
  %v258 = vsel %vm164, %v233, 0.0
  %v259 = vadd.f32 %v257, %v258
  %v260 = vsel %vm164, %v234, 0.0
  %v261 = vadd.f32 %v259, %v260
  %v262 = vsel %vm164, %v235, 0.0
  %v263 = vadd.f32 %v261, %v262
  %v264 = vsel %vm164, %v236, 0.0
  %v265 = vadd.f32 %v263, %v264
  %v266 = vsel %vm164, %v237, 0.0
  %v267 = vadd.f32 %v265, %v266
  %v268 = vsel %vm164, %v238, 0.0
  %v269 = vadd.f32 %v267, %v268
  %v270 = vrot.slane %v269, 4
  %v271 = vadd.f32 %v269, %v270
  %v272 = vrot.slane %v271, 2
  %v273 = vadd.f32 %v271, %v272
  %v274 = vrot.slane %v273, 1
  %v275 = vadd.f32 %v273, %v274
  %v276 = vadd.f32 %v222, %v275
  %277 = vst.msk [vmem:[%s5] sm:$0x1] %vm220, %v276
  // Predicated region
  $region18: #{upconv_block_forward.10} parent=0 // pred_check
    _
  $region19: #{upconv_block_forward.10} parent=0 // pred_check_branch
    %279 = sbr.rel (0) target = $region21
  $region20: #{upconv_block_forward.10} parent=0 // pred_region
    _
  $region21: #{upconv_block_forward.10} parent=0 // pred_fallthru
    _
  // Predicated region
  $region22: #{upconv_block_forward.10} parent=0 // pred_check
    _
  $region23: #{upconv_block_forward.10} parent=0 // pred_check_branch
    %281 = sbr.rel (0) target = $region25
  $region24: #{upconv_block_forward.10} parent=0 // pred_region
    _
  $region25: #{upconv_block_forward.10} parent=0 // pred_fallthru
    _
  // Predicated region
  $region26: #{upconv_block_forward.10} parent=0 // pred_check
    _
  $region27: #{upconv_block_forward.10} parent=0 // pred_check_branch
    %283 = sbr.rel (0) target = $region29
  $region28: #{upconv_block_forward.10} parent=0 // pred_region
    _
  $region29: #{upconv_block_forward.10} parent=0 // pred_fallthru
    _
  // Predicated region
  $region30: #{upconv_block_forward.10} parent=0 // pred_check
    _
  $region31: #{upconv_block_forward.10} parent=0 // pred_check_branch
    %285 = sbr.rel (0) target = $region33
  $region32: #{upconv_block_forward.10} parent=0 // pred_region
    _
  $region33: #{upconv_block_forward.10} parent=0 // pred_fallthru
    _
  // Predicated region
  $region34: #{upconv_block_forward.10} parent=0 // pred_check
    _
  $region35: #{upconv_block_forward.10} parent=0 // pred_check_branch
    %287 = sbr.rel (0) target = $region37
  $region36: #{upconv_block_forward.10} parent=0 // pred_region
    _
  $region37: #{upconv_block_forward.10} parent=0 // pred_fallthru
    _
  // Predicated region
  $region38: #{upconv_block_forward.10} parent=0 // pred_check
    _
  $region39: #{upconv_block_forward.10} parent=0 // pred_check_branch
    %289 = sbr.rel (0) target = $region41
  $region40: #{upconv_block_forward.10} parent=0 // pred_region
    _
  $region41: #{upconv_block_forward.10} parent=0 // pred_fallthru
    _

// kernel: upconv_block_forward.13
$region0: #{upconv_block_forward.13}
  #allocation0 [shape = 'u32[]', space=smem, size = 0x4, offset = 0x4, fixed_abs, tag = 'smem constant byte address 0x4 - core index']
  #allocation1 [shape = 'u32[72,128]{1,0:T(1,128)}', space=vmem, size = 0x9000, scoped, tag = 'internal scratch']
  %s0 = inlined_call_operand.vmem [shape: f32[16,128], index: 0, kind: input, shape index: {}]
  %s1 = inlined_call_operand.vmem [shape: f32[1,128], index: 1, kind: input, shape index: {}]
  %s2 = inlined_call_operand.vmem [shape: f32[1,128], index: 2, kind: input, shape index: {}]
  %s3 = inlined_call_operand.vmem [shape: f32[16,128], index: 3, kind: output, shape index: {}]
  %s4 = sld [smem:[#allocation0]]
  $region22: #{upconv_block_forward.13} parent=0
    _
  %s6 = ssub.s32 1, %s4
  %s7 = scalar_select 0, %s6, %s4
  // Predicated region
  $region2: #{upconv_block_forward.13} parent=0 // pred_check
    _
  $region3: #{upconv_block_forward.13} parent=0 // pred_check_branch
    %9 = sbr.rel (0) target = $region5
  $region4: #{upconv_block_forward.13} parent=0 // pred_region
    _
  $region5: #{upconv_block_forward.13} parent=0 // pred_fallthru
    _
  // Predicated region
  $region6: #{upconv_block_forward.13} parent=0 // pred_check
    _
  $region7: #{upconv_block_forward.13} parent=0 // pred_check_branch
    %11 = sbr.rel (0) target = $region9
  $region8: #{upconv_block_forward.13} parent=0 // pred_region
    _
  $region9: #{upconv_block_forward.13} parent=0 // pred_fallthru
    _
  // Predicated region
  $region10: #{upconv_block_forward.13} parent=0 // pred_check
    _
  $region11: #{upconv_block_forward.13} parent=0 // pred_check_branch
    %13 = sbr.rel (0) target = $region13
  $region12: #{upconv_block_forward.13} parent=0 // pred_region
    _
  $region13: #{upconv_block_forward.13} parent=0 // pred_fallthru
    _
  %v14 = vld [vmem:[%s0] sm:$0xff]
  %v15 = vld [vmem:[%s0 + $0x8] sm:$0xff]
  %v16 = vld [vmem:[%s1] sm:$0x1]
  %v18 = vperm.slane %v16, 0
  %v20 = vmul.f32 %v14, %v18
  %v21 = vmul.f32 %v15, %v18
  %v22 = vld [vmem:[%s2] sm:$0x1]
  %v24 = vperm.slane %v22, 0
  %v26 = vadd.f32 %v20, %v24
  %v27 = vadd.f32 %v21, %v24
  %v28 = vmax.f32 %v26, 0.0
  %v29 = vmax.f32 %v27, 0.0
  %30 = vst [vmem:[%s3] sm:$0xff] %v28
  %31 = vst [vmem:[%s3 + $0x8] sm:$0xff] %v29
  // Predicated region
  $region14: #{upconv_block_forward.13} parent=0 // pred_check
    _
  $region15: #{upconv_block_forward.13} parent=0 // pred_check_branch
    %33 = sbr.rel (0) target = $region17
  $region16: #{upconv_block_forward.13} parent=0 // pred_region
    _
  $region17: #{upconv_block_forward.13} parent=0 // pred_fallthru
    _
  // Predicated region
  $region18: #{upconv_block_forward.13} parent=0 // pred_check
    _
  $region19: #{upconv_block_forward.13} parent=0 // pred_check_branch
    %35 = sbr.rel (0) target = $region21
  $region20: #{upconv_block_forward.13} parent=0 // pred_region
    _
  $region21: #{upconv_block_forward.13} parent=0 // pred_fallthru
    _

// kernel: upconv_block_forward.12
$region0: #{upconv_block_forward.12}
  #allocation0 [shape = 'u32[]', space=smem, size = 0x4, offset = 0x4, fixed_abs, tag = 'smem constant byte address 0x4 - core index']
  #allocation1 [shape = 'u32[72,128]{1,0:T(1,128)}', space=vmem, size = 0x9000, scoped, tag = 'internal scratch']
  %s0 = inlined_call_operand.vmem [shape: bf16[2,18,18,8], index: 0, kind: input, shape index: {}]
  %s1 = inlined_call_operand.vmem [shape: bf16[9,8,4], index: 1, kind: input, shape index: {}]
  %s2 = inlined_call_operand.vmem [shape: f32[1,4], index: 2, kind: input, shape index: {}]
  %s3 = inlined_call_operand.vmem [shape: f32[2,256,4], index: 3, kind: output, shape index: {0}]
  %s4 = inlined_call_operand.vmem [shape: f32[1,4], index: 4, kind: output, shape index: {1}]
  %s5 = inlined_call_operand.vmem [shape: f32[1,4], index: 5, kind: output, shape index: {2}]
  %6 = xla_tuple %s3, %s4, %s5
  %s7 = sld [smem:[#allocation0]]
  $region65: #{upconv_block_forward.12} parent=0
    _
  %s9 = ssub.s32 1, %s7
  %s10 = scalar_select 0, %s9, %s7
  loop: start=0, step=1, limit=4
  $region2: #{upconv_block_forward.12} parent=0 // loop_pre_header
    _
  $region3: #{upconv_block_forward.12} parent=0 // loop_header
    %s12 = sphi 0, %s16
    %p13 = scmp.ge.s32.totalorder %s12, 4
    %s22 = sphi 0, %s24
    %s25 = sphi 0, %s22
    %s26 = sphi 0, %s25
    %s42 = sphi 0, %s26
    %s46 = sphi 0, %s46
    %s48 = sphi 0, %s46
    %s49 = sphi 0, %s48
    %s63 = sphi 0, %s49
    %s67 = sphi 0, %s67
    %s69 = sphi 0, %s67
    %s70 = sphi 0, %s69
    %s84 = sphi 0, %s70
    %s90 = sphi 0, %s92
    %s93 = sphi 0, %s90
    %s94 = sphi 0, %s93
    %s110 = sphi 0, %s94
    %s114 = sphi 0, %s114
    %s116 = sphi 0, %s114
    %s117 = sphi 0, %s116
    %s131 = sphi 0, %s117
    %s135 = sphi 0, %s135
    %s137 = sphi 0, %s135
    %s138 = sphi 0, %s137
    %s152 = sphi 0, %s138
  $region4: #{upconv_block_forward.12} parent=0 // loop_header_branch
    %15 = sbr.rel (%p13) target = $region8
  $region5: #{upconv_block_forward.12} parent=0 // loop_body
    %s17 = ssub.s32 %s12, 1
    %s18 = ssub.s32 %s12, 2
    %s19 = sadd.s32 %s12, 1
    %s20 = ssub.s32 %s12, %s19
    %p21 = scmp.eq.s32.totalorder %s20, 0
    %s23 = sadd.s32 %s22, 1
    %s24 = scalar_select %p21, %s22, %s23
    %p27 = pneg %p21
    %p28 = scmp.eq.s32.totalorder %s12, 1
    %p29 = por %p27, %p28
    %p30 = scmp.ne.s32.totalorder %s22, %s25
    %p31 = scmp.eq.s32.totalorder %s12, 0
    %p32 = por %p30, %p31
    %p33 = scmp.ne.s32.totalorder %s22, %s25
    %p34 = scmp.eq.s32.totalorder %s17, 1
    %p35 = por %p33, %p34
    %p36 = scmp.ne.s32.totalorder %s25, %s26
    %p37 = scmp.eq.s32.totalorder %s17, 0
    %p38 = por %p36, %p37
    %p39 = scmp.ne.s32.totalorder %s25, %s26
    %p40 = scmp.eq.s32.totalorder %s18, 1
    %p41 = por %p39, %p40
    %p43 = scmp.ne.s32.totalorder %s26, %s42
    %p44 = scmp.eq.s32.totalorder %s18, 0
    %p45 = por %p43, %p44
    %s47 = sadd.s32 %s46, 1
    %p50 = scmp.eq.s32.totalorder %s12, 1
    %p51 = scmp.ne.s32.totalorder %s46, %s48
    %p52 = scmp.eq.s32.totalorder %s12, 0
    %p53 = por %p51, %p52
    %p54 = scmp.ne.s32.totalorder %s46, %s48
    %p55 = scmp.eq.s32.totalorder %s17, 1
    %p56 = por %p54, %p55
    %p57 = scmp.ne.s32.totalorder %s48, %s49
    %p58 = scmp.eq.s32.totalorder %s17, 0
    %p59 = por %p57, %p58
    %p60 = scmp.ne.s32.totalorder %s48, %s49
    %p61 = scmp.eq.s32.totalorder %s18, 1
    %p62 = por %p60, %p61
    %p64 = scmp.ne.s32.totalorder %s49, %s63
    %p65 = scmp.eq.s32.totalorder %s18, 0
    %p66 = por %p64, %p65
    %s68 = sadd.s32 %s67, 1
    %p71 = scmp.eq.s32.totalorder %s12, 1
    %p72 = scmp.ne.s32.totalorder %s67, %s69
    %p73 = scmp.eq.s32.totalorder %s12, 0
    %p74 = por %p72, %p73
    %p75 = scmp.ne.s32.totalorder %s67, %s69
    %p76 = scmp.eq.s32.totalorder %s17, 1
    %p77 = por %p75, %p76
    %p78 = scmp.ne.s32.totalorder %s69, %s70
    %p79 = scmp.eq.s32.totalorder %s17, 0
    %p80 = por %p78, %p79
    %p81 = scmp.ne.s32.totalorder %s69, %s70
    %p82 = scmp.eq.s32.totalorder %s18, 1
    %p83 = por %p81, %p82
    %p85 = scmp.ne.s32.totalorder %s70, %s84
    %p86 = scmp.eq.s32.totalorder %s18, 0
    %p87 = por %p85, %p86
    %s88 = ssub.s32 %s12, %s19
    %p89 = scmp.eq.s32.totalorder %s88, 0
    %s91 = sadd.s32 %s90, 1
    %s92 = scalar_select %p89, %s90, %s91
    %p95 = pneg %p89
    %p96 = scmp.eq.s32.totalorder %s12, 1
    %p97 = por %p95, %p96
    %p98 = scmp.ne.s32.totalorder %s90, %s93
    %p99 = scmp.eq.s32.totalorder %s12, 0
    %p100 = por %p98, %p99
    %p101 = scmp.ne.s32.totalorder %s90, %s93
    %p102 = scmp.eq.s32.totalorder %s17, 1
    %p103 = por %p101, %p102
    %p104 = scmp.ne.s32.totalorder %s93, %s94
    %p105 = scmp.eq.s32.totalorder %s17, 0
    %p106 = por %p104, %p105
    %p107 = scmp.ne.s32.totalorder %s93, %s94
    %p108 = scmp.eq.s32.totalorder %s18, 1
    %p109 = por %p107, %p108
    %p111 = scmp.ne.s32.totalorder %s94, %s110
    %p112 = scmp.eq.s32.totalorder %s18, 0
    %p113 = por %p111, %p112
    %s115 = sadd.s32 %s114, 1
    %p118 = scmp.eq.s32.totalorder %s12, 1
    %p119 = scmp.ne.s32.totalorder %s114, %s116
    %p120 = scmp.eq.s32.totalorder %s12, 0
    %p121 = por %p119, %p120
    %p122 = scmp.ne.s32.totalorder %s114, %s116
    %p123 = scmp.eq.s32.totalorder %s17, 1
    %p124 = por %p122, %p123
    %p125 = scmp.ne.s32.totalorder %s116, %s117
    %p126 = scmp.eq.s32.totalorder %s17, 0
    %p127 = por %p125, %p126
    %p128 = scmp.ne.s32.totalorder %s116, %s117
    %p129 = scmp.eq.s32.totalorder %s18, 1
    %p130 = por %p128, %p129
    %p132 = scmp.ne.s32.totalorder %s117, %s131
    %p133 = scmp.eq.s32.totalorder %s18, 0
    %p134 = por %p132, %p133
    %s136 = sadd.s32 %s135, 1
    %p139 = scmp.eq.s32.totalorder %s12, 1
    %p140 = scmp.ne.s32.totalorder %s135, %s137
    %p141 = scmp.eq.s32.totalorder %s12, 0
    %p142 = por %p140, %p141
    %p143 = scmp.ne.s32.totalorder %s135, %s137
    %p144 = scmp.eq.s32.totalorder %s17, 1
    %p145 = por %p143, %p144
    %p146 = scmp.ne.s32.totalorder %s137, %s138
    %p147 = scmp.eq.s32.totalorder %s17, 0
    %p148 = por %p146, %p147
    %p149 = scmp.ne.s32.totalorder %s137, %s138
    %p150 = scmp.eq.s32.totalorder %s18, 1
    %p151 = por %p149, %p150
    %p153 = scmp.ne.s32.totalorder %s138, %s152
    %p154 = scmp.eq.s32.totalorder %s18, 0
    %p155 = por %p153, %p154
    %p156 = scmp.le.s32.totalorder 1, %s12
    %p157 = scmp.lt.s32.totalorder %s12, 3
    %p158 = pnand %p156, %p157
    %p159 = pneg %p158
    // Predicated region
    $region9: #{upconv_block_forward.12} parent=5 // pred_check
      _
    $region10: #{upconv_block_forward.12} parent=5 // pred_check_branch
      %161 = sbr.rel (%p158) target = $region12
    $region11: #{upconv_block_forward.12} parent=5 // pred_region
      %s162 = ssub.s32 %s12, 1
      // Predicated region
      $region13: #{upconv_block_forward.12} parent=11 // pred_check
        %p163 = pneg %p59
      $region14: #{upconv_block_forward.12} parent=11 // pred_check_branch
        %165 = sbr.rel (%p163) target = $region16
      $region15: #{upconv_block_forward.12} parent=11 // pred_region
        _
      $region16: #{upconv_block_forward.12} parent=11 // pred_fallthru
        _
      // Predicated region
      $region17: #{upconv_block_forward.12} parent=11 // pred_check
        %p166 = pneg %p80
      $region18: #{upconv_block_forward.12} parent=11 // pred_check_branch
        %168 = sbr.rel (%p166) target = $region20
      $region19: #{upconv_block_forward.12} parent=11 // pred_region
        _
      $region20: #{upconv_block_forward.12} parent=11 // pred_fallthru
        _
    $region12: #{upconv_block_forward.12} parent=5 // pred_fallthru
      _
    %p169 = scmp.lt.s32.totalorder %s12, 2
    // Predicated region
    $region21: #{upconv_block_forward.12} parent=5 // pred_check
      %p170 = pneg %p169
    $region22: #{upconv_block_forward.12} parent=5 // pred_check_branch
      %172 = sbr.rel (%p170) target = $region24
    $region23: #{upconv_block_forward.12} parent=5 // pred_region
      // Predicated region
      $region25: #{upconv_block_forward.12} parent=23 // pred_check
        %p173 = pneg %p32
      $region26: #{upconv_block_forward.12} parent=23 // pred_check_branch
        %175 = sbr.rel (%p173) target = $region28
      $region27: #{upconv_block_forward.12} parent=23 // pred_region
        %p176 = scmp.lt.s32.totalorder %s12, 1
        %s177 = scalar_select %p176, %s12, 1
        %s178 = smul.addr %s177, 54
        %s179 = smul.addr %s178, 4
        %s180 = scalar_lea.vmem %s0, %s179
      $region28: #{upconv_block_forward.12} parent=23 // pred_fallthru
        _
    $region24: #{upconv_block_forward.12} parent=5 // pred_fallthru
      _
    %p181 = scmp.le.s32.totalorder 1, %s12
    %p182 = scmp.lt.s32.totalorder %s12, 3
    %p183 = pnand %p181, %p182
    %p184 = pneg %p183
    // Predicated region
    $region29: #{upconv_block_forward.12} parent=5 // pred_check
      _
    $region30: #{upconv_block_forward.12} parent=5 // pred_check_branch
      %186 = sbr.rel (%p183) target = $region32
    $region31: #{upconv_block_forward.12} parent=5 // pred_region
      %s187 = ssub.s32 %s12, 1
      %p188 = scmp.lt.s32.totalorder %s17, 1
      %s189 = scalar_select %p188, %s17, 1
      %s190 = smul.addr %s189, 54
      %s191 = smul.addr %s190, 4
      %s192 = scalar_lea.vmem %s0, %s191
      %p193 = pneg %p38
      %p194 = pneg %p35
      %p195 = pneg %p59
      %p196 = pneg %p56
      %p197 = pneg %p80
      %p198 = pneg %p77
      %p199 = pneg %p106
      %p200 = pneg %p103
      %p201 = scmp.lt.s32.totalorder %s17, 1
      %s202 = scalar_select %p201, %s17, 1
      %s203 = smul.addr %s202, 32
      %s204 = smul.addr %s203, 8
      %s205 = scalar_lea.vmem %s3, %s204
      %p206 = pneg %p127
      %p207 = pneg %p124
      %p208 = pneg %p148
      %p209 = pneg %p145
      %p210 = scmp.lt.s32.totalorder %s17, 1
      %s211 = scalar_select %p210, %s17, 1
      %s212 = smul.addr %s211, 54
      %s213 = smul.addr %s212, 4
      %s214 = scalar_lea.vmem %s0, %s213
      %p215 = scmp.lt.s32.totalorder %s17, 1
      %s216 = scalar_select %p215, %s17, 1
      %s217 = smul.addr %s216, 32
      %s218 = smul.addr %s217, 8
      %s219 = scalar_lea.vmem %s3, %s218
      %p221 = scmp.eq.s32.totalorder %s17, 0
      // Predicated region
      $region33: #{upconv_block_forward.12} parent=31 // pred_check
        %p222 = pneg %p221
      $region34: #{upconv_block_forward.12} parent=31 // pred_check_branch
        %224 = sbr.rel (%p222) target = $region36
      $region35: #{upconv_block_forward.12} parent=31 // pred_region
        %vm225 = vcmask 24576
        %226 = vst.msk [vmem:[%s4] sm:$0x1] %vm225, 0.0
        %227 = vst.msk [vmem:[%s5] sm:$0x1] %vm225, 0.0
      $region36: #{upconv_block_forward.12} parent=31 // pred_fallthru
        _
      %v228 = vld [vmem:[%s214] sm:$0xf]
      %v229 = vld [vmem:[%s214 + $0x4] sm:$0xf]
      %v230 = vld [vmem:[%s214 + $0x8] sm:$0x1]
      %v231 = vld [vmem:[%s214 + $0xc] sm:$0xf]
      %v232 = vld [vmem:[%s214 + $0x10] sm:$0xf]
      %v233 = vld [vmem:[%s214 + $0x14] sm:$0x1]
      %v234 = vld [vmem:[%s214 + $0x18] sm:$0xf]
      %v235 = vld [vmem:[%s214 + $0x1c] sm:$0xf]
      %v236 = vld [vmem:[%s214 + $0x20] sm:$0x1]
      %v237 = vld [vmem:[%s214 + $0x24] sm:$0xf]
      %v238 = vld [vmem:[%s214 + $0x28] sm:$0xf]
      %v239 = vld [vmem:[%s214 + $0x2c] sm:$0x1]
      %v240 = vld [vmem:[%s214 + $0x30] sm:$0xf]
      %v241 = vld [vmem:[%s214 + $0x34] sm:$0xf]
      %v242 = vld [vmem:[%s214 + $0x38] sm:$0x1]
      %v243 = vld [vmem:[%s214 + $0x3c] sm:$0xf]
      %v244 = vld [vmem:[%s214 + $0x40] sm:$0xf]
      %v245 = vld [vmem:[%s214 + $0x44] sm:$0x1]
      %v246 = vld [vmem:[%s214 + $0x48] sm:$0xf]
      %v247 = vld [vmem:[%s214 + $0x4c] sm:$0xf]
      %v248 = vld [vmem:[%s214 + $0x50] sm:$0x1]
      %v249 = vld [vmem:[%s214 + $0x54] sm:$0xf]
      %v250 = vld [vmem:[%s214 + $0x58] sm:$0xf]
      %v251 = vld [vmem:[%s214 + $0x5c] sm:$0x1]
      %v252 = vld [vmem:[%s214 + $0x60] sm:$0xf]
      %v253 = vld [vmem:[%s214 + $0x64] sm:$0xf]
      %v254 = vld [vmem:[%s214 + $0x68] sm:$0x1]
      %v255 = vld [vmem:[%s214 + $0x6c] sm:$0xf]
      %v256 = vld [vmem:[%s214 + $0x70] sm:$0xf]
      %v257 = vld [vmem:[%s214 + $0x74] sm:$0x1]
      %v258 = vld [vmem:[%s214 + $0x78] sm:$0xf]
      %v259 = vld [vmem:[%s214 + $0x7c] sm:$0xf]
      %v260 = vld [vmem:[%s214 + $0x80] sm:$0x1]
      %v261 = vld [vmem:[%s214 + $0x84] sm:$0xf]
      %v262 = vld [vmem:[%s214 + $0x88] sm:$0xf]
      %v263 = vld [vmem:[%s214 + $0x8c] sm:$0x1]
      %v264 = vld [vmem:[%s214 + $0x90] sm:$0xf]
      %v265 = vld [vmem:[%s214 + $0x94] sm:$0xf]
      %v266 = vld [vmem:[%s214 + $0x98] sm:$0x1]
      %v267 = vld [vmem:[%s214 + $0x9c] sm:$0xf]
      %v268 = vld [vmem:[%s214 + $0xa0] sm:$0xf]
      %v269 = vld [vmem:[%s214 + $0xa4] sm:$0x1]
      %v270 = vld [vmem:[%s214 + $0xa8] sm:$0xf]
      %v271 = vld [vmem:[%s214 + $0xac] sm:$0xf]
      %v272 = vld [vmem:[%s214 + $0xb0] sm:$0x1]
      %v273 = vld [vmem:[%s214 + $0xb4] sm:$0xf]
      %v274 = vld [vmem:[%s214 + $0xb8] sm:$0xf]
      %v275 = vld [vmem:[%s214 + $0xbc] sm:$0x1]
      %v276 = vld [vmem:[%s214 + $0xc0] sm:$0xf]
      %v277 = vld [vmem:[%s214 + $0xc4] sm:$0xf]
      %v278 = vld [vmem:[%s214 + $0xc8] sm:$0x1]
      %v279 = vld [vmem:[%s214 + $0xcc] sm:$0xf]
      %v280 = vld [vmem:[%s214 + $0xd0] sm:$0xf]
      %v281 = vld [vmem:[%s214 + $0xd4] sm:$0x1]
      %v282 = vld [vmem:[%s1] sm:$0xf]
      %vm283 = vsmask.f32 3328
      %vm284 = vsmask.f32 7440
      %vm285 = vmor %vm283, %vm284
      %v287 = vshrl.u32 %v228, 16
      %v289 = vrot.slane %v287, 4
      %v290 = vshll.u32 %v228, 16
      %v292 = vrot.slane %v290, 5
      %v293 = vor.u32 %v289, %v292
      %v294 = vrot.slane %v293, 4
      %v296 = vshll.u32 %v229, 16
      %v298 = vrot.slane %v296, 5
      %v299 = vsel %vm285, %v294, %v298
      %v300 = vshrl.u32 %v229, 16
      %v302 = vrot.slane %v300, 4
      %v303 = vor.u32 %v302, %v298
      %v304 = vrot.slane %v303, 4
      %v306 = vshll.u32 %v230, 16
      %v308 = vrot.slane %v306, 5
      %v309 = vsel %vm285, %v304, %v308
      %v311 = vshrl.u32 %v231, 16
      %v313 = vrot.slane %v311, 4
      %v314 = vshll.u32 %v231, 16
      %v316 = vrot.slane %v314, 5
      %v317 = vor.u32 %v313, %v316
      %v318 = vrot.slane %v317, 4
      %v320 = vshll.u32 %v232, 16
      %v322 = vrot.slane %v320, 5
      %v323 = vsel %vm285, %v318, %v322
      %v324 = vshrl.u32 %v232, 16
      %v326 = vrot.slane %v324, 4
      %v327 = vor.u32 %v326, %v322
      %v328 = vrot.slane %v327, 4
      %v330 = vshll.u32 %v233, 16
      %v332 = vrot.slane %v330, 5
      %v333 = vsel %vm285, %v328, %v332
      %v335 = vshrl.u32 %v234, 16
      %v337 = vrot.slane %v335, 4
      %v338 = vshll.u32 %v234, 16
      %v340 = vrot.slane %v338, 5
      %v341 = vor.u32 %v337, %v340
      %v342 = vrot.slane %v341, 4
      %v344 = vshll.u32 %v235, 16
      %v346 = vrot.slane %v344, 5
      %v347 = vsel %vm285, %v342, %v346
      %v348 = vshrl.u32 %v235, 16
      %v350 = vrot.slane %v348, 4
      %v351 = vor.u32 %v350, %v346
      %v352 = vrot.slane %v351, 4
      %v354 = vshll.u32 %v236, 16
      %v356 = vrot.slane %v354, 5
      %v357 = vsel %vm285, %v352, %v356
      %v359 = vshrl.u32 %v237, 16
      %v361 = vrot.slane %v359, 4
      %v362 = vshll.u32 %v237, 16
      %v364 = vrot.slane %v362, 5
      %v365 = vor.u32 %v361, %v364
      %v366 = vrot.slane %v365, 4
      %v368 = vshll.u32 %v238, 16
      %v370 = vrot.slane %v368, 5
      %v371 = vsel %vm285, %v366, %v370
      %v372 = vshrl.u32 %v238, 16
      %v374 = vrot.slane %v372, 4
      %v375 = vor.u32 %v374, %v370
      %v376 = vrot.slane %v375, 4
      %v378 = vshll.u32 %v239, 16
      %v380 = vrot.slane %v378, 5
      %v381 = vsel %vm285, %v376, %v380
      %v383 = vshrl.u32 %v240, 16
      %v385 = vrot.slane %v383, 4
      %v386 = vshll.u32 %v240, 16
      %v388 = vrot.slane %v386, 5
      %v389 = vor.u32 %v385, %v388
      %v390 = vrot.slane %v389, 4
      %v392 = vshll.u32 %v241, 16
      %v394 = vrot.slane %v392, 5
      %v395 = vsel %vm285, %v390, %v394
      %v396 = vshrl.u32 %v241, 16
      %v398 = vrot.slane %v396, 4
      %v399 = vor.u32 %v398, %v394
      %v400 = vrot.slane %v399, 4
      %v402 = vshll.u32 %v242, 16
      %v404 = vrot.slane %v402, 5
      %v405 = vsel %vm285, %v400, %v404
      %v407 = vshrl.u32 %v243, 16
      %v409 = vrot.slane %v407, 4
      %v410 = vshll.u32 %v243, 16
      %v412 = vrot.slane %v410, 5
      %v413 = vor.u32 %v409, %v412
      %v414 = vrot.slane %v413, 4
      %v416 = vshll.u32 %v244, 16
      %v418 = vrot.slane %v416, 5
      %v419 = vsel %vm285, %v414, %v418
      %v420 = vshrl.u32 %v244, 16
      %v422 = vrot.slane %v420, 4
      %v423 = vor.u32 %v422, %v418
      %v424 = vrot.slane %v423, 4
      %v426 = vshll.u32 %v245, 16
      %v428 = vrot.slane %v426, 5
      %v429 = vsel %vm285, %v424, %v428
      %v431 = vshrl.u32 %v246, 16
      %v433 = vrot.slane %v431, 4
      %v434 = vshll.u32 %v246, 16
      %v436 = vrot.slane %v434, 5
      %v437 = vor.u32 %v433, %v436
      %v438 = vrot.slane %v437, 4
      %v440 = vshll.u32 %v247, 16
      %v442 = vrot.slane %v440, 5
      %v443 = vsel %vm285, %v438, %v442
      %v444 = vshrl.u32 %v247, 16
      %v446 = vrot.slane %v444, 4
      %v447 = vor.u32 %v446, %v442
      %v448 = vrot.slane %v447, 4
      %v450 = vshll.u32 %v248, 16
      %v452 = vrot.slane %v450, 5
      %v453 = vsel %vm285, %v448, %v452
      %v455 = vshrl.u32 %v249, 16
      %v457 = vrot.slane %v455, 4
      %v458 = vshll.u32 %v249, 16
      %v460 = vrot.slane %v458, 5
      %v461 = vor.u32 %v457, %v460
      %v462 = vrot.slane %v461, 4
      %v464 = vshll.u32 %v250, 16
      %v466 = vrot.slane %v464, 5
      %v467 = vsel %vm285, %v462, %v466
      %v468 = vshrl.u32 %v250, 16
      %v470 = vrot.slane %v468, 4
      %v471 = vor.u32 %v470, %v466
      %v472 = vrot.slane %v471, 4
      %v474 = vshll.u32 %v251, 16
      %v476 = vrot.slane %v474, 5
      %v477 = vsel %vm285, %v472, %v476
      %v479 = vshrl.u32 %v252, 16
      %v481 = vrot.slane %v479, 4
      %v482 = vshll.u32 %v252, 16
      %v484 = vrot.slane %v482, 5
      %v485 = vor.u32 %v481, %v484
      %v486 = vrot.slane %v485, 4
      %v488 = vshll.u32 %v253, 16
      %v490 = vrot.slane %v488, 5
      %v491 = vsel %vm285, %v486, %v490
      %v492 = vshrl.u32 %v253, 16
      %v494 = vrot.slane %v492, 4
      %v495 = vor.u32 %v494, %v490
      %v496 = vrot.slane %v495, 4
      %v498 = vshll.u32 %v254, 16
      %v500 = vrot.slane %v498, 5
      %v501 = vsel %vm285, %v496, %v500
      %v503 = vshrl.u32 %v255, 16
      %v505 = vrot.slane %v503, 4
      %v506 = vshll.u32 %v255, 16
      %v508 = vrot.slane %v506, 5
      %v509 = vor.u32 %v505, %v508
      %v510 = vrot.slane %v509, 4
      %v512 = vshll.u32 %v256, 16
      %v514 = vrot.slane %v512, 5
      %v515 = vsel %vm285, %v510, %v514
      %v516 = vshrl.u32 %v256, 16
      %v518 = vrot.slane %v516, 4
      %v519 = vor.u32 %v518, %v514
      %v520 = vrot.slane %v519, 4
      %v522 = vshll.u32 %v257, 16
      %v524 = vrot.slane %v522, 5
      %v525 = vsel %vm285, %v520, %v524
      %v527 = vshrl.u32 %v258, 16
      %v529 = vrot.slane %v527, 4
      %v530 = vshll.u32 %v258, 16
      %v532 = vrot.slane %v530, 5
      %v533 = vor.u32 %v529, %v532
      %v534 = vrot.slane %v533, 4
      %v536 = vshll.u32 %v259, 16
      %v538 = vrot.slane %v536, 5
      %v539 = vsel %vm285, %v534, %v538
      %v540 = vshrl.u32 %v259, 16
      %v542 = vrot.slane %v540, 4
      %v543 = vor.u32 %v542, %v538
      %v544 = vrot.slane %v543, 4
      %v546 = vshll.u32 %v260, 16
      %v548 = vrot.slane %v546, 5
      %v549 = vsel %vm285, %v544, %v548
      %v551 = vshrl.u32 %v261, 16
      %v553 = vrot.slane %v551, 4
      %v554 = vshll.u32 %v261, 16
      %v556 = vrot.slane %v554, 5
      %v557 = vor.u32 %v553, %v556
      %v558 = vrot.slane %v557, 4
      %v560 = vshll.u32 %v262, 16
      %v562 = vrot.slane %v560, 5
      %v563 = vsel %vm285, %v558, %v562
      %v564 = vshrl.u32 %v262, 16
      %v566 = vrot.slane %v564, 4
      %v567 = vor.u32 %v566, %v562
      %v568 = vrot.slane %v567, 4
      %v570 = vshll.u32 %v263, 16
      %v572 = vrot.slane %v570, 5
      %v573 = vsel %vm285, %v568, %v572
      %v575 = vshrl.u32 %v264, 16
      %v577 = vrot.slane %v575, 4
      %v578 = vshll.u32 %v264, 16
      %v580 = vrot.slane %v578, 5
      %v581 = vor.u32 %v577, %v580
      %v582 = vrot.slane %v581, 4
      %v584 = vshll.u32 %v265, 16
      %v586 = vrot.slane %v584, 5
      %v587 = vsel %vm285, %v582, %v586
      %v588 = vshrl.u32 %v265, 16
      %v590 = vrot.slane %v588, 4
      %v591 = vor.u32 %v590, %v586
      %v592 = vrot.slane %v591, 4
      %v594 = vshll.u32 %v266, 16
      %v596 = vrot.slane %v594, 5
      %v597 = vsel %vm285, %v592, %v596
      %v599 = vshrl.u32 %v267, 16
      %v601 = vrot.slane %v599, 4
      %v602 = vshll.u32 %v267, 16
      %v604 = vrot.slane %v602, 5
      %v605 = vor.u32 %v601, %v604
      %v606 = vrot.slane %v605, 4
      %v608 = vshll.u32 %v268, 16
      %v610 = vrot.slane %v608, 5
      %v611 = vsel %vm285, %v606, %v610
      %v612 = vshrl.u32 %v268, 16
      %v614 = vrot.slane %v612, 4
      %v615 = vor.u32 %v614, %v610
      %v616 = vrot.slane %v615, 4
      %v618 = vshll.u32 %v269, 16
      %v620 = vrot.slane %v618, 5
      %v621 = vsel %vm285, %v616, %v620
      %v623 = vshrl.u32 %v270, 16
      %v625 = vrot.slane %v623, 4
      %v626 = vshll.u32 %v270, 16
      %v628 = vrot.slane %v626, 5
      %v629 = vor.u32 %v625, %v628
      %v630 = vrot.slane %v629, 4
      %v632 = vshll.u32 %v271, 16
      %v634 = vrot.slane %v632, 5
      %v635 = vsel %vm285, %v630, %v634
      %v636 = vshrl.u32 %v271, 16
      %v638 = vrot.slane %v636, 4
      %v639 = vor.u32 %v638, %v634
      %v640 = vrot.slane %v639, 4
      %v642 = vshll.u32 %v272, 16
      %v644 = vrot.slane %v642, 5
      %v645 = vsel %vm285, %v640, %v644
      %v647 = vshrl.u32 %v273, 16
      %v649 = vrot.slane %v647, 4
      %v650 = vshll.u32 %v273, 16
      %v652 = vrot.slane %v650, 5
      %v653 = vor.u32 %v649, %v652
      %v654 = vrot.slane %v653, 4
      %v656 = vshll.u32 %v274, 16
      %v658 = vrot.slane %v656, 5
      %v659 = vsel %vm285, %v654, %v658
      %v660 = vshrl.u32 %v274, 16
      %v662 = vrot.slane %v660, 4
      %v663 = vor.u32 %v662, %v658
      %v664 = vrot.slane %v663, 4
      %v666 = vshll.u32 %v275, 16
      %v668 = vrot.slane %v666, 5
      %v669 = vsel %vm285, %v664, %v668
      %s670 = scalar_lea.vmem %s1, 4
      %v671 = vld [vmem:[%s670] sm:$0xf]
      %v672 = vunpack.c.l.b16 %v299
      %v673 = vunpack.c.l.b16 %v309
      %v674 = vunpack.c.l.b16 %v323
      %v675 = vunpack.c.l.b16 %v333
      %v676 = vunpack.c.l.b16 %v347
      %v677 = vunpack.c.l.b16 %v357
      %v678 = vunpack.c.l.b16 %v371
      %v679 = vunpack.c.l.b16 %v381
      %v680 = vunpack.c.l.b16 %v395
      %v681 = vunpack.c.l.b16 %v405
      %v682 = vunpack.c.l.b16 %v419
      %v683 = vunpack.c.l.b16 %v429
      %v684 = vunpack.c.l.b16 %v443
      %v685 = vunpack.c.l.b16 %v453
      %v686 = vunpack.c.l.b16 %v467
      %v687 = vunpack.c.l.b16 %v477
      %v688 = vunpack.c.l.b16 %v491
      %v689 = vunpack.c.l.b16 %v501
      %v690 = vunpack.c.l.b16 %v515
      %v691 = vunpack.c.l.b16 %v525
      %v692 = vunpack.c.l.b16 %v539
      %v693 = vunpack.c.l.b16 %v549
      %v694 = vunpack.c.l.b16 %v563
      %v695 = vunpack.c.l.b16 %v573
      %v696 = vunpack.c.l.b16 %v587
      %v697 = vunpack.c.l.b16 %v597
      %v698 = vunpack.c.l.b16 %v611
      %v699 = vunpack.c.l.b16 %v621
      %v700 = vunpack.c.l.b16 %v635
      %v701 = vunpack.c.l.b16 %v645
      %v702 = vunpack.c.l.b16 %v659
      %v703 = vunpack.c.l.b16 %v669
      %v704 = vpack.c.b16 %v673, %v672
      %v705 = vpack.c.b16 %v675, %v674
      %v706 = vpack.c.b16 %v677, %v676
      %v707 = vpack.c.b16 %v679, %v678
      %v708 = vpack.c.b16 %v681, %v680
      %v709 = vpack.c.b16 %v683, %v682
      %v710 = vpack.c.b16 %v685, %v684
      %v711 = vpack.c.b16 %v687, %v686
      %v712 = vpack.c.b16 %v689, %v688
      %v713 = vpack.c.b16 %v691, %v690
      %v714 = vpack.c.b16 %v693, %v692
      %v715 = vpack.c.b16 %v695, %v694
      %v716 = vpack.c.b16 %v697, %v696
      %v717 = vpack.c.b16 %v699, %v698
      %v718 = vpack.c.b16 %v701, %v700
      %v719 = vpack.c.b16 %v703, %v702
      %vm720 = vcmask 64512
      %v722 = vsel %vm720, %v704, 0
      %v725 = vsel %vm720, %v705, 0
      %v728 = vsel %vm720, %v706, 0
      %v731 = vsel %vm720, %v707, 0
      %v734 = vsel %vm720, %v708, 0
      %v737 = vsel %vm720, %v709, 0
      %v740 = vsel %vm720, %v710, 0
      %v743 = vsel %vm720, %v711, 0
      %v746 = vsel %vm720, %v712, 0
      %v749 = vsel %vm720, %v713, 0
      %v752 = vsel %vm720, %v714, 0
      %v755 = vsel %vm720, %v715, 0
      %v758 = vsel %vm720, %v716, 0
      %v761 = vsel %vm720, %v717, 0
      %v764 = vsel %vm720, %v718, 0
      %v767 = vsel %vm720, %v719, 0
      %vm769 = vcmask 1043456
      %v771 = vsel %vm769, %v671, 0
      %773 = vmatpush.bf16.msra.mxu0 0
      %774 = vmatpush.bf16.msra.mxu0 0
      %775 = vmatpush.bf16.msra.mxu0 0
      %776 = vmatpush.bf16.msra.mxu0 0
      %777 = vmatpush.bf16.msra.mxu0 0
      %778 = vmatpush.bf16.msra.mxu0 0
      %779 = vmatpush.bf16.msra.mxu0 0
      %780 = vmatpush.bf16.msra.mxu0 %v771
      %781 = vmatmul.bf16.gmra.mxu0 %v722
      %v782 = vpop.f32.mrf.mxu0
      %v783 = vadd.f32 0.0, %v782
      %v784 = vpop.f32.mrf.mxu0
      %v785 = vadd.f32 0.0, %v784
      %786 = vmatmul.bf16.gmra.mxu0 %v725
      %v787 = vpop.f32.mrf.mxu0
      %v788 = vadd.f32 0.0, %v787
      %v789 = vpop.f32.mrf.mxu0
      %v790 = vadd.f32 0.0, %v789
      %791 = vmatmul.bf16.gmra.mxu0 %v728
      %v792 = vpop.f32.mrf.mxu0
      %v793 = vadd.f32 0.0, %v792
      %v794 = vpop.f32.mrf.mxu0
      %v795 = vadd.f32 0.0, %v794
      %796 = vmatmul.bf16.gmra.mxu0 %v731
      %v797 = vpop.f32.mrf.mxu0
      %v798 = vadd.f32 0.0, %v797
      %v799 = vpop.f32.mrf.mxu0
      %v800 = vadd.f32 0.0, %v799
      %801 = vmatmul.bf16.gmra.mxu0 %v734
      %v802 = vpop.f32.mrf.mxu0
      %v803 = vadd.f32 0.0, %v802
      %v804 = vpop.f32.mrf.mxu0
      %v805 = vadd.f32 0.0, %v804
      %806 = vmatmul.bf16.gmra.mxu0 %v737
      %v807 = vpop.f32.mrf.mxu0
      %v808 = vadd.f32 0.0, %v807
      %v809 = vpop.f32.mrf.mxu0
      %v810 = vadd.f32 0.0, %v809
      %811 = vmatmul.bf16.gmra.mxu0 %v740
      %v812 = vpop.f32.mrf.mxu0
      %v813 = vadd.f32 0.0, %v812
      %v814 = vpop.f32.mrf.mxu0
      %v815 = vadd.f32 0.0, %v814
      %816 = vmatmul.bf16.gmra.mxu0 %v743
      %v817 = vpop.f32.mrf.mxu0
      %v818 = vadd.f32 0.0, %v817
      %v819 = vpop.f32.mrf.mxu0
      %v820 = vadd.f32 0.0, %v819
      %821 = vmatmul.bf16.gmra.mxu0 %v746
      %v822 = vpop.f32.mrf.mxu0
      %v823 = vadd.f32 0.0, %v822
      %v824 = vpop.f32.mrf.mxu0
      %v825 = vadd.f32 0.0, %v824
      %826 = vmatmul.bf16.gmra.mxu0 %v749
      %v827 = vpop.f32.mrf.mxu0
      %v828 = vadd.f32 0.0, %v827
      %v829 = vpop.f32.mrf.mxu0
      %v830 = vadd.f32 0.0, %v829
      %831 = vmatmul.bf16.gmra.mxu0 %v752
      %v832 = vpop.f32.mrf.mxu0
      %v833 = vadd.f32 0.0, %v832
      %v834 = vpop.f32.mrf.mxu0
      %v835 = vadd.f32 0.0, %v834
      %836 = vmatmul.bf16.gmra.mxu0 %v755
      %v837 = vpop.f32.mrf.mxu0
      %v838 = vadd.f32 0.0, %v837
      %v839 = vpop.f32.mrf.mxu0
      %v840 = vadd.f32 0.0, %v839
      %841 = vmatmul.bf16.gmra.mxu0 %v758
      %v842 = vpop.f32.mrf.mxu0
      %v843 = vadd.f32 0.0, %v842
      %v844 = vpop.f32.mrf.mxu0
      %v845 = vadd.f32 0.0, %v844
      %846 = vmatmul.bf16.gmra.mxu0 %v761
      %v847 = vpop.f32.mrf.mxu0
      %v848 = vadd.f32 0.0, %v847
      %v849 = vpop.f32.mrf.mxu0
      %v850 = vadd.f32 0.0, %v849
      %851 = vmatmul.bf16.gmra.mxu0 %v764
      %v852 = vpop.f32.mrf.mxu0
      %v853 = vadd.f32 0.0, %v852
      %v854 = vpop.f32.mrf.mxu0
      %v855 = vadd.f32 0.0, %v854
      %856 = vmatmul.bf16.gmra.mxu0 %v767
      %v857 = vpop.f32.mrf.mxu0
      %v858 = vadd.f32 0.0, %v857
      %v859 = vpop.f32.mrf.mxu0
      %v860 = vadd.f32 0.0, %v859
      %861 = vdwg.mxu0
      %v894 = vunpack.c.l.b16 %v228
      %v895 = vunpack.c.l.b16 %v229
      %v896 = vunpack.c.l.b16 %v231
      %v897 = vunpack.c.l.b16 %v232
      %v898 = vunpack.c.l.b16 %v234
      %v899 = vunpack.c.l.b16 %v235
      %v900 = vunpack.c.l.b16 %v237
      %v901 = vunpack.c.l.b16 %v238
      %v902 = vunpack.c.l.b16 %v240
      %v903 = vunpack.c.l.b16 %v241
      %v904 = vunpack.c.l.b16 %v243
      %v905 = vunpack.c.l.b16 %v244
      %v906 = vunpack.c.l.b16 %v246
      %v907 = vunpack.c.l.b16 %v247
      %v908 = vunpack.c.l.b16 %v249
      %v909 = vunpack.c.l.b16 %v250
      %v910 = vunpack.c.l.b16 %v252
      %v911 = vunpack.c.l.b16 %v253
      %v912 = vunpack.c.l.b16 %v255
      %v913 = vunpack.c.l.b16 %v256
      %v914 = vunpack.c.l.b16 %v258
      %v915 = vunpack.c.l.b16 %v259
      %v916 = vunpack.c.l.b16 %v261
      %v917 = vunpack.c.l.b16 %v262
      %v918 = vunpack.c.l.b16 %v264
      %v919 = vunpack.c.l.b16 %v265
      %v920 = vunpack.c.l.b16 %v267
      %v921 = vunpack.c.l.b16 %v268
      %v922 = vunpack.c.l.b16 %v270
      %v923 = vunpack.c.l.b16 %v271
      %v924 = vunpack.c.l.b16 %v273
      %v925 = vunpack.c.l.b16 %v274
      %v926 = vpack.c.b16 %v895, %v894
      %v927 = vpack.c.b16 %v897, %v896
      %v928 = vpack.c.b16 %v899, %v898
      %v929 = vpack.c.b16 %v901, %v900
      %v930 = vpack.c.b16 %v903, %v902
      %v931 = vpack.c.b16 %v905, %v904
      %v932 = vpack.c.b16 %v907, %v906
      %v933 = vpack.c.b16 %v909, %v908
      %v934 = vpack.c.b16 %v911, %v910
      %v935 = vpack.c.b16 %v913, %v912
      %v936 = vpack.c.b16 %v915, %v914
      %v937 = vpack.c.b16 %v917, %v916
      %v938 = vpack.c.b16 %v919, %v918
      %v939 = vpack.c.b16 %v921, %v920
      %v940 = vpack.c.b16 %v923, %v922
      %v941 = vpack.c.b16 %v925, %v924
      %v943 = vsel %vm720, %v926, 0
      %v946 = vsel %vm720, %v927, 0
      %v949 = vsel %vm720, %v928, 0
      %v952 = vsel %vm720, %v929, 0
      %v955 = vsel %vm720, %v930, 0
      %v958 = vsel %vm720, %v931, 0
      %v961 = vsel %vm720, %v932, 0
      %v964 = vsel %vm720, %v933, 0
      %v967 = vsel %vm720, %v934, 0
      %v970 = vsel %vm720, %v935, 0
      %v973 = vsel %vm720, %v936, 0
      %v976 = vsel %vm720, %v937, 0
      %v979 = vsel %vm720, %v938, 0
      %v982 = vsel %vm720, %v939, 0
      %v985 = vsel %vm720, %v940, 0
      %v988 = vsel %vm720, %v941, 0
      %v991 = vsel %vm769, %v282, 0
      %993 = vmatpush.bf16.msra.mxu0 0
      %994 = vmatpush.bf16.msra.mxu0 0
      %995 = vmatpush.bf16.msra.mxu0 0
      %996 = vmatpush.bf16.msra.mxu0 0
      %997 = vmatpush.bf16.msra.mxu0 0
      %998 = vmatpush.bf16.msra.mxu0 0
      %999 = vmatpush.bf16.msra.mxu0 0
      %1000 = vmatpush.bf16.msra.mxu0 %v991
      %1001 = vmatmul.bf16.gmra.mxu0 %v943
      %v1002 = vpop.f32.mrf.mxu0
      %v1003 = vadd.f32 %v783, %v1002
      %v1004 = vpop.f32.mrf.mxu0
      %v1005 = vadd.f32 %v785, %v1004
      %1006 = vmatmul.bf16.gmra.mxu0 %v946
      %v1007 = vpop.f32.mrf.mxu0
      %v1008 = vadd.f32 %v788, %v1007
      %v1009 = vpop.f32.mrf.mxu0
      %v1010 = vadd.f32 %v790, %v1009
      %1011 = vmatmul.bf16.gmra.mxu0 %v949
      %v1012 = vpop.f32.mrf.mxu0
      %v1013 = vadd.f32 %v793, %v1012
      %v1014 = vpop.f32.mrf.mxu0
      %v1015 = vadd.f32 %v795, %v1014
      %1016 = vmatmul.bf16.gmra.mxu0 %v952
      %v1017 = vpop.f32.mrf.mxu0
      %v1018 = vadd.f32 %v798, %v1017
      %v1019 = vpop.f32.mrf.mxu0
      %v1020 = vadd.f32 %v800, %v1019
      %1021 = vmatmul.bf16.gmra.mxu0 %v955
      %v1022 = vpop.f32.mrf.mxu0
      %v1023 = vadd.f32 %v803, %v1022
      %v1024 = vpop.f32.mrf.mxu0
      %v1025 = vadd.f32 %v805, %v1024
      %1026 = vmatmul.bf16.gmra.mxu0 %v958
      %v1027 = vpop.f32.mrf.mxu0
      %v1028 = vadd.f32 %v808, %v1027
      %v1029 = vpop.f32.mrf.mxu0
      %v1030 = vadd.f32 %v810, %v1029
      %1031 = vmatmul.bf16.gmra.mxu0 %v961
      %v1032 = vpop.f32.mrf.mxu0
      %v1033 = vadd.f32 %v813, %v1032
      %v1034 = vpop.f32.mrf.mxu0
      %v1035 = vadd.f32 %v815, %v1034
      %1036 = vmatmul.bf16.gmra.mxu0 %v964
      %v1037 = vpop.f32.mrf.mxu0
      %v1038 = vadd.f32 %v818, %v1037
      %v1039 = vpop.f32.mrf.mxu0
      %v1040 = vadd.f32 %v820, %v1039
      %1041 = vmatmul.bf16.gmra.mxu0 %v967
      %v1042 = vpop.f32.mrf.mxu0
      %v1043 = vadd.f32 %v823, %v1042
      %v1044 = vpop.f32.mrf.mxu0
      %v1045 = vadd.f32 %v825, %v1044
      %1046 = vmatmul.bf16.gmra.mxu0 %v970
      %v1047 = vpop.f32.mrf.mxu0
      %v1048 = vadd.f32 %v828, %v1047
      %v1049 = vpop.f32.mrf.mxu0
      %v1050 = vadd.f32 %v830, %v1049
      %1051 = vmatmul.bf16.gmra.mxu0 %v973
      %v1052 = vpop.f32.mrf.mxu0
      %v1053 = vadd.f32 %v833, %v1052
      %v1054 = vpop.f32.mrf.mxu0
      %v1055 = vadd.f32 %v835, %v1054
      %1056 = vmatmul.bf16.gmra.mxu0 %v976
      %v1057 = vpop.f32.mrf.mxu0
      %v1058 = vadd.f32 %v838, %v1057
      %v1059 = vpop.f32.mrf.mxu0
      %v1060 = vadd.f32 %v840, %v1059
      %1061 = vmatmul.bf16.gmra.mxu0 %v979
      %v1062 = vpop.f32.mrf.mxu0
      %v1063 = vadd.f32 %v843, %v1062
      %v1064 = vpop.f32.mrf.mxu0
      %v1065 = vadd.f32 %v845, %v1064
      %1066 = vmatmul.bf16.gmra.mxu0 %v982
      %v1067 = vpop.f32.mrf.mxu0
      %v1068 = vadd.f32 %v848, %v1067
      %v1069 = vpop.f32.mrf.mxu0
      %v1070 = vadd.f32 %v850, %v1069
      %1071 = vmatmul.bf16.gmra.mxu0 %v985
      %v1072 = vpop.f32.mrf.mxu0
      %v1073 = vadd.f32 %v853, %v1072
      %v1074 = vpop.f32.mrf.mxu0
      %v1075 = vadd.f32 %v855, %v1074
      %1076 = vmatmul.bf16.gmra.mxu0 %v988
      %v1077 = vpop.f32.mrf.mxu0
      %v1078 = vadd.f32 %v858, %v1077
      %v1079 = vpop.f32.mrf.mxu0
      %v1080 = vadd.f32 %v860, %v1079
      %1081 = vdwg.mxu0
      %vm1098 = vcmask 1042432
      %vm1099 = vcmask 1046532
      %vm1100 = vmor %vm1098, %vm1099
      %v1101 = vrot.slane %v228, 5
      %v1102 = vrot.slane %v1101, 4
      %v1103 = vrot.slane %v229, 5
      %v1104 = vsel %vm1100, %v1102, %v1103
      %v1105 = vrot.slane %v1103, 4
      %v1106 = vrot.slane %v230, 5
      %v1107 = vsel %vm1100, %v1105, %v1106
      %v1108 = vrot.slane %v231, 5
      %v1109 = vrot.slane %v1108, 4
      %v1110 = vrot.slane %v232, 5
      %v1111 = vsel %vm1100, %v1109, %v1110
      %v1112 = vrot.slane %v1110, 4
      %v1113 = vrot.slane %v233, 5
      %v1114 = vsel %vm1100, %v1112, %v1113
      %v1115 = vrot.slane %v234, 5
      %v1116 = vrot.slane %v1115, 4
      %v1117 = vrot.slane %v235, 5
      %v1118 = vsel %vm1100, %v1116, %v1117
      %v1119 = vrot.slane %v1117, 4
      %v1120 = vrot.slane %v236, 5
      %v1121 = vsel %vm1100, %v1119, %v1120
      %v1122 = vrot.slane %v237, 5
      %v1123 = vrot.slane %v1122, 4
      %v1124 = vrot.slane %v238, 5
      %v1125 = vsel %vm1100, %v1123, %v1124
      %v1126 = vrot.slane %v1124, 4
      %v1127 = vrot.slane %v239, 5
      %v1128 = vsel %vm1100, %v1126, %v1127
      %v1129 = vrot.slane %v240, 5
      %v1130 = vrot.slane %v1129, 4
      %v1131 = vrot.slane %v241, 5
      %v1132 = vsel %vm1100, %v1130, %v1131
      %v1133 = vrot.slane %v1131, 4
      %v1134 = vrot.slane %v242, 5
      %v1135 = vsel %vm1100, %v1133, %v1134
      %v1136 = vrot.slane %v243, 5
      %v1137 = vrot.slane %v1136, 4
      %v1138 = vrot.slane %v244, 5
      %v1139 = vsel %vm1100, %v1137, %v1138
      %v1140 = vrot.slane %v1138, 4
      %v1141 = vrot.slane %v245, 5
      %v1142 = vsel %vm1100, %v1140, %v1141
      %v1143 = vrot.slane %v246, 5
      %v1144 = vrot.slane %v1143, 4
      %v1145 = vrot.slane %v247, 5
      %v1146 = vsel %vm1100, %v1144, %v1145
      %v1147 = vrot.slane %v1145, 4
      %v1148 = vrot.slane %v248, 5
      %v1149 = vsel %vm1100, %v1147, %v1148
      %v1150 = vrot.slane %v249, 5
      %v1151 = vrot.slane %v1150, 4
      %v1152 = vrot.slane %v250, 5
      %v1153 = vsel %vm1100, %v1151, %v1152
      %v1154 = vrot.slane %v1152, 4
      %v1155 = vrot.slane %v251, 5
      %v1156 = vsel %vm1100, %v1154, %v1155
      %v1157 = vrot.slane %v252, 5
      %v1158 = vrot.slane %v1157, 4
      %v1159 = vrot.slane %v253, 5
      %v1160 = vsel %vm1100, %v1158, %v1159
      %v1161 = vrot.slane %v1159, 4
      %v1162 = vrot.slane %v254, 5
      %v1163 = vsel %vm1100, %v1161, %v1162
      %v1164 = vrot.slane %v255, 5
      %v1165 = vrot.slane %v1164, 4
      %v1166 = vrot.slane %v256, 5
      %v1167 = vsel %vm1100, %v1165, %v1166
      %v1168 = vrot.slane %v1166, 4
      %v1169 = vrot.slane %v257, 5
      %v1170 = vsel %vm1100, %v1168, %v1169
      %v1171 = vrot.slane %v258, 5
      %v1172 = vrot.slane %v1171, 4
      %v1173 = vrot.slane %v259, 5
      %v1174 = vsel %vm1100, %v1172, %v1173
      %v1175 = vrot.slane %v1173, 4
      %v1176 = vrot.slane %v260, 5
      %v1177 = vsel %vm1100, %v1175, %v1176
      %v1178 = vrot.slane %v261, 5
      %v1179 = vrot.slane %v1178, 4
      %v1180 = vrot.slane %v262, 5
      %v1181 = vsel %vm1100, %v1179, %v1180
      %v1182 = vrot.slane %v1180, 4
      %v1183 = vrot.slane %v263, 5
      %v1184 = vsel %vm1100, %v1182, %v1183
      %v1185 = vrot.slane %v264, 5
      %v1186 = vrot.slane %v1185, 4
      %v1187 = vrot.slane %v265, 5
      %v1188 = vsel %vm1100, %v1186, %v1187
      %v1189 = vrot.slane %v1187, 4
      %v1190 = vrot.slane %v266, 5
      %v1191 = vsel %vm1100, %v1189, %v1190
      %v1192 = vrot.slane %v267, 5
      %v1193 = vrot.slane %v1192, 4
      %v1194 = vrot.slane %v268, 5
      %v1195 = vsel %vm1100, %v1193, %v1194
      %v1196 = vrot.slane %v1194, 4
      %v1197 = vrot.slane %v269, 5
      %v1198 = vsel %vm1100, %v1196, %v1197
      %v1199 = vrot.slane %v270, 5
      %v1200 = vrot.slane %v1199, 4
      %v1201 = vrot.slane %v271, 5
      %v1202 = vsel %vm1100, %v1200, %v1201
      %v1203 = vrot.slane %v1201, 4
      %v1204 = vrot.slane %v272, 5
      %v1205 = vsel %vm1100, %v1203, %v1204
      %v1206 = vrot.slane %v273, 5
      %v1207 = vrot.slane %v1206, 4
      %v1208 = vrot.slane %v274, 5
      %v1209 = vsel %vm1100, %v1207, %v1208
      %v1210 = vrot.slane %v1208, 4
      %v1211 = vrot.slane %v275, 5
      %v1212 = vsel %vm1100, %v1210, %v1211
      %s1213 = scalar_lea.vmem %s1, 8
      %v1214 = vld [vmem:[%s1213] sm:$0xf]
      %v1215 = vunpack.c.l.b16 %v1104
      %v1216 = vunpack.c.l.b16 %v1107
      %v1217 = vunpack.c.l.b16 %v1111
      %v1218 = vunpack.c.l.b16 %v1114
      %v1219 = vunpack.c.l.b16 %v1118
      %v1220 = vunpack.c.l.b16 %v1121
      %v1221 = vunpack.c.l.b16 %v1125
      %v1222 = vunpack.c.l.b16 %v1128
      %v1223 = vunpack.c.l.b16 %v1132
      %v1224 = vunpack.c.l.b16 %v1135
      %v1225 = vunpack.c.l.b16 %v1139
      %v1226 = vunpack.c.l.b16 %v1142
      %v1227 = vunpack.c.l.b16 %v1146
      %v1228 = vunpack.c.l.b16 %v1149
      %v1229 = vunpack.c.l.b16 %v1153
      %v1230 = vunpack.c.l.b16 %v1156
      %v1231 = vunpack.c.l.b16 %v1160
      %v1232 = vunpack.c.l.b16 %v1163
      %v1233 = vunpack.c.l.b16 %v1167
      %v1234 = vunpack.c.l.b16 %v1170
      %v1235 = vunpack.c.l.b16 %v1174
      %v1236 = vunpack.c.l.b16 %v1177
      %v1237 = vunpack.c.l.b16 %v1181
      %v1238 = vunpack.c.l.b16 %v1184
      %v1239 = vunpack.c.l.b16 %v1188
      %v1240 = vunpack.c.l.b16 %v1191
      %v1241 = vunpack.c.l.b16 %v1195
      %v1242 = vunpack.c.l.b16 %v1198
      %v1243 = vunpack.c.l.b16 %v1202
      %v1244 = vunpack.c.l.b16 %v1205
      %v1245 = vunpack.c.l.b16 %v1209
      %v1246 = vunpack.c.l.b16 %v1212
      %v1247 = vpack.c.b16 %v1216, %v1215
      %v1248 = vpack.c.b16 %v1218, %v1217
      %v1249 = vpack.c.b16 %v1220, %v1219
      %v1250 = vpack.c.b16 %v1222, %v1221
      %v1251 = vpack.c.b16 %v1224, %v1223
      %v1252 = vpack.c.b16 %v1226, %v1225
      %v1253 = vpack.c.b16 %v1228, %v1227
      %v1254 = vpack.c.b16 %v1230, %v1229
      %v1255 = vpack.c.b16 %v1232, %v1231
      %v1256 = vpack.c.b16 %v1234, %v1233
      %v1257 = vpack.c.b16 %v1236, %v1235
      %v1258 = vpack.c.b16 %v1238, %v1237
      %v1259 = vpack.c.b16 %v1240, %v1239
      %v1260 = vpack.c.b16 %v1242, %v1241
      %v1261 = vpack.c.b16 %v1244, %v1243
      %v1262 = vpack.c.b16 %v1246, %v1245
      %v1264 = vsel %vm720, %v1247, 0
      %v1267 = vsel %vm720, %v1248, 0
      %v1270 = vsel %vm720, %v1249, 0
      %v1273 = vsel %vm720, %v1250, 0
      %v1276 = vsel %vm720, %v1251, 0
      %v1279 = vsel %vm720, %v1252, 0
      %v1282 = vsel %vm720, %v1253, 0
      %v1285 = vsel %vm720, %v1254, 0
      %v1288 = vsel %vm720, %v1255, 0
      %v1291 = vsel %vm720, %v1256, 0
      %v1294 = vsel %vm720, %v1257, 0
      %v1297 = vsel %vm720, %v1258, 0
      %v1300 = vsel %vm720, %v1259, 0
      %v1303 = vsel %vm720, %v1260, 0
      %v1306 = vsel %vm720, %v1261, 0
      %v1309 = vsel %vm720, %v1262, 0
      %v1312 = vsel %vm769, %v1214, 0
      %1314 = vmatpush.bf16.msra.mxu0 0
      %1315 = vmatpush.bf16.msra.mxu0 0
      %1316 = vmatpush.bf16.msra.mxu0 0
      %1317 = vmatpush.bf16.msra.mxu0 0
      %1318 = vmatpush.bf16.msra.mxu0 0
      %1319 = vmatpush.bf16.msra.mxu0 0
      %1320 = vmatpush.bf16.msra.mxu0 0
      %1321 = vmatpush.bf16.msra.mxu0 %v1312
      %1322 = vmatmul.bf16.gmra.mxu0 %v1264
      %v1323 = vpop.f32.mrf.mxu0
      %v1324 = vadd.f32 0.0, %v1323
      %v1325 = vpop.f32.mrf.mxu0
      %v1326 = vadd.f32 0.0, %v1325
      %1327 = vmatmul.bf16.gmra.mxu0 %v1267
      %v1328 = vpop.f32.mrf.mxu0
      %v1329 = vadd.f32 0.0, %v1328
      %v1330 = vpop.f32.mrf.mxu0
      %v1331 = vadd.f32 0.0, %v1330
      %1332 = vmatmul.bf16.gmra.mxu0 %v1270
      %v1333 = vpop.f32.mrf.mxu0
      %v1334 = vadd.f32 0.0, %v1333
      %v1335 = vpop.f32.mrf.mxu0
      %v1336 = vadd.f32 0.0, %v1335
      %1337 = vmatmul.bf16.gmra.mxu0 %v1273
      %v1338 = vpop.f32.mrf.mxu0
      %v1339 = vadd.f32 0.0, %v1338
      %v1340 = vpop.f32.mrf.mxu0
      %v1341 = vadd.f32 0.0, %v1340
      %1342 = vmatmul.bf16.gmra.mxu0 %v1276
      %v1343 = vpop.f32.mrf.mxu0
      %v1344 = vadd.f32 0.0, %v1343
      %v1345 = vpop.f32.mrf.mxu0
      %v1346 = vadd.f32 0.0, %v1345
      %1347 = vmatmul.bf16.gmra.mxu0 %v1279
      %v1348 = vpop.f32.mrf.mxu0
      %v1349 = vadd.f32 0.0, %v1348
      %v1350 = vpop.f32.mrf.mxu0
      %v1351 = vadd.f32 0.0, %v1350
      %1352 = vmatmul.bf16.gmra.mxu0 %v1282
      %v1353 = vpop.f32.mrf.mxu0
      %v1354 = vadd.f32 0.0, %v1353
      %v1355 = vpop.f32.mrf.mxu0
      %v1356 = vadd.f32 0.0, %v1355
      %1357 = vmatmul.bf16.gmra.mxu0 %v1285
      %v1358 = vpop.f32.mrf.mxu0
      %v1359 = vadd.f32 0.0, %v1358
      %v1360 = vpop.f32.mrf.mxu0
      %v1361 = vadd.f32 0.0, %v1360
      %1362 = vmatmul.bf16.gmra.mxu0 %v1288
      %v1363 = vpop.f32.mrf.mxu0
      %v1364 = vadd.f32 0.0, %v1363
      %v1365 = vpop.f32.mrf.mxu0
      %v1366 = vadd.f32 0.0, %v1365
      %1367 = vmatmul.bf16.gmra.mxu0 %v1291
      %v1368 = vpop.f32.mrf.mxu0
      %v1369 = vadd.f32 0.0, %v1368
      %v1370 = vpop.f32.mrf.mxu0
      %v1371 = vadd.f32 0.0, %v1370
      %1372 = vmatmul.bf16.gmra.mxu0 %v1294
      %v1373 = vpop.f32.mrf.mxu0
      %v1374 = vadd.f32 0.0, %v1373
      %v1375 = vpop.f32.mrf.mxu0
      %v1376 = vadd.f32 0.0, %v1375
      %1377 = vmatmul.bf16.gmra.mxu0 %v1297
      %v1378 = vpop.f32.mrf.mxu0
      %v1379 = vadd.f32 0.0, %v1378
      %v1380 = vpop.f32.mrf.mxu0
      %v1381 = vadd.f32 0.0, %v1380
      %1382 = vmatmul.bf16.gmra.mxu0 %v1300
      %v1383 = vpop.f32.mrf.mxu0
      %v1384 = vadd.f32 0.0, %v1383
      %v1385 = vpop.f32.mrf.mxu0
      %v1386 = vadd.f32 0.0, %v1385
      %1387 = vmatmul.bf16.gmra.mxu0 %v1303
      %v1388 = vpop.f32.mrf.mxu0
      %v1389 = vadd.f32 0.0, %v1388
      %v1390 = vpop.f32.mrf.mxu0
      %v1391 = vadd.f32 0.0, %v1390
      %1392 = vmatmul.bf16.gmra.mxu0 %v1306
      %v1393 = vpop.f32.mrf.mxu0
      %v1394 = vadd.f32 0.0, %v1393
      %v1395 = vpop.f32.mrf.mxu0
      %v1396 = vadd.f32 0.0, %v1395
      %1397 = vmatmul.bf16.gmra.mxu0 %v1309
      %v1398 = vpop.f32.mrf.mxu0
      %v1399 = vadd.f32 0.0, %v1398
      %v1400 = vpop.f32.mrf.mxu0
      %v1401 = vadd.f32 0.0, %v1400
      %1402 = vdwg.mxu0
      %v1403 = vadd.f32 %v1003, %v1324
      %v1404 = vadd.f32 %v1005, %v1326
      %v1405 = vadd.f32 %v1008, %v1329
      %v1406 = vadd.f32 %v1010, %v1331
      %v1407 = vadd.f32 %v1013, %v1334
      %v1408 = vadd.f32 %v1015, %v1336
      %v1409 = vadd.f32 %v1018, %v1339
      %v1410 = vadd.f32 %v1020, %v1341
      %v1411 = vadd.f32 %v1023, %v1344
      %v1412 = vadd.f32 %v1025, %v1346
      %v1413 = vadd.f32 %v1028, %v1349
      %v1414 = vadd.f32 %v1030, %v1351
      %v1415 = vadd.f32 %v1033, %v1354
      %v1416 = vadd.f32 %v1035, %v1356
      %v1417 = vadd.f32 %v1038, %v1359
      %v1418 = vadd.f32 %v1040, %v1361
      %v1419 = vadd.f32 %v1043, %v1364
      %v1420 = vadd.f32 %v1045, %v1366
      %v1421 = vadd.f32 %v1048, %v1369
      %v1422 = vadd.f32 %v1050, %v1371
      %v1423 = vadd.f32 %v1053, %v1374
      %v1424 = vadd.f32 %v1055, %v1376
      %v1425 = vadd.f32 %v1058, %v1379
      %v1426 = vadd.f32 %v1060, %v1381
      %v1427 = vadd.f32 %v1063, %v1384
      %v1428 = vadd.f32 %v1065, %v1386
      %v1429 = vadd.f32 %v1068, %v1389
      %v1430 = vadd.f32 %v1070, %v1391
      %v1431 = vadd.f32 %v1073, %v1394
      %v1432 = vadd.f32 %v1075, %v1396
      %v1433 = vadd.f32 %v1078, %v1399
      %v1434 = vadd.f32 %v1080, %v1401
      %s1435 = scalar_lea.vmem %s1, 12
      %v1436 = vld [vmem:[%s1435] sm:$0xf]
      %v1439 = vunpack.c.l.b16 %v276
      %v1440 = vunpack.c.l.b16 %v277
      %v1441 = vpack.c.b16 %v1440, %v1439
      %v1443 = vsel %vm720, %v1441, 0
      %v1446 = vsel %vm769, %v1436, 0
      %1448 = vmatpush.bf16.msra.mxu0 0
      %1449 = vmatpush.bf16.msra.mxu0 0
      %1450 = vmatpush.bf16.msra.mxu0 0
      %1451 = vmatpush.bf16.msra.mxu0 0
      %1452 = vmatpush.bf16.msra.mxu0 0
      %1453 = vmatpush.bf16.msra.mxu0 0
      %1454 = vmatpush.bf16.msra.mxu0 0
      %1455 = vmatpush.bf16.msra.mxu0 %v1446
      %1456 = vmatmul.bf16.gmra.mxu0 %v946
      %v1457 = vpop.f32.mrf.mxu0
      %v1458 = vadd.f32 0.0, %v1457
      %v1459 = vpop.f32.mrf.mxu0
      %v1460 = vadd.f32 0.0, %v1459
      %1461 = vmatmul.bf16.gmra.mxu0 %v949
      %v1462 = vpop.f32.mrf.mxu0
      %v1463 = vadd.f32 0.0, %v1462
      %v1464 = vpop.f32.mrf.mxu0
      %v1465 = vadd.f32 0.0, %v1464
      %1466 = vmatmul.bf16.gmra.mxu0 %v952
      %v1467 = vpop.f32.mrf.mxu0
      %v1468 = vadd.f32 0.0, %v1467
      %v1469 = vpop.f32.mrf.mxu0
      %v1470 = vadd.f32 0.0, %v1469
      %1471 = vmatmul.bf16.gmra.mxu0 %v955
      %v1472 = vpop.f32.mrf.mxu0
      %v1473 = vadd.f32 0.0, %v1472
      %v1474 = vpop.f32.mrf.mxu0
      %v1475 = vadd.f32 0.0, %v1474
      %1476 = vmatmul.bf16.gmra.mxu0 %v958
      %v1477 = vpop.f32.mrf.mxu0
      %v1478 = vadd.f32 0.0, %v1477
      %v1479 = vpop.f32.mrf.mxu0
      %v1480 = vadd.f32 0.0, %v1479
      %1481 = vmatmul.bf16.gmra.mxu0 %v961
      %v1482 = vpop.f32.mrf.mxu0
      %v1483 = vadd.f32 0.0, %v1482
      %v1484 = vpop.f32.mrf.mxu0
      %v1485 = vadd.f32 0.0, %v1484
      %1486 = vmatmul.bf16.gmra.mxu0 %v964
      %v1487 = vpop.f32.mrf.mxu0
      %v1488 = vadd.f32 0.0, %v1487
      %v1489 = vpop.f32.mrf.mxu0
      %v1490 = vadd.f32 0.0, %v1489
      %1491 = vmatmul.bf16.gmra.mxu0 %v967
      %v1492 = vpop.f32.mrf.mxu0
      %v1493 = vadd.f32 0.0, %v1492
      %v1494 = vpop.f32.mrf.mxu0
      %v1495 = vadd.f32 0.0, %v1494
      %1496 = vmatmul.bf16.gmra.mxu0 %v970
      %v1497 = vpop.f32.mrf.mxu0
      %v1498 = vadd.f32 0.0, %v1497
      %v1499 = vpop.f32.mrf.mxu0
      %v1500 = vadd.f32 0.0, %v1499
      %1501 = vmatmul.bf16.gmra.mxu0 %v973
      %v1502 = vpop.f32.mrf.mxu0
      %v1503 = vadd.f32 0.0, %v1502
      %v1504 = vpop.f32.mrf.mxu0
      %v1505 = vadd.f32 0.0, %v1504
      %1506 = vmatmul.bf16.gmra.mxu0 %v976
      %v1507 = vpop.f32.mrf.mxu0
      %v1508 = vadd.f32 0.0, %v1507
      %v1509 = vpop.f32.mrf.mxu0
      %v1510 = vadd.f32 0.0, %v1509
      %1511 = vmatmul.bf16.gmra.mxu0 %v979
      %v1512 = vpop.f32.mrf.mxu0
      %v1513 = vadd.f32 0.0, %v1512
      %v1514 = vpop.f32.mrf.mxu0
      %v1515 = vadd.f32 0.0, %v1514
      %1516 = vmatmul.bf16.gmra.mxu0 %v982
      %v1517 = vpop.f32.mrf.mxu0
      %v1518 = vadd.f32 0.0, %v1517
      %v1519 = vpop.f32.mrf.mxu0
      %v1520 = vadd.f32 0.0, %v1519
      %1521 = vmatmul.bf16.gmra.mxu0 %v985
      %v1522 = vpop.f32.mrf.mxu0
      %v1523 = vadd.f32 0.0, %v1522
      %v1524 = vpop.f32.mrf.mxu0
      %v1525 = vadd.f32 0.0, %v1524
      %1526 = vmatmul.bf16.gmra.mxu0 %v988
      %v1527 = vpop.f32.mrf.mxu0
      %v1528 = vadd.f32 0.0, %v1527
      %v1529 = vpop.f32.mrf.mxu0
      %v1530 = vadd.f32 0.0, %v1529
      %1531 = vmatmul.bf16.gmra.mxu0 %v1443
      %v1532 = vpop.f32.mrf.mxu0
      %v1533 = vadd.f32 0.0, %v1532
      %v1534 = vpop.f32.mrf.mxu0
      %v1535 = vadd.f32 0.0, %v1534
      %1536 = vdwg.mxu0
      %v1537 = vadd.f32 %v1403, %v1458
      %v1538 = vadd.f32 %v1404, %v1460
      %v1539 = vadd.f32 %v1405, %v1463
      %v1540 = vadd.f32 %v1406, %v1465
      %v1541 = vadd.f32 %v1407, %v1468
      %v1542 = vadd.f32 %v1408, %v1470
      %v1543 = vadd.f32 %v1409, %v1473
      %v1544 = vadd.f32 %v1410, %v1475
      %v1545 = vadd.f32 %v1411, %v1478
      %v1546 = vadd.f32 %v1412, %v1480
      %v1547 = vadd.f32 %v1413, %v1483
      %v1548 = vadd.f32 %v1414, %v1485
      %v1549 = vadd.f32 %v1415, %v1488
      %v1550 = vadd.f32 %v1416, %v1490
      %v1551 = vadd.f32 %v1417, %v1493
      %v1552 = vadd.f32 %v1418, %v1495
      %v1553 = vadd.f32 %v1419, %v1498
      %v1554 = vadd.f32 %v1420, %v1500
      %v1555 = vadd.f32 %v1421, %v1503
      %v1556 = vadd.f32 %v1422, %v1505
      %v1557 = vadd.f32 %v1423, %v1508
      %v1558 = vadd.f32 %v1424, %v1510
      %v1559 = vadd.f32 %v1425, %v1513
      %v1560 = vadd.f32 %v1426, %v1515
      %v1561 = vadd.f32 %v1427, %v1518
      %v1562 = vadd.f32 %v1428, %v1520
      %v1563 = vadd.f32 %v1429, %v1523
      %v1564 = vadd.f32 %v1430, %v1525
      %v1565 = vadd.f32 %v1431, %v1528
      %v1566 = vadd.f32 %v1432, %v1530
      %v1567 = vadd.f32 %v1433, %v1533
      %v1568 = vadd.f32 %v1434, %v1535
      %v1570 = vshrl.u32 %v276, 16
      %v1572 = vrot.slane %v1570, 4
      %v1573 = vshll.u32 %v276, 16
      %v1575 = vrot.slane %v1573, 5
      %v1576 = vor.u32 %v1572, %v1575
      %v1577 = vrot.slane %v1576, 4
      %v1579 = vshll.u32 %v277, 16
      %v1581 = vrot.slane %v1579, 5
      %v1582 = vsel %vm285, %v1577, %v1581
      %v1583 = vshrl.u32 %v277, 16
      %v1585 = vrot.slane %v1583, 4
      %v1586 = vor.u32 %v1585, %v1581
      %v1587 = vrot.slane %v1586, 4
      %v1589 = vshll.u32 %v278, 16
      %v1591 = vrot.slane %v1589, 5
      %v1592 = vsel %vm285, %v1587, %v1591
      %s1593 = scalar_lea.vmem %s1, 16
      %v1594 = vld [vmem:[%s1593] sm:$0xf]
      %v1595 = vunpack.c.l.b16 %v1582
      %v1596 = vunpack.c.l.b16 %v1592
      %v1597 = vpack.c.b16 %v1596, %v1595
      %v1599 = vsel %vm720, %v1597, 0
      %v1602 = vsel %vm769, %v1594, 0
      %1604 = vmatpush.bf16.msra.mxu0 0
      %1605 = vmatpush.bf16.msra.mxu0 0
      %1606 = vmatpush.bf16.msra.mxu0 0
      %1607 = vmatpush.bf16.msra.mxu0 0
      %1608 = vmatpush.bf16.msra.mxu0 0
      %1609 = vmatpush.bf16.msra.mxu0 0
      %1610 = vmatpush.bf16.msra.mxu0 0
      %1611 = vmatpush.bf16.msra.mxu0 %v1602
      %1612 = vmatmul.bf16.gmra.mxu0 %v725
      %v1613 = vpop.f32.mrf.mxu0
      %v1614 = vadd.f32 0.0, %v1613
      %v1615 = vpop.f32.mrf.mxu0
      %v1616 = vadd.f32 0.0, %v1615
      %1617 = vmatmul.bf16.gmra.mxu0 %v728
      %v1618 = vpop.f32.mrf.mxu0
      %v1619 = vadd.f32 0.0, %v1618
      %v1620 = vpop.f32.mrf.mxu0
      %v1621 = vadd.f32 0.0, %v1620
      %1622 = vmatmul.bf16.gmra.mxu0 %v731
      %v1623 = vpop.f32.mrf.mxu0
      %v1624 = vadd.f32 0.0, %v1623
      %v1625 = vpop.f32.mrf.mxu0
      %v1626 = vadd.f32 0.0, %v1625
      %1627 = vmatmul.bf16.gmra.mxu0 %v734
      %v1628 = vpop.f32.mrf.mxu0
      %v1629 = vadd.f32 0.0, %v1628
      %v1630 = vpop.f32.mrf.mxu0
      %v1631 = vadd.f32 0.0, %v1630
      %1632 = vmatmul.bf16.gmra.mxu0 %v737
      %v1633 = vpop.f32.mrf.mxu0
      %v1634 = vadd.f32 0.0, %v1633
      %v1635 = vpop.f32.mrf.mxu0
      %v1636 = vadd.f32 0.0, %v1635
      %1637 = vmatmul.bf16.gmra.mxu0 %v740
      %v1638 = vpop.f32.mrf.mxu0
      %v1639 = vadd.f32 0.0, %v1638
      %v1640 = vpop.f32.mrf.mxu0
      %v1641 = vadd.f32 0.0, %v1640
      %1642 = vmatmul.bf16.gmra.mxu0 %v743
      %v1643 = vpop.f32.mrf.mxu0
      %v1644 = vadd.f32 0.0, %v1643
      %v1645 = vpop.f32.mrf.mxu0
      %v1646 = vadd.f32 0.0, %v1645
      %1647 = vmatmul.bf16.gmra.mxu0 %v746
      %v1648 = vpop.f32.mrf.mxu0
      %v1649 = vadd.f32 0.0, %v1648
      %v1650 = vpop.f32.mrf.mxu0
      %v1651 = vadd.f32 0.0, %v1650
      %1652 = vmatmul.bf16.gmra.mxu0 %v749
      %v1653 = vpop.f32.mrf.mxu0
      %v1654 = vadd.f32 0.0, %v1653
      %v1655 = vpop.f32.mrf.mxu0
      %v1656 = vadd.f32 0.0, %v1655
      %1657 = vmatmul.bf16.gmra.mxu0 %v752
      %v1658 = vpop.f32.mrf.mxu0
      %v1659 = vadd.f32 0.0, %v1658
      %v1660 = vpop.f32.mrf.mxu0
      %v1661 = vadd.f32 0.0, %v1660
      %1662 = vmatmul.bf16.gmra.mxu0 %v755
      %v1663 = vpop.f32.mrf.mxu0
      %v1664 = vadd.f32 0.0, %v1663
      %v1665 = vpop.f32.mrf.mxu0
      %v1666 = vadd.f32 0.0, %v1665
      %1667 = vmatmul.bf16.gmra.mxu0 %v758
      %v1668 = vpop.f32.mrf.mxu0
      %v1669 = vadd.f32 0.0, %v1668
      %v1670 = vpop.f32.mrf.mxu0
      %v1671 = vadd.f32 0.0, %v1670
      %1672 = vmatmul.bf16.gmra.mxu0 %v761
      %v1673 = vpop.f32.mrf.mxu0
      %v1674 = vadd.f32 0.0, %v1673
      %v1675 = vpop.f32.mrf.mxu0
      %v1676 = vadd.f32 0.0, %v1675
      %1677 = vmatmul.bf16.gmra.mxu0 %v764
      %v1678 = vpop.f32.mrf.mxu0
      %v1679 = vadd.f32 0.0, %v1678
      %v1680 = vpop.f32.mrf.mxu0
      %v1681 = vadd.f32 0.0, %v1680
      %1682 = vmatmul.bf16.gmra.mxu0 %v767
      %v1683 = vpop.f32.mrf.mxu0
      %v1684 = vadd.f32 0.0, %v1683
      %v1685 = vpop.f32.mrf.mxu0
      %v1686 = vadd.f32 0.0, %v1685
      %1687 = vmatmul.bf16.gmra.mxu0 %v1599
      %v1688 = vpop.f32.mrf.mxu0
      %v1689 = vadd.f32 0.0, %v1688
      %v1690 = vpop.f32.mrf.mxu0
      %v1691 = vadd.f32 0.0, %v1690
      %1692 = vdwg.mxu0
      %v1693 = vadd.f32 %v1537, %v1614
      %v1694 = vadd.f32 %v1538, %v1616
      %v1695 = vadd.f32 %v1539, %v1619
      %v1696 = vadd.f32 %v1540, %v1621
      %v1697 = vadd.f32 %v1541, %v1624
      %v1698 = vadd.f32 %v1542, %v1626
      %v1699 = vadd.f32 %v1543, %v1629
      %v1700 = vadd.f32 %v1544, %v1631
      %v1701 = vadd.f32 %v1545, %v1634
      %v1702 = vadd.f32 %v1546, %v1636
      %v1703 = vadd.f32 %v1547, %v1639
      %v1704 = vadd.f32 %v1548, %v1641
      %v1705 = vadd.f32 %v1549, %v1644
      %v1706 = vadd.f32 %v1550, %v1646
      %v1707 = vadd.f32 %v1551, %v1649
      %v1708 = vadd.f32 %v1552, %v1651
      %v1709 = vadd.f32 %v1553, %v1654
      %v1710 = vadd.f32 %v1554, %v1656
      %v1711 = vadd.f32 %v1555, %v1659
      %v1712 = vadd.f32 %v1556, %v1661
      %v1713 = vadd.f32 %v1557, %v1664
      %v1714 = vadd.f32 %v1558, %v1666
      %v1715 = vadd.f32 %v1559, %v1669
      %v1716 = vadd.f32 %v1560, %v1671
      %v1717 = vadd.f32 %v1561, %v1674
      %v1718 = vadd.f32 %v1562, %v1676
      %v1719 = vadd.f32 %v1563, %v1679
      %v1720 = vadd.f32 %v1564, %v1681
      %v1721 = vadd.f32 %v1565, %v1684
      %v1722 = vadd.f32 %v1566, %v1686
      %v1723 = vadd.f32 %v1567, %v1689
      %v1724 = vadd.f32 %v1568, %v1691
      %v1726 = vrot.slane %v276, 5
      %v1727 = vrot.slane %v1726, 4
      %v1728 = vrot.slane %v277, 5
      %v1729 = vsel %vm1100, %v1727, %v1728
      %v1730 = vrot.slane %v1728, 4
      %v1731 = vrot.slane %v278, 5
      %v1732 = vsel %vm1100, %v1730, %v1731
      %s1733 = scalar_lea.vmem %s1, 20
      %v1734 = vld [vmem:[%s1733] sm:$0xf]
      %v1735 = vunpack.c.l.b16 %v1729
      %v1736 = vunpack.c.l.b16 %v1732
      %v1737 = vpack.c.b16 %v1736, %v1735
      %v1739 = vsel %vm720, %v1737, 0
      %v1742 = vsel %vm769, %v1734, 0
      %1744 = vmatpush.bf16.msra.mxu0 0
      %1745 = vmatpush.bf16.msra.mxu0 0
      %1746 = vmatpush.bf16.msra.mxu0 0
      %1747 = vmatpush.bf16.msra.mxu0 0
      %1748 = vmatpush.bf16.msra.mxu0 0
      %1749 = vmatpush.bf16.msra.mxu0 0
      %1750 = vmatpush.bf16.msra.mxu0 0
      %1751 = vmatpush.bf16.msra.mxu0 %v1742
      %1752 = vmatmul.bf16.gmra.mxu0 %v1267
      %v1753 = vpop.f32.mrf.mxu0
      %v1754 = vadd.f32 0.0, %v1753
      %v1755 = vpop.f32.mrf.mxu0
      %v1756 = vadd.f32 0.0, %v1755
      %1757 = vmatmul.bf16.gmra.mxu0 %v1270
      %v1758 = vpop.f32.mrf.mxu0
      %v1759 = vadd.f32 0.0, %v1758
      %v1760 = vpop.f32.mrf.mxu0
      %v1761 = vadd.f32 0.0, %v1760
      %1762 = vmatmul.bf16.gmra.mxu0 %v1273
      %v1763 = vpop.f32.mrf.mxu0
      %v1764 = vadd.f32 0.0, %v1763
      %v1765 = vpop.f32.mrf.mxu0
      %v1766 = vadd.f32 0.0, %v1765
      %1767 = vmatmul.bf16.gmra.mxu0 %v1276
      %v1768 = vpop.f32.mrf.mxu0
      %v1769 = vadd.f32 0.0, %v1768
      %v1770 = vpop.f32.mrf.mxu0
      %v1771 = vadd.f32 0.0, %v1770
      %1772 = vmatmul.bf16.gmra.mxu0 %v1279
      %v1773 = vpop.f32.mrf.mxu0
      %v1774 = vadd.f32 0.0, %v1773
      %v1775 = vpop.f32.mrf.mxu0
      %v1776 = vadd.f32 0.0, %v1775
      %1777 = vmatmul.bf16.gmra.mxu0 %v1282
      %v1778 = vpop.f32.mrf.mxu0
      %v1779 = vadd.f32 0.0, %v1778
      %v1780 = vpop.f32.mrf.mxu0
      %v1781 = vadd.f32 0.0, %v1780
      %1782 = vmatmul.bf16.gmra.mxu0 %v1285
      %v1783 = vpop.f32.mrf.mxu0
      %v1784 = vadd.f32 0.0, %v1783
      %v1785 = vpop.f32.mrf.mxu0
      %v1786 = vadd.f32 0.0, %v1785
      %1787 = vmatmul.bf16.gmra.mxu0 %v1288
      %v1788 = vpop.f32.mrf.mxu0
      %v1789 = vadd.f32 0.0, %v1788
      %v1790 = vpop.f32.mrf.mxu0
      %v1791 = vadd.f32 0.0, %v1790
      %1792 = vmatmul.bf16.gmra.mxu0 %v1291
      %v1793 = vpop.f32.mrf.mxu0
      %v1794 = vadd.f32 0.0, %v1793
      %v1795 = vpop.f32.mrf.mxu0
      %v1796 = vadd.f32 0.0, %v1795
      %1797 = vmatmul.bf16.gmra.mxu0 %v1294
      %v1798 = vpop.f32.mrf.mxu0
      %v1799 = vadd.f32 0.0, %v1798
      %v1800 = vpop.f32.mrf.mxu0
      %v1801 = vadd.f32 0.0, %v1800
      %1802 = vmatmul.bf16.gmra.mxu0 %v1297
      %v1803 = vpop.f32.mrf.mxu0
      %v1804 = vadd.f32 0.0, %v1803
      %v1805 = vpop.f32.mrf.mxu0
      %v1806 = vadd.f32 0.0, %v1805
      %1807 = vmatmul.bf16.gmra.mxu0 %v1300
      %v1808 = vpop.f32.mrf.mxu0
      %v1809 = vadd.f32 0.0, %v1808
      %v1810 = vpop.f32.mrf.mxu0
      %v1811 = vadd.f32 0.0, %v1810
      %1812 = vmatmul.bf16.gmra.mxu0 %v1303
      %v1813 = vpop.f32.mrf.mxu0
      %v1814 = vadd.f32 0.0, %v1813
      %v1815 = vpop.f32.mrf.mxu0
      %v1816 = vadd.f32 0.0, %v1815
      %1817 = vmatmul.bf16.gmra.mxu0 %v1306
      %v1818 = vpop.f32.mrf.mxu0
      %v1819 = vadd.f32 0.0, %v1818
      %v1820 = vpop.f32.mrf.mxu0
      %v1821 = vadd.f32 0.0, %v1820
      %1822 = vmatmul.bf16.gmra.mxu0 %v1309
      %v1823 = vpop.f32.mrf.mxu0
      %v1824 = vadd.f32 0.0, %v1823
      %v1825 = vpop.f32.mrf.mxu0
      %v1826 = vadd.f32 0.0, %v1825
      %1827 = vmatmul.bf16.gmra.mxu0 %v1739
      %v1828 = vpop.f32.mrf.mxu0
      %v1829 = vadd.f32 0.0, %v1828
      %v1830 = vpop.f32.mrf.mxu0
      %v1831 = vadd.f32 0.0, %v1830
      %1832 = vdwg.mxu0
      %v1833 = vadd.f32 %v1693, %v1754
      %v1834 = vadd.f32 %v1694, %v1756
      %v1835 = vadd.f32 %v1695, %v1759
      %v1836 = vadd.f32 %v1696, %v1761
      %v1837 = vadd.f32 %v1697, %v1764
      %v1838 = vadd.f32 %v1698, %v1766
      %v1839 = vadd.f32 %v1699, %v1769
      %v1840 = vadd.f32 %v1700, %v1771
      %v1841 = vadd.f32 %v1701, %v1774
      %v1842 = vadd.f32 %v1702, %v1776
      %v1843 = vadd.f32 %v1703, %v1779
      %v1844 = vadd.f32 %v1704, %v1781
      %v1845 = vadd.f32 %v1705, %v1784
      %v1846 = vadd.f32 %v1706, %v1786
      %v1847 = vadd.f32 %v1707, %v1789
      %v1848 = vadd.f32 %v1708, %v1791
      %v1849 = vadd.f32 %v1709, %v1794
      %v1850 = vadd.f32 %v1710, %v1796
      %v1851 = vadd.f32 %v1711, %v1799
      %v1852 = vadd.f32 %v1712, %v1801
      %v1853 = vadd.f32 %v1713, %v1804
      %v1854 = vadd.f32 %v1714, %v1806
      %v1855 = vadd.f32 %v1715, %v1809
      %v1856 = vadd.f32 %v1716, %v1811
      %v1857 = vadd.f32 %v1717, %v1814
      %v1858 = vadd.f32 %v1718, %v1816
      %v1859 = vadd.f32 %v1719, %v1819
      %v1860 = vadd.f32 %v1720, %v1821
      %v1861 = vadd.f32 %v1721, %v1824
      %v1862 = vadd.f32 %v1722, %v1826
      %v1863 = vadd.f32 %v1723, %v1829
      %v1864 = vadd.f32 %v1724, %v1831
      %s1865 = scalar_lea.vmem %s1, 24
      %v1866 = vld [vmem:[%s1865] sm:$0xf]
      %v1869 = vunpack.c.l.b16 %v279
      %v1870 = vunpack.c.l.b16 %v280
      %v1871 = vpack.c.b16 %v1870, %v1869
      %v1873 = vsel %vm720, %v1871, 0
      %v1876 = vsel %vm769, %v1866, 0
      %1878 = vmatpush.bf16.msra.mxu0 0
      %1879 = vmatpush.bf16.msra.mxu0 0
      %1880 = vmatpush.bf16.msra.mxu0 0
      %1881 = vmatpush.bf16.msra.mxu0 0
      %1882 = vmatpush.bf16.msra.mxu0 0
      %1883 = vmatpush.bf16.msra.mxu0 0
      %1884 = vmatpush.bf16.msra.mxu0 0
      %1885 = vmatpush.bf16.msra.mxu0 %v1876
      %1886 = vmatmul.bf16.gmra.mxu0 %v949
      %v1887 = vpop.f32.mrf.mxu0
      %v1888 = vadd.f32 0.0, %v1887
      %v1889 = vpop.f32.mrf.mxu0
      %v1890 = vadd.f32 0.0, %v1889
      %1891 = vmatmul.bf16.gmra.mxu0 %v952
      %v1892 = vpop.f32.mrf.mxu0
      %v1893 = vadd.f32 0.0, %v1892
      %v1894 = vpop.f32.mrf.mxu0
      %v1895 = vadd.f32 0.0, %v1894
      %1896 = vmatmul.bf16.gmra.mxu0 %v955
      %v1897 = vpop.f32.mrf.mxu0
      %v1898 = vadd.f32 0.0, %v1897
      %v1899 = vpop.f32.mrf.mxu0
      %v1900 = vadd.f32 0.0, %v1899
      %1901 = vmatmul.bf16.gmra.mxu0 %v958
      %v1902 = vpop.f32.mrf.mxu0
      %v1903 = vadd.f32 0.0, %v1902
      %v1904 = vpop.f32.mrf.mxu0
      %v1905 = vadd.f32 0.0, %v1904
      %1906 = vmatmul.bf16.gmra.mxu0 %v961
      %v1907 = vpop.f32.mrf.mxu0
      %v1908 = vadd.f32 0.0, %v1907
      %v1909 = vpop.f32.mrf.mxu0
      %v1910 = vadd.f32 0.0, %v1909
      %1911 = vmatmul.bf16.gmra.mxu0 %v964
      %v1912 = vpop.f32.mrf.mxu0
      %v1913 = vadd.f32 0.0, %v1912
      %v1914 = vpop.f32.mrf.mxu0
      %v1915 = vadd.f32 0.0, %v1914
      %1916 = vmatmul.bf16.gmra.mxu0 %v967
      %v1917 = vpop.f32.mrf.mxu0
      %v1918 = vadd.f32 0.0, %v1917
      %v1919 = vpop.f32.mrf.mxu0
      %v1920 = vadd.f32 0.0, %v1919
      %1921 = vmatmul.bf16.gmra.mxu0 %v970
      %v1922 = vpop.f32.mrf.mxu0
      %v1923 = vadd.f32 0.0, %v1922
      %v1924 = vpop.f32.mrf.mxu0
      %v1925 = vadd.f32 0.0, %v1924
      %1926 = vmatmul.bf16.gmra.mxu0 %v973
      %v1927 = vpop.f32.mrf.mxu0
      %v1928 = vadd.f32 0.0, %v1927
      %v1929 = vpop.f32.mrf.mxu0
      %v1930 = vadd.f32 0.0, %v1929
      %1931 = vmatmul.bf16.gmra.mxu0 %v976
      %v1932 = vpop.f32.mrf.mxu0
      %v1933 = vadd.f32 0.0, %v1932
      %v1934 = vpop.f32.mrf.mxu0
      %v1935 = vadd.f32 0.0, %v1934
      %1936 = vmatmul.bf16.gmra.mxu0 %v979
      %v1937 = vpop.f32.mrf.mxu0
      %v1938 = vadd.f32 0.0, %v1937
      %v1939 = vpop.f32.mrf.mxu0
      %v1940 = vadd.f32 0.0, %v1939
      %1941 = vmatmul.bf16.gmra.mxu0 %v982
      %v1942 = vpop.f32.mrf.mxu0
      %v1943 = vadd.f32 0.0, %v1942
      %v1944 = vpop.f32.mrf.mxu0
      %v1945 = vadd.f32 0.0, %v1944
      %1946 = vmatmul.bf16.gmra.mxu0 %v985
      %v1947 = vpop.f32.mrf.mxu0
      %v1948 = vadd.f32 0.0, %v1947
      %v1949 = vpop.f32.mrf.mxu0
      %v1950 = vadd.f32 0.0, %v1949
      %1951 = vmatmul.bf16.gmra.mxu0 %v988
      %v1952 = vpop.f32.mrf.mxu0
      %v1953 = vadd.f32 0.0, %v1952
      %v1954 = vpop.f32.mrf.mxu0
      %v1955 = vadd.f32 0.0, %v1954
      %1956 = vmatmul.bf16.gmra.mxu0 %v1443
      %v1957 = vpop.f32.mrf.mxu0
      %v1958 = vadd.f32 0.0, %v1957
      %v1959 = vpop.f32.mrf.mxu0
      %v1960 = vadd.f32 0.0, %v1959
      %1961 = vmatmul.bf16.gmra.mxu0 %v1873
      %v1962 = vpop.f32.mrf.mxu0
      %v1963 = vadd.f32 0.0, %v1962
      %v1964 = vpop.f32.mrf.mxu0
      %v1965 = vadd.f32 0.0, %v1964
      %1966 = vdwg.mxu0
      %v1967 = vadd.f32 %v1833, %v1888
      %v1968 = vadd.f32 %v1834, %v1890
      %v1969 = vadd.f32 %v1835, %v1893
      %v1970 = vadd.f32 %v1836, %v1895
      %v1971 = vadd.f32 %v1837, %v1898
      %v1972 = vadd.f32 %v1838, %v1900
      %v1973 = vadd.f32 %v1839, %v1903
      %v1974 = vadd.f32 %v1840, %v1905
      %v1975 = vadd.f32 %v1841, %v1908
      %v1976 = vadd.f32 %v1842, %v1910
      %v1977 = vadd.f32 %v1843, %v1913
      %v1978 = vadd.f32 %v1844, %v1915
      %v1979 = vadd.f32 %v1845, %v1918
      %v1980 = vadd.f32 %v1846, %v1920
      %v1981 = vadd.f32 %v1847, %v1923
      %v1982 = vadd.f32 %v1848, %v1925
      %v1983 = vadd.f32 %v1849, %v1928
      %v1984 = vadd.f32 %v1850, %v1930
      %v1985 = vadd.f32 %v1851, %v1933
      %v1986 = vadd.f32 %v1852, %v1935
      %v1987 = vadd.f32 %v1853, %v1938
      %v1988 = vadd.f32 %v1854, %v1940
      %v1989 = vadd.f32 %v1855, %v1943
      %v1990 = vadd.f32 %v1856, %v1945
      %v1991 = vadd.f32 %v1857, %v1948
      %v1992 = vadd.f32 %v1858, %v1950
      %v1993 = vadd.f32 %v1859, %v1953
      %v1994 = vadd.f32 %v1860, %v1955
      %v1995 = vadd.f32 %v1861, %v1958
      %v1996 = vadd.f32 %v1862, %v1960
      %v1997 = vadd.f32 %v1863, %v1963
      %v1998 = vadd.f32 %v1864, %v1965
      %v2000 = vshrl.u32 %v279, 16
      %v2002 = vrot.slane %v2000, 4
      %v2003 = vshll.u32 %v279, 16
      %v2005 = vrot.slane %v2003, 5
      %v2006 = vor.u32 %v2002, %v2005
      %v2007 = vrot.slane %v2006, 4
      %v2009 = vshll.u32 %v280, 16
      %v2011 = vrot.slane %v2009, 5
      %v2012 = vsel %vm285, %v2007, %v2011
      %v2013 = vshrl.u32 %v280, 16
      %v2015 = vrot.slane %v2013, 4
      %v2016 = vor.u32 %v2015, %v2011
      %v2017 = vrot.slane %v2016, 4
      %v2019 = vshll.u32 %v281, 16
      %v2021 = vrot.slane %v2019, 5
      %v2022 = vsel %vm285, %v2017, %v2021
      %s2023 = scalar_lea.vmem %s1, 28
      %v2024 = vld [vmem:[%s2023] sm:$0xf]
      %v2025 = vunpack.c.l.b16 %v2012
      %v2026 = vunpack.c.l.b16 %v2022
      %v2027 = vpack.c.b16 %v2026, %v2025
      %v2029 = vsel %vm720, %v2027, 0
      %v2032 = vsel %vm769, %v2024, 0
      %2034 = vmatpush.bf16.msra.mxu0 0
      %2035 = vmatpush.bf16.msra.mxu0 0
      %2036 = vmatpush.bf16.msra.mxu0 0
      %2037 = vmatpush.bf16.msra.mxu0 0
      %2038 = vmatpush.bf16.msra.mxu0 0
      %2039 = vmatpush.bf16.msra.mxu0 0
      %2040 = vmatpush.bf16.msra.mxu0 0
      %2041 = vmatpush.bf16.msra.mxu0 %v2032
      %2042 = vmatmul.bf16.gmra.mxu0 %v728
      %v2043 = vpop.f32.mrf.mxu0
      %v2044 = vadd.f32 0.0, %v2043
      %v2045 = vpop.f32.mrf.mxu0
      %v2046 = vadd.f32 0.0, %v2045
      %2047 = vmatmul.bf16.gmra.mxu0 %v731
      %v2048 = vpop.f32.mrf.mxu0
      %v2049 = vadd.f32 0.0, %v2048
      %v2050 = vpop.f32.mrf.mxu0
      %v2051 = vadd.f32 0.0, %v2050
      %2052 = vmatmul.bf16.gmra.mxu0 %v734
      %v2053 = vpop.f32.mrf.mxu0
      %v2054 = vadd.f32 0.0, %v2053
      %v2055 = vpop.f32.mrf.mxu0
      %v2056 = vadd.f32 0.0, %v2055
      %2057 = vmatmul.bf16.gmra.mxu0 %v737
      %v2058 = vpop.f32.mrf.mxu0
      %v2059 = vadd.f32 0.0, %v2058
      %v2060 = vpop.f32.mrf.mxu0
      %v2061 = vadd.f32 0.0, %v2060
      %2062 = vmatmul.bf16.gmra.mxu0 %v740
      %v2063 = vpop.f32.mrf.mxu0
      %v2064 = vadd.f32 0.0, %v2063
      %v2065 = vpop.f32.mrf.mxu0
      %v2066 = vadd.f32 0.0, %v2065
      %2067 = vmatmul.bf16.gmra.mxu0 %v743
      %v2068 = vpop.f32.mrf.mxu0
      %v2069 = vadd.f32 0.0, %v2068
      %v2070 = vpop.f32.mrf.mxu0
      %v2071 = vadd.f32 0.0, %v2070
      %2072 = vmatmul.bf16.gmra.mxu0 %v746
      %v2073 = vpop.f32.mrf.mxu0
      %v2074 = vadd.f32 0.0, %v2073
      %v2075 = vpop.f32.mrf.mxu0
      %v2076 = vadd.f32 0.0, %v2075
      %2077 = vmatmul.bf16.gmra.mxu0 %v749
      %v2078 = vpop.f32.mrf.mxu0
      %v2079 = vadd.f32 0.0, %v2078
      %v2080 = vpop.f32.mrf.mxu0
      %v2081 = vadd.f32 0.0, %v2080
      %2082 = vmatmul.bf16.gmra.mxu0 %v752
      %v2083 = vpop.f32.mrf.mxu0
      %v2084 = vadd.f32 0.0, %v2083
      %v2085 = vpop.f32.mrf.mxu0
      %v2086 = vadd.f32 0.0, %v2085
      %2087 = vmatmul.bf16.gmra.mxu0 %v755
      %v2088 = vpop.f32.mrf.mxu0
      %v2089 = vadd.f32 0.0, %v2088
      %v2090 = vpop.f32.mrf.mxu0
      %v2091 = vadd.f32 0.0, %v2090
      %2092 = vmatmul.bf16.gmra.mxu0 %v758
      %v2093 = vpop.f32.mrf.mxu0
      %v2094 = vadd.f32 0.0, %v2093
      %v2095 = vpop.f32.mrf.mxu0
      %v2096 = vadd.f32 0.0, %v2095
      %2097 = vmatmul.bf16.gmra.mxu0 %v761
      %v2098 = vpop.f32.mrf.mxu0
      %v2099 = vadd.f32 0.0, %v2098
      %v2100 = vpop.f32.mrf.mxu0
      %v2101 = vadd.f32 0.0, %v2100
      %2102 = vmatmul.bf16.gmra.mxu0 %v764
      %v2103 = vpop.f32.mrf.mxu0
      %v2104 = vadd.f32 0.0, %v2103
      %v2105 = vpop.f32.mrf.mxu0
      %v2106 = vadd.f32 0.0, %v2105
      %2107 = vmatmul.bf16.gmra.mxu0 %v767
      %v2108 = vpop.f32.mrf.mxu0
      %v2109 = vadd.f32 0.0, %v2108
      %v2110 = vpop.f32.mrf.mxu0
      %v2111 = vadd.f32 0.0, %v2110
      %2112 = vmatmul.bf16.gmra.mxu0 %v1599
      %v2113 = vpop.f32.mrf.mxu0
      %v2114 = vadd.f32 0.0, %v2113
      %v2115 = vpop.f32.mrf.mxu0
      %v2116 = vadd.f32 0.0, %v2115
      %2117 = vmatmul.bf16.gmra.mxu0 %v2029
      %v2118 = vpop.f32.mrf.mxu0
      %v2119 = vadd.f32 0.0, %v2118
      %v2120 = vpop.f32.mrf.mxu0
      %v2121 = vadd.f32 0.0, %v2120
      %2122 = vdwg.mxu0
      %v2123 = vadd.f32 %v1967, %v2044
      %v2124 = vadd.f32 %v1968, %v2046
      %v2125 = vadd.f32 %v1969, %v2049
      %v2126 = vadd.f32 %v1970, %v2051
      %v2127 = vadd.f32 %v1971, %v2054
      %v2128 = vadd.f32 %v1972, %v2056
      %v2129 = vadd.f32 %v1973, %v2059
      %v2130 = vadd.f32 %v1974, %v2061
      %v2131 = vadd.f32 %v1975, %v2064
      %v2132 = vadd.f32 %v1976, %v2066
      %v2133 = vadd.f32 %v1977, %v2069
      %v2134 = vadd.f32 %v1978, %v2071
      %v2135 = vadd.f32 %v1979, %v2074
      %v2136 = vadd.f32 %v1980, %v2076
      %v2137 = vadd.f32 %v1981, %v2079
      %v2138 = vadd.f32 %v1982, %v2081
      %v2139 = vadd.f32 %v1983, %v2084
      %v2140 = vadd.f32 %v1984, %v2086
      %v2141 = vadd.f32 %v1985, %v2089
      %v2142 = vadd.f32 %v1986, %v2091
      %v2143 = vadd.f32 %v1987, %v2094
      %v2144 = vadd.f32 %v1988, %v2096
      %v2145 = vadd.f32 %v1989, %v2099
      %v2146 = vadd.f32 %v1990, %v2101
      %v2147 = vadd.f32 %v1991, %v2104
      %v2148 = vadd.f32 %v1992, %v2106
      %v2149 = vadd.f32 %v1993, %v2109
      %v2150 = vadd.f32 %v1994, %v2111
      %v2151 = vadd.f32 %v1995, %v2114
      %v2152 = vadd.f32 %v1996, %v2116
      %v2153 = vadd.f32 %v1997, %v2119
      %v2154 = vadd.f32 %v1998, %v2121
      %v2156 = vrot.slane %v279, 5
      %v2157 = vrot.slane %v2156, 4
      %v2158 = vrot.slane %v280, 5
      %v2159 = vsel %vm1100, %v2157, %v2158
      %v2160 = vrot.slane %v2158, 4
      %v2161 = vrot.slane %v281, 5
      %v2162 = vsel %vm1100, %v2160, %v2161
      %s2163 = scalar_lea.vmem %s1, 32
      %v2164 = vld [vmem:[%s2163] sm:$0xf]
      %v2165 = vunpack.c.l.b16 %v2159
      %v2166 = vunpack.c.l.b16 %v2162
      %v2167 = vpack.c.b16 %v2166, %v2165
      %v2169 = vsel %vm720, %v2167, 0
      %v2172 = vsel %vm769, %v2164, 0
      %2174 = vmatpush.bf16.msra.mxu0 0
      %2175 = vmatpush.bf16.msra.mxu0 0
      %2176 = vmatpush.bf16.msra.mxu0 0
      %2177 = vmatpush.bf16.msra.mxu0 0
      %2178 = vmatpush.bf16.msra.mxu0 0
      %2179 = vmatpush.bf16.msra.mxu0 0
      %2180 = vmatpush.bf16.msra.mxu0 0
      %2181 = vmatpush.bf16.msra.mxu0 %v2172
      %2182 = vmatmul.bf16.gmra.mxu0 %v1270
      %v2183 = vpop.f32.mrf.mxu0
      %v2184 = vadd.f32 0.0, %v2183
      %v2185 = vpop.f32.mrf.mxu0
      %v2186 = vadd.f32 0.0, %v2185
      %2187 = vmatmul.bf16.gmra.mxu0 %v1273
      %v2188 = vpop.f32.mrf.mxu0
      %v2189 = vadd.f32 0.0, %v2188
      %v2190 = vpop.f32.mrf.mxu0
      %v2191 = vadd.f32 0.0, %v2190
      %2192 = vmatmul.bf16.gmra.mxu0 %v1276
      %v2193 = vpop.f32.mrf.mxu0
      %v2194 = vadd.f32 0.0, %v2193
      %v2195 = vpop.f32.mrf.mxu0
      %v2196 = vadd.f32 0.0, %v2195
      %2197 = vmatmul.bf16.gmra.mxu0 %v1279
      %v2198 = vpop.f32.mrf.mxu0
      %v2199 = vadd.f32 0.0, %v2198
      %v2200 = vpop.f32.mrf.mxu0
      %v2201 = vadd.f32 0.0, %v2200
      %2202 = vmatmul.bf16.gmra.mxu0 %v1282
      %v2203 = vpop.f32.mrf.mxu0
      %v2204 = vadd.f32 0.0, %v2203
      %v2205 = vpop.f32.mrf.mxu0
      %v2206 = vadd.f32 0.0, %v2205
      %2207 = vmatmul.bf16.gmra.mxu0 %v1285
      %v2208 = vpop.f32.mrf.mxu0
      %v2209 = vadd.f32 0.0, %v2208
      %v2210 = vpop.f32.mrf.mxu0
      %v2211 = vadd.f32 0.0, %v2210
      %2212 = vmatmul.bf16.gmra.mxu0 %v1288
      %v2213 = vpop.f32.mrf.mxu0
      %v2214 = vadd.f32 0.0, %v2213
      %v2215 = vpop.f32.mrf.mxu0
      %v2216 = vadd.f32 0.0, %v2215
      %2217 = vmatmul.bf16.gmra.mxu0 %v1291
      %v2218 = vpop.f32.mrf.mxu0
      %v2219 = vadd.f32 0.0, %v2218
      %v2220 = vpop.f32.mrf.mxu0
      %v2221 = vadd.f32 0.0, %v2220
      %2222 = vmatmul.bf16.gmra.mxu0 %v1294
      %v2223 = vpop.f32.mrf.mxu0
      %v2224 = vadd.f32 0.0, %v2223
      %v2225 = vpop.f32.mrf.mxu0
      %v2226 = vadd.f32 0.0, %v2225
      %2227 = vmatmul.bf16.gmra.mxu0 %v1297
      %v2228 = vpop.f32.mrf.mxu0
      %v2229 = vadd.f32 0.0, %v2228
      %v2230 = vpop.f32.mrf.mxu0
      %v2231 = vadd.f32 0.0, %v2230
      %2232 = vmatmul.bf16.gmra.mxu0 %v1300
      %v2233 = vpop.f32.mrf.mxu0
      %v2234 = vadd.f32 0.0, %v2233
      %v2235 = vpop.f32.mrf.mxu0
      %v2236 = vadd.f32 0.0, %v2235
      %2237 = vmatmul.bf16.gmra.mxu0 %v1303
      %v2238 = vpop.f32.mrf.mxu0
      %v2239 = vadd.f32 0.0, %v2238
      %v2240 = vpop.f32.mrf.mxu0
      %v2241 = vadd.f32 0.0, %v2240
      %2242 = vmatmul.bf16.gmra.mxu0 %v1306
      %v2243 = vpop.f32.mrf.mxu0
      %v2244 = vadd.f32 0.0, %v2243
      %v2245 = vpop.f32.mrf.mxu0
      %v2246 = vadd.f32 0.0, %v2245
      %2247 = vmatmul.bf16.gmra.mxu0 %v1309
      %v2248 = vpop.f32.mrf.mxu0
      %v2249 = vadd.f32 0.0, %v2248
      %v2250 = vpop.f32.mrf.mxu0
      %v2251 = vadd.f32 0.0, %v2250
      %2252 = vmatmul.bf16.gmra.mxu0 %v1739
      %v2253 = vpop.f32.mrf.mxu0
      %v2254 = vadd.f32 0.0, %v2253
      %v2255 = vpop.f32.mrf.mxu0
      %v2256 = vadd.f32 0.0, %v2255
      %2257 = vmatmul.bf16.gmra.mxu0 %v2169
      %v2258 = vpop.f32.mrf.mxu0
      %v2259 = vadd.f32 0.0, %v2258
      %v2260 = vpop.f32.mrf.mxu0
      %v2261 = vadd.f32 0.0, %v2260
      %2262 = vdwg.mxu0
      %v2263 = vadd.f32 %v2123, %v2184
      %v2264 = vadd.f32 %v2124, %v2186
      %v2265 = vadd.f32 %v2125, %v2189
      %v2266 = vadd.f32 %v2126, %v2191
      %v2267 = vadd.f32 %v2127, %v2194
      %v2268 = vadd.f32 %v2128, %v2196
      %v2269 = vadd.f32 %v2129, %v2199
      %v2270 = vadd.f32 %v2130, %v2201
      %v2271 = vadd.f32 %v2131, %v2204
      %v2272 = vadd.f32 %v2132, %v2206
      %v2273 = vadd.f32 %v2133, %v2209
      %v2274 = vadd.f32 %v2134, %v2211
      %v2275 = vadd.f32 %v2135, %v2214
      %v2276 = vadd.f32 %v2136, %v2216
      %v2277 = vadd.f32 %v2137, %v2219
      %v2278 = vadd.f32 %v2138, %v2221
      %v2279 = vadd.f32 %v2139, %v2224
      %v2280 = vadd.f32 %v2140, %v2226
      %v2281 = vadd.f32 %v2141, %v2229
      %v2282 = vadd.f32 %v2142, %v2231
      %v2283 = vadd.f32 %v2143, %v2234
      %v2284 = vadd.f32 %v2144, %v2236
      %v2285 = vadd.f32 %v2145, %v2239
      %v2286 = vadd.f32 %v2146, %v2241
      %v2287 = vadd.f32 %v2147, %v2244
      %v2288 = vadd.f32 %v2148, %v2246
      %v2289 = vadd.f32 %v2149, %v2249
      %v2290 = vadd.f32 %v2150, %v2251
      %v2291 = vadd.f32 %v2151, %v2254
      %v2292 = vadd.f32 %v2152, %v2256
      %v2293 = vadd.f32 %v2153, %v2259
      %v2294 = vadd.f32 %v2154, %v2261
      %v2295 = vld [vmem:[%s2] sm:$0x1]
      %v2297 = vperm.slane %v2295, 0
      %v2299 = vadd.f32 %v2263, %v2297
      %v2300 = vadd.f32 %v2264, %v2297
      %v2301 = vadd.f32 %v2265, %v2297
      %v2302 = vadd.f32 %v2266, %v2297
      %v2303 = vadd.f32 %v2267, %v2297
      %v2304 = vadd.f32 %v2268, %v2297
      %v2305 = vadd.f32 %v2269, %v2297
      %v2306 = vadd.f32 %v2270, %v2297
      %v2307 = vadd.f32 %v2271, %v2297
      %v2308 = vadd.f32 %v2272, %v2297
      %v2309 = vadd.f32 %v2273, %v2297
      %v2310 = vadd.f32 %v2274, %v2297
      %v2311 = vadd.f32 %v2275, %v2297
      %v2312 = vadd.f32 %v2276, %v2297
      %v2313 = vadd.f32 %v2277, %v2297
      %v2314 = vadd.f32 %v2278, %v2297
      %v2315 = vadd.f32 %v2279, %v2297
      %v2316 = vadd.f32 %v2280, %v2297
      %v2317 = vadd.f32 %v2281, %v2297
      %v2318 = vadd.f32 %v2282, %v2297
      %v2319 = vadd.f32 %v2283, %v2297
      %v2320 = vadd.f32 %v2284, %v2297
      %v2321 = vadd.f32 %v2285, %v2297
      %v2322 = vadd.f32 %v2286, %v2297
      %v2323 = vadd.f32 %v2287, %v2297
      %v2324 = vadd.f32 %v2288, %v2297
      %v2325 = vadd.f32 %v2289, %v2297
      %v2326 = vadd.f32 %v2290, %v2297
      %v2327 = vadd.f32 %v2291, %v2297
      %v2328 = vadd.f32 %v2292, %v2297
      %v2329 = vadd.f32 %v2293, %v2297
      %v2330 = vadd.f32 %v2294, %v2297
      %vm2331 = vcmask 31744
      %2332 = vst.msk [vmem:[%s219] sm:$0xff] %vm2331, %v2299
      %2333 = vst.msk [vmem:[%s219 + $0x8] sm:$0xff] %vm2331, %v2300
      %2334 = vst.msk [vmem:[%s219 + $0x10] sm:$0xff] %vm2331, %v2301
      %2335 = vst.msk [vmem:[%s219 + $0x18] sm:$0xff] %vm2331, %v2302
      %2336 = vst.msk [vmem:[%s219 + $0x20] sm:$0xff] %vm2331, %v2303
      %2337 = vst.msk [vmem:[%s219 + $0x28] sm:$0xff] %vm2331, %v2304
      %2338 = vst.msk [vmem:[%s219 + $0x30] sm:$0xff] %vm2331, %v2305
      %2339 = vst.msk [vmem:[%s219 + $0x38] sm:$0xff] %vm2331, %v2306
      %2340 = vst.msk [vmem:[%s219 + $0x40] sm:$0xff] %vm2331, %v2307
      %2341 = vst.msk [vmem:[%s219 + $0x48] sm:$0xff] %vm2331, %v2308
      %2342 = vst.msk [vmem:[%s219 + $0x50] sm:$0xff] %vm2331, %v2309
      %2343 = vst.msk [vmem:[%s219 + $0x58] sm:$0xff] %vm2331, %v2310
      %2344 = vst.msk [vmem:[%s219 + $0x60] sm:$0xff] %vm2331, %v2311
      %2345 = vst.msk [vmem:[%s219 + $0x68] sm:$0xff] %vm2331, %v2312
      %2346 = vst.msk [vmem:[%s219 + $0x70] sm:$0xff] %vm2331, %v2313
      %2347 = vst.msk [vmem:[%s219 + $0x78] sm:$0xff] %vm2331, %v2314
      %2348 = vst.msk [vmem:[%s219 + $0x80] sm:$0xff] %vm2331, %v2315
      %2349 = vst.msk [vmem:[%s219 + $0x88] sm:$0xff] %vm2331, %v2316
      %2350 = vst.msk [vmem:[%s219 + $0x90] sm:$0xff] %vm2331, %v2317
      %2351 = vst.msk [vmem:[%s219 + $0x98] sm:$0xff] %vm2331, %v2318
      %2352 = vst.msk [vmem:[%s219 + $0xa0] sm:$0xff] %vm2331, %v2319
      %2353 = vst.msk [vmem:[%s219 + $0xa8] sm:$0xff] %vm2331, %v2320
      %2354 = vst.msk [vmem:[%s219 + $0xb0] sm:$0xff] %vm2331, %v2321
      %2355 = vst.msk [vmem:[%s219 + $0xb8] sm:$0xff] %vm2331, %v2322
      %2356 = vst.msk [vmem:[%s219 + $0xc0] sm:$0xff] %vm2331, %v2323
      %2357 = vst.msk [vmem:[%s219 + $0xc8] sm:$0xff] %vm2331, %v2324
      %2358 = vst.msk [vmem:[%s219 + $0xd0] sm:$0xff] %vm2331, %v2325
      %2359 = vst.msk [vmem:[%s219 + $0xd8] sm:$0xff] %vm2331, %v2326
      %2360 = vst.msk [vmem:[%s219 + $0xe0] sm:$0xff] %vm2331, %v2327
      %2361 = vst.msk [vmem:[%s219 + $0xe8] sm:$0xff] %vm2331, %v2328
      %2362 = vst.msk [vmem:[%s219 + $0xf0] sm:$0xff] %vm2331, %v2329
      %2363 = vst.msk [vmem:[%s219 + $0xf8] sm:$0xff] %vm2331, %v2330
      %v2364 = vld [vmem:[%s4] sm:$0x1]
      %v2365 = vsel %vm2331, %v2299, 0.0
      %v2366 = vsel %vm2331, %v2300, 0.0
      %v2367 = vadd.f32 %v2365, %v2366
      %v2368 = vsel %vm2331, %v2301, 0.0
      %v2369 = vadd.f32 %v2367, %v2368
      %v2370 = vsel %vm2331, %v2302, 0.0
      %v2371 = vadd.f32 %v2369, %v2370
      %v2372 = vsel %vm2331, %v2303, 0.0
      %v2373 = vadd.f32 %v2371, %v2372
      %v2374 = vsel %vm2331, %v2304, 0.0
      %v2375 = vadd.f32 %v2373, %v2374
      %v2376 = vsel %vm2331, %v2305, 0.0
      %v2377 = vadd.f32 %v2375, %v2376
      %v2378 = vsel %vm2331, %v2306, 0.0
      %v2379 = vadd.f32 %v2377, %v2378
      %v2380 = vsel %vm2331, %v2307, 0.0
      %v2381 = vadd.f32 %v2379, %v2380
      %v2382 = vsel %vm2331, %v2308, 0.0
      %v2383 = vadd.f32 %v2381, %v2382
      %v2384 = vsel %vm2331, %v2309, 0.0
      %v2385 = vadd.f32 %v2383, %v2384
      %v2386 = vsel %vm2331, %v2310, 0.0
      %v2387 = vadd.f32 %v2385, %v2386
      %v2388 = vsel %vm2331, %v2311, 0.0
      %v2389 = vadd.f32 %v2387, %v2388
      %v2390 = vsel %vm2331, %v2312, 0.0
      %v2391 = vadd.f32 %v2389, %v2390
      %v2392 = vsel %vm2331, %v2313, 0.0
      %v2393 = vadd.f32 %v2391, %v2392
      %v2394 = vsel %vm2331, %v2314, 0.0
      %v2395 = vadd.f32 %v2393, %v2394
      %v2396 = vsel %vm2331, %v2315, 0.0
      %v2397 = vadd.f32 %v2395, %v2396
      %v2398 = vsel %vm2331, %v2316, 0.0
      %v2399 = vadd.f32 %v2397, %v2398
      %v2400 = vsel %vm2331, %v2317, 0.0
      %v2401 = vadd.f32 %v2399, %v2400
      %v2402 = vsel %vm2331, %v2318, 0.0
      %v2403 = vadd.f32 %v2401, %v2402
      %v2404 = vsel %vm2331, %v2319, 0.0
      %v2405 = vadd.f32 %v2403, %v2404
      %v2406 = vsel %vm2331, %v2320, 0.0
      %v2407 = vadd.f32 %v2405, %v2406
      %v2408 = vsel %vm2331, %v2321, 0.0
      %v2409 = vadd.f32 %v2407, %v2408
      %v2410 = vsel %vm2331, %v2322, 0.0
      %v2411 = vadd.f32 %v2409, %v2410
      %v2412 = vsel %vm2331, %v2323, 0.0
      %v2413 = vadd.f32 %v2411, %v2412
      %v2414 = vsel %vm2331, %v2324, 0.0
      %v2415 = vadd.f32 %v2413, %v2414
      %v2416 = vsel %vm2331, %v2325, 0.0
      %v2417 = vadd.f32 %v2415, %v2416
      %v2418 = vsel %vm2331, %v2326, 0.0
      %v2419 = vadd.f32 %v2417, %v2418
      %v2420 = vsel %vm2331, %v2327, 0.0
      %v2421 = vadd.f32 %v2419, %v2420
      %v2422 = vsel %vm2331, %v2328, 0.0
      %v2423 = vadd.f32 %v2421, %v2422
      %v2424 = vsel %vm2331, %v2329, 0.0
      %v2425 = vadd.f32 %v2423, %v2424
      %v2426 = vsel %vm2331, %v2330, 0.0
      %v2427 = vadd.f32 %v2425, %v2426
      %v2428 = vrot.slane %v2427, 4
      %v2429 = vadd.f32 %v2427, %v2428
      %v2430 = vrot.slane %v2429, 2
      %v2431 = vadd.f32 %v2429, %v2430
      %v2432 = vrot.slane %v2431, 1
      %v2433 = vadd.f32 %v2431, %v2432
      %v2434 = vadd.f32 %v2364, %v2433
      %vm2435 = vcmask 24576
      %2436 = vst.msk [vmem:[%s4] sm:$0x1] %vm2435, %v2434
      %v2437 = vld [vmem:[%s5] sm:$0x1]
      %v2438 = vmul.f32 %v2299, %v2299
      %v2439 = vmul.f32 %v2300, %v2300
      %v2440 = vmul.f32 %v2301, %v2301
      %v2441 = vmul.f32 %v2302, %v2302
      %v2442 = vmul.f32 %v2303, %v2303
      %v2443 = vmul.f32 %v2304, %v2304
      %v2444 = vmul.f32 %v2305, %v2305
      %v2445 = vmul.f32 %v2306, %v2306
      %v2446 = vmul.f32 %v2307, %v2307
      %v2447 = vmul.f32 %v2308, %v2308
      %v2448 = vmul.f32 %v2309, %v2309
      %v2449 = vmul.f32 %v2310, %v2310
      %v2450 = vmul.f32 %v2311, %v2311
      %v2451 = vmul.f32 %v2312, %v2312
      %v2452 = vmul.f32 %v2313, %v2313
      %v2453 = vmul.f32 %v2314, %v2314
      %v2454 = vmul.f32 %v2315, %v2315
      %v2455 = vmul.f32 %v2316, %v2316
      %v2456 = vmul.f32 %v2317, %v2317
      %v2457 = vmul.f32 %v2318, %v2318
      %v2458 = vmul.f32 %v2319, %v2319
      %v2459 = vmul.f32 %v2320, %v2320
      %v2460 = vmul.f32 %v2321, %v2321
      %v2461 = vmul.f32 %v2322, %v2322
      %v2462 = vmul.f32 %v2323, %v2323
      %v2463 = vmul.f32 %v2324, %v2324
      %v2464 = vmul.f32 %v2325, %v2325
      %v2465 = vmul.f32 %v2326, %v2326
      %v2466 = vmul.f32 %v2327, %v2327
      %v2467 = vmul.f32 %v2328, %v2328
      %v2468 = vmul.f32 %v2329, %v2329
      %v2469 = vmul.f32 %v2330, %v2330
      %v2470 = vsel %vm2331, %v2438, 0.0
      %v2471 = vsel %vm2331, %v2439, 0.0
      %v2472 = vadd.f32 %v2470, %v2471
      %v2473 = vsel %vm2331, %v2440, 0.0
      %v2474 = vadd.f32 %v2472, %v2473
      %v2475 = vsel %vm2331, %v2441, 0.0
      %v2476 = vadd.f32 %v2474, %v2475
      %v2477 = vsel %vm2331, %v2442, 0.0
      %v2478 = vadd.f32 %v2476, %v2477
      %v2479 = vsel %vm2331, %v2443, 0.0
      %v2480 = vadd.f32 %v2478, %v2479
      %v2481 = vsel %vm2331, %v2444, 0.0
      %v2482 = vadd.f32 %v2480, %v2481
      %v2483 = vsel %vm2331, %v2445, 0.0
      %v2484 = vadd.f32 %v2482, %v2483
      %v2485 = vsel %vm2331, %v2446, 0.0
      %v2486 = vadd.f32 %v2484, %v2485
      %v2487 = vsel %vm2331, %v2447, 0.0
      %v2488 = vadd.f32 %v2486, %v2487
      %v2489 = vsel %vm2331, %v2448, 0.0
      %v2490 = vadd.f32 %v2488, %v2489
      %v2491 = vsel %vm2331, %v2449, 0.0
      %v2492 = vadd.f32 %v2490, %v2491
      %v2493 = vsel %vm2331, %v2450, 0.0
      %v2494 = vadd.f32 %v2492, %v2493
      %v2495 = vsel %vm2331, %v2451, 0.0
      %v2496 = vadd.f32 %v2494, %v2495
      %v2497 = vsel %vm2331, %v2452, 0.0
      %v2498 = vadd.f32 %v2496, %v2497
      %v2499 = vsel %vm2331, %v2453, 0.0
      %v2500 = vadd.f32 %v2498, %v2499
      %v2501 = vsel %vm2331, %v2454, 0.0
      %v2502 = vadd.f32 %v2500, %v2501
      %v2503 = vsel %vm2331, %v2455, 0.0
      %v2504 = vadd.f32 %v2502, %v2503
      %v2505 = vsel %vm2331, %v2456, 0.0
      %v2506 = vadd.f32 %v2504, %v2505
      %v2507 = vsel %vm2331, %v2457, 0.0
      %v2508 = vadd.f32 %v2506, %v2507
      %v2509 = vsel %vm2331, %v2458, 0.0
      %v2510 = vadd.f32 %v2508, %v2509
      %v2511 = vsel %vm2331, %v2459, 0.0
      %v2512 = vadd.f32 %v2510, %v2511
      %v2513 = vsel %vm2331, %v2460, 0.0
      %v2514 = vadd.f32 %v2512, %v2513
      %v2515 = vsel %vm2331, %v2461, 0.0
      %v2516 = vadd.f32 %v2514, %v2515
      %v2517 = vsel %vm2331, %v2462, 0.0
      %v2518 = vadd.f32 %v2516, %v2517
      %v2519 = vsel %vm2331, %v2463, 0.0
      %v2520 = vadd.f32 %v2518, %v2519
      %v2521 = vsel %vm2331, %v2464, 0.0
      %v2522 = vadd.f32 %v2520, %v2521
      %v2523 = vsel %vm2331, %v2465, 0.0
      %v2524 = vadd.f32 %v2522, %v2523
      %v2525 = vsel %vm2331, %v2466, 0.0
      %v2526 = vadd.f32 %v2524, %v2525
      %v2527 = vsel %vm2331, %v2467, 0.0
      %v2528 = vadd.f32 %v2526, %v2527
      %v2529 = vsel %vm2331, %v2468, 0.0
      %v2530 = vadd.f32 %v2528, %v2529
      %v2531 = vsel %vm2331, %v2469, 0.0
      %v2532 = vadd.f32 %v2530, %v2531
      %v2533 = vrot.slane %v2532, 4
      %v2534 = vadd.f32 %v2532, %v2533
      %v2535 = vrot.slane %v2534, 2
      %v2536 = vadd.f32 %v2534, %v2535
      %v2537 = vrot.slane %v2536, 1
      %v2538 = vadd.f32 %v2536, %v2537
      %v2539 = vadd.f32 %v2437, %v2538
      %2540 = vst.msk [vmem:[%s5] sm:$0x1] %vm2435, %v2539
      %p2541 = scmp.lt.s32.totalorder %s17, 1
      %s2542 = scalar_select %p2541, %s17, 1
      %s2543 = smul.addr %s2542, 32
      %s2544 = smul.addr %s2543, 8
      %s2545 = scalar_lea.vmem %s3, %s2544
      // Predicated region
      $region37: #{upconv_block_forward.12} parent=31 // pred_check
        %p2546 = pneg %p103
      $region38: #{upconv_block_forward.12} parent=31 // pred_check_branch
        %2548 = sbr.rel (%p2546) target = $region40
      $region39: #{upconv_block_forward.12} parent=31 // pred_region
        _
      $region40: #{upconv_block_forward.12} parent=31 // pred_fallthru
        _
      // Predicated region
      $region41: #{upconv_block_forward.12} parent=31 // pred_check
        %p2549 = pneg %p124
      $region42: #{upconv_block_forward.12} parent=31 // pred_check_branch
        %2551 = sbr.rel (%p2549) target = $region44
      $region43: #{upconv_block_forward.12} parent=31 // pred_region
        _
      $region44: #{upconv_block_forward.12} parent=31 // pred_fallthru
        _
      // Predicated region
      $region45: #{upconv_block_forward.12} parent=31 // pred_check
        %p2552 = pneg %p145
      $region46: #{upconv_block_forward.12} parent=31 // pred_check_branch
        %2554 = sbr.rel (%p2552) target = $region48
      $region47: #{upconv_block_forward.12} parent=31 // pred_region
        _
      $region48: #{upconv_block_forward.12} parent=31 // pred_fallthru
        _
      // Predicated region
      $region49: #{upconv_block_forward.12} parent=31 // pred_check
        %p2555 = pneg %p124
      $region50: #{upconv_block_forward.12} parent=31 // pred_check_branch
        %2557 = sbr.rel (%p2555) target = $region52
      $region51: #{upconv_block_forward.12} parent=31 // pred_region
        _
      $region52: #{upconv_block_forward.12} parent=31 // pred_fallthru
        _
      // Predicated region
      $region53: #{upconv_block_forward.12} parent=31 // pred_check
        %p2558 = pneg %p145
      $region54: #{upconv_block_forward.12} parent=31 // pred_check_branch
        %2560 = sbr.rel (%p2558) target = $region56
      $region55: #{upconv_block_forward.12} parent=31 // pred_region
        _
      $region56: #{upconv_block_forward.12} parent=31 // pred_fallthru
        _
    $region32: #{upconv_block_forward.12} parent=5 // pred_fallthru
      _
    %p2561 = scmp.le.s32.totalorder 2, %s12
    // Predicated region
    $region57: #{upconv_block_forward.12} parent=5 // pred_check
      %p2562 = pneg %p2561
    $region58: #{upconv_block_forward.12} parent=5 // pred_check_branch
      %2564 = sbr.rel (%p2562) target = $region60
    $region59: #{upconv_block_forward.12} parent=5 // pred_region
      %s2565 = ssub.s32 %s12, 2
      // Predicated region
      $region61: #{upconv_block_forward.12} parent=59 // pred_check
        %p2566 = pneg %p109
      $region62: #{upconv_block_forward.12} parent=59 // pred_check_branch
        %2568 = sbr.rel (%p2566) target = $region64
      $region63: #{upconv_block_forward.12} parent=59 // pred_region
        %p2569 = scmp.lt.s32.totalorder %s18, 1
        %s2570 = scalar_select %p2569, %s18, 1
        %s2571 = smul.addr %s2570, 32
        %s2572 = smul.addr %s2571, 8
        %s2573 = scalar_lea.vmem %s3, %s2572
      $region64: #{upconv_block_forward.12} parent=59 // pred_fallthru
        _
    $region60: #{upconv_block_forward.12} parent=5 // pred_fallthru
      _
  $region6: #{upconv_block_forward.12} parent=0 // loop_footer
    %s16 = sadd.s32 1, %s12
  $region7: #{upconv_block_forward.12} parent=0 // loop_footer_branch
    %11 = sbr.rel target = $region3
  $region8: #{upconv_block_forward.12} parent=0 // loop_exit
    _

// kernel: upconv_block_forward.15
$region0: #{upconv_block_forward.15}
  #allocation0 [shape = 'u32[]', space=smem, size = 0x4, offset = 0x4, fixed_abs, tag = 'smem constant byte address 0x4 - core index']
  #allocation1 [shape = 'u32[72,128]{1,0:T(1,128)}', space=vmem, size = 0x9000, scoped, tag = 'internal scratch']
  %s0 = inlined_call_operand.vmem [shape: f32[16,128], index: 0, kind: input, shape index: {}]
  %s1 = inlined_call_operand.vmem [shape: f32[1,128], index: 1, kind: input, shape index: {}]
  %s2 = inlined_call_operand.vmem [shape: f32[1,128], index: 2, kind: input, shape index: {}]
  %s3 = inlined_call_operand.vmem [shape: f32[16,128], index: 3, kind: input, shape index: {}]
  %s4 = inlined_call_operand.vmem [shape: f32[16,128], index: 4, kind: output, shape index: {}]
  %s5 = sld [smem:[#allocation0]]
  $region26: #{upconv_block_forward.15} parent=0
    _
  %s7 = ssub.s32 1, %s5
  %s8 = scalar_select 0, %s7, %s5
  // Predicated region
  $region2: #{upconv_block_forward.15} parent=0 // pred_check
    _
  $region3: #{upconv_block_forward.15} parent=0 // pred_check_branch
    %10 = sbr.rel (0) target = $region5
  $region4: #{upconv_block_forward.15} parent=0 // pred_region
    _
  $region5: #{upconv_block_forward.15} parent=0 // pred_fallthru
    _
  // Predicated region
  $region6: #{upconv_block_forward.15} parent=0 // pred_check
    _
  $region7: #{upconv_block_forward.15} parent=0 // pred_check_branch
    %12 = sbr.rel (0) target = $region9
  $region8: #{upconv_block_forward.15} parent=0 // pred_region
    _
  $region9: #{upconv_block_forward.15} parent=0 // pred_fallthru
    _
  // Predicated region
  $region10: #{upconv_block_forward.15} parent=0 // pred_check
    _
  $region11: #{upconv_block_forward.15} parent=0 // pred_check_branch
    %14 = sbr.rel (0) target = $region13
  $region12: #{upconv_block_forward.15} parent=0 // pred_region
    _
  $region13: #{upconv_block_forward.15} parent=0 // pred_fallthru
    _
  // Predicated region
  $region14: #{upconv_block_forward.15} parent=0 // pred_check
    _
  $region15: #{upconv_block_forward.15} parent=0 // pred_check_branch
    %16 = sbr.rel (0) target = $region17
  $region16: #{upconv_block_forward.15} parent=0 // pred_region
    _
  $region17: #{upconv_block_forward.15} parent=0 // pred_fallthru
    _
  %v17 = vld [vmem:[%s0] sm:$0xff]
  %v18 = vld [vmem:[%s0 + $0x8] sm:$0xff]
  %v19 = vld [vmem:[%s1] sm:$0x1]
  %v21 = vperm.slane %v19, 0
  %v23 = vmul.f32 %v17, %v21
  %v24 = vmul.f32 %v18, %v21
  %v25 = vld [vmem:[%s2] sm:$0x1]
  %v27 = vperm.slane %v25, 0
  %v29 = vadd.f32 %v23, %v27
  %v30 = vadd.f32 %v24, %v27
  %v31 = vld [vmem:[%s3] sm:$0xff]
  %v32 = vld [vmem:[%s3 + $0x8] sm:$0xff]
  %v33 = vadd.f32 %v29, %v31
  %v34 = vadd.f32 %v30, %v32
  %35 = vst [vmem:[%s4] sm:$0xff] %v33
  %36 = vst [vmem:[%s4 + $0x8] sm:$0xff] %v34
  // Predicated region
  $region18: #{upconv_block_forward.15} parent=0 // pred_check
    _
  $region19: #{upconv_block_forward.15} parent=0 // pred_check_branch
    %38 = sbr.rel (0) target = $region21
  $region20: #{upconv_block_forward.15} parent=0 // pred_region
    _
  $region21: #{upconv_block_forward.15} parent=0 // pred_fallthru
    _
  // Predicated region
  $region22: #{upconv_block_forward.15} parent=0 // pred_check
    _
  $region23: #{upconv_block_forward.15} parent=0 // pred_check_branch
    %40 = sbr.rel (0) target = $region25
  $region24: #{upconv_block_forward.15} parent=0 // pred_region
    _
  $region25: #{upconv_block_forward.15} parent=0 // pred_fallthru
    _

// kernel: upconv_block_forward.14
$region0: #{upconv_block_forward.14}
  #allocation0 [shape = 'u32[]', space=smem, size = 0x4, offset = 0x4, fixed_abs, tag = 'smem constant byte address 0x4 - core index']
  #allocation1 [shape = 'u32[72,128]{1,0:T(1,128)}', space=vmem, size = 0x9000, scoped, tag = 'internal scratch']
  %s0 = inlined_call_operand.vmem [shape: bf16[2,18,18,4], index: 0, kind: input, shape index: {}]
  %s1 = inlined_call_operand.vmem [shape: bf16[9,4,4], index: 1, kind: input, shape index: {}]
  %s2 = inlined_call_operand.vmem [shape: f32[1,4], index: 2, kind: input, shape index: {}]
  %s3 = inlined_call_operand.vmem [shape: f32[2,256,4], index: 3, kind: output, shape index: {0}]
  %s4 = inlined_call_operand.vmem [shape: f32[1,4], index: 4, kind: output, shape index: {1}]
  %s5 = inlined_call_operand.vmem [shape: f32[1,4], index: 5, kind: output, shape index: {2}]
  %6 = xla_tuple %s3, %s4, %s5
  %s7 = sld [smem:[#allocation0]]
  $region65: #{upconv_block_forward.14} parent=0
    _
  %s9 = ssub.s32 1, %s7
  %s10 = scalar_select 0, %s9, %s7
  loop: start=0, step=1, limit=4
  $region2: #{upconv_block_forward.14} parent=0 // loop_pre_header
    _
  $region3: #{upconv_block_forward.14} parent=0 // loop_header
    %s12 = sphi 0, %s16
    %p13 = scmp.ge.s32.totalorder %s12, 4
    %s22 = sphi 0, %s24
    %s25 = sphi 0, %s22
    %s26 = sphi 0, %s25
    %s42 = sphi 0, %s26
    %s46 = sphi 0, %s46
    %s48 = sphi 0, %s46
    %s49 = sphi 0, %s48
    %s63 = sphi 0, %s49
    %s67 = sphi 0, %s67
    %s69 = sphi 0, %s67
    %s70 = sphi 0, %s69
    %s84 = sphi 0, %s70
    %s90 = sphi 0, %s92
    %s93 = sphi 0, %s90
    %s94 = sphi 0, %s93
    %s110 = sphi 0, %s94
    %s114 = sphi 0, %s114
    %s116 = sphi 0, %s114
    %s117 = sphi 0, %s116
    %s131 = sphi 0, %s117
    %s135 = sphi 0, %s135
    %s137 = sphi 0, %s135
    %s138 = sphi 0, %s137
    %s152 = sphi 0, %s138
  $region4: #{upconv_block_forward.14} parent=0 // loop_header_branch
    %15 = sbr.rel (%p13) target = $region8
  $region5: #{upconv_block_forward.14} parent=0 // loop_body
    %s17 = ssub.s32 %s12, 1
    %s18 = ssub.s32 %s12, 2
    %s19 = sadd.s32 %s12, 1
    %s20 = ssub.s32 %s12, %s19
    %p21 = scmp.eq.s32.totalorder %s20, 0
    %s23 = sadd.s32 %s22, 1
    %s24 = scalar_select %p21, %s22, %s23
    %p27 = pneg %p21
    %p28 = scmp.eq.s32.totalorder %s12, 1
    %p29 = por %p27, %p28
    %p30 = scmp.ne.s32.totalorder %s22, %s25
    %p31 = scmp.eq.s32.totalorder %s12, 0
    %p32 = por %p30, %p31
    %p33 = scmp.ne.s32.totalorder %s22, %s25
    %p34 = scmp.eq.s32.totalorder %s17, 1
    %p35 = por %p33, %p34
    %p36 = scmp.ne.s32.totalorder %s25, %s26
    %p37 = scmp.eq.s32.totalorder %s17, 0
    %p38 = por %p36, %p37
    %p39 = scmp.ne.s32.totalorder %s25, %s26
    %p40 = scmp.eq.s32.totalorder %s18, 1
    %p41 = por %p39, %p40
    %p43 = scmp.ne.s32.totalorder %s26, %s42
    %p44 = scmp.eq.s32.totalorder %s18, 0
    %p45 = por %p43, %p44
    %s47 = sadd.s32 %s46, 1
    %p50 = scmp.eq.s32.totalorder %s12, 1
    %p51 = scmp.ne.s32.totalorder %s46, %s48
    %p52 = scmp.eq.s32.totalorder %s12, 0
    %p53 = por %p51, %p52
    %p54 = scmp.ne.s32.totalorder %s46, %s48
    %p55 = scmp.eq.s32.totalorder %s17, 1
    %p56 = por %p54, %p55
    %p57 = scmp.ne.s32.totalorder %s48, %s49
    %p58 = scmp.eq.s32.totalorder %s17, 0
    %p59 = por %p57, %p58
    %p60 = scmp.ne.s32.totalorder %s48, %s49
    %p61 = scmp.eq.s32.totalorder %s18, 1
    %p62 = por %p60, %p61
    %p64 = scmp.ne.s32.totalorder %s49, %s63
    %p65 = scmp.eq.s32.totalorder %s18, 0
    %p66 = por %p64, %p65
    %s68 = sadd.s32 %s67, 1
    %p71 = scmp.eq.s32.totalorder %s12, 1
    %p72 = scmp.ne.s32.totalorder %s67, %s69
    %p73 = scmp.eq.s32.totalorder %s12, 0
    %p74 = por %p72, %p73
    %p75 = scmp.ne.s32.totalorder %s67, %s69
    %p76 = scmp.eq.s32.totalorder %s17, 1
    %p77 = por %p75, %p76
    %p78 = scmp.ne.s32.totalorder %s69, %s70
    %p79 = scmp.eq.s32.totalorder %s17, 0
    %p80 = por %p78, %p79
    %p81 = scmp.ne.s32.totalorder %s69, %s70
    %p82 = scmp.eq.s32.totalorder %s18, 1
    %p83 = por %p81, %p82
    %p85 = scmp.ne.s32.totalorder %s70, %s84
    %p86 = scmp.eq.s32.totalorder %s18, 0
    %p87 = por %p85, %p86
    %s88 = ssub.s32 %s12, %s19
    %p89 = scmp.eq.s32.totalorder %s88, 0
    %s91 = sadd.s32 %s90, 1
    %s92 = scalar_select %p89, %s90, %s91
    %p95 = pneg %p89
    %p96 = scmp.eq.s32.totalorder %s12, 1
    %p97 = por %p95, %p96
    %p98 = scmp.ne.s32.totalorder %s90, %s93
    %p99 = scmp.eq.s32.totalorder %s12, 0
    %p100 = por %p98, %p99
    %p101 = scmp.ne.s32.totalorder %s90, %s93
    %p102 = scmp.eq.s32.totalorder %s17, 1
    %p103 = por %p101, %p102
    %p104 = scmp.ne.s32.totalorder %s93, %s94
    %p105 = scmp.eq.s32.totalorder %s17, 0
    %p106 = por %p104, %p105
    %p107 = scmp.ne.s32.totalorder %s93, %s94
    %p108 = scmp.eq.s32.totalorder %s18, 1
    %p109 = por %p107, %p108
    %p111 = scmp.ne.s32.totalorder %s94, %s110
    %p112 = scmp.eq.s32.totalorder %s18, 0
    %p113 = por %p111, %p112
    %s115 = sadd.s32 %s114, 1
    %p118 = scmp.eq.s32.totalorder %s12, 1
    %p119 = scmp.ne.s32.totalorder %s114, %s116
    %p120 = scmp.eq.s32.totalorder %s12, 0
    %p121 = por %p119, %p120
    %p122 = scmp.ne.s32.totalorder %s114, %s116
    %p123 = scmp.eq.s32.totalorder %s17, 1
    %p124 = por %p122, %p123
    %p125 = scmp.ne.s32.totalorder %s116, %s117
    %p126 = scmp.eq.s32.totalorder %s17, 0
    %p127 = por %p125, %p126
    %p128 = scmp.ne.s32.totalorder %s116, %s117
    %p129 = scmp.eq.s32.totalorder %s18, 1
    %p130 = por %p128, %p129
    %p132 = scmp.ne.s32.totalorder %s117, %s131
    %p133 = scmp.eq.s32.totalorder %s18, 0
    %p134 = por %p132, %p133
    %s136 = sadd.s32 %s135, 1
    %p139 = scmp.eq.s32.totalorder %s12, 1
    %p140 = scmp.ne.s32.totalorder %s135, %s137
    %p141 = scmp.eq.s32.totalorder %s12, 0
    %p142 = por %p140, %p141
    %p143 = scmp.ne.s32.totalorder %s135, %s137
    %p144 = scmp.eq.s32.totalorder %s17, 1
    %p145 = por %p143, %p144
    %p146 = scmp.ne.s32.totalorder %s137, %s138
    %p147 = scmp.eq.s32.totalorder %s17, 0
    %p148 = por %p146, %p147
    %p149 = scmp.ne.s32.totalorder %s137, %s138
    %p150 = scmp.eq.s32.totalorder %s18, 1
    %p151 = por %p149, %p150
    %p153 = scmp.ne.s32.totalorder %s138, %s152
    %p154 = scmp.eq.s32.totalorder %s18, 0
    %p155 = por %p153, %p154
    %p156 = scmp.le.s32.totalorder 1, %s12
    %p157 = scmp.lt.s32.totalorder %s12, 3
    %p158 = pnand %p156, %p157
    %p159 = pneg %p158
    // Predicated region
    $region9: #{upconv_block_forward.14} parent=5 // pred_check
      _
    $region10: #{upconv_block_forward.14} parent=5 // pred_check_branch
      %161 = sbr.rel (%p158) target = $region12
    $region11: #{upconv_block_forward.14} parent=5 // pred_region
      %s162 = ssub.s32 %s12, 1
      // Predicated region
      $region13: #{upconv_block_forward.14} parent=11 // pred_check
        %p163 = pneg %p59
      $region14: #{upconv_block_forward.14} parent=11 // pred_check_branch
        %165 = sbr.rel (%p163) target = $region16
      $region15: #{upconv_block_forward.14} parent=11 // pred_region
        _
      $region16: #{upconv_block_forward.14} parent=11 // pred_fallthru
        _
      // Predicated region
      $region17: #{upconv_block_forward.14} parent=11 // pred_check
        %p166 = pneg %p80
      $region18: #{upconv_block_forward.14} parent=11 // pred_check_branch
        %168 = sbr.rel (%p166) target = $region20
      $region19: #{upconv_block_forward.14} parent=11 // pred_region
        _
      $region20: #{upconv_block_forward.14} parent=11 // pred_fallthru
        _
    $region12: #{upconv_block_forward.14} parent=5 // pred_fallthru
      _
    %p169 = scmp.lt.s32.totalorder %s12, 2
    // Predicated region
    $region21: #{upconv_block_forward.14} parent=5 // pred_check
      %p170 = pneg %p169
    $region22: #{upconv_block_forward.14} parent=5 // pred_check_branch
      %172 = sbr.rel (%p170) target = $region24
    $region23: #{upconv_block_forward.14} parent=5 // pred_region
      // Predicated region
      $region25: #{upconv_block_forward.14} parent=23 // pred_check
        %p173 = pneg %p32
      $region26: #{upconv_block_forward.14} parent=23 // pred_check_branch
        %175 = sbr.rel (%p173) target = $region28
      $region27: #{upconv_block_forward.14} parent=23 // pred_region
        %p176 = scmp.lt.s32.totalorder %s12, 1
        %s177 = scalar_select %p176, %s12, 1
        %s178 = smul.addr %s177, 54
        %s179 = smul.addr %s178, 4
        %s180 = scalar_lea.vmem %s0, %s179
      $region28: #{upconv_block_forward.14} parent=23 // pred_fallthru
        _
    $region24: #{upconv_block_forward.14} parent=5 // pred_fallthru
      _
    %p181 = scmp.le.s32.totalorder 1, %s12
    %p182 = scmp.lt.s32.totalorder %s12, 3
    %p183 = pnand %p181, %p182
    %p184 = pneg %p183
    // Predicated region
    $region29: #{upconv_block_forward.14} parent=5 // pred_check
      _
    $region30: #{upconv_block_forward.14} parent=5 // pred_check_branch
      %186 = sbr.rel (%p183) target = $region32
    $region31: #{upconv_block_forward.14} parent=5 // pred_region
      %s187 = ssub.s32 %s12, 1
      %p188 = scmp.lt.s32.totalorder %s17, 1
      %s189 = scalar_select %p188, %s17, 1
      %s190 = smul.addr %s189, 54
      %s191 = smul.addr %s190, 4
      %s192 = scalar_lea.vmem %s0, %s191
      %p193 = pneg %p38
      %p194 = pneg %p35
      %p195 = pneg %p59
      %p196 = pneg %p56
      %p197 = pneg %p80
      %p198 = pneg %p77
      %p199 = pneg %p106
      %p200 = pneg %p103
      %p201 = scmp.lt.s32.totalorder %s17, 1
      %s202 = scalar_select %p201, %s17, 1
      %s203 = smul.addr %s202, 32
      %s204 = smul.addr %s203, 8
      %s205 = scalar_lea.vmem %s3, %s204
      %p206 = pneg %p127
      %p207 = pneg %p124
      %p208 = pneg %p148
      %p209 = pneg %p145
      %p210 = scmp.lt.s32.totalorder %s17, 1
      %s211 = scalar_select %p210, %s17, 1
      %s212 = smul.addr %s211, 54
      %s213 = smul.addr %s212, 4
      %s214 = scalar_lea.vmem %s0, %s213
      %p215 = scmp.lt.s32.totalorder %s17, 1
      %s216 = scalar_select %p215, %s17, 1
      %s217 = smul.addr %s216, 32
      %s218 = smul.addr %s217, 8
      %s219 = scalar_lea.vmem %s3, %s218
      %p221 = scmp.eq.s32.totalorder %s17, 0
      // Predicated region
      $region33: #{upconv_block_forward.14} parent=31 // pred_check
        %p222 = pneg %p221
      $region34: #{upconv_block_forward.14} parent=31 // pred_check_branch
        %224 = sbr.rel (%p222) target = $region36
      $region35: #{upconv_block_forward.14} parent=31 // pred_region
        %vm225 = vcmask 24576
        %226 = vst.msk [vmem:[%s4] sm:$0x1] %vm225, 0.0
        %227 = vst.msk [vmem:[%s5] sm:$0x1] %vm225, 0.0
      $region36: #{upconv_block_forward.14} parent=31 // pred_fallthru
        _
      %v228 = vld [vmem:[%s214] sm:$0xf]
      %v229 = vld [vmem:[%s214 + $0x4] sm:$0xf]
      %v230 = vld [vmem:[%s214 + $0x8] sm:$0x1]
      %v231 = vld [vmem:[%s214 + $0xc] sm:$0xf]
      %v232 = vld [vmem:[%s214 + $0x10] sm:$0xf]
      %v233 = vld [vmem:[%s214 + $0x14] sm:$0x1]
      %v234 = vld [vmem:[%s214 + $0x18] sm:$0xf]
      %v235 = vld [vmem:[%s214 + $0x1c] sm:$0xf]
      %v236 = vld [vmem:[%s214 + $0x20] sm:$0x1]
      %v237 = vld [vmem:[%s214 + $0x24] sm:$0xf]
      %v238 = vld [vmem:[%s214 + $0x28] sm:$0xf]
      %v239 = vld [vmem:[%s214 + $0x2c] sm:$0x1]
      %v240 = vld [vmem:[%s214 + $0x30] sm:$0xf]
      %v241 = vld [vmem:[%s214 + $0x34] sm:$0xf]
      %v242 = vld [vmem:[%s214 + $0x38] sm:$0x1]
      %v243 = vld [vmem:[%s214 + $0x3c] sm:$0xf]
      %v244 = vld [vmem:[%s214 + $0x40] sm:$0xf]
      %v245 = vld [vmem:[%s214 + $0x44] sm:$0x1]
      %v246 = vld [vmem:[%s214 + $0x48] sm:$0xf]
      %v247 = vld [vmem:[%s214 + $0x4c] sm:$0xf]
      %v248 = vld [vmem:[%s214 + $0x50] sm:$0x1]
      %v249 = vld [vmem:[%s214 + $0x54] sm:$0xf]
      %v250 = vld [vmem:[%s214 + $0x58] sm:$0xf]
      %v251 = vld [vmem:[%s214 + $0x5c] sm:$0x1]
      %v252 = vld [vmem:[%s214 + $0x60] sm:$0xf]
      %v253 = vld [vmem:[%s214 + $0x64] sm:$0xf]
      %v254 = vld [vmem:[%s214 + $0x68] sm:$0x1]
      %v255 = vld [vmem:[%s214 + $0x6c] sm:$0xf]
      %v256 = vld [vmem:[%s214 + $0x70] sm:$0xf]
      %v257 = vld [vmem:[%s214 + $0x74] sm:$0x1]
      %v258 = vld [vmem:[%s214 + $0x78] sm:$0xf]
      %v259 = vld [vmem:[%s214 + $0x7c] sm:$0xf]
      %v260 = vld [vmem:[%s214 + $0x80] sm:$0x1]
      %v261 = vld [vmem:[%s214 + $0x84] sm:$0xf]
      %v262 = vld [vmem:[%s214 + $0x88] sm:$0xf]
      %v263 = vld [vmem:[%s214 + $0x8c] sm:$0x1]
      %v264 = vld [vmem:[%s214 + $0x90] sm:$0xf]
      %v265 = vld [vmem:[%s214 + $0x94] sm:$0xf]
      %v266 = vld [vmem:[%s214 + $0x98] sm:$0x1]
      %v267 = vld [vmem:[%s214 + $0x9c] sm:$0xf]
      %v268 = vld [vmem:[%s214 + $0xa0] sm:$0xf]
      %v269 = vld [vmem:[%s214 + $0xa4] sm:$0x1]
      %v270 = vld [vmem:[%s214 + $0xa8] sm:$0xf]
      %v271 = vld [vmem:[%s214 + $0xac] sm:$0xf]
      %v272 = vld [vmem:[%s214 + $0xb0] sm:$0x1]
      %v273 = vld [vmem:[%s214 + $0xb4] sm:$0xf]
      %v274 = vld [vmem:[%s214 + $0xb8] sm:$0xf]
      %v275 = vld [vmem:[%s214 + $0xbc] sm:$0x1]
      %v276 = vld [vmem:[%s214 + $0xc0] sm:$0xf]
      %v277 = vld [vmem:[%s214 + $0xc4] sm:$0xf]
      %v278 = vld [vmem:[%s214 + $0xc8] sm:$0x1]
      %v279 = vld [vmem:[%s214 + $0xcc] sm:$0xf]
      %v280 = vld [vmem:[%s214 + $0xd0] sm:$0xf]
      %v281 = vld [vmem:[%s214 + $0xd4] sm:$0x1]
      %v282 = vld [vmem:[%s1] sm:$0x3]
      %vm283 = vsmask.f32 3328
      %vm284 = vsmask.f32 7440
      %vm285 = vmor %vm283, %vm284
      %v287 = vshrl.u32 %v228, 16
      %v289 = vrot.slane %v287, 4
      %v290 = vshll.u32 %v228, 16
      %v292 = vrot.slane %v290, 5
      %v293 = vor.u32 %v289, %v292
      %v294 = vrot.slane %v293, 4
      %v296 = vshll.u32 %v229, 16
      %v298 = vrot.slane %v296, 5
      %v299 = vsel %vm285, %v294, %v298
      %v300 = vshrl.u32 %v229, 16
      %v302 = vrot.slane %v300, 4
      %v303 = vor.u32 %v302, %v298
      %v304 = vrot.slane %v303, 4
      %v306 = vshll.u32 %v230, 16
      %v308 = vrot.slane %v306, 5
      %v309 = vsel %vm285, %v304, %v308
      %v311 = vshrl.u32 %v231, 16
      %v313 = vrot.slane %v311, 4
      %v314 = vshll.u32 %v231, 16
      %v316 = vrot.slane %v314, 5
      %v317 = vor.u32 %v313, %v316
      %v318 = vrot.slane %v317, 4
      %v320 = vshll.u32 %v232, 16
      %v322 = vrot.slane %v320, 5
      %v323 = vsel %vm285, %v318, %v322
      %v324 = vshrl.u32 %v232, 16
      %v326 = vrot.slane %v324, 4
      %v327 = vor.u32 %v326, %v322
      %v328 = vrot.slane %v327, 4
      %v330 = vshll.u32 %v233, 16
      %v332 = vrot.slane %v330, 5
      %v333 = vsel %vm285, %v328, %v332
      %v335 = vshrl.u32 %v234, 16
      %v337 = vrot.slane %v335, 4
      %v338 = vshll.u32 %v234, 16
      %v340 = vrot.slane %v338, 5
      %v341 = vor.u32 %v337, %v340
      %v342 = vrot.slane %v341, 4
      %v344 = vshll.u32 %v235, 16
      %v346 = vrot.slane %v344, 5
      %v347 = vsel %vm285, %v342, %v346
      %v348 = vshrl.u32 %v235, 16
      %v350 = vrot.slane %v348, 4
      %v351 = vor.u32 %v350, %v346
      %v352 = vrot.slane %v351, 4
      %v354 = vshll.u32 %v236, 16
      %v356 = vrot.slane %v354, 5
      %v357 = vsel %vm285, %v352, %v356
      %v359 = vshrl.u32 %v237, 16
      %v361 = vrot.slane %v359, 4
      %v362 = vshll.u32 %v237, 16
      %v364 = vrot.slane %v362, 5
      %v365 = vor.u32 %v361, %v364
      %v366 = vrot.slane %v365, 4
      %v368 = vshll.u32 %v238, 16
      %v370 = vrot.slane %v368, 5
      %v371 = vsel %vm285, %v366, %v370
      %v372 = vshrl.u32 %v238, 16
      %v374 = vrot.slane %v372, 4
      %v375 = vor.u32 %v374, %v370
      %v376 = vrot.slane %v375, 4
      %v378 = vshll.u32 %v239, 16
      %v380 = vrot.slane %v378, 5
      %v381 = vsel %vm285, %v376, %v380
      %v383 = vshrl.u32 %v240, 16
      %v385 = vrot.slane %v383, 4
      %v386 = vshll.u32 %v240, 16
      %v388 = vrot.slane %v386, 5
      %v389 = vor.u32 %v385, %v388
      %v390 = vrot.slane %v389, 4
      %v392 = vshll.u32 %v241, 16
      %v394 = vrot.slane %v392, 5
      %v395 = vsel %vm285, %v390, %v394
      %v396 = vshrl.u32 %v241, 16
      %v398 = vrot.slane %v396, 4
      %v399 = vor.u32 %v398, %v394
      %v400 = vrot.slane %v399, 4
      %v402 = vshll.u32 %v242, 16
      %v404 = vrot.slane %v402, 5
      %v405 = vsel %vm285, %v400, %v404
      %v407 = vshrl.u32 %v243, 16
      %v409 = vrot.slane %v407, 4
      %v410 = vshll.u32 %v243, 16
      %v412 = vrot.slane %v410, 5
      %v413 = vor.u32 %v409, %v412
      %v414 = vrot.slane %v413, 4
      %v416 = vshll.u32 %v244, 16
      %v418 = vrot.slane %v416, 5
      %v419 = vsel %vm285, %v414, %v418
      %v420 = vshrl.u32 %v244, 16
      %v422 = vrot.slane %v420, 4
      %v423 = vor.u32 %v422, %v418
      %v424 = vrot.slane %v423, 4
      %v426 = vshll.u32 %v245, 16
      %v428 = vrot.slane %v426, 5
      %v429 = vsel %vm285, %v424, %v428
      %v431 = vshrl.u32 %v246, 16
      %v433 = vrot.slane %v431, 4
      %v434 = vshll.u32 %v246, 16
      %v436 = vrot.slane %v434, 5
      %v437 = vor.u32 %v433, %v436
      %v438 = vrot.slane %v437, 4
      %v440 = vshll.u32 %v247, 16
      %v442 = vrot.slane %v440, 5
      %v443 = vsel %vm285, %v438, %v442
      %v444 = vshrl.u32 %v247, 16
      %v446 = vrot.slane %v444, 4
      %v447 = vor.u32 %v446, %v442
      %v448 = vrot.slane %v447, 4
      %v450 = vshll.u32 %v248, 16
      %v452 = vrot.slane %v450, 5
      %v453 = vsel %vm285, %v448, %v452
      %v455 = vshrl.u32 %v249, 16
      %v457 = vrot.slane %v455, 4
      %v458 = vshll.u32 %v249, 16
      %v460 = vrot.slane %v458, 5
      %v461 = vor.u32 %v457, %v460
      %v462 = vrot.slane %v461, 4
      %v464 = vshll.u32 %v250, 16
      %v466 = vrot.slane %v464, 5
      %v467 = vsel %vm285, %v462, %v466
      %v468 = vshrl.u32 %v250, 16
      %v470 = vrot.slane %v468, 4
      %v471 = vor.u32 %v470, %v466
      %v472 = vrot.slane %v471, 4
      %v474 = vshll.u32 %v251, 16
      %v476 = vrot.slane %v474, 5
      %v477 = vsel %vm285, %v472, %v476
      %v479 = vshrl.u32 %v252, 16
      %v481 = vrot.slane %v479, 4
      %v482 = vshll.u32 %v252, 16
      %v484 = vrot.slane %v482, 5
      %v485 = vor.u32 %v481, %v484
      %v486 = vrot.slane %v485, 4
      %v488 = vshll.u32 %v253, 16
      %v490 = vrot.slane %v488, 5
      %v491 = vsel %vm285, %v486, %v490
      %v492 = vshrl.u32 %v253, 16
      %v494 = vrot.slane %v492, 4
      %v495 = vor.u32 %v494, %v490
      %v496 = vrot.slane %v495, 4
      %v498 = vshll.u32 %v254, 16
      %v500 = vrot.slane %v498, 5
      %v501 = vsel %vm285, %v496, %v500
      %v503 = vshrl.u32 %v255, 16
      %v505 = vrot.slane %v503, 4
      %v506 = vshll.u32 %v255, 16
      %v508 = vrot.slane %v506, 5
      %v509 = vor.u32 %v505, %v508
      %v510 = vrot.slane %v509, 4
      %v512 = vshll.u32 %v256, 16
      %v514 = vrot.slane %v512, 5
      %v515 = vsel %vm285, %v510, %v514
      %v516 = vshrl.u32 %v256, 16
      %v518 = vrot.slane %v516, 4
      %v519 = vor.u32 %v518, %v514
      %v520 = vrot.slane %v519, 4
      %v522 = vshll.u32 %v257, 16
      %v524 = vrot.slane %v522, 5
      %v525 = vsel %vm285, %v520, %v524
      %v527 = vshrl.u32 %v258, 16
      %v529 = vrot.slane %v527, 4
      %v530 = vshll.u32 %v258, 16
      %v532 = vrot.slane %v530, 5
      %v533 = vor.u32 %v529, %v532
      %v534 = vrot.slane %v533, 4
      %v536 = vshll.u32 %v259, 16
      %v538 = vrot.slane %v536, 5
      %v539 = vsel %vm285, %v534, %v538
      %v540 = vshrl.u32 %v259, 16
      %v542 = vrot.slane %v540, 4
      %v543 = vor.u32 %v542, %v538
      %v544 = vrot.slane %v543, 4
      %v546 = vshll.u32 %v260, 16
      %v548 = vrot.slane %v546, 5
      %v549 = vsel %vm285, %v544, %v548
      %v551 = vshrl.u32 %v261, 16
      %v553 = vrot.slane %v551, 4
      %v554 = vshll.u32 %v261, 16
      %v556 = vrot.slane %v554, 5
      %v557 = vor.u32 %v553, %v556
      %v558 = vrot.slane %v557, 4
      %v560 = vshll.u32 %v262, 16
      %v562 = vrot.slane %v560, 5
      %v563 = vsel %vm285, %v558, %v562
      %v564 = vshrl.u32 %v262, 16
      %v566 = vrot.slane %v564, 4
      %v567 = vor.u32 %v566, %v562
      %v568 = vrot.slane %v567, 4
      %v570 = vshll.u32 %v263, 16
      %v572 = vrot.slane %v570, 5
      %v573 = vsel %vm285, %v568, %v572
      %v575 = vshrl.u32 %v264, 16
      %v577 = vrot.slane %v575, 4
      %v578 = vshll.u32 %v264, 16
      %v580 = vrot.slane %v578, 5
      %v581 = vor.u32 %v577, %v580
      %v582 = vrot.slane %v581, 4
      %v584 = vshll.u32 %v265, 16
      %v586 = vrot.slane %v584, 5
      %v587 = vsel %vm285, %v582, %v586
      %v588 = vshrl.u32 %v265, 16
      %v590 = vrot.slane %v588, 4
      %v591 = vor.u32 %v590, %v586
      %v592 = vrot.slane %v591, 4
      %v594 = vshll.u32 %v266, 16
      %v596 = vrot.slane %v594, 5
      %v597 = vsel %vm285, %v592, %v596
      %v599 = vshrl.u32 %v267, 16
      %v601 = vrot.slane %v599, 4
      %v602 = vshll.u32 %v267, 16
      %v604 = vrot.slane %v602, 5
      %v605 = vor.u32 %v601, %v604
      %v606 = vrot.slane %v605, 4
      %v608 = vshll.u32 %v268, 16
      %v610 = vrot.slane %v608, 5
      %v611 = vsel %vm285, %v606, %v610
      %v612 = vshrl.u32 %v268, 16
      %v614 = vrot.slane %v612, 4
      %v615 = vor.u32 %v614, %v610
      %v616 = vrot.slane %v615, 4
      %v618 = vshll.u32 %v269, 16
      %v620 = vrot.slane %v618, 5
      %v621 = vsel %vm285, %v616, %v620
      %v623 = vshrl.u32 %v270, 16
      %v625 = vrot.slane %v623, 4
      %v626 = vshll.u32 %v270, 16
      %v628 = vrot.slane %v626, 5
      %v629 = vor.u32 %v625, %v628
      %v630 = vrot.slane %v629, 4
      %v632 = vshll.u32 %v271, 16
      %v634 = vrot.slane %v632, 5
      %v635 = vsel %vm285, %v630, %v634
      %v636 = vshrl.u32 %v271, 16
      %v638 = vrot.slane %v636, 4
      %v639 = vor.u32 %v638, %v634
      %v640 = vrot.slane %v639, 4
      %v642 = vshll.u32 %v272, 16
      %v644 = vrot.slane %v642, 5
      %v645 = vsel %vm285, %v640, %v644
      %v647 = vshrl.u32 %v273, 16
      %v649 = vrot.slane %v647, 4
      %v650 = vshll.u32 %v273, 16
      %v652 = vrot.slane %v650, 5
      %v653 = vor.u32 %v649, %v652
      %v654 = vrot.slane %v653, 4
      %v656 = vshll.u32 %v274, 16
      %v658 = vrot.slane %v656, 5
      %v659 = vsel %vm285, %v654, %v658
      %v660 = vshrl.u32 %v274, 16
      %v662 = vrot.slane %v660, 4
      %v663 = vor.u32 %v662, %v658
      %v664 = vrot.slane %v663, 4
      %v666 = vshll.u32 %v275, 16
      %v668 = vrot.slane %v666, 5
      %v669 = vsel %vm285, %v664, %v668
      %s670 = scalar_lea.vmem %s1, 2
      %v671 = vld [vmem:[%s670] sm:$0x3]
      %v672 = vunpack.c.l.b16 %v299
      %v673 = vunpack.c.l.b16 %v309
      %v674 = vunpack.c.l.b16 %v323
      %v675 = vunpack.c.l.b16 %v333
      %v676 = vunpack.c.l.b16 %v347
      %v677 = vunpack.c.l.b16 %v357
      %v678 = vunpack.c.l.b16 %v371
      %v679 = vunpack.c.l.b16 %v381
      %v680 = vunpack.c.l.b16 %v395
      %v681 = vunpack.c.l.b16 %v405
      %v682 = vunpack.c.l.b16 %v419
      %v683 = vunpack.c.l.b16 %v429
      %v684 = vunpack.c.l.b16 %v443
      %v685 = vunpack.c.l.b16 %v453
      %v686 = vunpack.c.l.b16 %v467
      %v687 = vunpack.c.l.b16 %v477
      %v688 = vunpack.c.l.b16 %v491
      %v689 = vunpack.c.l.b16 %v501
      %v690 = vunpack.c.l.b16 %v515
      %v691 = vunpack.c.l.b16 %v525
      %v692 = vunpack.c.l.b16 %v539
      %v693 = vunpack.c.l.b16 %v549
      %v694 = vunpack.c.l.b16 %v563
      %v695 = vunpack.c.l.b16 %v573
      %v696 = vunpack.c.l.b16 %v587
      %v697 = vunpack.c.l.b16 %v597
      %v698 = vunpack.c.l.b16 %v611
      %v699 = vunpack.c.l.b16 %v621
      %v700 = vunpack.c.l.b16 %v635
      %v701 = vunpack.c.l.b16 %v645
      %v702 = vunpack.c.l.b16 %v659
      %v703 = vunpack.c.l.b16 %v669
      %v704 = vpack.c.b16 %v673, %v672
      %v705 = vpack.c.b16 %v675, %v674
      %v706 = vpack.c.b16 %v677, %v676
      %v707 = vpack.c.b16 %v679, %v678
      %v708 = vpack.c.b16 %v681, %v680
      %v709 = vpack.c.b16 %v683, %v682
      %v710 = vpack.c.b16 %v685, %v684
      %v711 = vpack.c.b16 %v687, %v686
      %v712 = vpack.c.b16 %v689, %v688
      %v713 = vpack.c.b16 %v691, %v690
      %v714 = vpack.c.b16 %v693, %v692
      %v715 = vpack.c.b16 %v695, %v694
      %v716 = vpack.c.b16 %v697, %v696
      %v717 = vpack.c.b16 %v699, %v698
      %v718 = vpack.c.b16 %v701, %v700
      %v719 = vpack.c.b16 %v703, %v702
      %vm720 = vcmask 31744
      %v722 = vsel %vm720, %v704, 0
      %v725 = vsel %vm720, %v705, 0
      %v728 = vsel %vm720, %v706, 0
      %v731 = vsel %vm720, %v707, 0
      %v734 = vsel %vm720, %v708, 0
      %v737 = vsel %vm720, %v709, 0
      %v740 = vsel %vm720, %v710, 0
      %v743 = vsel %vm720, %v711, 0
      %v746 = vsel %vm720, %v712, 0
      %v749 = vsel %vm720, %v713, 0
      %v752 = vsel %vm720, %v714, 0
      %v755 = vsel %vm720, %v715, 0
      %v758 = vsel %vm720, %v716, 0
      %v761 = vsel %vm720, %v717, 0
      %v764 = vsel %vm720, %v718, 0
      %v767 = vsel %vm720, %v719, 0
      %vm769 = vcmask 1041408
      %v771 = vsel %vm769, %v671, 0
      %773 = vmatpush.bf16.msra.mxu0 0
      %774 = vmatpush.bf16.msra.mxu0 0
      %775 = vmatpush.bf16.msra.mxu0 0
      %776 = vmatpush.bf16.msra.mxu0 0
      %777 = vmatpush.bf16.msra.mxu0 0
      %778 = vmatpush.bf16.msra.mxu0 0
      %779 = vmatpush.bf16.msra.mxu0 0
      %780 = vmatpush.bf16.msra.mxu0 %v771
      %781 = vmatmul.bf16.gmra.mxu0 %v722
      %v782 = vpop.f32.mrf.mxu0
      %v783 = vadd.f32 0.0, %v782
      %v784 = vpop.f32.mrf.mxu0
      %v785 = vadd.f32 0.0, %v784
      %786 = vmatmul.bf16.gmra.mxu0 %v725
      %v787 = vpop.f32.mrf.mxu0
      %v788 = vadd.f32 0.0, %v787
      %v789 = vpop.f32.mrf.mxu0
      %v790 = vadd.f32 0.0, %v789
      %791 = vmatmul.bf16.gmra.mxu0 %v728
      %v792 = vpop.f32.mrf.mxu0
      %v793 = vadd.f32 0.0, %v792
      %v794 = vpop.f32.mrf.mxu0
      %v795 = vadd.f32 0.0, %v794
      %796 = vmatmul.bf16.gmra.mxu0 %v731
      %v797 = vpop.f32.mrf.mxu0
      %v798 = vadd.f32 0.0, %v797
      %v799 = vpop.f32.mrf.mxu0
      %v800 = vadd.f32 0.0, %v799
      %801 = vmatmul.bf16.gmra.mxu0 %v734
      %v802 = vpop.f32.mrf.mxu0
      %v803 = vadd.f32 0.0, %v802
      %v804 = vpop.f32.mrf.mxu0
      %v805 = vadd.f32 0.0, %v804
      %806 = vmatmul.bf16.gmra.mxu0 %v737
      %v807 = vpop.f32.mrf.mxu0
      %v808 = vadd.f32 0.0, %v807
      %v809 = vpop.f32.mrf.mxu0
      %v810 = vadd.f32 0.0, %v809
      %811 = vmatmul.bf16.gmra.mxu0 %v740
      %v812 = vpop.f32.mrf.mxu0
      %v813 = vadd.f32 0.0, %v812
      %v814 = vpop.f32.mrf.mxu0
      %v815 = vadd.f32 0.0, %v814
      %816 = vmatmul.bf16.gmra.mxu0 %v743
      %v817 = vpop.f32.mrf.mxu0
      %v818 = vadd.f32 0.0, %v817
      %v819 = vpop.f32.mrf.mxu0
      %v820 = vadd.f32 0.0, %v819
      %821 = vmatmul.bf16.gmra.mxu0 %v746
      %v822 = vpop.f32.mrf.mxu0
      %v823 = vadd.f32 0.0, %v822
      %v824 = vpop.f32.mrf.mxu0
      %v825 = vadd.f32 0.0, %v824
      %826 = vmatmul.bf16.gmra.mxu0 %v749
      %v827 = vpop.f32.mrf.mxu0
      %v828 = vadd.f32 0.0, %v827
      %v829 = vpop.f32.mrf.mxu0
      %v830 = vadd.f32 0.0, %v829
      %831 = vmatmul.bf16.gmra.mxu0 %v752
      %v832 = vpop.f32.mrf.mxu0
      %v833 = vadd.f32 0.0, %v832
      %v834 = vpop.f32.mrf.mxu0
      %v835 = vadd.f32 0.0, %v834
      %836 = vmatmul.bf16.gmra.mxu0 %v755
      %v837 = vpop.f32.mrf.mxu0
      %v838 = vadd.f32 0.0, %v837
      %v839 = vpop.f32.mrf.mxu0
      %v840 = vadd.f32 0.0, %v839
      %841 = vmatmul.bf16.gmra.mxu0 %v758
      %v842 = vpop.f32.mrf.mxu0
      %v843 = vadd.f32 0.0, %v842
      %v844 = vpop.f32.mrf.mxu0
      %v845 = vadd.f32 0.0, %v844
      %846 = vmatmul.bf16.gmra.mxu0 %v761
      %v847 = vpop.f32.mrf.mxu0
      %v848 = vadd.f32 0.0, %v847
      %v849 = vpop.f32.mrf.mxu0
      %v850 = vadd.f32 0.0, %v849
      %851 = vmatmul.bf16.gmra.mxu0 %v764
      %v852 = vpop.f32.mrf.mxu0
      %v853 = vadd.f32 0.0, %v852
      %v854 = vpop.f32.mrf.mxu0
      %v855 = vadd.f32 0.0, %v854
      %856 = vmatmul.bf16.gmra.mxu0 %v767
      %v857 = vpop.f32.mrf.mxu0
      %v858 = vadd.f32 0.0, %v857
      %v859 = vpop.f32.mrf.mxu0
      %v860 = vadd.f32 0.0, %v859
      %861 = vdwg.mxu0
      %v894 = vunpack.c.l.b16 %v228
      %v895 = vunpack.c.l.b16 %v229
      %v896 = vunpack.c.l.b16 %v231
      %v897 = vunpack.c.l.b16 %v232
      %v898 = vunpack.c.l.b16 %v234
      %v899 = vunpack.c.l.b16 %v235
      %v900 = vunpack.c.l.b16 %v237
      %v901 = vunpack.c.l.b16 %v238
      %v902 = vunpack.c.l.b16 %v240
      %v903 = vunpack.c.l.b16 %v241
      %v904 = vunpack.c.l.b16 %v243
      %v905 = vunpack.c.l.b16 %v244
      %v906 = vunpack.c.l.b16 %v246
      %v907 = vunpack.c.l.b16 %v247
      %v908 = vunpack.c.l.b16 %v249
      %v909 = vunpack.c.l.b16 %v250
      %v910 = vunpack.c.l.b16 %v252
      %v911 = vunpack.c.l.b16 %v253
      %v912 = vunpack.c.l.b16 %v255
      %v913 = vunpack.c.l.b16 %v256
      %v914 = vunpack.c.l.b16 %v258
      %v915 = vunpack.c.l.b16 %v259
      %v916 = vunpack.c.l.b16 %v261
      %v917 = vunpack.c.l.b16 %v262
      %v918 = vunpack.c.l.b16 %v264
      %v919 = vunpack.c.l.b16 %v265
      %v920 = vunpack.c.l.b16 %v267
      %v921 = vunpack.c.l.b16 %v268
      %v922 = vunpack.c.l.b16 %v270
      %v923 = vunpack.c.l.b16 %v271
      %v924 = vunpack.c.l.b16 %v273
      %v925 = vunpack.c.l.b16 %v274
      %v926 = vpack.c.b16 %v895, %v894
      %v927 = vpack.c.b16 %v897, %v896
      %v928 = vpack.c.b16 %v899, %v898
      %v929 = vpack.c.b16 %v901, %v900
      %v930 = vpack.c.b16 %v903, %v902
      %v931 = vpack.c.b16 %v905, %v904
      %v932 = vpack.c.b16 %v907, %v906
      %v933 = vpack.c.b16 %v909, %v908
      %v934 = vpack.c.b16 %v911, %v910
      %v935 = vpack.c.b16 %v913, %v912
      %v936 = vpack.c.b16 %v915, %v914
      %v937 = vpack.c.b16 %v917, %v916
      %v938 = vpack.c.b16 %v919, %v918
      %v939 = vpack.c.b16 %v921, %v920
      %v940 = vpack.c.b16 %v923, %v922
      %v941 = vpack.c.b16 %v925, %v924
      %v943 = vsel %vm720, %v926, 0
      %v946 = vsel %vm720, %v927, 0
      %v949 = vsel %vm720, %v928, 0
      %v952 = vsel %vm720, %v929, 0
      %v955 = vsel %vm720, %v930, 0
      %v958 = vsel %vm720, %v931, 0
      %v961 = vsel %vm720, %v932, 0
      %v964 = vsel %vm720, %v933, 0
      %v967 = vsel %vm720, %v934, 0
      %v970 = vsel %vm720, %v935, 0
      %v973 = vsel %vm720, %v936, 0
      %v976 = vsel %vm720, %v937, 0
      %v979 = vsel %vm720, %v938, 0
      %v982 = vsel %vm720, %v939, 0
      %v985 = vsel %vm720, %v940, 0
      %v988 = vsel %vm720, %v941, 0
      %v991 = vsel %vm769, %v282, 0
      %993 = vmatpush.bf16.msra.mxu0 0
      %994 = vmatpush.bf16.msra.mxu0 0
      %995 = vmatpush.bf16.msra.mxu0 0
      %996 = vmatpush.bf16.msra.mxu0 0
      %997 = vmatpush.bf16.msra.mxu0 0
      %998 = vmatpush.bf16.msra.mxu0 0
      %999 = vmatpush.bf16.msra.mxu0 0
      %1000 = vmatpush.bf16.msra.mxu0 %v991
      %1001 = vmatmul.bf16.gmra.mxu0 %v943
      %v1002 = vpop.f32.mrf.mxu0
      %v1003 = vadd.f32 %v783, %v1002
      %v1004 = vpop.f32.mrf.mxu0
      %v1005 = vadd.f32 %v785, %v1004
      %1006 = vmatmul.bf16.gmra.mxu0 %v946
      %v1007 = vpop.f32.mrf.mxu0
      %v1008 = vadd.f32 %v788, %v1007
      %v1009 = vpop.f32.mrf.mxu0
      %v1010 = vadd.f32 %v790, %v1009
      %1011 = vmatmul.bf16.gmra.mxu0 %v949
      %v1012 = vpop.f32.mrf.mxu0
      %v1013 = vadd.f32 %v793, %v1012
      %v1014 = vpop.f32.mrf.mxu0
      %v1015 = vadd.f32 %v795, %v1014
      %1016 = vmatmul.bf16.gmra.mxu0 %v952
      %v1017 = vpop.f32.mrf.mxu0
      %v1018 = vadd.f32 %v798, %v1017
      %v1019 = vpop.f32.mrf.mxu0
      %v1020 = vadd.f32 %v800, %v1019
      %1021 = vmatmul.bf16.gmra.mxu0 %v955
      %v1022 = vpop.f32.mrf.mxu0
      %v1023 = vadd.f32 %v803, %v1022
      %v1024 = vpop.f32.mrf.mxu0
      %v1025 = vadd.f32 %v805, %v1024
      %1026 = vmatmul.bf16.gmra.mxu0 %v958
      %v1027 = vpop.f32.mrf.mxu0
      %v1028 = vadd.f32 %v808, %v1027
      %v1029 = vpop.f32.mrf.mxu0
      %v1030 = vadd.f32 %v810, %v1029
      %1031 = vmatmul.bf16.gmra.mxu0 %v961
      %v1032 = vpop.f32.mrf.mxu0
      %v1033 = vadd.f32 %v813, %v1032
      %v1034 = vpop.f32.mrf.mxu0
      %v1035 = vadd.f32 %v815, %v1034
      %1036 = vmatmul.bf16.gmra.mxu0 %v964
      %v1037 = vpop.f32.mrf.mxu0
      %v1038 = vadd.f32 %v818, %v1037
      %v1039 = vpop.f32.mrf.mxu0
      %v1040 = vadd.f32 %v820, %v1039
      %1041 = vmatmul.bf16.gmra.mxu0 %v967
      %v1042 = vpop.f32.mrf.mxu0
      %v1043 = vadd.f32 %v823, %v1042
      %v1044 = vpop.f32.mrf.mxu0
      %v1045 = vadd.f32 %v825, %v1044
      %1046 = vmatmul.bf16.gmra.mxu0 %v970
      %v1047 = vpop.f32.mrf.mxu0
      %v1048 = vadd.f32 %v828, %v1047
      %v1049 = vpop.f32.mrf.mxu0
      %v1050 = vadd.f32 %v830, %v1049
      %1051 = vmatmul.bf16.gmra.mxu0 %v973
      %v1052 = vpop.f32.mrf.mxu0
      %v1053 = vadd.f32 %v833, %v1052
      %v1054 = vpop.f32.mrf.mxu0
      %v1055 = vadd.f32 %v835, %v1054
      %1056 = vmatmul.bf16.gmra.mxu0 %v976
      %v1057 = vpop.f32.mrf.mxu0
      %v1058 = vadd.f32 %v838, %v1057
      %v1059 = vpop.f32.mrf.mxu0
      %v1060 = vadd.f32 %v840, %v1059
      %1061 = vmatmul.bf16.gmra.mxu0 %v979
      %v1062 = vpop.f32.mrf.mxu0
      %v1063 = vadd.f32 %v843, %v1062
      %v1064 = vpop.f32.mrf.mxu0
      %v1065 = vadd.f32 %v845, %v1064
      %1066 = vmatmul.bf16.gmra.mxu0 %v982
      %v1067 = vpop.f32.mrf.mxu0
      %v1068 = vadd.f32 %v848, %v1067
      %v1069 = vpop.f32.mrf.mxu0
      %v1070 = vadd.f32 %v850, %v1069
      %1071 = vmatmul.bf16.gmra.mxu0 %v985
      %v1072 = vpop.f32.mrf.mxu0
      %v1073 = vadd.f32 %v853, %v1072
      %v1074 = vpop.f32.mrf.mxu0
      %v1075 = vadd.f32 %v855, %v1074
      %1076 = vmatmul.bf16.gmra.mxu0 %v988
      %v1077 = vpop.f32.mrf.mxu0
      %v1078 = vadd.f32 %v858, %v1077
      %v1079 = vpop.f32.mrf.mxu0
      %v1080 = vadd.f32 %v860, %v1079
      %1081 = vdwg.mxu0
      %vm1098 = vcmask 1042432
      %vm1099 = vcmask 1046532
      %vm1100 = vmor %vm1098, %vm1099
      %v1101 = vrot.slane %v228, 5
      %v1102 = vrot.slane %v1101, 4
      %v1103 = vrot.slane %v229, 5
      %v1104 = vsel %vm1100, %v1102, %v1103
      %v1105 = vrot.slane %v1103, 4
      %v1106 = vrot.slane %v230, 5
      %v1107 = vsel %vm1100, %v1105, %v1106
      %v1108 = vrot.slane %v231, 5
      %v1109 = vrot.slane %v1108, 4
      %v1110 = vrot.slane %v232, 5
      %v1111 = vsel %vm1100, %v1109, %v1110
      %v1112 = vrot.slane %v1110, 4
      %v1113 = vrot.slane %v233, 5
      %v1114 = vsel %vm1100, %v1112, %v1113
      %v1115 = vrot.slane %v234, 5
      %v1116 = vrot.slane %v1115, 4
      %v1117 = vrot.slane %v235, 5
      %v1118 = vsel %vm1100, %v1116, %v1117
      %v1119 = vrot.slane %v1117, 4
      %v1120 = vrot.slane %v236, 5
      %v1121 = vsel %vm1100, %v1119, %v1120
      %v1122 = vrot.slane %v237, 5
      %v1123 = vrot.slane %v1122, 4
      %v1124 = vrot.slane %v238, 5
      %v1125 = vsel %vm1100, %v1123, %v1124
      %v1126 = vrot.slane %v1124, 4
      %v1127 = vrot.slane %v239, 5
      %v1128 = vsel %vm1100, %v1126, %v1127
      %v1129 = vrot.slane %v240, 5
      %v1130 = vrot.slane %v1129, 4
      %v1131 = vrot.slane %v241, 5
      %v1132 = vsel %vm1100, %v1130, %v1131
      %v1133 = vrot.slane %v1131, 4
      %v1134 = vrot.slane %v242, 5
      %v1135 = vsel %vm1100, %v1133, %v1134
      %v1136 = vrot.slane %v243, 5
      %v1137 = vrot.slane %v1136, 4
      %v1138 = vrot.slane %v244, 5
      %v1139 = vsel %vm1100, %v1137, %v1138
      %v1140 = vrot.slane %v1138, 4
      %v1141 = vrot.slane %v245, 5
      %v1142 = vsel %vm1100, %v1140, %v1141
      %v1143 = vrot.slane %v246, 5
      %v1144 = vrot.slane %v1143, 4
      %v1145 = vrot.slane %v247, 5
      %v1146 = vsel %vm1100, %v1144, %v1145
      %v1147 = vrot.slane %v1145, 4
      %v1148 = vrot.slane %v248, 5
      %v1149 = vsel %vm1100, %v1147, %v1148
      %v1150 = vrot.slane %v249, 5
      %v1151 = vrot.slane %v1150, 4
      %v1152 = vrot.slane %v250, 5
      %v1153 = vsel %vm1100, %v1151, %v1152
      %v1154 = vrot.slane %v1152, 4
      %v1155 = vrot.slane %v251, 5
      %v1156 = vsel %vm1100, %v1154, %v1155
      %v1157 = vrot.slane %v252, 5
      %v1158 = vrot.slane %v1157, 4
      %v1159 = vrot.slane %v253, 5
      %v1160 = vsel %vm1100, %v1158, %v1159
      %v1161 = vrot.slane %v1159, 4
      %v1162 = vrot.slane %v254, 5
      %v1163 = vsel %vm1100, %v1161, %v1162
      %v1164 = vrot.slane %v255, 5
      %v1165 = vrot.slane %v1164, 4
      %v1166 = vrot.slane %v256, 5
      %v1167 = vsel %vm1100, %v1165, %v1166
      %v1168 = vrot.slane %v1166, 4
      %v1169 = vrot.slane %v257, 5
      %v1170 = vsel %vm1100, %v1168, %v1169
      %v1171 = vrot.slane %v258, 5
      %v1172 = vrot.slane %v1171, 4
      %v1173 = vrot.slane %v259, 5
      %v1174 = vsel %vm1100, %v1172, %v1173
      %v1175 = vrot.slane %v1173, 4
      %v1176 = vrot.slane %v260, 5
      %v1177 = vsel %vm1100, %v1175, %v1176
      %v1178 = vrot.slane %v261, 5
      %v1179 = vrot.slane %v1178, 4
      %v1180 = vrot.slane %v262, 5
      %v1181 = vsel %vm1100, %v1179, %v1180
      %v1182 = vrot.slane %v1180, 4
      %v1183 = vrot.slane %v263, 5
      %v1184 = vsel %vm1100, %v1182, %v1183
      %v1185 = vrot.slane %v264, 5
      %v1186 = vrot.slane %v1185, 4
      %v1187 = vrot.slane %v265, 5
      %v1188 = vsel %vm1100, %v1186, %v1187
      %v1189 = vrot.slane %v1187, 4
      %v1190 = vrot.slane %v266, 5
      %v1191 = vsel %vm1100, %v1189, %v1190
      %v1192 = vrot.slane %v267, 5
      %v1193 = vrot.slane %v1192, 4
      %v1194 = vrot.slane %v268, 5
      %v1195 = vsel %vm1100, %v1193, %v1194
      %v1196 = vrot.slane %v1194, 4
      %v1197 = vrot.slane %v269, 5
      %v1198 = vsel %vm1100, %v1196, %v1197
      %v1199 = vrot.slane %v270, 5
      %v1200 = vrot.slane %v1199, 4
      %v1201 = vrot.slane %v271, 5
      %v1202 = vsel %vm1100, %v1200, %v1201
      %v1203 = vrot.slane %v1201, 4
      %v1204 = vrot.slane %v272, 5
      %v1205 = vsel %vm1100, %v1203, %v1204
      %v1206 = vrot.slane %v273, 5
      %v1207 = vrot.slane %v1206, 4
      %v1208 = vrot.slane %v274, 5
      %v1209 = vsel %vm1100, %v1207, %v1208
      %v1210 = vrot.slane %v1208, 4
      %v1211 = vrot.slane %v275, 5
      %v1212 = vsel %vm1100, %v1210, %v1211
      %s1213 = scalar_lea.vmem %s1, 4
      %v1214 = vld [vmem:[%s1213] sm:$0x3]
      %v1215 = vunpack.c.l.b16 %v1104
      %v1216 = vunpack.c.l.b16 %v1107
      %v1217 = vunpack.c.l.b16 %v1111
      %v1218 = vunpack.c.l.b16 %v1114
      %v1219 = vunpack.c.l.b16 %v1118
      %v1220 = vunpack.c.l.b16 %v1121
      %v1221 = vunpack.c.l.b16 %v1125
      %v1222 = vunpack.c.l.b16 %v1128
      %v1223 = vunpack.c.l.b16 %v1132
      %v1224 = vunpack.c.l.b16 %v1135
      %v1225 = vunpack.c.l.b16 %v1139
      %v1226 = vunpack.c.l.b16 %v1142
      %v1227 = vunpack.c.l.b16 %v1146
      %v1228 = vunpack.c.l.b16 %v1149
      %v1229 = vunpack.c.l.b16 %v1153
      %v1230 = vunpack.c.l.b16 %v1156
      %v1231 = vunpack.c.l.b16 %v1160
      %v1232 = vunpack.c.l.b16 %v1163
      %v1233 = vunpack.c.l.b16 %v1167
      %v1234 = vunpack.c.l.b16 %v1170
      %v1235 = vunpack.c.l.b16 %v1174
      %v1236 = vunpack.c.l.b16 %v1177
      %v1237 = vunpack.c.l.b16 %v1181
      %v1238 = vunpack.c.l.b16 %v1184
      %v1239 = vunpack.c.l.b16 %v1188
      %v1240 = vunpack.c.l.b16 %v1191
      %v1241 = vunpack.c.l.b16 %v1195
      %v1242 = vunpack.c.l.b16 %v1198
      %v1243 = vunpack.c.l.b16 %v1202
      %v1244 = vunpack.c.l.b16 %v1205
      %v1245 = vunpack.c.l.b16 %v1209
      %v1246 = vunpack.c.l.b16 %v1212
      %v1247 = vpack.c.b16 %v1216, %v1215
      %v1248 = vpack.c.b16 %v1218, %v1217
      %v1249 = vpack.c.b16 %v1220, %v1219
      %v1250 = vpack.c.b16 %v1222, %v1221
      %v1251 = vpack.c.b16 %v1224, %v1223
      %v1252 = vpack.c.b16 %v1226, %v1225
      %v1253 = vpack.c.b16 %v1228, %v1227
      %v1254 = vpack.c.b16 %v1230, %v1229
      %v1255 = vpack.c.b16 %v1232, %v1231
      %v1256 = vpack.c.b16 %v1234, %v1233
      %v1257 = vpack.c.b16 %v1236, %v1235
      %v1258 = vpack.c.b16 %v1238, %v1237
      %v1259 = vpack.c.b16 %v1240, %v1239
      %v1260 = vpack.c.b16 %v1242, %v1241
      %v1261 = vpack.c.b16 %v1244, %v1243
      %v1262 = vpack.c.b16 %v1246, %v1245
      %v1264 = vsel %vm720, %v1247, 0
      %v1267 = vsel %vm720, %v1248, 0
      %v1270 = vsel %vm720, %v1249, 0
      %v1273 = vsel %vm720, %v1250, 0
      %v1276 = vsel %vm720, %v1251, 0
      %v1279 = vsel %vm720, %v1252, 0
      %v1282 = vsel %vm720, %v1253, 0
      %v1285 = vsel %vm720, %v1254, 0
      %v1288 = vsel %vm720, %v1255, 0
      %v1291 = vsel %vm720, %v1256, 0
      %v1294 = vsel %vm720, %v1257, 0
      %v1297 = vsel %vm720, %v1258, 0
      %v1300 = vsel %vm720, %v1259, 0
      %v1303 = vsel %vm720, %v1260, 0
      %v1306 = vsel %vm720, %v1261, 0
      %v1309 = vsel %vm720, %v1262, 0
      %v1312 = vsel %vm769, %v1214, 0
      %1314 = vmatpush.bf16.msra.mxu0 0
      %1315 = vmatpush.bf16.msra.mxu0 0
      %1316 = vmatpush.bf16.msra.mxu0 0
      %1317 = vmatpush.bf16.msra.mxu0 0
      %1318 = vmatpush.bf16.msra.mxu0 0
      %1319 = vmatpush.bf16.msra.mxu0 0
      %1320 = vmatpush.bf16.msra.mxu0 0
      %1321 = vmatpush.bf16.msra.mxu0 %v1312
      %1322 = vmatmul.bf16.gmra.mxu0 %v1264
      %v1323 = vpop.f32.mrf.mxu0
      %v1324 = vadd.f32 0.0, %v1323
      %v1325 = vpop.f32.mrf.mxu0
      %v1326 = vadd.f32 0.0, %v1325
      %1327 = vmatmul.bf16.gmra.mxu0 %v1267
      %v1328 = vpop.f32.mrf.mxu0
      %v1329 = vadd.f32 0.0, %v1328
      %v1330 = vpop.f32.mrf.mxu0
      %v1331 = vadd.f32 0.0, %v1330
      %1332 = vmatmul.bf16.gmra.mxu0 %v1270
      %v1333 = vpop.f32.mrf.mxu0
      %v1334 = vadd.f32 0.0, %v1333
      %v1335 = vpop.f32.mrf.mxu0
      %v1336 = vadd.f32 0.0, %v1335
      %1337 = vmatmul.bf16.gmra.mxu0 %v1273
      %v1338 = vpop.f32.mrf.mxu0
      %v1339 = vadd.f32 0.0, %v1338
      %v1340 = vpop.f32.mrf.mxu0
      %v1341 = vadd.f32 0.0, %v1340
      %1342 = vmatmul.bf16.gmra.mxu0 %v1276
      %v1343 = vpop.f32.mrf.mxu0
      %v1344 = vadd.f32 0.0, %v1343
      %v1345 = vpop.f32.mrf.mxu0
      %v1346 = vadd.f32 0.0, %v1345
      %1347 = vmatmul.bf16.gmra.mxu0 %v1279
      %v1348 = vpop.f32.mrf.mxu0
      %v1349 = vadd.f32 0.0, %v1348
      %v1350 = vpop.f32.mrf.mxu0
      %v1351 = vadd.f32 0.0, %v1350
      %1352 = vmatmul.bf16.gmra.mxu0 %v1282
      %v1353 = vpop.f32.mrf.mxu0
      %v1354 = vadd.f32 0.0, %v1353
      %v1355 = vpop.f32.mrf.mxu0
      %v1356 = vadd.f32 0.0, %v1355
      %1357 = vmatmul.bf16.gmra.mxu0 %v1285
      %v1358 = vpop.f32.mrf.mxu0
      %v1359 = vadd.f32 0.0, %v1358
      %v1360 = vpop.f32.mrf.mxu0
      %v1361 = vadd.f32 0.0, %v1360
      %1362 = vmatmul.bf16.gmra.mxu0 %v1288
      %v1363 = vpop.f32.mrf.mxu0
      %v1364 = vadd.f32 0.0, %v1363
      %v1365 = vpop.f32.mrf.mxu0
      %v1366 = vadd.f32 0.0, %v1365
      %1367 = vmatmul.bf16.gmra.mxu0 %v1291
      %v1368 = vpop.f32.mrf.mxu0
      %v1369 = vadd.f32 0.0, %v1368
      %v1370 = vpop.f32.mrf.mxu0
      %v1371 = vadd.f32 0.0, %v1370
      %1372 = vmatmul.bf16.gmra.mxu0 %v1294
      %v1373 = vpop.f32.mrf.mxu0
      %v1374 = vadd.f32 0.0, %v1373
      %v1375 = vpop.f32.mrf.mxu0
      %v1376 = vadd.f32 0.0, %v1375
      %1377 = vmatmul.bf16.gmra.mxu0 %v1297
      %v1378 = vpop.f32.mrf.mxu0
      %v1379 = vadd.f32 0.0, %v1378
      %v1380 = vpop.f32.mrf.mxu0
      %v1381 = vadd.f32 0.0, %v1380
      %1382 = vmatmul.bf16.gmra.mxu0 %v1300
      %v1383 = vpop.f32.mrf.mxu0
      %v1384 = vadd.f32 0.0, %v1383
      %v1385 = vpop.f32.mrf.mxu0
      %v1386 = vadd.f32 0.0, %v1385
      %1387 = vmatmul.bf16.gmra.mxu0 %v1303
      %v1388 = vpop.f32.mrf.mxu0
      %v1389 = vadd.f32 0.0, %v1388
      %v1390 = vpop.f32.mrf.mxu0
      %v1391 = vadd.f32 0.0, %v1390
      %1392 = vmatmul.bf16.gmra.mxu0 %v1306
      %v1393 = vpop.f32.mrf.mxu0
      %v1394 = vadd.f32 0.0, %v1393
      %v1395 = vpop.f32.mrf.mxu0
      %v1396 = vadd.f32 0.0, %v1395
      %1397 = vmatmul.bf16.gmra.mxu0 %v1309
      %v1398 = vpop.f32.mrf.mxu0
      %v1399 = vadd.f32 0.0, %v1398
      %v1400 = vpop.f32.mrf.mxu0
      %v1401 = vadd.f32 0.0, %v1400
      %1402 = vdwg.mxu0
      %v1403 = vadd.f32 %v1003, %v1324
      %v1404 = vadd.f32 %v1005, %v1326
      %v1405 = vadd.f32 %v1008, %v1329
      %v1406 = vadd.f32 %v1010, %v1331
      %v1407 = vadd.f32 %v1013, %v1334
      %v1408 = vadd.f32 %v1015, %v1336
      %v1409 = vadd.f32 %v1018, %v1339
      %v1410 = vadd.f32 %v1020, %v1341
      %v1411 = vadd.f32 %v1023, %v1344
      %v1412 = vadd.f32 %v1025, %v1346
      %v1413 = vadd.f32 %v1028, %v1349
      %v1414 = vadd.f32 %v1030, %v1351
      %v1415 = vadd.f32 %v1033, %v1354
      %v1416 = vadd.f32 %v1035, %v1356
      %v1417 = vadd.f32 %v1038, %v1359
      %v1418 = vadd.f32 %v1040, %v1361
      %v1419 = vadd.f32 %v1043, %v1364
      %v1420 = vadd.f32 %v1045, %v1366
      %v1421 = vadd.f32 %v1048, %v1369
      %v1422 = vadd.f32 %v1050, %v1371
      %v1423 = vadd.f32 %v1053, %v1374
      %v1424 = vadd.f32 %v1055, %v1376
      %v1425 = vadd.f32 %v1058, %v1379
      %v1426 = vadd.f32 %v1060, %v1381
      %v1427 = vadd.f32 %v1063, %v1384
      %v1428 = vadd.f32 %v1065, %v1386
      %v1429 = vadd.f32 %v1068, %v1389
      %v1430 = vadd.f32 %v1070, %v1391
      %v1431 = vadd.f32 %v1073, %v1394
      %v1432 = vadd.f32 %v1075, %v1396
      %v1433 = vadd.f32 %v1078, %v1399
      %v1434 = vadd.f32 %v1080, %v1401
      %s1435 = scalar_lea.vmem %s1, 6
      %v1436 = vld [vmem:[%s1435] sm:$0x3]
      %v1439 = vunpack.c.l.b16 %v276
      %v1440 = vunpack.c.l.b16 %v277
      %v1441 = vpack.c.b16 %v1440, %v1439
      %v1443 = vsel %vm720, %v1441, 0
      %v1446 = vsel %vm769, %v1436, 0
      %1448 = vmatpush.bf16.msra.mxu0 0
      %1449 = vmatpush.bf16.msra.mxu0 0
      %1450 = vmatpush.bf16.msra.mxu0 0
      %1451 = vmatpush.bf16.msra.mxu0 0
      %1452 = vmatpush.bf16.msra.mxu0 0
      %1453 = vmatpush.bf16.msra.mxu0 0
      %1454 = vmatpush.bf16.msra.mxu0 0
      %1455 = vmatpush.bf16.msra.mxu0 %v1446
      %1456 = vmatmul.bf16.gmra.mxu0 %v946
      %v1457 = vpop.f32.mrf.mxu0
      %v1458 = vadd.f32 0.0, %v1457
      %v1459 = vpop.f32.mrf.mxu0
      %v1460 = vadd.f32 0.0, %v1459
      %1461 = vmatmul.bf16.gmra.mxu0 %v949
      %v1462 = vpop.f32.mrf.mxu0
      %v1463 = vadd.f32 0.0, %v1462
      %v1464 = vpop.f32.mrf.mxu0
      %v1465 = vadd.f32 0.0, %v1464
      %1466 = vmatmul.bf16.gmra.mxu0 %v952
      %v1467 = vpop.f32.mrf.mxu0
      %v1468 = vadd.f32 0.0, %v1467
      %v1469 = vpop.f32.mrf.mxu0
      %v1470 = vadd.f32 0.0, %v1469
      %1471 = vmatmul.bf16.gmra.mxu0 %v955
      %v1472 = vpop.f32.mrf.mxu0
      %v1473 = vadd.f32 0.0, %v1472
      %v1474 = vpop.f32.mrf.mxu0
      %v1475 = vadd.f32 0.0, %v1474
      %1476 = vmatmul.bf16.gmra.mxu0 %v958
      %v1477 = vpop.f32.mrf.mxu0
      %v1478 = vadd.f32 0.0, %v1477
      %v1479 = vpop.f32.mrf.mxu0
      %v1480 = vadd.f32 0.0, %v1479
      %1481 = vmatmul.bf16.gmra.mxu0 %v961
      %v1482 = vpop.f32.mrf.mxu0
      %v1483 = vadd.f32 0.0, %v1482
      %v1484 = vpop.f32.mrf.mxu0
      %v1485 = vadd.f32 0.0, %v1484
      %1486 = vmatmul.bf16.gmra.mxu0 %v964
      %v1487 = vpop.f32.mrf.mxu0
      %v1488 = vadd.f32 0.0, %v1487
      %v1489 = vpop.f32.mrf.mxu0
      %v1490 = vadd.f32 0.0, %v1489
      %1491 = vmatmul.bf16.gmra.mxu0 %v967
      %v1492 = vpop.f32.mrf.mxu0
      %v1493 = vadd.f32 0.0, %v1492
      %v1494 = vpop.f32.mrf.mxu0
      %v1495 = vadd.f32 0.0, %v1494
      %1496 = vmatmul.bf16.gmra.mxu0 %v970
      %v1497 = vpop.f32.mrf.mxu0
      %v1498 = vadd.f32 0.0, %v1497
      %v1499 = vpop.f32.mrf.mxu0
      %v1500 = vadd.f32 0.0, %v1499
      %1501 = vmatmul.bf16.gmra.mxu0 %v973
      %v1502 = vpop.f32.mrf.mxu0
      %v1503 = vadd.f32 0.0, %v1502
      %v1504 = vpop.f32.mrf.mxu0
      %v1505 = vadd.f32 0.0, %v1504
      %1506 = vmatmul.bf16.gmra.mxu0 %v976
      %v1507 = vpop.f32.mrf.mxu0
      %v1508 = vadd.f32 0.0, %v1507
      %v1509 = vpop.f32.mrf.mxu0
      %v1510 = vadd.f32 0.0, %v1509
      %1511 = vmatmul.bf16.gmra.mxu0 %v979
      %v1512 = vpop.f32.mrf.mxu0
      %v1513 = vadd.f32 0.0, %v1512
      %v1514 = vpop.f32.mrf.mxu0
      %v1515 = vadd.f32 0.0, %v1514
      %1516 = vmatmul.bf16.gmra.mxu0 %v982
      %v1517 = vpop.f32.mrf.mxu0
      %v1518 = vadd.f32 0.0, %v1517
      %v1519 = vpop.f32.mrf.mxu0
      %v1520 = vadd.f32 0.0, %v1519
      %1521 = vmatmul.bf16.gmra.mxu0 %v985
      %v1522 = vpop.f32.mrf.mxu0
      %v1523 = vadd.f32 0.0, %v1522
      %v1524 = vpop.f32.mrf.mxu0
      %v1525 = vadd.f32 0.0, %v1524
      %1526 = vmatmul.bf16.gmra.mxu0 %v988
      %v1527 = vpop.f32.mrf.mxu0
      %v1528 = vadd.f32 0.0, %v1527
      %v1529 = vpop.f32.mrf.mxu0
      %v1530 = vadd.f32 0.0, %v1529
      %1531 = vmatmul.bf16.gmra.mxu0 %v1443
      %v1532 = vpop.f32.mrf.mxu0
      %v1533 = vadd.f32 0.0, %v1532
      %v1534 = vpop.f32.mrf.mxu0
      %v1535 = vadd.f32 0.0, %v1534
      %1536 = vdwg.mxu0
      %v1537 = vadd.f32 %v1403, %v1458
      %v1538 = vadd.f32 %v1404, %v1460
      %v1539 = vadd.f32 %v1405, %v1463
      %v1540 = vadd.f32 %v1406, %v1465
      %v1541 = vadd.f32 %v1407, %v1468
      %v1542 = vadd.f32 %v1408, %v1470
      %v1543 = vadd.f32 %v1409, %v1473
      %v1544 = vadd.f32 %v1410, %v1475
      %v1545 = vadd.f32 %v1411, %v1478
      %v1546 = vadd.f32 %v1412, %v1480
      %v1547 = vadd.f32 %v1413, %v1483
      %v1548 = vadd.f32 %v1414, %v1485
      %v1549 = vadd.f32 %v1415, %v1488
      %v1550 = vadd.f32 %v1416, %v1490
      %v1551 = vadd.f32 %v1417, %v1493
      %v1552 = vadd.f32 %v1418, %v1495
      %v1553 = vadd.f32 %v1419, %v1498
      %v1554 = vadd.f32 %v1420, %v1500
      %v1555 = vadd.f32 %v1421, %v1503
      %v1556 = vadd.f32 %v1422, %v1505
      %v1557 = vadd.f32 %v1423, %v1508
      %v1558 = vadd.f32 %v1424, %v1510
      %v1559 = vadd.f32 %v1425, %v1513
      %v1560 = vadd.f32 %v1426, %v1515
      %v1561 = vadd.f32 %v1427, %v1518
      %v1562 = vadd.f32 %v1428, %v1520
      %v1563 = vadd.f32 %v1429, %v1523
      %v1564 = vadd.f32 %v1430, %v1525
      %v1565 = vadd.f32 %v1431, %v1528
      %v1566 = vadd.f32 %v1432, %v1530
      %v1567 = vadd.f32 %v1433, %v1533
      %v1568 = vadd.f32 %v1434, %v1535
      %v1570 = vshrl.u32 %v276, 16
      %v1572 = vrot.slane %v1570, 4
      %v1573 = vshll.u32 %v276, 16
      %v1575 = vrot.slane %v1573, 5
      %v1576 = vor.u32 %v1572, %v1575
      %v1577 = vrot.slane %v1576, 4
      %v1579 = vshll.u32 %v277, 16
      %v1581 = vrot.slane %v1579, 5
      %v1582 = vsel %vm285, %v1577, %v1581
      %v1583 = vshrl.u32 %v277, 16
      %v1585 = vrot.slane %v1583, 4
      %v1586 = vor.u32 %v1585, %v1581
      %v1587 = vrot.slane %v1586, 4
      %v1589 = vshll.u32 %v278, 16
      %v1591 = vrot.slane %v1589, 5
      %v1592 = vsel %vm285, %v1587, %v1591
      %s1593 = scalar_lea.vmem %s1, 8
      %v1594 = vld [vmem:[%s1593] sm:$0x3]
      %v1595 = vunpack.c.l.b16 %v1582
      %v1596 = vunpack.c.l.b16 %v1592
      %v1597 = vpack.c.b16 %v1596, %v1595
      %v1599 = vsel %vm720, %v1597, 0
      %v1602 = vsel %vm769, %v1594, 0
      %1604 = vmatpush.bf16.msra.mxu0 0
      %1605 = vmatpush.bf16.msra.mxu0 0
      %1606 = vmatpush.bf16.msra.mxu0 0
      %1607 = vmatpush.bf16.msra.mxu0 0
      %1608 = vmatpush.bf16.msra.mxu0 0
      %1609 = vmatpush.bf16.msra.mxu0 0
      %1610 = vmatpush.bf16.msra.mxu0 0
      %1611 = vmatpush.bf16.msra.mxu0 %v1602
      %1612 = vmatmul.bf16.gmra.mxu0 %v725
      %v1613 = vpop.f32.mrf.mxu0
      %v1614 = vadd.f32 0.0, %v1613
      %v1615 = vpop.f32.mrf.mxu0
      %v1616 = vadd.f32 0.0, %v1615
      %1617 = vmatmul.bf16.gmra.mxu0 %v728
      %v1618 = vpop.f32.mrf.mxu0
      %v1619 = vadd.f32 0.0, %v1618
      %v1620 = vpop.f32.mrf.mxu0
      %v1621 = vadd.f32 0.0, %v1620
      %1622 = vmatmul.bf16.gmra.mxu0 %v731
      %v1623 = vpop.f32.mrf.mxu0
      %v1624 = vadd.f32 0.0, %v1623
      %v1625 = vpop.f32.mrf.mxu0
      %v1626 = vadd.f32 0.0, %v1625
      %1627 = vmatmul.bf16.gmra.mxu0 %v734
      %v1628 = vpop.f32.mrf.mxu0
      %v1629 = vadd.f32 0.0, %v1628
      %v1630 = vpop.f32.mrf.mxu0
      %v1631 = vadd.f32 0.0, %v1630
      %1632 = vmatmul.bf16.gmra.mxu0 %v737
      %v1633 = vpop.f32.mrf.mxu0
      %v1634 = vadd.f32 0.0, %v1633
      %v1635 = vpop.f32.mrf.mxu0
      %v1636 = vadd.f32 0.0, %v1635
      %1637 = vmatmul.bf16.gmra.mxu0 %v740
      %v1638 = vpop.f32.mrf.mxu0
      %v1639 = vadd.f32 0.0, %v1638
      %v1640 = vpop.f32.mrf.mxu0
      %v1641 = vadd.f32 0.0, %v1640
      %1642 = vmatmul.bf16.gmra.mxu0 %v743
      %v1643 = vpop.f32.mrf.mxu0
      %v1644 = vadd.f32 0.0, %v1643
      %v1645 = vpop.f32.mrf.mxu0
      %v1646 = vadd.f32 0.0, %v1645
      %1647 = vmatmul.bf16.gmra.mxu0 %v746
      %v1648 = vpop.f32.mrf.mxu0
      %v1649 = vadd.f32 0.0, %v1648
      %v1650 = vpop.f32.mrf.mxu0
      %v1651 = vadd.f32 0.0, %v1650
      %1652 = vmatmul.bf16.gmra.mxu0 %v749
      %v1653 = vpop.f32.mrf.mxu0
      %v1654 = vadd.f32 0.0, %v1653
      %v1655 = vpop.f32.mrf.mxu0
      %v1656 = vadd.f32 0.0, %v1655
      %1657 = vmatmul.bf16.gmra.mxu0 %v752
      %v1658 = vpop.f32.mrf.mxu0
      %v1659 = vadd.f32 0.0, %v1658
      %v1660 = vpop.f32.mrf.mxu0
      %v1661 = vadd.f32 0.0, %v1660
      %1662 = vmatmul.bf16.gmra.mxu0 %v755
      %v1663 = vpop.f32.mrf.mxu0
      %v1664 = vadd.f32 0.0, %v1663
      %v1665 = vpop.f32.mrf.mxu0
      %v1666 = vadd.f32 0.0, %v1665
      %1667 = vmatmul.bf16.gmra.mxu0 %v758
      %v1668 = vpop.f32.mrf.mxu0
      %v1669 = vadd.f32 0.0, %v1668
      %v1670 = vpop.f32.mrf.mxu0
      %v1671 = vadd.f32 0.0, %v1670
      %1672 = vmatmul.bf16.gmra.mxu0 %v761
      %v1673 = vpop.f32.mrf.mxu0
      %v1674 = vadd.f32 0.0, %v1673
      %v1675 = vpop.f32.mrf.mxu0
      %v1676 = vadd.f32 0.0, %v1675
      %1677 = vmatmul.bf16.gmra.mxu0 %v764
      %v1678 = vpop.f32.mrf.mxu0
      %v1679 = vadd.f32 0.0, %v1678
      %v1680 = vpop.f32.mrf.mxu0
      %v1681 = vadd.f32 0.0, %v1680
      %1682 = vmatmul.bf16.gmra.mxu0 %v767
      %v1683 = vpop.f32.mrf.mxu0
      %v1684 = vadd.f32 0.0, %v1683
      %v1685 = vpop.f32.mrf.mxu0
      %v1686 = vadd.f32 0.0, %v1685
      %1687 = vmatmul.bf16.gmra.mxu0 %v1599
      %v1688 = vpop.f32.mrf.mxu0
      %v1689 = vadd.f32 0.0, %v1688
      %v1690 = vpop.f32.mrf.mxu0
      %v1691 = vadd.f32 0.0, %v1690
      %1692 = vdwg.mxu0
      %v1693 = vadd.f32 %v1537, %v1614
      %v1694 = vadd.f32 %v1538, %v1616
      %v1695 = vadd.f32 %v1539, %v1619
      %v1696 = vadd.f32 %v1540, %v1621
      %v1697 = vadd.f32 %v1541, %v1624
      %v1698 = vadd.f32 %v1542, %v1626
      %v1699 = vadd.f32 %v1543, %v1629
      %v1700 = vadd.f32 %v1544, %v1631
      %v1701 = vadd.f32 %v1545, %v1634
      %v1702 = vadd.f32 %v1546, %v1636
      %v1703 = vadd.f32 %v1547, %v1639
      %v1704 = vadd.f32 %v1548, %v1641
      %v1705 = vadd.f32 %v1549, %v1644
      %v1706 = vadd.f32 %v1550, %v1646
      %v1707 = vadd.f32 %v1551, %v1649
      %v1708 = vadd.f32 %v1552, %v1651
      %v1709 = vadd.f32 %v1553, %v1654
      %v1710 = vadd.f32 %v1554, %v1656
      %v1711 = vadd.f32 %v1555, %v1659
      %v1712 = vadd.f32 %v1556, %v1661
      %v1713 = vadd.f32 %v1557, %v1664
      %v1714 = vadd.f32 %v1558, %v1666
      %v1715 = vadd.f32 %v1559, %v1669
      %v1716 = vadd.f32 %v1560, %v1671
      %v1717 = vadd.f32 %v1561, %v1674
      %v1718 = vadd.f32 %v1562, %v1676
      %v1719 = vadd.f32 %v1563, %v1679
      %v1720 = vadd.f32 %v1564, %v1681
      %v1721 = vadd.f32 %v1565, %v1684
      %v1722 = vadd.f32 %v1566, %v1686
      %v1723 = vadd.f32 %v1567, %v1689
      %v1724 = vadd.f32 %v1568, %v1691
      %v1726 = vrot.slane %v276, 5
      %v1727 = vrot.slane %v1726, 4
      %v1728 = vrot.slane %v277, 5
      %v1729 = vsel %vm1100, %v1727, %v1728
      %v1730 = vrot.slane %v1728, 4
      %v1731 = vrot.slane %v278, 5
      %v1732 = vsel %vm1100, %v1730, %v1731
      %s1733 = scalar_lea.vmem %s1, 10
      %v1734 = vld [vmem:[%s1733] sm:$0x3]
      %v1735 = vunpack.c.l.b16 %v1729
      %v1736 = vunpack.c.l.b16 %v1732
      %v1737 = vpack.c.b16 %v1736, %v1735
      %v1739 = vsel %vm720, %v1737, 0
      %v1742 = vsel %vm769, %v1734, 0
      %1744 = vmatpush.bf16.msra.mxu0 0
      %1745 = vmatpush.bf16.msra.mxu0 0
      %1746 = vmatpush.bf16.msra.mxu0 0
      %1747 = vmatpush.bf16.msra.mxu0 0
      %1748 = vmatpush.bf16.msra.mxu0 0
      %1749 = vmatpush.bf16.msra.mxu0 0
      %1750 = vmatpush.bf16.msra.mxu0 0
      %1751 = vmatpush.bf16.msra.mxu0 %v1742
      %1752 = vmatmul.bf16.gmra.mxu0 %v1267
      %v1753 = vpop.f32.mrf.mxu0
      %v1754 = vadd.f32 0.0, %v1753
      %v1755 = vpop.f32.mrf.mxu0
      %v1756 = vadd.f32 0.0, %v1755
      %1757 = vmatmul.bf16.gmra.mxu0 %v1270
      %v1758 = vpop.f32.mrf.mxu0
      %v1759 = vadd.f32 0.0, %v1758
      %v1760 = vpop.f32.mrf.mxu0
      %v1761 = vadd.f32 0.0, %v1760
      %1762 = vmatmul.bf16.gmra.mxu0 %v1273
      %v1763 = vpop.f32.mrf.mxu0
      %v1764 = vadd.f32 0.0, %v1763
      %v1765 = vpop.f32.mrf.mxu0
      %v1766 = vadd.f32 0.0, %v1765
      %1767 = vmatmul.bf16.gmra.mxu0 %v1276
      %v1768 = vpop.f32.mrf.mxu0
      %v1769 = vadd.f32 0.0, %v1768
      %v1770 = vpop.f32.mrf.mxu0
      %v1771 = vadd.f32 0.0, %v1770
      %1772 = vmatmul.bf16.gmra.mxu0 %v1279
      %v1773 = vpop.f32.mrf.mxu0
      %v1774 = vadd.f32 0.0, %v1773
      %v1775 = vpop.f32.mrf.mxu0
      %v1776 = vadd.f32 0.0, %v1775
      %1777 = vmatmul.bf16.gmra.mxu0 %v1282
      %v1778 = vpop.f32.mrf.mxu0
      %v1779 = vadd.f32 0.0, %v1778
      %v1780 = vpop.f32.mrf.mxu0
      %v1781 = vadd.f32 0.0, %v1780
      %1782 = vmatmul.bf16.gmra.mxu0 %v1285
      %v1783 = vpop.f32.mrf.mxu0
      %v1784 = vadd.f32 0.0, %v1783
      %v1785 = vpop.f32.mrf.mxu0
      %v1786 = vadd.f32 0.0, %v1785
      %1787 = vmatmul.bf16.gmra.mxu0 %v1288
      %v1788 = vpop.f32.mrf.mxu0
      %v1789 = vadd.f32 0.0, %v1788
      %v1790 = vpop.f32.mrf.mxu0
      %v1791 = vadd.f32 0.0, %v1790
      %1792 = vmatmul.bf16.gmra.mxu0 %v1291
      %v1793 = vpop.f32.mrf.mxu0
      %v1794 = vadd.f32 0.0, %v1793
      %v1795 = vpop.f32.mrf.mxu0
      %v1796 = vadd.f32 0.0, %v1795
      %1797 = vmatmul.bf16.gmra.mxu0 %v1294
      %v1798 = vpop.f32.mrf.mxu0
      %v1799 = vadd.f32 0.0, %v1798
      %v1800 = vpop.f32.mrf.mxu0
      %v1801 = vadd.f32 0.0, %v1800
      %1802 = vmatmul.bf16.gmra.mxu0 %v1297
      %v1803 = vpop.f32.mrf.mxu0
      %v1804 = vadd.f32 0.0, %v1803
      %v1805 = vpop.f32.mrf.mxu0
      %v1806 = vadd.f32 0.0, %v1805
      %1807 = vmatmul.bf16.gmra.mxu0 %v1300
      %v1808 = vpop.f32.mrf.mxu0
      %v1809 = vadd.f32 0.0, %v1808
      %v1810 = vpop.f32.mrf.mxu0
      %v1811 = vadd.f32 0.0, %v1810
      %1812 = vmatmul.bf16.gmra.mxu0 %v1303
      %v1813 = vpop.f32.mrf.mxu0
      %v1814 = vadd.f32 0.0, %v1813
      %v1815 = vpop.f32.mrf.mxu0
      %v1816 = vadd.f32 0.0, %v1815
      %1817 = vmatmul.bf16.gmra.mxu0 %v1306
      %v1818 = vpop.f32.mrf.mxu0
      %v1819 = vadd.f32 0.0, %v1818
      %v1820 = vpop.f32.mrf.mxu0
      %v1821 = vadd.f32 0.0, %v1820
      %1822 = vmatmul.bf16.gmra.mxu0 %v1309
      %v1823 = vpop.f32.mrf.mxu0
      %v1824 = vadd.f32 0.0, %v1823
      %v1825 = vpop.f32.mrf.mxu0
      %v1826 = vadd.f32 0.0, %v1825
      %1827 = vmatmul.bf16.gmra.mxu0 %v1739
      %v1828 = vpop.f32.mrf.mxu0
      %v1829 = vadd.f32 0.0, %v1828
      %v1830 = vpop.f32.mrf.mxu0
      %v1831 = vadd.f32 0.0, %v1830
      %1832 = vdwg.mxu0
      %v1833 = vadd.f32 %v1693, %v1754
      %v1834 = vadd.f32 %v1694, %v1756
      %v1835 = vadd.f32 %v1695, %v1759
      %v1836 = vadd.f32 %v1696, %v1761
      %v1837 = vadd.f32 %v1697, %v1764
      %v1838 = vadd.f32 %v1698, %v1766
      %v1839 = vadd.f32 %v1699, %v1769
      %v1840 = vadd.f32 %v1700, %v1771
      %v1841 = vadd.f32 %v1701, %v1774
      %v1842 = vadd.f32 %v1702, %v1776
      %v1843 = vadd.f32 %v1703, %v1779
      %v1844 = vadd.f32 %v1704, %v1781
      %v1845 = vadd.f32 %v1705, %v1784
      %v1846 = vadd.f32 %v1706, %v1786
      %v1847 = vadd.f32 %v1707, %v1789
      %v1848 = vadd.f32 %v1708, %v1791
      %v1849 = vadd.f32 %v1709, %v1794
      %v1850 = vadd.f32 %v1710, %v1796
      %v1851 = vadd.f32 %v1711, %v1799
      %v1852 = vadd.f32 %v1712, %v1801
      %v1853 = vadd.f32 %v1713, %v1804
      %v1854 = vadd.f32 %v1714, %v1806
      %v1855 = vadd.f32 %v1715, %v1809
      %v1856 = vadd.f32 %v1716, %v1811
      %v1857 = vadd.f32 %v1717, %v1814
      %v1858 = vadd.f32 %v1718, %v1816
      %v1859 = vadd.f32 %v1719, %v1819
      %v1860 = vadd.f32 %v1720, %v1821
      %v1861 = vadd.f32 %v1721, %v1824
      %v1862 = vadd.f32 %v1722, %v1826
      %v1863 = vadd.f32 %v1723, %v1829
      %v1864 = vadd.f32 %v1724, %v1831
      %s1865 = scalar_lea.vmem %s1, 12
      %v1866 = vld [vmem:[%s1865] sm:$0x3]
      %v1869 = vunpack.c.l.b16 %v279
      %v1870 = vunpack.c.l.b16 %v280
      %v1871 = vpack.c.b16 %v1870, %v1869
      %v1873 = vsel %vm720, %v1871, 0
      %v1876 = vsel %vm769, %v1866, 0
      %1878 = vmatpush.bf16.msra.mxu0 0
      %1879 = vmatpush.bf16.msra.mxu0 0
      %1880 = vmatpush.bf16.msra.mxu0 0
      %1881 = vmatpush.bf16.msra.mxu0 0
      %1882 = vmatpush.bf16.msra.mxu0 0
      %1883 = vmatpush.bf16.msra.mxu0 0
      %1884 = vmatpush.bf16.msra.mxu0 0
      %1885 = vmatpush.bf16.msra.mxu0 %v1876
      %1886 = vmatmul.bf16.gmra.mxu0 %v949
      %v1887 = vpop.f32.mrf.mxu0
      %v1888 = vadd.f32 0.0, %v1887
      %v1889 = vpop.f32.mrf.mxu0
      %v1890 = vadd.f32 0.0, %v1889
      %1891 = vmatmul.bf16.gmra.mxu0 %v952
      %v1892 = vpop.f32.mrf.mxu0
      %v1893 = vadd.f32 0.0, %v1892
      %v1894 = vpop.f32.mrf.mxu0
      %v1895 = vadd.f32 0.0, %v1894
      %1896 = vmatmul.bf16.gmra.mxu0 %v955
      %v1897 = vpop.f32.mrf.mxu0
      %v1898 = vadd.f32 0.0, %v1897
      %v1899 = vpop.f32.mrf.mxu0
      %v1900 = vadd.f32 0.0, %v1899
      %1901 = vmatmul.bf16.gmra.mxu0 %v958
      %v1902 = vpop.f32.mrf.mxu0
      %v1903 = vadd.f32 0.0, %v1902
      %v1904 = vpop.f32.mrf.mxu0
      %v1905 = vadd.f32 0.0, %v1904
      %1906 = vmatmul.bf16.gmra.mxu0 %v961
      %v1907 = vpop.f32.mrf.mxu0
      %v1908 = vadd.f32 0.0, %v1907
      %v1909 = vpop.f32.mrf.mxu0
      %v1910 = vadd.f32 0.0, %v1909
      %1911 = vmatmul.bf16.gmra.mxu0 %v964
      %v1912 = vpop.f32.mrf.mxu0
      %v1913 = vadd.f32 0.0, %v1912
      %v1914 = vpop.f32.mrf.mxu0
      %v1915 = vadd.f32 0.0, %v1914
      %1916 = vmatmul.bf16.gmra.mxu0 %v967
      %v1917 = vpop.f32.mrf.mxu0
      %v1918 = vadd.f32 0.0, %v1917
      %v1919 = vpop.f32.mrf.mxu0
      %v1920 = vadd.f32 0.0, %v1919
      %1921 = vmatmul.bf16.gmra.mxu0 %v970
      %v1922 = vpop.f32.mrf.mxu0
      %v1923 = vadd.f32 0.0, %v1922
      %v1924 = vpop.f32.mrf.mxu0
      %v1925 = vadd.f32 0.0, %v1924
      %1926 = vmatmul.bf16.gmra.mxu0 %v973
      %v1927 = vpop.f32.mrf.mxu0
      %v1928 = vadd.f32 0.0, %v1927
      %v1929 = vpop.f32.mrf.mxu0
      %v1930 = vadd.f32 0.0, %v1929
      %1931 = vmatmul.bf16.gmra.mxu0 %v976
      %v1932 = vpop.f32.mrf.mxu0
      %v1933 = vadd.f32 0.0, %v1932
      %v1934 = vpop.f32.mrf.mxu0
      %v1935 = vadd.f32 0.0, %v1934
      %1936 = vmatmul.bf16.gmra.mxu0 %v979
      %v1937 = vpop.f32.mrf.mxu0
      %v1938 = vadd.f32 0.0, %v1937
      %v1939 = vpop.f32.mrf.mxu0
      %v1940 = vadd.f32 0.0, %v1939
      %1941 = vmatmul.bf16.gmra.mxu0 %v982
      %v1942 = vpop.f32.mrf.mxu0
      %v1943 = vadd.f32 0.0, %v1942
      %v1944 = vpop.f32.mrf.mxu0
      %v1945 = vadd.f32 0.0, %v1944
      %1946 = vmatmul.bf16.gmra.mxu0 %v985
      %v1947 = vpop.f32.mrf.mxu0
      %v1948 = vadd.f32 0.0, %v1947
      %v1949 = vpop.f32.mrf.mxu0
      %v1950 = vadd.f32 0.0, %v1949
      %1951 = vmatmul.bf16.gmra.mxu0 %v988
      %v1952 = vpop.f32.mrf.mxu0
      %v1953 = vadd.f32 0.0, %v1952
      %v1954 = vpop.f32.mrf.mxu0
      %v1955 = vadd.f32 0.0, %v1954
      %1956 = vmatmul.bf16.gmra.mxu0 %v1443
      %v1957 = vpop.f32.mrf.mxu0
      %v1958 = vadd.f32 0.0, %v1957
      %v1959 = vpop.f32.mrf.mxu0
      %v1960 = vadd.f32 0.0, %v1959
      %1961 = vmatmul.bf16.gmra.mxu0 %v1873
      %v1962 = vpop.f32.mrf.mxu0
      %v1963 = vadd.f32 0.0, %v1962
      %v1964 = vpop.f32.mrf.mxu0
      %v1965 = vadd.f32 0.0, %v1964
      %1966 = vdwg.mxu0
      %v1967 = vadd.f32 %v1833, %v1888
      %v1968 = vadd.f32 %v1834, %v1890
      %v1969 = vadd.f32 %v1835, %v1893
      %v1970 = vadd.f32 %v1836, %v1895
      %v1971 = vadd.f32 %v1837, %v1898
      %v1972 = vadd.f32 %v1838, %v1900
      %v1973 = vadd.f32 %v1839, %v1903
      %v1974 = vadd.f32 %v1840, %v1905
      %v1975 = vadd.f32 %v1841, %v1908
      %v1976 = vadd.f32 %v1842, %v1910
      %v1977 = vadd.f32 %v1843, %v1913
      %v1978 = vadd.f32 %v1844, %v1915
      %v1979 = vadd.f32 %v1845, %v1918
      %v1980 = vadd.f32 %v1846, %v1920
      %v1981 = vadd.f32 %v1847, %v1923
      %v1982 = vadd.f32 %v1848, %v1925
      %v1983 = vadd.f32 %v1849, %v1928
      %v1984 = vadd.f32 %v1850, %v1930
      %v1985 = vadd.f32 %v1851, %v1933
      %v1986 = vadd.f32 %v1852, %v1935
      %v1987 = vadd.f32 %v1853, %v1938
      %v1988 = vadd.f32 %v1854, %v1940
      %v1989 = vadd.f32 %v1855, %v1943
      %v1990 = vadd.f32 %v1856, %v1945
      %v1991 = vadd.f32 %v1857, %v1948
      %v1992 = vadd.f32 %v1858, %v1950
      %v1993 = vadd.f32 %v1859, %v1953
      %v1994 = vadd.f32 %v1860, %v1955
      %v1995 = vadd.f32 %v1861, %v1958
      %v1996 = vadd.f32 %v1862, %v1960
      %v1997 = vadd.f32 %v1863, %v1963
      %v1998 = vadd.f32 %v1864, %v1965
      %v2000 = vshrl.u32 %v279, 16
      %v2002 = vrot.slane %v2000, 4
      %v2003 = vshll.u32 %v279, 16
      %v2005 = vrot.slane %v2003, 5
      %v2006 = vor.u32 %v2002, %v2005
      %v2007 = vrot.slane %v2006, 4
      %v2009 = vshll.u32 %v280, 16
      %v2011 = vrot.slane %v2009, 5
      %v2012 = vsel %vm285, %v2007, %v2011
      %v2013 = vshrl.u32 %v280, 16
      %v2015 = vrot.slane %v2013, 4
      %v2016 = vor.u32 %v2015, %v2011
      %v2017 = vrot.slane %v2016, 4
      %v2019 = vshll.u32 %v281, 16
      %v2021 = vrot.slane %v2019, 5
      %v2022 = vsel %vm285, %v2017, %v2021
      %s2023 = scalar_lea.vmem %s1, 14
      %v2024 = vld [vmem:[%s2023] sm:$0x3]
      %v2025 = vunpack.c.l.b16 %v2012
      %v2026 = vunpack.c.l.b16 %v2022
      %v2027 = vpack.c.b16 %v2026, %v2025
      %v2029 = vsel %vm720, %v2027, 0
      %v2032 = vsel %vm769, %v2024, 0
      %2034 = vmatpush.bf16.msra.mxu0 0
      %2035 = vmatpush.bf16.msra.mxu0 0
      %2036 = vmatpush.bf16.msra.mxu0 0
      %2037 = vmatpush.bf16.msra.mxu0 0
      %2038 = vmatpush.bf16.msra.mxu0 0
      %2039 = vmatpush.bf16.msra.mxu0 0
      %2040 = vmatpush.bf16.msra.mxu0 0
      %2041 = vmatpush.bf16.msra.mxu0 %v2032
      %2042 = vmatmul.bf16.gmra.mxu0 %v728
      %v2043 = vpop.f32.mrf.mxu0
      %v2044 = vadd.f32 0.0, %v2043
      %v2045 = vpop.f32.mrf.mxu0
      %v2046 = vadd.f32 0.0, %v2045
      %2047 = vmatmul.bf16.gmra.mxu0 %v731
      %v2048 = vpop.f32.mrf.mxu0
      %v2049 = vadd.f32 0.0, %v2048
      %v2050 = vpop.f32.mrf.mxu0
      %v2051 = vadd.f32 0.0, %v2050
      %2052 = vmatmul.bf16.gmra.mxu0 %v734
      %v2053 = vpop.f32.mrf.mxu0
      %v2054 = vadd.f32 0.0, %v2053
      %v2055 = vpop.f32.mrf.mxu0
      %v2056 = vadd.f32 0.0, %v2055
      %2057 = vmatmul.bf16.gmra.mxu0 %v737
      %v2058 = vpop.f32.mrf.mxu0
      %v2059 = vadd.f32 0.0, %v2058
      %v2060 = vpop.f32.mrf.mxu0
      %v2061 = vadd.f32 0.0, %v2060
      %2062 = vmatmul.bf16.gmra.mxu0 %v740
      %v2063 = vpop.f32.mrf.mxu0
      %v2064 = vadd.f32 0.0, %v2063
      %v2065 = vpop.f32.mrf.mxu0
      %v2066 = vadd.f32 0.0, %v2065
      %2067 = vmatmul.bf16.gmra.mxu0 %v743
      %v2068 = vpop.f32.mrf.mxu0
      %v2069 = vadd.f32 0.0, %v2068
      %v2070 = vpop.f32.mrf.mxu0
      %v2071 = vadd.f32 0.0, %v2070
      %2072 = vmatmul.bf16.gmra.mxu0 %v746
      %v2073 = vpop.f32.mrf.mxu0
      %v2074 = vadd.f32 0.0, %v2073
      %v2075 = vpop.f32.mrf.mxu0
      %v2076 = vadd.f32 0.0, %v2075
      %2077 = vmatmul.bf16.gmra.mxu0 %v749
      %v2078 = vpop.f32.mrf.mxu0
      %v2079 = vadd.f32 0.0, %v2078
      %v2080 = vpop.f32.mrf.mxu0
      %v2081 = vadd.f32 0.0, %v2080
      %2082 = vmatmul.bf16.gmra.mxu0 %v752
      %v2083 = vpop.f32.mrf.mxu0
      %v2084 = vadd.f32 0.0, %v2083
      %v2085 = vpop.f32.mrf.mxu0
      %v2086 = vadd.f32 0.0, %v2085
      %2087 = vmatmul.bf16.gmra.mxu0 %v755
      %v2088 = vpop.f32.mrf.mxu0
      %v2089 = vadd.f32 0.0, %v2088
      %v2090 = vpop.f32.mrf.mxu0
      %v2091 = vadd.f32 0.0, %v2090
      %2092 = vmatmul.bf16.gmra.mxu0 %v758
      %v2093 = vpop.f32.mrf.mxu0
      %v2094 = vadd.f32 0.0, %v2093
      %v2095 = vpop.f32.mrf.mxu0
      %v2096 = vadd.f32 0.0, %v2095
      %2097 = vmatmul.bf16.gmra.mxu0 %v761
      %v2098 = vpop.f32.mrf.mxu0
      %v2099 = vadd.f32 0.0, %v2098
      %v2100 = vpop.f32.mrf.mxu0
      %v2101 = vadd.f32 0.0, %v2100
      %2102 = vmatmul.bf16.gmra.mxu0 %v764
      %v2103 = vpop.f32.mrf.mxu0
      %v2104 = vadd.f32 0.0, %v2103
      %v2105 = vpop.f32.mrf.mxu0
      %v2106 = vadd.f32 0.0, %v2105
      %2107 = vmatmul.bf16.gmra.mxu0 %v767
      %v2108 = vpop.f32.mrf.mxu0
      %v2109 = vadd.f32 0.0, %v2108
      %v2110 = vpop.f32.mrf.mxu0
      %v2111 = vadd.f32 0.0, %v2110
      %2112 = vmatmul.bf16.gmra.mxu0 %v1599
      %v2113 = vpop.f32.mrf.mxu0
      %v2114 = vadd.f32 0.0, %v2113
      %v2115 = vpop.f32.mrf.mxu0
      %v2116 = vadd.f32 0.0, %v2115
      %2117 = vmatmul.bf16.gmra.mxu0 %v2029
      %v2118 = vpop.f32.mrf.mxu0
      %v2119 = vadd.f32 0.0, %v2118
      %v2120 = vpop.f32.mrf.mxu0
      %v2121 = vadd.f32 0.0, %v2120
      %2122 = vdwg.mxu0
      %v2123 = vadd.f32 %v1967, %v2044
      %v2124 = vadd.f32 %v1968, %v2046
      %v2125 = vadd.f32 %v1969, %v2049
      %v2126 = vadd.f32 %v1970, %v2051
      %v2127 = vadd.f32 %v1971, %v2054
      %v2128 = vadd.f32 %v1972, %v2056
      %v2129 = vadd.f32 %v1973, %v2059
      %v2130 = vadd.f32 %v1974, %v2061
      %v2131 = vadd.f32 %v1975, %v2064
      %v2132 = vadd.f32 %v1976, %v2066
      %v2133 = vadd.f32 %v1977, %v2069
      %v2134 = vadd.f32 %v1978, %v2071
      %v2135 = vadd.f32 %v1979, %v2074
      %v2136 = vadd.f32 %v1980, %v2076
      %v2137 = vadd.f32 %v1981, %v2079
      %v2138 = vadd.f32 %v1982, %v2081
      %v2139 = vadd.f32 %v1983, %v2084
      %v2140 = vadd.f32 %v1984, %v2086
      %v2141 = vadd.f32 %v1985, %v2089
      %v2142 = vadd.f32 %v1986, %v2091
      %v2143 = vadd.f32 %v1987, %v2094
      %v2144 = vadd.f32 %v1988, %v2096
      %v2145 = vadd.f32 %v1989, %v2099
      %v2146 = vadd.f32 %v1990, %v2101
      %v2147 = vadd.f32 %v1991, %v2104
      %v2148 = vadd.f32 %v1992, %v2106
      %v2149 = vadd.f32 %v1993, %v2109
      %v2150 = vadd.f32 %v1994, %v2111
      %v2151 = vadd.f32 %v1995, %v2114
      %v2152 = vadd.f32 %v1996, %v2116
      %v2153 = vadd.f32 %v1997, %v2119
      %v2154 = vadd.f32 %v1998, %v2121
      %v2156 = vrot.slane %v279, 5
      %v2157 = vrot.slane %v2156, 4
      %v2158 = vrot.slane %v280, 5
      %v2159 = vsel %vm1100, %v2157, %v2158
      %v2160 = vrot.slane %v2158, 4
      %v2161 = vrot.slane %v281, 5
      %v2162 = vsel %vm1100, %v2160, %v2161
      %s2163 = scalar_lea.vmem %s1, 16
      %v2164 = vld [vmem:[%s2163] sm:$0x3]
      %v2165 = vunpack.c.l.b16 %v2159
      %v2166 = vunpack.c.l.b16 %v2162
      %v2167 = vpack.c.b16 %v2166, %v2165
      %v2169 = vsel %vm720, %v2167, 0
      %v2172 = vsel %vm769, %v2164, 0
      %2174 = vmatpush.bf16.msra.mxu0 0
      %2175 = vmatpush.bf16.msra.mxu0 0
      %2176 = vmatpush.bf16.msra.mxu0 0
      %2177 = vmatpush.bf16.msra.mxu0 0
      %2178 = vmatpush.bf16.msra.mxu0 0
      %2179 = vmatpush.bf16.msra.mxu0 0
      %2180 = vmatpush.bf16.msra.mxu0 0
      %2181 = vmatpush.bf16.msra.mxu0 %v2172
      %2182 = vmatmul.bf16.gmra.mxu0 %v1270
      %v2183 = vpop.f32.mrf.mxu0
      %v2184 = vadd.f32 0.0, %v2183
      %v2185 = vpop.f32.mrf.mxu0
      %v2186 = vadd.f32 0.0, %v2185
      %2187 = vmatmul.bf16.gmra.mxu0 %v1273
      %v2188 = vpop.f32.mrf.mxu0
      %v2189 = vadd.f32 0.0, %v2188
      %v2190 = vpop.f32.mrf.mxu0
      %v2191 = vadd.f32 0.0, %v2190
      %2192 = vmatmul.bf16.gmra.mxu0 %v1276
      %v2193 = vpop.f32.mrf.mxu0
      %v2194 = vadd.f32 0.0, %v2193
      %v2195 = vpop.f32.mrf.mxu0
      %v2196 = vadd.f32 0.0, %v2195
      %2197 = vmatmul.bf16.gmra.mxu0 %v1279
      %v2198 = vpop.f32.mrf.mxu0
      %v2199 = vadd.f32 0.0, %v2198
      %v2200 = vpop.f32.mrf.mxu0
      %v2201 = vadd.f32 0.0, %v2200
      %2202 = vmatmul.bf16.gmra.mxu0 %v1282
      %v2203 = vpop.f32.mrf.mxu0
      %v2204 = vadd.f32 0.0, %v2203
      %v2205 = vpop.f32.mrf.mxu0
      %v2206 = vadd.f32 0.0, %v2205
      %2207 = vmatmul.bf16.gmra.mxu0 %v1285
      %v2208 = vpop.f32.mrf.mxu0
      %v2209 = vadd.f32 0.0, %v2208
      %v2210 = vpop.f32.mrf.mxu0
      %v2211 = vadd.f32 0.0, %v2210
      %2212 = vmatmul.bf16.gmra.mxu0 %v1288
      %v2213 = vpop.f32.mrf.mxu0
      %v2214 = vadd.f32 0.0, %v2213
      %v2215 = vpop.f32.mrf.mxu0
      %v2216 = vadd.f32 0.0, %v2215
      %2217 = vmatmul.bf16.gmra.mxu0 %v1291
      %v2218 = vpop.f32.mrf.mxu0
      %v2219 = vadd.f32 0.0, %v2218
      %v2220 = vpop.f32.mrf.mxu0
      %v2221 = vadd.f32 0.0, %v2220
      %2222 = vmatmul.bf16.gmra.mxu0 %v1294
      %v2223 = vpop.f32.mrf.mxu0
      %v2224 = vadd.f32 0.0, %v2223
      %v2225 = vpop.f32.mrf.mxu0
      %v2226 = vadd.f32 0.0, %v2225
      %2227 = vmatmul.bf16.gmra.mxu0 %v1297
      %v2228 = vpop.f32.mrf.mxu0
      %v2229 = vadd.f32 0.0, %v2228
      %v2230 = vpop.f32.mrf.mxu0
      %v2231 = vadd.f32 0.0, %v2230
      %2232 = vmatmul.bf16.gmra.mxu0 %v1300
      %v2233 = vpop.f32.mrf.mxu0
      %v2234 = vadd.f32 0.0, %v2233
      %v2235 = vpop.f32.mrf.mxu0
      %v2236 = vadd.f32 0.0, %v2235
      %2237 = vmatmul.bf16.gmra.mxu0 %v1303
      %v2238 = vpop.f32.mrf.mxu0
      %v2239 = vadd.f32 0.0, %v2238
      %v2240 = vpop.f32.mrf.mxu0
      %v2241 = vadd.f32 0.0, %v2240
      %2242 = vmatmul.bf16.gmra.mxu0 %v1306
      %v2243 = vpop.f32.mrf.mxu0
      %v2244 = vadd.f32 0.0, %v2243
      %v2245 = vpop.f32.mrf.mxu0
      %v2246 = vadd.f32 0.0, %v2245
      %2247 = vmatmul.bf16.gmra.mxu0 %v1309
      %v2248 = vpop.f32.mrf.mxu0
      %v2249 = vadd.f32 0.0, %v2248
      %v2250 = vpop.f32.mrf.mxu0
      %v2251 = vadd.f32 0.0, %v2250
      %2252 = vmatmul.bf16.gmra.mxu0 %v1739
      %v2253 = vpop.f32.mrf.mxu0
      %v2254 = vadd.f32 0.0, %v2253
      %v2255 = vpop.f32.mrf.mxu0
      %v2256 = vadd.f32 0.0, %v2255
      %2257 = vmatmul.bf16.gmra.mxu0 %v2169
      %v2258 = vpop.f32.mrf.mxu0
      %v2259 = vadd.f32 0.0, %v2258
      %v2260 = vpop.f32.mrf.mxu0
      %v2261 = vadd.f32 0.0, %v2260
      %2262 = vdwg.mxu0
      %v2263 = vadd.f32 %v2123, %v2184
      %v2264 = vadd.f32 %v2124, %v2186
      %v2265 = vadd.f32 %v2125, %v2189
      %v2266 = vadd.f32 %v2126, %v2191
      %v2267 = vadd.f32 %v2127, %v2194
      %v2268 = vadd.f32 %v2128, %v2196
      %v2269 = vadd.f32 %v2129, %v2199
      %v2270 = vadd.f32 %v2130, %v2201
      %v2271 = vadd.f32 %v2131, %v2204
      %v2272 = vadd.f32 %v2132, %v2206
      %v2273 = vadd.f32 %v2133, %v2209
      %v2274 = vadd.f32 %v2134, %v2211
      %v2275 = vadd.f32 %v2135, %v2214
      %v2276 = vadd.f32 %v2136, %v2216
      %v2277 = vadd.f32 %v2137, %v2219
      %v2278 = vadd.f32 %v2138, %v2221
      %v2279 = vadd.f32 %v2139, %v2224
      %v2280 = vadd.f32 %v2140, %v2226
      %v2281 = vadd.f32 %v2141, %v2229
      %v2282 = vadd.f32 %v2142, %v2231
      %v2283 = vadd.f32 %v2143, %v2234
      %v2284 = vadd.f32 %v2144, %v2236
      %v2285 = vadd.f32 %v2145, %v2239
      %v2286 = vadd.f32 %v2146, %v2241
      %v2287 = vadd.f32 %v2147, %v2244
      %v2288 = vadd.f32 %v2148, %v2246
      %v2289 = vadd.f32 %v2149, %v2249
      %v2290 = vadd.f32 %v2150, %v2251
      %v2291 = vadd.f32 %v2151, %v2254
      %v2292 = vadd.f32 %v2152, %v2256
      %v2293 = vadd.f32 %v2153, %v2259
      %v2294 = vadd.f32 %v2154, %v2261
      %v2295 = vld [vmem:[%s2] sm:$0x1]
      %v2297 = vperm.slane %v2295, 0
      %v2299 = vadd.f32 %v2263, %v2297
      %v2300 = vadd.f32 %v2264, %v2297
      %v2301 = vadd.f32 %v2265, %v2297
      %v2302 = vadd.f32 %v2266, %v2297
      %v2303 = vadd.f32 %v2267, %v2297
      %v2304 = vadd.f32 %v2268, %v2297
      %v2305 = vadd.f32 %v2269, %v2297
      %v2306 = vadd.f32 %v2270, %v2297
      %v2307 = vadd.f32 %v2271, %v2297
      %v2308 = vadd.f32 %v2272, %v2297
      %v2309 = vadd.f32 %v2273, %v2297
      %v2310 = vadd.f32 %v2274, %v2297
      %v2311 = vadd.f32 %v2275, %v2297
      %v2312 = vadd.f32 %v2276, %v2297
      %v2313 = vadd.f32 %v2277, %v2297
      %v2314 = vadd.f32 %v2278, %v2297
      %v2315 = vadd.f32 %v2279, %v2297
      %v2316 = vadd.f32 %v2280, %v2297
      %v2317 = vadd.f32 %v2281, %v2297
      %v2318 = vadd.f32 %v2282, %v2297
      %v2319 = vadd.f32 %v2283, %v2297
      %v2320 = vadd.f32 %v2284, %v2297
      %v2321 = vadd.f32 %v2285, %v2297
      %v2322 = vadd.f32 %v2286, %v2297
      %v2323 = vadd.f32 %v2287, %v2297
      %v2324 = vadd.f32 %v2288, %v2297
      %v2325 = vadd.f32 %v2289, %v2297
      %v2326 = vadd.f32 %v2290, %v2297
      %v2327 = vadd.f32 %v2291, %v2297
      %v2328 = vadd.f32 %v2292, %v2297
      %v2329 = vadd.f32 %v2293, %v2297
      %v2330 = vadd.f32 %v2294, %v2297
      %2331 = vst.msk [vmem:[%s219] sm:$0xff] %vm720, %v2299
      %2332 = vst.msk [vmem:[%s219 + $0x8] sm:$0xff] %vm720, %v2300
      %2333 = vst.msk [vmem:[%s219 + $0x10] sm:$0xff] %vm720, %v2301
      %2334 = vst.msk [vmem:[%s219 + $0x18] sm:$0xff] %vm720, %v2302
      %2335 = vst.msk [vmem:[%s219 + $0x20] sm:$0xff] %vm720, %v2303
      %2336 = vst.msk [vmem:[%s219 + $0x28] sm:$0xff] %vm720, %v2304
      %2337 = vst.msk [vmem:[%s219 + $0x30] sm:$0xff] %vm720, %v2305
      %2338 = vst.msk [vmem:[%s219 + $0x38] sm:$0xff] %vm720, %v2306
      %2339 = vst.msk [vmem:[%s219 + $0x40] sm:$0xff] %vm720, %v2307
      %2340 = vst.msk [vmem:[%s219 + $0x48] sm:$0xff] %vm720, %v2308
      %2341 = vst.msk [vmem:[%s219 + $0x50] sm:$0xff] %vm720, %v2309
      %2342 = vst.msk [vmem:[%s219 + $0x58] sm:$0xff] %vm720, %v2310
      %2343 = vst.msk [vmem:[%s219 + $0x60] sm:$0xff] %vm720, %v2311
      %2344 = vst.msk [vmem:[%s219 + $0x68] sm:$0xff] %vm720, %v2312
      %2345 = vst.msk [vmem:[%s219 + $0x70] sm:$0xff] %vm720, %v2313
      %2346 = vst.msk [vmem:[%s219 + $0x78] sm:$0xff] %vm720, %v2314
      %2347 = vst.msk [vmem:[%s219 + $0x80] sm:$0xff] %vm720, %v2315
      %2348 = vst.msk [vmem:[%s219 + $0x88] sm:$0xff] %vm720, %v2316
      %2349 = vst.msk [vmem:[%s219 + $0x90] sm:$0xff] %vm720, %v2317
      %2350 = vst.msk [vmem:[%s219 + $0x98] sm:$0xff] %vm720, %v2318
      %2351 = vst.msk [vmem:[%s219 + $0xa0] sm:$0xff] %vm720, %v2319
      %2352 = vst.msk [vmem:[%s219 + $0xa8] sm:$0xff] %vm720, %v2320
      %2353 = vst.msk [vmem:[%s219 + $0xb0] sm:$0xff] %vm720, %v2321
      %2354 = vst.msk [vmem:[%s219 + $0xb8] sm:$0xff] %vm720, %v2322
      %2355 = vst.msk [vmem:[%s219 + $0xc0] sm:$0xff] %vm720, %v2323
      %2356 = vst.msk [vmem:[%s219 + $0xc8] sm:$0xff] %vm720, %v2324
      %2357 = vst.msk [vmem:[%s219 + $0xd0] sm:$0xff] %vm720, %v2325
      %2358 = vst.msk [vmem:[%s219 + $0xd8] sm:$0xff] %vm720, %v2326
      %2359 = vst.msk [vmem:[%s219 + $0xe0] sm:$0xff] %vm720, %v2327
      %2360 = vst.msk [vmem:[%s219 + $0xe8] sm:$0xff] %vm720, %v2328
      %2361 = vst.msk [vmem:[%s219 + $0xf0] sm:$0xff] %vm720, %v2329
      %2362 = vst.msk [vmem:[%s219 + $0xf8] sm:$0xff] %vm720, %v2330
      %v2363 = vld [vmem:[%s4] sm:$0x1]
      %v2364 = vsel %vm720, %v2299, 0.0
      %v2365 = vsel %vm720, %v2300, 0.0
      %v2366 = vadd.f32 %v2364, %v2365
      %v2367 = vsel %vm720, %v2301, 0.0
      %v2368 = vadd.f32 %v2366, %v2367
      %v2369 = vsel %vm720, %v2302, 0.0
      %v2370 = vadd.f32 %v2368, %v2369
      %v2371 = vsel %vm720, %v2303, 0.0
      %v2372 = vadd.f32 %v2370, %v2371
      %v2373 = vsel %vm720, %v2304, 0.0
      %v2374 = vadd.f32 %v2372, %v2373
      %v2375 = vsel %vm720, %v2305, 0.0
      %v2376 = vadd.f32 %v2374, %v2375
      %v2377 = vsel %vm720, %v2306, 0.0
      %v2378 = vadd.f32 %v2376, %v2377
      %v2379 = vsel %vm720, %v2307, 0.0
      %v2380 = vadd.f32 %v2378, %v2379
      %v2381 = vsel %vm720, %v2308, 0.0
      %v2382 = vadd.f32 %v2380, %v2381
      %v2383 = vsel %vm720, %v2309, 0.0
      %v2384 = vadd.f32 %v2382, %v2383
      %v2385 = vsel %vm720, %v2310, 0.0
      %v2386 = vadd.f32 %v2384, %v2385
      %v2387 = vsel %vm720, %v2311, 0.0
      %v2388 = vadd.f32 %v2386, %v2387
      %v2389 = vsel %vm720, %v2312, 0.0
      %v2390 = vadd.f32 %v2388, %v2389
      %v2391 = vsel %vm720, %v2313, 0.0
      %v2392 = vadd.f32 %v2390, %v2391
      %v2393 = vsel %vm720, %v2314, 0.0
      %v2394 = vadd.f32 %v2392, %v2393
      %v2395 = vsel %vm720, %v2315, 0.0
      %v2396 = vadd.f32 %v2394, %v2395
      %v2397 = vsel %vm720, %v2316, 0.0
      %v2398 = vadd.f32 %v2396, %v2397
      %v2399 = vsel %vm720, %v2317, 0.0
      %v2400 = vadd.f32 %v2398, %v2399
      %v2401 = vsel %vm720, %v2318, 0.0
      %v2402 = vadd.f32 %v2400, %v2401
      %v2403 = vsel %vm720, %v2319, 0.0
      %v2404 = vadd.f32 %v2402, %v2403
      %v2405 = vsel %vm720, %v2320, 0.0
      %v2406 = vadd.f32 %v2404, %v2405
      %v2407 = vsel %vm720, %v2321, 0.0
      %v2408 = vadd.f32 %v2406, %v2407
      %v2409 = vsel %vm720, %v2322, 0.0
      %v2410 = vadd.f32 %v2408, %v2409
      %v2411 = vsel %vm720, %v2323, 0.0
      %v2412 = vadd.f32 %v2410, %v2411
      %v2413 = vsel %vm720, %v2324, 0.0
      %v2414 = vadd.f32 %v2412, %v2413
      %v2415 = vsel %vm720, %v2325, 0.0
      %v2416 = vadd.f32 %v2414, %v2415
      %v2417 = vsel %vm720, %v2326, 0.0
      %v2418 = vadd.f32 %v2416, %v2417
      %v2419 = vsel %vm720, %v2327, 0.0
      %v2420 = vadd.f32 %v2418, %v2419
      %v2421 = vsel %vm720, %v2328, 0.0
      %v2422 = vadd.f32 %v2420, %v2421
      %v2423 = vsel %vm720, %v2329, 0.0
      %v2424 = vadd.f32 %v2422, %v2423
      %v2425 = vsel %vm720, %v2330, 0.0
      %v2426 = vadd.f32 %v2424, %v2425
      %v2427 = vrot.slane %v2426, 4
      %v2428 = vadd.f32 %v2426, %v2427
      %v2429 = vrot.slane %v2428, 2
      %v2430 = vadd.f32 %v2428, %v2429
      %v2431 = vrot.slane %v2430, 1
      %v2432 = vadd.f32 %v2430, %v2431
      %v2433 = vadd.f32 %v2363, %v2432
      %vm2434 = vcmask 24576
      %2435 = vst.msk [vmem:[%s4] sm:$0x1] %vm2434, %v2433
      %v2436 = vld [vmem:[%s5] sm:$0x1]
      %v2437 = vmul.f32 %v2299, %v2299
      %v2438 = vmul.f32 %v2300, %v2300
      %v2439 = vmul.f32 %v2301, %v2301
      %v2440 = vmul.f32 %v2302, %v2302
      %v2441 = vmul.f32 %v2303, %v2303
      %v2442 = vmul.f32 %v2304, %v2304
      %v2443 = vmul.f32 %v2305, %v2305
      %v2444 = vmul.f32 %v2306, %v2306
      %v2445 = vmul.f32 %v2307, %v2307
      %v2446 = vmul.f32 %v2308, %v2308
      %v2447 = vmul.f32 %v2309, %v2309
      %v2448 = vmul.f32 %v2310, %v2310
      %v2449 = vmul.f32 %v2311, %v2311
      %v2450 = vmul.f32 %v2312, %v2312
      %v2451 = vmul.f32 %v2313, %v2313
      %v2452 = vmul.f32 %v2314, %v2314
      %v2453 = vmul.f32 %v2315, %v2315
      %v2454 = vmul.f32 %v2316, %v2316
      %v2455 = vmul.f32 %v2317, %v2317
      %v2456 = vmul.f32 %v2318, %v2318
      %v2457 = vmul.f32 %v2319, %v2319
      %v2458 = vmul.f32 %v2320, %v2320
      %v2459 = vmul.f32 %v2321, %v2321
      %v2460 = vmul.f32 %v2322, %v2322
      %v2461 = vmul.f32 %v2323, %v2323
      %v2462 = vmul.f32 %v2324, %v2324
      %v2463 = vmul.f32 %v2325, %v2325
      %v2464 = vmul.f32 %v2326, %v2326
      %v2465 = vmul.f32 %v2327, %v2327
      %v2466 = vmul.f32 %v2328, %v2328
      %v2467 = vmul.f32 %v2329, %v2329
      %v2468 = vmul.f32 %v2330, %v2330
      %v2469 = vsel %vm720, %v2437, 0.0
      %v2470 = vsel %vm720, %v2438, 0.0
      %v2471 = vadd.f32 %v2469, %v2470
      %v2472 = vsel %vm720, %v2439, 0.0
      %v2473 = vadd.f32 %v2471, %v2472
      %v2474 = vsel %vm720, %v2440, 0.0
      %v2475 = vadd.f32 %v2473, %v2474
      %v2476 = vsel %vm720, %v2441, 0.0
      %v2477 = vadd.f32 %v2475, %v2476
      %v2478 = vsel %vm720, %v2442, 0.0
      %v2479 = vadd.f32 %v2477, %v2478
      %v2480 = vsel %vm720, %v2443, 0.0
      %v2481 = vadd.f32 %v2479, %v2480
      %v2482 = vsel %vm720, %v2444, 0.0
      %v2483 = vadd.f32 %v2481, %v2482
      %v2484 = vsel %vm720, %v2445, 0.0
      %v2485 = vadd.f32 %v2483, %v2484
      %v2486 = vsel %vm720, %v2446, 0.0
      %v2487 = vadd.f32 %v2485, %v2486
      %v2488 = vsel %vm720, %v2447, 0.0
      %v2489 = vadd.f32 %v2487, %v2488
      %v2490 = vsel %vm720, %v2448, 0.0
      %v2491 = vadd.f32 %v2489, %v2490
      %v2492 = vsel %vm720, %v2449, 0.0
      %v2493 = vadd.f32 %v2491, %v2492
      %v2494 = vsel %vm720, %v2450, 0.0
      %v2495 = vadd.f32 %v2493, %v2494
      %v2496 = vsel %vm720, %v2451, 0.0
      %v2497 = vadd.f32 %v2495, %v2496
      %v2498 = vsel %vm720, %v2452, 0.0
      %v2499 = vadd.f32 %v2497, %v2498
      %v2500 = vsel %vm720, %v2453, 0.0
      %v2501 = vadd.f32 %v2499, %v2500
      %v2502 = vsel %vm720, %v2454, 0.0
      %v2503 = vadd.f32 %v2501, %v2502
      %v2504 = vsel %vm720, %v2455, 0.0
      %v2505 = vadd.f32 %v2503, %v2504
      %v2506 = vsel %vm720, %v2456, 0.0
      %v2507 = vadd.f32 %v2505, %v2506
      %v2508 = vsel %vm720, %v2457, 0.0
      %v2509 = vadd.f32 %v2507, %v2508
      %v2510 = vsel %vm720, %v2458, 0.0
      %v2511 = vadd.f32 %v2509, %v2510
      %v2512 = vsel %vm720, %v2459, 0.0
      %v2513 = vadd.f32 %v2511, %v2512
      %v2514 = vsel %vm720, %v2460, 0.0
      %v2515 = vadd.f32 %v2513, %v2514
      %v2516 = vsel %vm720, %v2461, 0.0
      %v2517 = vadd.f32 %v2515, %v2516
      %v2518 = vsel %vm720, %v2462, 0.0
      %v2519 = vadd.f32 %v2517, %v2518
      %v2520 = vsel %vm720, %v2463, 0.0
      %v2521 = vadd.f32 %v2519, %v2520
      %v2522 = vsel %vm720, %v2464, 0.0
      %v2523 = vadd.f32 %v2521, %v2522
      %v2524 = vsel %vm720, %v2465, 0.0
      %v2525 = vadd.f32 %v2523, %v2524
      %v2526 = vsel %vm720, %v2466, 0.0
      %v2527 = vadd.f32 %v2525, %v2526
      %v2528 = vsel %vm720, %v2467, 0.0
      %v2529 = vadd.f32 %v2527, %v2528
      %v2530 = vsel %vm720, %v2468, 0.0
      %v2531 = vadd.f32 %v2529, %v2530
      %v2532 = vrot.slane %v2531, 4
      %v2533 = vadd.f32 %v2531, %v2532
      %v2534 = vrot.slane %v2533, 2
      %v2535 = vadd.f32 %v2533, %v2534
      %v2536 = vrot.slane %v2535, 1
      %v2537 = vadd.f32 %v2535, %v2536
      %v2538 = vadd.f32 %v2436, %v2537
      %2539 = vst.msk [vmem:[%s5] sm:$0x1] %vm2434, %v2538
      %p2540 = scmp.lt.s32.totalorder %s17, 1
      %s2541 = scalar_select %p2540, %s17, 1
      %s2542 = smul.addr %s2541, 32
      %s2543 = smul.addr %s2542, 8
      %s2544 = scalar_lea.vmem %s3, %s2543
      // Predicated region
      $region37: #{upconv_block_forward.14} parent=31 // pred_check
        %p2545 = pneg %p103
      $region38: #{upconv_block_forward.14} parent=31 // pred_check_branch
        %2547 = sbr.rel (%p2545) target = $region40
      $region39: #{upconv_block_forward.14} parent=31 // pred_region
        _
      $region40: #{upconv_block_forward.14} parent=31 // pred_fallthru
        _
      // Predicated region
      $region41: #{upconv_block_forward.14} parent=31 // pred_check
        %p2548 = pneg %p124
      $region42: #{upconv_block_forward.14} parent=31 // pred_check_branch
        %2550 = sbr.rel (%p2548) target = $region44
      $region43: #{upconv_block_forward.14} parent=31 // pred_region
        _
      $region44: #{upconv_block_forward.14} parent=31 // pred_fallthru
        _
      // Predicated region
      $region45: #{upconv_block_forward.14} parent=31 // pred_check
        %p2551 = pneg %p145
      $region46: #{upconv_block_forward.14} parent=31 // pred_check_branch
        %2553 = sbr.rel (%p2551) target = $region48
      $region47: #{upconv_block_forward.14} parent=31 // pred_region
        _
      $region48: #{upconv_block_forward.14} parent=31 // pred_fallthru
        _
      // Predicated region
      $region49: #{upconv_block_forward.14} parent=31 // pred_check
        %p2554 = pneg %p124
      $region50: #{upconv_block_forward.14} parent=31 // pred_check_branch
        %2556 = sbr.rel (%p2554) target = $region52
      $region51: #{upconv_block_forward.14} parent=31 // pred_region
        _
      $region52: #{upconv_block_forward.14} parent=31 // pred_fallthru
        _
      // Predicated region
      $region53: #{upconv_block_forward.14} parent=31 // pred_check
        %p2557 = pneg %p145
      $region54: #{upconv_block_forward.14} parent=31 // pred_check_branch
        %2559 = sbr.rel (%p2557) target = $region56
      $region55: #{upconv_block_forward.14} parent=31 // pred_region
        _
      $region56: #{upconv_block_forward.14} parent=31 // pred_fallthru
        _
    $region32: #{upconv_block_forward.14} parent=5 // pred_fallthru
      _
    %p2560 = scmp.le.s32.totalorder 2, %s12
    // Predicated region
    $region57: #{upconv_block_forward.14} parent=5 // pred_check
      %p2561 = pneg %p2560
    $region58: #{upconv_block_forward.14} parent=5 // pred_check_branch
      %2563 = sbr.rel (%p2561) target = $region60
    $region59: #{upconv_block_forward.14} parent=5 // pred_region
      %s2564 = ssub.s32 %s12, 2
      // Predicated region
      $region61: #{upconv_block_forward.14} parent=59 // pred_check
        %p2565 = pneg %p109
      $region62: #{upconv_block_forward.14} parent=59 // pred_check_branch
        %2567 = sbr.rel (%p2565) target = $region64
      $region63: #{upconv_block_forward.14} parent=59 // pred_region
        %p2568 = scmp.lt.s32.totalorder %s18, 1
        %s2569 = scalar_select %p2568, %s18, 1
        %s2570 = smul.addr %s2569, 32
        %s2571 = smul.addr %s2570, 8
        %s2572 = scalar_lea.vmem %s3, %s2571
      $region64: #{upconv_block_forward.14} parent=59 // pred_fallthru
        _
    $region60: #{upconv_block_forward.14} parent=5 // pred_fallthru
      _
  $region6: #{upconv_block_forward.14} parent=0 // loop_footer
    %s16 = sadd.s32 1, %s12
  $region7: #{upconv_block_forward.14} parent=0 // loop_footer_branch
    %11 = sbr.rel target = $region3
  $region8: #{upconv_block_forward.14} parent=0 // loop_exit
    _

</llo_original>
